<compile_context>
chip_gen: v7x
topology: tpu7x:2x2x1
jax: 0.10.0
libtpu: 0.0.40
codegen_flags: <defaults>
</compile_context>

<pallas_src>
import math
from functools import partial

import jax
import jax.numpy as jnp
from jax import lax
from jax.experimental import pallas as pl
from jax.experimental.pallas import tpu as pltpu


def _layer_norm(v, eps=1e-6):
    # One-pass: var = E[x^2] - mu^2 (both cross-lane reductions issue back-to-back).
    mu = jnp.mean(v, axis=-1, keepdims=True)
    ms = jnp.mean(v * v, axis=-1, keepdims=True)
    var = jnp.maximum(ms - mu * mu, 0.0)
    return (v - mu) * lax.rsqrt(var + eps)


def _gelu_tanh(v):
    c = math.sqrt(2.0 / math.pi)
    return 0.5 * v * (1.0 + jnp.tanh(c * (v + 0.044715 * v * v * v)))


def dit_block_kernel(x_ref, mod_ref,
                     w_in_ref, b_in_ref,
                     w_out_ref, b_out_ref,
                     w1_ref, b1_ref,
                     w2_ref, b2_ref,
                     o_ref, *, n_heads, mlp_chunk, compute_dtype):
    S, H = x_ref.shape
    dh = H // n_heads
    cd = compute_dtype

    mods = mod_ref[...]                                      # (6, H) f32
    shift_msa, scale_msa, gate_msa = mods[0:1], mods[1:2], mods[2:3]
    shift_mlp, scale_mlp, gate_mlp = mods[3:4], mods[4:5], mods[5:6]

    # ---- x = modulate(norm1(x), shift_msa, scale_msa)  (reference overwrites x here) ----
    x = x_ref[...].astype(jnp.float32)
    x = _layer_norm(x) * (1.0 + scale_msa) + shift_msa       # (S, H) f32

    # ---- multi-head self-attention (eval mode: attention dropout = identity) ----
    # 1/sqrt(dh) already folded into the Q columns of w_in / b_in in the wrapper.
    qkv = jnp.dot(x.astype(cd), w_in_ref[...],
                  preferred_element_type=jnp.float32) + b_in_ref[...]      # (S, 3H) f32

    # Single head-major relayout, then batched attention over the head axis.
    qkv_h = jnp.swapaxes(qkv.reshape(S, 3 * n_heads, dh), 0, 1)            # (3*nh, S, dh)
    q = qkv_h[:n_heads].astype(cd)                                         # (nh, S, dh)
    k = qkv_h[n_heads:2 * n_heads].astype(cd)
    v = qkv_h[2 * n_heads:].astype(cd)

    s = jnp.einsum('hqd,hkd->hqk', q, k,
                   preferred_element_type=jnp.float32)                     # (nh, S, S) f32
    m = jnp.max(s, axis=-1, keepdims=True)
    e = jnp.exp(s - m)
    p = e * pl.reciprocal(jnp.sum(e, axis=-1, keepdims=True), approx=True)  # EUP rcp
    o = jnp.einsum('hqk,hkd->hqd', p.astype(cd), v,
                   preferred_element_type=jnp.float32)                     # (nh, S, dh)

    o_sh = jnp.swapaxes(o, 0, 1).reshape(S, H)               # merge heads back -> (S, H)
    attn = jnp.dot(o_sh.astype(cd), w_out_ref[...],          # single full-depth out-proj
                   preferred_element_type=jnp.float32) + b_out_ref[...]

    x = x + gate_msa * attn

    # ---- MLP branch: Linear -> GELU(tanh) -> (Dropout=id) -> Linear, chunked over 4H ----
    x2 = _layer_norm(x) * (1.0 + scale_mlp) + shift_mlp
    x2_cd = x2.astype(cd)
    H4 = w1_ref.shape[1]
    n_chunks = H4 // mlp_chunk

    if n_chunks <= 1:
        h1 = jnp.dot(x2_cd, w1_ref[...], preferred_element_type=jnp.float32) + b1_ref[...]
        mlp = jnp.dot(_gelu_tanh(h1).astype(cd), w2_ref[...],
                      preferred_element_type=jnp.float32)
    else:
        def body(c, acc):
            off = pl.multiple_of(c * mlp_chunk, mlp_chunk)
            h1 = jnp.dot(x2_cd, w1_ref[:, pl.ds(off, mlp_chunk)],
                         preferred_element_type=jnp.float32) + b1_ref[:, pl.ds(off, mlp_chunk)]
            g = _gelu_tanh(h1).astype(cd)
            return acc + jnp.dot(g, w2_ref[pl.ds(off, mlp_chunk), :],
                                 preferred_element_type=jnp.float32)
        mlp = lax.fori_loop(0, n_chunks, body, jnp.zeros((S, H), jnp.float32))

    mlp = mlp + b2_ref[...]
    o_ref[...] = (x + gate_mlp * mlp).astype(o_ref.dtype)


def _pick_mlp_chunk(total, target=1024):
    """Largest divisor of `total` that is a multiple of 128 and <= target (else `total`)."""
    if total <= target:
        return total
    start = target - (target % 128)
    for c in range(start, 0, -128):
        if total % c == 0:
            return c
    return total


def _vmem_capacity_bytes(default=64 * 2 ** 20):
    try:
        info = pltpu.get_tpu_info()
        return int(getattr(info, "vmem_capacity_bytes", default))
    except Exception:
        return default


def dit_block(x, t, params, n_heads, *, compute_dtype=jnp.bfloat16, mlp_chunk_target=1024):
    B, S, H = x.shape
    assert H % n_heads == 0
    dh = H // n_heads

    # ---- adaLN modulation hoisted out of the Pallas kernel (plain XLA pre-pass) ----
    silu_t = t * jax.nn.sigmoid(t)
    ada = silu_t @ params["w_ada"] + params["b_ada"]            # (B, 6H) f32
    mods = ada.reshape(B, 6, H).astype(jnp.float32)             # chunk(6, dim=1) order preserved

    # Fold 1/sqrt(dh) into the Q columns of the in_proj (zero in-kernel cost).
    col_scale = jnp.concatenate([jnp.full((H,), 1.0 / math.sqrt(dh), jnp.float32),
                                 jnp.ones((2 * H,), jnp.float32)])
    w_in = (params["w_in"] * col_scale[None, :]).astype(compute_dtype)
    b_in = params["b_in"] * col_scale[None, :]                  # bias stays f32

    w_out = params["w_out"].astype(compute_dtype)
    w1 = params["w1"].astype(compute_dtype)
    w2 = params["w2"].astype(compute_dtype)

    weights = [w_in, b_in,
               w_out, params["b_out"],
               w1, params["b1"],
               w2, params["b2"]]

    mlp_chunk = _pick_mlp_chunk(4 * H, mlp_chunk_target)
    assert (4 * H) % mlp_chunk == 0

    def resident_spec(arr):
        # Constant index_map + single buffer: weight lives once in VMEM (no double-buffer).
        nd = arr.ndim
        return pl.BlockSpec(arr.shape, lambda b, _nd=nd: (0,) * _nd,
                            pipeline_mode=pl.Buffered(1))

    grid_spec = pltpu.PrefetchScalarGridSpec(
        num_scalar_prefetch=0,
        grid=(B,),
        in_specs=[
            pl.BlockSpec((None, S, H), lambda b: (b, 0, 0)),    # x: (S,H) slab, batch squeezed
            pl.BlockSpec((None, 6, H), lambda b: (b, 0, 0)),    # per-batch shift/scale/gate
        ] + [resident_spec(w) for w in weights],
        out_specs=pl.BlockSpec((None, S, H), lambda b: (b, 0, 0)),
    )

    # ---- VMEM budget: physical capacity minus headroom, never a flat 64 MiB cap ----
    weight_bytes = sum(int(w.size) * w.dtype.itemsize for w in weights)
    act_bytes = 4 * S * (18 * H + 3 * n_heads * S + 3 * mlp_chunk)
    io_bytes = 4 * S * H * x.dtype.itemsize + 6 * H * 4
    need = int(1.5 * (weight_bytes + act_bytes + io_bytes))
    phys = _vmem_capacity_bytes()
    vmem_limit = max(32 * 2 ** 20, min(int(phys * 0.85), need))

    flops = B * (24 * S * H * H + 4 * S * S * H)
    transcendentals = B * (n_heads * S * S + 4 * S * H + 2 * S)
    bytes_accessed = weight_bytes + 4 * (2 * B * S * H + 6 * B * H)

    kernel = partial(dit_block_kernel, n_heads=n_heads, mlp_chunk=mlp_chunk,
                     compute_dtype=compute_dtype)

    return pl.pallas_call(
        kernel,
        out_shape=jax.ShapeDtypeStruct((B, S, H), x.dtype),
        grid_spec=grid_spec,
        compiler_params=pltpu.CompilerParams(
            dimension_semantics=("parallel",),
            vmem_limit_bytes=vmem_limit),
        cost_estimate=pl.CostEstimate(flops=flops,
                                      transcendentals=transcendentals,
                                      bytes_accessed=bytes_accessed),
    )(x, mods, *weights)


# ---------------- pure-JAX reference (same math, no Pallas) ----------------
def dit_block_ref(x, t, p, n_heads):
    B, S, H = x.shape
    dh = H // n_heads

    def ln(v):
        mu = v.mean(-1, keepdims=True)
        var = ((v - mu) ** 2).mean(-1, keepdims=True)
        return (v - mu) / jnp.sqrt(var + 1e-6)

    silu_t = t * jax.nn.sigmoid(t)
    ada = silu_t @ p["w_ada"] + p["b_ada"][0]
    sm, cm, gm, sp, cp, gp = jnp.split(ada, 6, axis=1)

    x = ln(x) * (1.0 + cm[:, None, :]) + sm[:, None, :]
    qkv = x @ p["w_in"] + p["b_in"][0]
    q, k, v = jnp.split(qkv, 3, axis=-1)
    q = q.reshape(B, S, n_heads, dh).transpose(0, 2, 1, 3)
    k = k.reshape(B, S, n_heads, dh).transpose(0, 2, 1, 3)
    v = v.reshape(B, S, n_heads, dh).transpose(0, 2, 1, 3)
    s = jnp.einsum("bhqd,bhkd->bhqk", q, k) / math.sqrt(dh)
    pw = jax.nn.softmax(s, axis=-1)
    a = jnp.einsum("bhqk,bhkd->bhqd", pw, v).transpose(0, 2, 1, 3).reshape(B, S, H)
    a = a @ p["w_out"] + p["b_out"][0]
    x = x + gm[:, None, :] * a

    x2 = ln(x) * (1.0 + cp[:, None, :]) + sp[:, None, :]
    h1 = x2 @ p["w1"] + p["b1"][0]
    c = math.sqrt(2.0 / math.pi)
    g = 0.5 * h1 * (1.0 + jnp.tanh(c * (h1 + 0.044715 * h1 ** 3)))
    mlp = g @ p["w2"] + p["b2"][0]
    return x + gp[:, None, :] * mlp


def init_params(key, hidden):
    H = hidden
    keys = jax.random.split(key, 10)
    n = lambda k, shape, s=0.02: (s * jax.random.normal(k, shape)).astype(jnp.float32)
    return {
        # adaLN_modulation[1]: Linear(H, 6H)      (stored transposed: (in, out))
        "w_ada": n(keys[0], (H, 6 * H)),
        "b_ada": n(keys[1], (1, 6 * H)),
        # attn in_proj: Linear(H, 3H)
        "w_in": n(keys[2], (H, 3 * H)),
        "b_in": n(keys[3], (1, 3 * H)),
        # attn out_proj: Linear(H, H)
        "w_out": n(keys[4], (H, H)),
        "b_out": n(keys[5], (1, H)),
        # mlp fc1: Linear(H, 4H)
        "w1": n(keys[6], (H, 4 * H)),
        "b1": n(keys[7], (1, 4 * H)),
        # mlp fc2: Linear(4H, H)
        "w2": n(keys[8], (4 * H, H)),
        "b2": n(keys[9], (1, H)),
    }


if __name__ == "__main__":
    # Small but layout-representative shapes: lane-aligned H, multi-sublane S.
    B, S, H, NH = 2, 64, 128, 4
    key = jax.random.PRNGKey(0)
    kx, kt, kp = jax.random.split(key, 3)
    x = jax.random.normal(kx, (B, S, H), dtype=jnp.float32)
    t = jax.random.normal(kt, (B, H), dtype=jnp.float32)
    params = init_params(kp, H)

    ref = dit_block_ref(x, t, params, NH)

    # f32 compute path (near-exact vs reference; approx softmax reciprocal is the only deviation)
    out_f32 = jax.block_until_ready(dit_block(x, t, params, NH, compute_dtype=jnp.float32))
    assert out_f32.shape == (B, S, H)
    assert bool(jnp.all(jnp.isfinite(out_f32)))
    assert bool(jnp.allclose(out_f32, ref, rtol=5e-3, atol=5e-3)), "f32 mismatch vs reference"

    # Default path: bf16 matmul inputs (MXU-friendly on v5e/v6e/v7x), f32 accumulation.
    out = jax.block_until_ready(dit_block(x, t, params, NH))
    assert out.shape == (B, S, H)
    assert bool(jnp.all(jnp.isfinite(out)))
    assert bool(jnp.allclose(out, ref, rtol=1e-1, atol=1e-1)), "bf16 mismatch vs reference"

    print("KERNEL_OK")
</pallas_src>

<mosaic_0001>
module attributes {stable_mosaic.version = 11 : i64} {
  func.func @dit_block_kernel(%arg0: i32, %arg1: memref<1x64x128xf32, #tpu.memory_space<vmem>>, %arg2: memref<1x6x128xf32, #tpu.memory_space<vmem>>, %arg3: memref<128x384xf32, #tpu.memory_space<vmem>>, %arg4: memref<1x384xf32, #tpu.memory_space<vmem>>, %arg5: memref<128x128xf32, #tpu.memory_space<vmem>>, %arg6: memref<1x128xf32, #tpu.memory_space<vmem>>, %arg7: memref<128x512xf32, #tpu.memory_space<vmem>>, %arg8: memref<1x512xf32, #tpu.memory_space<vmem>>, %arg9: memref<512x128xf32, #tpu.memory_space<vmem>>, %arg10: memref<1x128xf32, #tpu.memory_space<vmem>>, %arg11: memref<1x64x128xf32, #tpu.memory_space<vmem>>) attributes {dimension_semantics = [#tpu.dimension_semantics<parallel>], iteration_bounds = array<i64: 2>, scalar_prefetch = 0 : i64, scratch_operands = 0 : i64, tpu.core_type = #tpu.core_type<tc>, window_params = [{transform_indices = @transform_0, window_bounds = array<i64: 1, 64, 128>}, {transform_indices = @transform_1, window_bounds = array<i64: 1, 6, 128>}, {pipeline_mode = #tpu.pipeline_mode<synchronous>, transform_indices = @transform_2, window_bounds = array<i64: 128, 384>}, {pipeline_mode = #tpu.pipeline_mode<synchronous>, transform_indices = @transform_3, window_bounds = array<i64: 1, 384>}, {pipeline_mode = #tpu.pipeline_mode<synchronous>, transform_indices = @transform_4, window_bounds = array<i64: 128, 128>}, {pipeline_mode = #tpu.pipeline_mode<synchronous>, transform_indices = @transform_5, window_bounds = array<i64: 1, 128>}, {pipeline_mode = #tpu.pipeline_mode<synchronous>, transform_indices = @transform_6, window_bounds = array<i64: 128, 512>}, {pipeline_mode = #tpu.pipeline_mode<synchronous>, transform_indices = @transform_7, window_bounds = array<i64: 1, 512>}, {pipeline_mode = #tpu.pipeline_mode<synchronous>, transform_indices = @transform_8, window_bounds = array<i64: 512, 128>}, {pipeline_mode = #tpu.pipeline_mode<synchronous>, transform_indices = @transform_9, window_bounds = array<i64: 1, 128>}, {transform_indices = @transform_10, window_bounds = array<i64: 1, 64, 128>}]} {
    %c0 = arith.constant 0 : index
    %c0_0 = arith.constant 0 : index
    %c0_1 = arith.constant 0 : index
    %0 = vector.load %arg2[%c0, %c0_0, %c0_1] : memref<1x6x128xf32, #tpu.memory_space<vmem>>, vector<1x6x128xf32>
    %1 = vector.shape_cast %0 : vector<1x6x128xf32> to vector<6x128xf32>
    %2 = vector.extract_strided_slice %1 {offsets = [0, 0], sizes = [1, 128], strides = [1, 1]} : vector<6x128xf32> to vector<1x128xf32>
    %3 = vector.extract_strided_slice %1 {offsets = [1, 0], sizes = [1, 128], strides = [1, 1]} : vector<6x128xf32> to vector<1x128xf32>
    %4 = vector.extract_strided_slice %1 {offsets = [2, 0], sizes = [1, 128], strides = [1, 1]} : vector<6x128xf32> to vector<1x128xf32>
    %5 = vector.extract_strided_slice %1 {offsets = [3, 0], sizes = [1, 128], strides = [1, 1]} : vector<6x128xf32> to vector<1x128xf32>
    %6 = vector.extract_strided_slice %1 {offsets = [4, 0], sizes = [1, 128], strides = [1, 1]} : vector<6x128xf32> to vector<1x128xf32>
    %7 = vector.extract_strided_slice %1 {offsets = [5, 0], sizes = [1, 128], strides = [1, 1]} : vector<6x128xf32> to vector<1x128xf32>
    %c0_2 = arith.constant 0 : index
    %c0_3 = arith.constant 0 : index
    %c0_4 = arith.constant 0 : index
    %8 = vector.load %arg1[%c0_2, %c0_3, %c0_4] : memref<1x64x128xf32, #tpu.memory_space<vmem>>, vector<1x64x128xf32>
    %9 = vector.shape_cast %8 : vector<1x64x128xf32> to vector<64x128xf32>
    %cst = arith.constant dense<0.000000e+00> : vector<64xf32>
    %10 = vector.multi_reduction <add>, %9, %cst [1] : vector<64x128xf32> to vector<64xf32>
    %11 = vector.shape_cast %10 : vector<64xf32> to vector<64x1xf32>
    %cst_5 = arith.constant 1.280000e+02 : f32
    %12 = vector.broadcast %cst_5 : f32 to vector<64x1xf32>
    %13 = arith.divf %11, %12 : vector<64x1xf32>
    %14 = arith.mulf %9, %9 : vector<64x128xf32>
    %cst_6 = arith.constant dense<0.000000e+00> : vector<64xf32>
    %15 = vector.multi_reduction <add>, %14, %cst_6 [1] : vector<64x128xf32> to vector<64xf32>
    %16 = vector.shape_cast %15 : vector<64xf32> to vector<64x1xf32>
    %cst_7 = arith.constant 1.280000e+02 : f32
    %17 = vector.broadcast %cst_7 : f32 to vector<64x1xf32>
    %18 = arith.divf %16, %17 : vector<64x1xf32>
    %19 = arith.mulf %13, %13 : vector<64x1xf32>
    %20 = arith.subf %18, %19 : vector<64x1xf32>
    %cst_8 = arith.constant 0.000000e+00 : f32
    %21 = vector.broadcast %cst_8 : f32 to vector<64x1xf32>
    %22 = arith.maximumf %20, %21 : vector<64x1xf32>
    %23 = vector.broadcast %13 : vector<64x1xf32> to vector<64x128xf32>
    %24 = arith.subf %9, %23 : vector<64x128xf32>
    %cst_9 = arith.constant 9.99999997E-7 : f32
    %25 = vector.broadcast %cst_9 : f32 to vector<64x1xf32>
    %26 = arith.addf %22, %25 : vector<64x1xf32>
    %27 = math.rsqrt %26 : vector<64x1xf32>
    %28 = vector.broadcast %27 : vector<64x1xf32> to vector<64x128xf32>
    %29 = arith.mulf %24, %28 : vector<64x128xf32>
    %cst_10 = arith.constant 1.000000e+00 : f32
    %30 = vector.broadcast %cst_10 : f32 to vector<1x128xf32>
    %31 = arith.addf %30, %3 : vector<1x128xf32>
    %32 = vector.broadcast %31 : vector<1x128xf32> to vector<64x128xf32>
    %33 = arith.mulf %29, %32 : vector<64x128xf32>
    %34 = vector.broadcast %2 : vector<1x128xf32> to vector<64x128xf32>
    %35 = arith.addf %33, %34 : vector<64x128xf32>
    %c0_11 = arith.constant 0 : index
    %c0_12 = arith.constant 0 : index
    %36 = vector.load %arg3[%c0_11, %c0_12] : memref<128x384xf32, #tpu.memory_space<vmem>>, vector<128x384xf32>
    %cst_13 = arith.constant dense<0.000000e+00> : vector<64x384xf32>
    %37 = tpu.matmul %35, %36, %cst_13 {dimension_numbers = #tpu.dot_dimension_numbers<[1], [0], [0], [1], [0, 0, 1, 1], [], []>} : vector<64x128xf32>, vector<128x384xf32>, vector<64x384xf32> -> vector<64x384xf32>
    %c0_14 = arith.constant 0 : index
    %c0_15 = arith.constant 0 : index
    %38 = vector.load %arg4[%c0_14, %c0_15] : memref<1x384xf32, #tpu.memory_space<vmem>>, vector<1x384xf32>
    %39 = vector.broadcast %38 : vector<1x384xf32> to vector<64x384xf32>
    %40 = arith.addf %37, %39 : vector<64x384xf32>
    %41 = vector.shape_cast %40 : vector<64x384xf32> to vector<64x12x32xf32>
    %42 = tpu.transpose %41, [1, 0, 2] : vector<64x12x32xf32> -> vector<12x64x32xf32>
    %43 = vector.extract_strided_slice %42 {offsets = [0, 0, 0], sizes = [4, 64, 32], strides = [1, 1, 1]} : vector<12x64x32xf32> to vector<4x64x32xf32>
    %44 = vector.extract_strided_slice %42 {offsets = [4, 0, 0], sizes = [4, 64, 32], strides = [1, 1, 1]} : vector<12x64x32xf32> to vector<4x64x32xf32>
    %45 = vector.extract_strided_slice %42 {offsets = [8, 0, 0], sizes = [4, 64, 32], strides = [1, 1, 1]} : vector<12x64x32xf32> to vector<4x64x32xf32>
    "tpu.trace_start"() <{level = 10 : i32, message = "hqd,hkd->hqk"}> : () -> ()
    %cst_16 = arith.constant dense<0.000000e+00> : vector<4x64x64xf32>
    %46 = tpu.matmul %43, %44, %cst_16 {dimension_numbers = #tpu.dot_dimension_numbers<[2], [2], [1], [1], [0, 0, 0, 1, 1, 1], [0], [0]>} : vector<4x64x32xf32>, vector<4x64x32xf32>, vector<4x64x64xf32> -> vector<4x64x64xf32>
    "tpu.trace_stop"() : () -> ()
    %cst_17 = arith.constant dense<0xFF800000> : vector<4x64xf32>
    %47 = vector.multi_reduction <maximumf>, %46, %cst_17 [2] : vector<4x64x64xf32> to vector<4x64xf32>
    %48 = vector.shape_cast %47 : vector<4x64xf32> to vector<4x64x1xf32>
    %49 = vector.broadcast %48 : vector<4x64x1xf32> to vector<4x64x64xf32>
    %50 = arith.subf %46, %49 : vector<4x64x64xf32>
    %51 = math.exp %50 : vector<4x64x64xf32>
    %cst_18 = arith.constant dense<0.000000e+00> : vector<4x64xf32>
    %52 = vector.multi_reduction <add>, %51, %cst_18 [2] : vector<4x64x64xf32> to vector<4x64xf32>
    %53 = vector.shape_cast %52 : vector<4x64xf32> to vector<4x64x1xf32>
    %54 = tpu.reciprocal %53 {approx = true} : vector<4x64x1xf32> -> vector<4x64x1xf32>
    %55 = vector.broadcast %54 : vector<4x64x1xf32> to vector<4x64x64xf32>
    %56 = arith.mulf %51, %55 : vector<4x64x64xf32>
    "tpu.trace_start"() <{level = 10 : i32, message = "hqk,hkd->hqd"}> : () -> ()
    %cst_19 = arith.constant dense<0.000000e+00> : vector<4x64x32xf32>
    %57 = tpu.matmul %56, %45, %cst_19 {dimension_numbers = #tpu.dot_dimension_numbers<[2], [1], [1], [2], [0, 0, 0, 1, 1, 2], [0], [0]>} : vector<4x64x64xf32>, vector<4x64x32xf32>, vector<4x64x32xf32> -> vector<4x64x32xf32>
    "tpu.trace_stop"() : () -> ()
    %58 = tpu.transpose %57, [1, 0, 2] : vector<4x64x32xf32> -> vector<64x4x32xf32>
    %59 = vector.shape_cast %58 : vector<64x4x32xf32> to vector<64x128xf32>
    %c0_20 = arith.constant 0 : index
    %c0_21 = arith.constant 0 : index
    %60 = vector.load %arg5[%c0_20, %c0_21] : memref<128x128xf32, #tpu.memory_space<vmem>>, vector<128x128xf32>
    %cst_22 = arith.constant dense<0.000000e+00> : vector<64x128xf32>
    %61 = tpu.matmul %59, %60, %cst_22 {dimension_numbers = #tpu.dot_dimension_numbers<[1], [0], [0], [1], [0, 0, 1, 1], [], []>} : vector<64x128xf32>, vector<128x128xf32>, vector<64x128xf32> -> vector<64x128xf32>
    %c0_23 = arith.constant 0 : index
    %c0_24 = arith.constant 0 : index
    %62 = vector.load %arg6[%c0_23, %c0_24] : memref<1x128xf32, #tpu.memory_space<vmem>>, vector<1x128xf32>
    %63 = vector.broadcast %62 : vector<1x128xf32> to vector<64x128xf32>
    %64 = arith.addf %61, %63 : vector<64x128xf32>
    %65 = vector.broadcast %4 : vector<1x128xf32> to vector<64x128xf32>
    %66 = arith.mulf %65, %64 : vector<64x128xf32>
    %67 = arith.addf %35, %66 : vector<64x128xf32>
    %cst_25 = arith.constant dense<0.000000e+00> : vector<64xf32>
    %68 = vector.multi_reduction <add>, %67, %cst_25 [1] : vector<64x128xf32> to vector<64xf32>
    %69 = vector.shape_cast %68 : vector<64xf32> to vector<64x1xf32>
    %cst_26 = arith.constant 1.280000e+02 : f32
    %70 = vector.broadcast %cst_26 : f32 to vector<64x1xf32>
    %71 = arith.divf %69, %70 : vector<64x1xf32>
    %72 = arith.mulf %67, %67 : vector<64x128xf32>
    %cst_27 = arith.constant dense<0.000000e+00> : vector<64xf32>
    %73 = vector.multi_reduction <add>, %72, %cst_27 [1] : vector<64x128xf32> to vector<64xf32>
    %74 = vector.shape_cast %73 : vector<64xf32> to vector<64x1xf32>
    %cst_28 = arith.constant 1.280000e+02 : f32
    %75 = vector.broadcast %cst_28 : f32 to vector<64x1xf32>
    %76 = arith.divf %74, %75 : vector<64x1xf32>
    %77 = arith.mulf %71, %71 : vector<64x1xf32>
    %78 = arith.subf %76, %77 : vector<64x1xf32>
    %cst_29 = arith.constant 0.000000e+00 : f32
    %79 = vector.broadcast %cst_29 : f32 to vector<64x1xf32>
    %80 = arith.maximumf %78, %79 : vector<64x1xf32>
    %81 = vector.broadcast %71 : vector<64x1xf32> to vector<64x128xf32>
    %82 = arith.subf %67, %81 : vector<64x128xf32>
    %cst_30 = arith.constant 9.99999997E-7 : f32
    %83 = vector.broadcast %cst_30 : f32 to vector<64x1xf32>
    %84 = arith.addf %80, %83 : vector<64x1xf32>
    %85 = math.rsqrt %84 : vector<64x1xf32>
    %86 = vector.broadcast %85 : vector<64x1xf32> to vector<64x128xf32>
    %87 = arith.mulf %82, %86 : vector<64x128xf32>
    %cst_31 = arith.constant 1.000000e+00 : f32
    %88 = vector.broadcast %cst_31 : f32 to vector<1x128xf32>
    %89 = arith.addf %88, %6 : vector<1x128xf32>
    %90 = vector.broadcast %89 : vector<1x128xf32> to vector<64x128xf32>
    %91 = arith.mulf %87, %90 : vector<64x128xf32>
    %92 = vector.broadcast %5 : vector<1x128xf32> to vector<64x128xf32>
    %93 = arith.addf %91, %92 : vector<64x128xf32>
    %c0_32 = arith.constant 0 : index
    %c0_33 = arith.constant 0 : index
    %94 = vector.load %arg7[%c0_32, %c0_33] : memref<128x512xf32, #tpu.memory_space<vmem>>, vector<128x512xf32>
    %cst_34 = arith.constant dense<0.000000e+00> : vector<64x512xf32>
    %95 = tpu.matmul %93, %94, %cst_34 {dimension_numbers = #tpu.dot_dimension_numbers<[1], [0], [0], [1], [0, 0, 1, 1], [], []>} : vector<64x128xf32>, vector<128x512xf32>, vector<64x512xf32> -> vector<64x512xf32>
    %c0_35 = arith.constant 0 : index
    %c0_36 = arith.constant 0 : index
    %96 = vector.load %arg8[%c0_35, %c0_36] : memref<1x512xf32, #tpu.memory_space<vmem>>, vector<1x512xf32>
    %97 = vector.broadcast %96 : vector<1x512xf32> to vector<64x512xf32>
    %98 = arith.addf %95, %97 : vector<64x512xf32>
    %cst_37 = arith.constant 5.000000e-01 : f32
    %99 = vector.broadcast %cst_37 : f32 to vector<64x512xf32>
    %100 = arith.mulf %99, %98 : vector<64x512xf32>
    %cst_38 = arith.constant 4.471500e-02 : f32
    %101 = vector.broadcast %cst_38 : f32 to vector<64x512xf32>
    %102 = arith.mulf %101, %98 : vector<64x512xf32>
    %103 = arith.mulf %102, %98 : vector<64x512xf32>
    %104 = arith.mulf %103, %98 : vector<64x512xf32>
    %105 = arith.addf %98, %104 : vector<64x512xf32>
    %cst_39 = arith.constant 0.797884583 : f32
    %106 = vector.broadcast %cst_39 : f32 to vector<64x512xf32>
    %107 = arith.mulf %106, %105 : vector<64x512xf32>
    %108 = math.tanh %107 : vector<64x512xf32>
    %cst_40 = arith.constant 1.000000e+00 : f32
    %109 = vector.broadcast %cst_40 : f32 to vector<64x512xf32>
    %110 = arith.addf %109, %108 : vector<64x512xf32>
    %111 = arith.mulf %100, %110 : vector<64x512xf32>
    %c0_41 = arith.constant 0 : index
    %c0_42 = arith.constant 0 : index
    %112 = vector.load %arg9[%c0_41, %c0_42] : memref<512x128xf32, #tpu.memory_space<vmem>>, vector<512x128xf32>
    %cst_43 = arith.constant dense<0.000000e+00> : vector<64x128xf32>
    %113 = tpu.matmul %111, %112, %cst_43 {dimension_numbers = #tpu.dot_dimension_numbers<[1], [0], [0], [1], [0, 0, 1, 1], [], []>} : vector<64x512xf32>, vector<512x128xf32>, vector<64x128xf32> -> vector<64x128xf32>
    %c0_44 = arith.constant 0 : index
    %c0_45 = arith.constant 0 : index
    %114 = vector.load %arg10[%c0_44, %c0_45] : memref<1x128xf32, #tpu.memory_space<vmem>>, vector<1x128xf32>
    %115 = vector.broadcast %114 : vector<1x128xf32> to vector<64x128xf32>
    %116 = arith.addf %113, %115 : vector<64x128xf32>
    %117 = vector.broadcast %7 : vector<1x128xf32> to vector<64x128xf32>
    %118 = arith.mulf %117, %116 : vector<64x128xf32>
    %119 = arith.addf %67, %118 : vector<64x128xf32>
    %c0_46 = arith.constant 0 : index
    %c0_47 = arith.constant 0 : index
    %c0_48 = arith.constant 0 : index
    %120 = vector.load %arg11[%c0_46, %c0_47, %c0_48] : memref<1x64x128xf32, #tpu.memory_space<vmem>>, vector<1x64x128xf32>
    %121 = vector.shape_cast %120 : vector<1x64x128xf32> to vector<64x128xf32>
    %122 = vector.shape_cast %119 : vector<64x128xf32> to vector<1x64x128xf32>
    tpu.vector_store %arg11[%c0_46, %c0_47, %c0_48], %122 {strides = array<i32>} : memref<1x64x128xf32, #tpu.memory_space<vmem>>, vector<1x64x128xf32>,
    return
  }
  func.func @transform_0(%arg0: i32) -> (i32, i32, i32) {
    %c0_i32 = arith.constant 0 : i32
    %c0_i32_0 = arith.constant 0 : i32
    %c0_i32_1 = arith.constant 0 : i32
    return %arg0, %c0_i32, %c0_i32_0 : i32, i32, i32
  }
  func.func @transform_1(%arg0: i32) -> (i32, i32, i32) {
    %c0_i32 = arith.constant 0 : i32
    %c0_i32_0 = arith.constant 0 : i32
    %c0_i32_1 = arith.constant 0 : i32
    return %arg0, %c0_i32, %c0_i32_0 : i32, i32, i32
  }
  func.func @transform_2(%arg0: i32) -> (i32, i32) {
    %c0_i32 = arith.constant 0 : i32
    %c0_i32_0 = arith.constant 0 : i32
    %c0_i32_1 = arith.constant 0 : i32
    return %c0_i32, %c0_i32_0 : i32, i32
  }
  func.func @transform_3(%arg0: i32) -> (i32, i32) {
    %c0_i32 = arith.constant 0 : i32
    %c0_i32_0 = arith.constant 0 : i32
    %c0_i32_1 = arith.constant 0 : i32
    return %c0_i32, %c0_i32_0 : i32, i32
  }
  func.func @transform_4(%arg0: i32) -> (i32, i32) {
    %c0_i32 = arith.constant 0 : i32
    %c0_i32_0 = arith.constant 0 : i32
    %c0_i32_1 = arith.constant 0 : i32
    return %c0_i32, %c0_i32_0 : i32, i32
  }
  func.func @transform_5(%arg0: i32) -> (i32, i32) {
    %c0_i32 = arith.constant 0 : i32
    %c0_i32_0 = arith.constant 0 : i32
    %c0_i32_1 = arith.constant 0 : i32
    return %c0_i32, %c0_i32_0 : i32, i32
  }
  func.func @transform_6(%arg0: i32) -> (i32, i32) {
    %c0_i32 = arith.constant 0 : i32
    %c0_i32_0 = arith.constant 0 : i32
    %c0_i32_1 = arith.constant 0 : i32
    return %c0_i32, %c0_i32_0 : i32, i32
  }
  func.func @transform_7(%arg0: i32) -> (i32, i32) {
    %c0_i32 = arith.constant 0 : i32
    %c0_i32_0 = arith.constant 0 : i32
    %c0_i32_1 = arith.constant 0 : i32
    return %c0_i32, %c0_i32_0 : i32, i32
  }
  func.func @transform_8(%arg0: i32) -> (i32, i32) {
    %c0_i32 = arith.constant 0 : i32
    %c0_i32_0 = arith.constant 0 : i32
    %c0_i32_1 = arith.constant 0 : i32
    return %c0_i32, %c0_i32_0 : i32, i32
  }
  func.func @transform_9(%arg0: i32) -> (i32, i32) {
    %c0_i32 = arith.constant 0 : i32
    %c0_i32_0 = arith.constant 0 : i32
    %c0_i32_1 = arith.constant 0 : i32
    return %c0_i32, %c0_i32_0 : i32, i32
  }
  func.func @transform_10(%arg0: i32) -> (i32, i32, i32) {
    %c0_i32 = arith.constant 0 : i32
    %c0_i32_0 = arith.constant 0 : i32
    %c0_i32_1 = arith.constant 0 : i32
    return %arg0, %c0_i32, %c0_i32_0 : i32, i32, i32
  }
}

</mosaic_0001>

<llo_original>
// kernel: tpu_custom_call.1
$region0: #{tpu_custom_call.1}
  #allocation0 [shape = 'u32[]', space=smem, size = 0x4, offset = 0x4, fixed_abs, tag = 'smem constant byte address 0x4 - core index']
  #allocation1 [shape = 'u32[144,128]{1,0:T(1,128)}', space=vmem, size = 0x12000, scoped, tag = 'internal scratch']
  %s0 = inlined_call_operand.hbm [shape: f32[2,64,128], index: 0, kind: input, shape index: {}]
  %s1 = inlined_call_operand.vmem [shape: f32[2,6,128], index: 1, kind: input, shape index: {}]
  %s2 = inlined_call_operand.hbm [shape: f32[128,384], index: 2, kind: input, shape index: {}]
  %s3 = inlined_call_operand.vmem [shape: f32[1,384], index: 3, kind: input, shape index: {}]
  %s4 = inlined_call_operand.hbm [shape: f32[128,128], index: 4, kind: input, shape index: {}]
  %s5 = inlined_call_operand.vmem [shape: f32[1,128], index: 5, kind: input, shape index: {}]
  %s6 = inlined_call_operand.hbm [shape: f32[128,512], index: 6, kind: input, shape index: {}]
  %s7 = inlined_call_operand.vmem [shape: f32[1,512], index: 7, kind: input, shape index: {}]
  %s8 = inlined_call_operand.hbm [shape: f32[512,128], index: 8, kind: input, shape index: {}]
  %s9 = inlined_call_operand.vmem [shape: f32[1,128], index: 9, kind: input, shape index: {}]
  %s10 = inlined_call_operand.hbm [shape: f32[2,64,128], index: 10, kind: output, shape index: {}]
  %s11 = sld [smem:[#allocation0]]
  $region93: #{tpu_custom_call.1} parent=0
    _
  %s13 = ssub.s32 1, %s11
  %s14 = scalar_select 0, %s13, %s11
  $region1: #{tpu_custom_call.1} parent=0
    #allocation2 [shape = 'u8[65536]{0}', space=vmem, size = 0x10000, scoped, tag = 'input window, operand 0']
    #allocation3 [shape = 's32[2]{0}', space=sflag, size = 0x8, scoped, tag = 'scoped memory for tpu_custom_call.1']
    #allocation4 [shape = 's32[2]{0}', space=sflag, size = 0x8, scoped, tag = 'scoped memory for tpu_custom_call.1']
    #allocation5 [shape = 'u8[196608]{0}', space=vmem, size = 0x30000, scoped, tag = 'input window, operand 2, single buffered']
    #allocation6 [shape = 's32[1]{0}', space=sflag, size = 0x4, scoped, tag = 'scoped memory for tpu_custom_call.1']
    #allocation7 [shape = 'u8[65536]{0}', space=vmem, size = 0x10000, scoped, tag = 'input window, operand 4, single buffered']
    #allocation8 [shape = 'u8[262144]{0}', space=vmem, size = 0x40000, scoped, tag = 'input window, operand 6, single buffered']
    #allocation9 [shape = 's32[1]{0}', space=sflag, size = 0x4, scoped, tag = 'scoped memory for tpu_custom_call.1']
    #allocation10 [shape = 'u8[262144]{0}', space=vmem, size = 0x40000, scoped, tag = 'input window, operand 8, single buffered']
    #allocation11 [shape = 'u8[65536]{0}', space=vmem, size = 0x10000, scoped, tag = 'output window, operand 0']
    %15 = vsyncpa [#allocation3], 0
    %s16 = scalar_lea.sflag [#allocation3], 1
    %17 = vsyncpa %s16, 0
    %18 = vsyncpa [#allocation6], 0
    %19 = vsyncpa [#allocation9], 0
    %20 = vsyncpa [#allocation4], 0
    %s21 = scalar_lea.sflag [#allocation4], 1
    %22 = vsyncpa %s21, 0
    loop: start=0, step=1, limit=4
    $region2: #{tpu_custom_call.1} parent=1 // loop_pre_header
      _
    $region3: #{tpu_custom_call.1} parent=1 // loop_header
      %s24 = sphi 0, %s28
      %p25 = scmp.ge.s32.totalorder %s24, 4
      %s34 = sphi 0, %s36
      %s37 = sphi 0, %s34
      %s38 = sphi 0, %s37
      %s54 = sphi 0, %s38
      %s60 = sphi 0, %s62
      %s63 = sphi 0, %s60
      %s64 = sphi 0, %s63
      %s80 = sphi 0, %s64
      %s84 = sphi 0, %s84
      %s86 = sphi 0, %s84
      %s87 = sphi 0, %s86
      %s101 = sphi 0, %s87
      %s105 = sphi 0, %s105
      %s107 = sphi 0, %s105
      %s108 = sphi 0, %s107
      %s122 = sphi 0, %s108
      %s126 = sphi 0, %s126
      %s128 = sphi 0, %s126
      %s129 = sphi 0, %s128
      %s143 = sphi 0, %s129
      %s147 = sphi 0, %s147
      %s149 = sphi 0, %s147
      %s150 = sphi 0, %s149
      %s164 = sphi 0, %s150
      %s168 = sphi 0, %s168
      %s170 = sphi 0, %s168
      %s171 = sphi 0, %s170
      %s185 = sphi 0, %s171
      %s189 = sphi 0, %s189
      %s191 = sphi 0, %s189
      %s192 = sphi 0, %s191
      %s206 = sphi 0, %s192
      %s210 = sphi 0, %s210
      %s212 = sphi 0, %s210
      %s213 = sphi 0, %s212
      %s227 = sphi 0, %s213
      %s231 = sphi 0, %s231
      %s233 = sphi 0, %s231
      %s234 = sphi 0, %s233
      %s248 = sphi 0, %s234
      %s254 = sphi 0, %s256
      %s257 = sphi 0, %s254
      %s258 = sphi 0, %s257
      %s274 = sphi 0, %s258
    $region4: #{tpu_custom_call.1} parent=1 // loop_header_branch
      %27 = sbr.rel (%p25) target = $region8
    $region5: #{tpu_custom_call.1} parent=1 // loop_body
      %s29 = ssub.s32 %s24, 1
      %s30 = ssub.s32 %s24, 2
      %s31 = sadd.s32 %s24, 1
      %s32 = ssub.s32 %s24, %s31
      %p33 = scmp.eq.s32.totalorder %s32, 0
      %s35 = sadd.s32 %s34, 1
      %s36 = scalar_select %p33, %s34, %s35
      %p39 = pneg %p33
      %p40 = scmp.eq.s32.totalorder %s24, 1
      %p41 = por %p39, %p40
      %p42 = scmp.ne.s32.totalorder %s34, %s37
      %p43 = scmp.eq.s32.totalorder %s24, 0
      %p44 = por %p42, %p43
      %p45 = scmp.ne.s32.totalorder %s34, %s37
      %p46 = scmp.eq.s32.totalorder %s29, 1
      %p47 = por %p45, %p46
      %p48 = scmp.ne.s32.totalorder %s37, %s38
      %p49 = scmp.eq.s32.totalorder %s29, 0
      %p50 = por %p48, %p49
      %p51 = scmp.ne.s32.totalorder %s37, %s38
      %p52 = scmp.eq.s32.totalorder %s30, 1
      %p53 = por %p51, %p52
      %p55 = scmp.ne.s32.totalorder %s38, %s54
      %p56 = scmp.eq.s32.totalorder %s30, 0
      %p57 = por %p55, %p56
      %s58 = ssub.s32 %s24, %s31
      %p59 = scmp.eq.s32.totalorder %s58, 0
      %s61 = sadd.s32 %s60, 1
      %s62 = scalar_select %p59, %s60, %s61
      %p65 = pneg %p59
      %p66 = scmp.eq.s32.totalorder %s24, 1
      %p67 = por %p65, %p66
      %p68 = scmp.ne.s32.totalorder %s60, %s63
      %p69 = scmp.eq.s32.totalorder %s24, 0
      %p70 = por %p68, %p69
      %p71 = scmp.ne.s32.totalorder %s60, %s63
      %p72 = scmp.eq.s32.totalorder %s29, 1
      %p73 = por %p71, %p72
      %p74 = scmp.ne.s32.totalorder %s63, %s64
      %p75 = scmp.eq.s32.totalorder %s29, 0
      %p76 = por %p74, %p75
      %p77 = scmp.ne.s32.totalorder %s63, %s64
      %p78 = scmp.eq.s32.totalorder %s30, 1
      %p79 = por %p77, %p78
      %p81 = scmp.ne.s32.totalorder %s64, %s80
      %p82 = scmp.eq.s32.totalorder %s30, 0
      %p83 = por %p81, %p82
      %s85 = sadd.s32 %s84, 1
      %p88 = scmp.eq.s32.totalorder %s24, 1
      %p89 = scmp.ne.s32.totalorder %s84, %s86
      %p90 = scmp.eq.s32.totalorder %s24, 0
      %p91 = por %p89, %p90
      %p92 = scmp.ne.s32.totalorder %s84, %s86
      %p93 = scmp.eq.s32.totalorder %s29, 1
      %p94 = por %p92, %p93
      %p95 = scmp.ne.s32.totalorder %s86, %s87
      %p96 = scmp.eq.s32.totalorder %s29, 0
      %p97 = por %p95, %p96
      %p98 = scmp.ne.s32.totalorder %s86, %s87
      %p99 = scmp.eq.s32.totalorder %s30, 1
      %p100 = por %p98, %p99
      %p102 = scmp.ne.s32.totalorder %s87, %s101
      %p103 = scmp.eq.s32.totalorder %s30, 0
      %p104 = por %p102, %p103
      %s106 = sadd.s32 %s105, 1
      %p109 = scmp.eq.s32.totalorder %s24, 1
      %p110 = scmp.ne.s32.totalorder %s105, %s107
      %p111 = scmp.eq.s32.totalorder %s24, 0
      %p112 = por %p110, %p111
      %p113 = scmp.ne.s32.totalorder %s105, %s107
      %p114 = scmp.eq.s32.totalorder %s29, 1
      %p115 = por %p113, %p114
      %p116 = scmp.ne.s32.totalorder %s107, %s108
      %p117 = scmp.eq.s32.totalorder %s29, 0
      %p118 = por %p116, %p117
      %p119 = scmp.ne.s32.totalorder %s107, %s108
      %p120 = scmp.eq.s32.totalorder %s30, 1
      %p121 = por %p119, %p120
      %p123 = scmp.ne.s32.totalorder %s108, %s122
      %p124 = scmp.eq.s32.totalorder %s30, 0
      %p125 = por %p123, %p124
      %s127 = sadd.s32 %s126, 1
      %p130 = scmp.eq.s32.totalorder %s24, 1
      %p131 = scmp.ne.s32.totalorder %s126, %s128
      %p132 = scmp.eq.s32.totalorder %s24, 0
      %p133 = por %p131, %p132
      %p134 = scmp.ne.s32.totalorder %s126, %s128
      %p135 = scmp.eq.s32.totalorder %s29, 1
      %p136 = por %p134, %p135
      %p137 = scmp.ne.s32.totalorder %s128, %s129
      %p138 = scmp.eq.s32.totalorder %s29, 0
      %p139 = por %p137, %p138
      %p140 = scmp.ne.s32.totalorder %s128, %s129
      %p141 = scmp.eq.s32.totalorder %s30, 1
      %p142 = por %p140, %p141
      %p144 = scmp.ne.s32.totalorder %s129, %s143
      %p145 = scmp.eq.s32.totalorder %s30, 0
      %p146 = por %p144, %p145
      %s148 = sadd.s32 %s147, 1
      %p151 = scmp.eq.s32.totalorder %s24, 1
      %p152 = scmp.ne.s32.totalorder %s147, %s149
      %p153 = scmp.eq.s32.totalorder %s24, 0
      %p154 = por %p152, %p153
      %p155 = scmp.ne.s32.totalorder %s147, %s149
      %p156 = scmp.eq.s32.totalorder %s29, 1
      %p157 = por %p155, %p156
      %p158 = scmp.ne.s32.totalorder %s149, %s150
      %p159 = scmp.eq.s32.totalorder %s29, 0
      %p160 = por %p158, %p159
      %p161 = scmp.ne.s32.totalorder %s149, %s150
      %p162 = scmp.eq.s32.totalorder %s30, 1
      %p163 = por %p161, %p162
      %p165 = scmp.ne.s32.totalorder %s150, %s164
      %p166 = scmp.eq.s32.totalorder %s30, 0
      %p167 = por %p165, %p166
      %s169 = sadd.s32 %s168, 1
      %p172 = scmp.eq.s32.totalorder %s24, 1
      %p173 = scmp.ne.s32.totalorder %s168, %s170
      %p174 = scmp.eq.s32.totalorder %s24, 0
      %p175 = por %p173, %p174
      %p176 = scmp.ne.s32.totalorder %s168, %s170
      %p177 = scmp.eq.s32.totalorder %s29, 1
      %p178 = por %p176, %p177
      %p179 = scmp.ne.s32.totalorder %s170, %s171
      %p180 = scmp.eq.s32.totalorder %s29, 0
      %p181 = por %p179, %p180
      %p182 = scmp.ne.s32.totalorder %s170, %s171
      %p183 = scmp.eq.s32.totalorder %s30, 1
      %p184 = por %p182, %p183
      %p186 = scmp.ne.s32.totalorder %s171, %s185
      %p187 = scmp.eq.s32.totalorder %s30, 0
      %p188 = por %p186, %p187
      %s190 = sadd.s32 %s189, 1
      %p193 = scmp.eq.s32.totalorder %s24, 1
      %p194 = scmp.ne.s32.totalorder %s189, %s191
      %p195 = scmp.eq.s32.totalorder %s24, 0
      %p196 = por %p194, %p195
      %p197 = scmp.ne.s32.totalorder %s189, %s191
      %p198 = scmp.eq.s32.totalorder %s29, 1
      %p199 = por %p197, %p198
      %p200 = scmp.ne.s32.totalorder %s191, %s192
      %p201 = scmp.eq.s32.totalorder %s29, 0
      %p202 = por %p200, %p201
      %p203 = scmp.ne.s32.totalorder %s191, %s192
      %p204 = scmp.eq.s32.totalorder %s30, 1
      %p205 = por %p203, %p204
      %p207 = scmp.ne.s32.totalorder %s192, %s206
      %p208 = scmp.eq.s32.totalorder %s30, 0
      %p209 = por %p207, %p208
      %s211 = sadd.s32 %s210, 1
      %p214 = scmp.eq.s32.totalorder %s24, 1
      %p215 = scmp.ne.s32.totalorder %s210, %s212
      %p216 = scmp.eq.s32.totalorder %s24, 0
      %p217 = por %p215, %p216
      %p218 = scmp.ne.s32.totalorder %s210, %s212
      %p219 = scmp.eq.s32.totalorder %s29, 1
      %p220 = por %p218, %p219
      %p221 = scmp.ne.s32.totalorder %s212, %s213
      %p222 = scmp.eq.s32.totalorder %s29, 0
      %p223 = por %p221, %p222
      %p224 = scmp.ne.s32.totalorder %s212, %s213
      %p225 = scmp.eq.s32.totalorder %s30, 1
      %p226 = por %p224, %p225
      %p228 = scmp.ne.s32.totalorder %s213, %s227
      %p229 = scmp.eq.s32.totalorder %s30, 0
      %p230 = por %p228, %p229
      %s232 = sadd.s32 %s231, 1
      %p235 = scmp.eq.s32.totalorder %s24, 1
      %p236 = scmp.ne.s32.totalorder %s231, %s233
      %p237 = scmp.eq.s32.totalorder %s24, 0
      %p238 = por %p236, %p237
      %p239 = scmp.ne.s32.totalorder %s231, %s233
      %p240 = scmp.eq.s32.totalorder %s29, 1
      %p241 = por %p239, %p240
      %p242 = scmp.ne.s32.totalorder %s233, %s234
      %p243 = scmp.eq.s32.totalorder %s29, 0
      %p244 = por %p242, %p243
      %p245 = scmp.ne.s32.totalorder %s233, %s234
      %p246 = scmp.eq.s32.totalorder %s30, 1
      %p247 = por %p245, %p246
      %p249 = scmp.ne.s32.totalorder %s234, %s248
      %p250 = scmp.eq.s32.totalorder %s30, 0
      %p251 = por %p249, %p250
      %s252 = ssub.s32 %s24, %s31
      %p253 = scmp.eq.s32.totalorder %s252, 0
      %s255 = sadd.s32 %s254, 1
      %s256 = scalar_select %p253, %s254, %s255
      %p259 = pneg %p253
      %p260 = scmp.eq.s32.totalorder %s24, 1
      %p261 = por %p259, %p260
      %p262 = scmp.ne.s32.totalorder %s254, %s257
      %p263 = scmp.eq.s32.totalorder %s24, 0
      %p264 = por %p262, %p263
      %p265 = scmp.ne.s32.totalorder %s254, %s257
      %p266 = scmp.eq.s32.totalorder %s29, 1
      %p267 = por %p265, %p266
      %p268 = scmp.ne.s32.totalorder %s257, %s258
      %p269 = scmp.eq.s32.totalorder %s29, 0
      %p270 = por %p268, %p269
      %p271 = scmp.ne.s32.totalorder %s257, %s258
      %p272 = scmp.eq.s32.totalorder %s30, 1
      %p273 = por %p271, %p272
      %p275 = scmp.ne.s32.totalorder %s258, %s274
      %p276 = scmp.eq.s32.totalorder %s30, 0
      %p277 = por %p275, %p276
      %p278 = scmp.le.s32.totalorder 1, %s24
      %p279 = scmp.lt.s32.totalorder %s24, 3
      %p280 = pnand %p278, %p279
      %p281 = pneg %p280
      // Predicated region
      $region9: #{tpu_custom_call.1} parent=5 // pred_check
        _
      $region10: #{tpu_custom_call.1} parent=5 // pred_check_branch
        %283 = sbr.rel (%p280) target = $region12
      $region11: #{tpu_custom_call.1} parent=5 // pred_region
        %s284 = ssub.s32 %s24, 1
        // Predicated region
        $region13: #{tpu_custom_call.1} parent=11 // pred_check
          %p285 = pneg %p97
        $region14: #{tpu_custom_call.1} parent=11 // pred_check_branch
          %287 = sbr.rel (%p285) target = $region16
        $region15: #{tpu_custom_call.1} parent=11 // pred_region
          %s289 = ssub.s32 6144, 6144
          %290 = vsyncadd [#allocation6], %s289
          %s291 = sshll.u32 [#allocation5], 4
          %s292 = int_to_ptr.vmem [resolvable:$true] %s291
          %297 = dma.hbm_to_vmem [thread:$0]  %s2, 6144, %s292, [#allocation6], 384, 384, 24
        $region16: #{tpu_custom_call.1} parent=11 // pred_fallthru
          _
        // Predicated region
        $region17: #{tpu_custom_call.1} parent=11 // pred_check
          %p298 = pneg %p118
        $region18: #{tpu_custom_call.1} parent=11 // pred_check_branch
          %300 = sbr.rel (%p298) target = $region20
        $region19: #{tpu_custom_call.1} parent=11 // pred_region
          _
        $region20: #{tpu_custom_call.1} parent=11 // pred_fallthru
          _
        // Predicated region
        $region21: #{tpu_custom_call.1} parent=11 // pred_check
          %p301 = pneg %p139
        $region22: #{tpu_custom_call.1} parent=11 // pred_check_branch
          %303 = sbr.rel (%p301) target = $region24
        $region23: #{tpu_custom_call.1} parent=11 // pred_region
          %s305 = ssub.s32 2048, 2048
          %306 = vsyncadd [#allocation6], %s305
          %s307 = sshll.u32 [#allocation7], 4
          %s308 = int_to_ptr.vmem [resolvable:$true] %s307
          %313 = dma.hbm_to_vmem [thread:$0]  %s4, 2048, %s308, [#allocation6], 128, 128, 8
        $region24: #{tpu_custom_call.1} parent=11 // pred_fallthru
          _
        // Predicated region
        $region25: #{tpu_custom_call.1} parent=11 // pred_check
          %p314 = pneg %p160
        $region26: #{tpu_custom_call.1} parent=11 // pred_check_branch
          %316 = sbr.rel (%p314) target = $region28
        $region27: #{tpu_custom_call.1} parent=11 // pred_region
          _
        $region28: #{tpu_custom_call.1} parent=11 // pred_fallthru
          _
        // Predicated region
        $region29: #{tpu_custom_call.1} parent=11 // pred_check
          %p317 = pneg %p181
        $region30: #{tpu_custom_call.1} parent=11 // pred_check_branch
          %319 = sbr.rel (%p317) target = $region32
        $region31: #{tpu_custom_call.1} parent=11 // pred_region
          %s321 = ssub.s32 8192, 8192
          %322 = vsyncadd [#allocation9], %s321
          %s323 = sshll.u32 [#allocation8], 4
          %s324 = int_to_ptr.vmem [resolvable:$true] %s323
          %329 = dma.hbm_to_vmem [thread:$0]  %s6, 8192, %s324, [#allocation9], 512, 512, 32
        $region32: #{tpu_custom_call.1} parent=11 // pred_fallthru
          _
        // Predicated region
        $region33: #{tpu_custom_call.1} parent=11 // pred_check
          %p330 = pneg %p202
        $region34: #{tpu_custom_call.1} parent=11 // pred_check_branch
          %332 = sbr.rel (%p330) target = $region36
        $region35: #{tpu_custom_call.1} parent=11 // pred_region
          _
        $region36: #{tpu_custom_call.1} parent=11 // pred_fallthru
          _
        // Predicated region
        $region37: #{tpu_custom_call.1} parent=11 // pred_check
          %p333 = pneg %p223
        $region38: #{tpu_custom_call.1} parent=11 // pred_check_branch
          %335 = sbr.rel (%p333) target = $region40
        $region39: #{tpu_custom_call.1} parent=11 // pred_region
          %s337 = ssub.s32 8192, 8192
          %338 = vsyncadd [#allocation9], %s337
          %s339 = sshll.u32 [#allocation10], 4
          %s340 = int_to_ptr.vmem [resolvable:$true] %s339
          %345 = dma.hbm_to_vmem [thread:$0]  %s8, 8192, %s340, [#allocation9], 128, 128, 8
        $region40: #{tpu_custom_call.1} parent=11 // pred_fallthru
          _
        // Predicated region
        $region41: #{tpu_custom_call.1} parent=11 // pred_check
          %p346 = pneg %p244
        $region42: #{tpu_custom_call.1} parent=11 // pred_check_branch
          %348 = sbr.rel (%p346) target = $region44
        $region43: #{tpu_custom_call.1} parent=11 // pred_region
          _
        $region44: #{tpu_custom_call.1} parent=11 // pred_fallthru
          _
      $region12: #{tpu_custom_call.1} parent=5 // pred_fallthru
        _
      %p349 = scmp.lt.s32.totalorder %s24, 2
      // Predicated region
      $region45: #{tpu_custom_call.1} parent=5 // pred_check
        %p350 = pneg %p349
      $region46: #{tpu_custom_call.1} parent=5 // pred_check_branch
        %352 = sbr.rel (%p350) target = $region48
      $region47: #{tpu_custom_call.1} parent=5 // pred_region
        // Predicated region
        $region49: #{tpu_custom_call.1} parent=47 // pred_check
          %p353 = pneg %p44
        $region50: #{tpu_custom_call.1} parent=47 // pred_check_branch
          %355 = sbr.rel (%p353) target = $region52
        $region51: #{tpu_custom_call.1} parent=47 // pred_region
          %s356 = sand.u32 %s34, 1
          %s357 = scalar_lea.sflag [#allocation3], %s356
          %s358 = sand.u32 %s34, 1
          %s359 = smul.addr %s358, 64
          %s360 = scalar_lea.vmem [#allocation2], %s359
          %s362 = ssub.s32 1024, 1024
          %363 = vsyncadd %s357, %s362
          %s364 = smul.addr %s24, 8
          %s365 = smul.addr %s364, 128
          %s366 = scalar_lea.hbm %s0, %s365
          %s367 = sshll.u32 %s360, 4
          %s368 = int_to_ptr.vmem [resolvable:$true] %s367
          %373 = dma.hbm_to_vmem [thread:$0]  %s366, 1024, %s368, %s357, 128, 128, 8
        $region52: #{tpu_custom_call.1} parent=47 // pred_fallthru
          _
        // Predicated region
        $region53: #{tpu_custom_call.1} parent=47 // pred_check
          %p374 = pneg %p70
        $region54: #{tpu_custom_call.1} parent=47 // pred_check_branch
          %376 = sbr.rel (%p374) target = $region56
        $region55: #{tpu_custom_call.1} parent=47 // pred_region
          %p377 = scmp.lt.s32.totalorder %s24, 1
          %s378 = scalar_select %p377, %s24, 1
          %s379 = smul.addr %s378, 8
          %s380 = scalar_lea.vmem %s1, %s379
        $region56: #{tpu_custom_call.1} parent=47 // pred_fallthru
          _
      $region48: #{tpu_custom_call.1} parent=5 // pred_fallthru
        _
      %p381 = scmp.le.s32.totalorder 1, %s24
      %p382 = scmp.lt.s32.totalorder %s24, 3
      %p383 = pnand %p381, %p382
      %p384 = pneg %p383
      // Predicated region
      $region57: #{tpu_custom_call.1} parent=5 // pred_check
        _
      $region58: #{tpu_custom_call.1} parent=5 // pred_check_branch
        %386 = sbr.rel (%p383) target = $region60
      $region59: #{tpu_custom_call.1} parent=5 // pred_region
        %s387 = ssub.s32 %s24, 1
        %s388 = sand.u32 %s37, 1
        %s389 = scalar_lea.sflag [#allocation3], %s388
        %s390 = sand.u32 %s37, 1
        %s391 = smul.addr %s390, 64
        %s392 = scalar_lea.vmem [#allocation2], %s391
        // Predicated region
        $region61: #{tpu_custom_call.1} parent=59 // pred_check
          %p393 = pneg %p50
        $region62: #{tpu_custom_call.1} parent=59 // pred_check_branch
          %395 = sbr.rel (%p393) target = $region64
        $region63: #{tpu_custom_call.1} parent=59 // pred_region
          %396 = dma.done %s389, 1024
        $region64: #{tpu_custom_call.1} parent=59 // pred_fallthru
          _
        // Predicated region
        $region65: #{tpu_custom_call.1} parent=59 // pred_check
          %p397 = pneg %p97
        $region66: #{tpu_custom_call.1} parent=59 // pred_check_branch
          %399 = sbr.rel (%p397) target = $region68
        $region67: #{tpu_custom_call.1} parent=59 // pred_region
          %400 = dma.done [#allocation6], 6144
        $region68: #{tpu_custom_call.1} parent=59 // pred_fallthru
          _
        // Predicated region
        $region69: #{tpu_custom_call.1} parent=59 // pred_check
          %p401 = pneg %p139
        $region70: #{tpu_custom_call.1} parent=59 // pred_check_branch
          %403 = sbr.rel (%p401) target = $region72
        $region71: #{tpu_custom_call.1} parent=59 // pred_region
          %404 = dma.done [#allocation6], 2048
        $region72: #{tpu_custom_call.1} parent=59 // pred_fallthru
          _
        // Predicated region
        $region73: #{tpu_custom_call.1} parent=59 // pred_check
          %p405 = pneg %p181
        $region74: #{tpu_custom_call.1} parent=59 // pred_check_branch
          %407 = sbr.rel (%p405) target = $region76
        $region75: #{tpu_custom_call.1} parent=59 // pred_region
          %408 = dma.done [#allocation9], 8192
        $region76: #{tpu_custom_call.1} parent=59 // pred_fallthru
          _
        // Predicated region
        $region77: #{tpu_custom_call.1} parent=59 // pred_check
          %p409 = pneg %p223
        $region78: #{tpu_custom_call.1} parent=59 // pred_check_branch
          %411 = sbr.rel (%p409) target = $region80
        $region79: #{tpu_custom_call.1} parent=59 // pred_region
          %412 = dma.done [#allocation9], 8192
        $region80: #{tpu_custom_call.1} parent=59 // pred_fallthru
          _
        %s413 = sand.u32 %s37, 1
        %s414 = scalar_lea.sflag [#allocation3], %s413
        %s415 = sand.u32 %s37, 1
        %s416 = smul.addr %s415, 64
        %s417 = scalar_lea.vmem [#allocation2], %s416
        %p418 = pneg %p50
        %p419 = pneg %p47
        %p420 = scmp.lt.s32.totalorder %s29, 1
        %s421 = scalar_select %p420, %s29, 1
        %s422 = smul.addr %s421, 8
        %s423 = scalar_lea.vmem %s1, %s422
        %p424 = pneg %p76
        %p425 = pneg %p73
        %p426 = pneg %p97
        %p427 = pneg %p94
        %p428 = pneg %p118
        %p429 = pneg %p115
        %p430 = pneg %p139
        %p431 = pneg %p136
        %p432 = pneg %p160
        %p433 = pneg %p157
        %p434 = pneg %p181
        %p435 = pneg %p178
        %p436 = pneg %p202
        %p437 = pneg %p199
        %p438 = pneg %p223
        %p439 = pneg %p220
        %p440 = pneg %p244
        %p441 = pneg %p241
        %p442 = pneg %p270
        %p443 = pneg %p267
        %s444 = sand.u32 %s257, 1
        %s445 = scalar_lea.sflag [#allocation4], %s444
        %s446 = sand.u32 %s257, 1
        %s447 = smul.addr %s446, 64
        %s448 = scalar_lea.vmem [#allocation11], %s447
        %p449 = scmp.lt.s32.totalorder %s29, 1
        %s450 = scalar_select %p449, %s29, 1
        %s451 = smul.addr %s450, 8
        %s452 = scalar_lea.vmem %s1, %s451
        %v453 = vld [vmem:[%s452] sm:$0x3f]
        %v454 = vld [vmem:[%s392] sm:$0xff]
        %v455 = vld [vmem:[%s392 + $0x8] sm:$0xff]
        %v456 = vld [vmem:[%s392 + $0x10] sm:$0xff]
        %v457 = vld [vmem:[%s392 + $0x18] sm:$0xff]
        %v458 = vld [vmem:[%s392 + $0x20] sm:$0xff]
        %v459 = vld [vmem:[%s392 + $0x28] sm:$0xff]
        %v460 = vld [vmem:[%s392 + $0x30] sm:$0xff]
        %v461 = vld [vmem:[%s392 + $0x38] sm:$0xff]
        %462 = vadd.xlane.f32.xlu0 %v454
        %v463 = vpop.xlane.xlu0 %462
        %464 = vadd.xlane.f32.xlu0 %v455
        %v465 = vpop.xlane.xlu0 %464
        %466 = vadd.xlane.f32.xlu0 %v456
        %v467 = vpop.xlane.xlu0 %466
        %468 = vadd.xlane.f32.xlu0 %v457
        %v469 = vpop.xlane.xlu0 %468
        %470 = vadd.xlane.f32.xlu0 %v458
        %v471 = vpop.xlane.xlu0 %470
        %472 = vadd.xlane.f32.xlu0 %v459
        %v473 = vpop.xlane.xlu0 %472
        %474 = vadd.xlane.f32.xlu0 %v460
        %v475 = vpop.xlane.xlu0 %474
        %476 = vadd.xlane.f32.xlu0 %v461
        %v477 = vpop.xlane.xlu0 %476
        %v478 = vrcp.pop 128.0
        %v479 = vmul.f32 %v463, %v478
        %v480 = vmul.f32 %v465, %v478
        %v481 = vmul.f32 %v467, %v478
        %v482 = vmul.f32 %v469, %v478
        %v483 = vmul.f32 %v471, %v478
        %v484 = vmul.f32 %v473, %v478
        %v485 = vmul.f32 %v475, %v478
        %v486 = vmul.f32 %v477, %v478
        %v487 = vmul.f32 %v454, %v454
        %v488 = vmul.f32 %v455, %v455
        %v489 = vmul.f32 %v456, %v456
        %v490 = vmul.f32 %v457, %v457
        %v491 = vmul.f32 %v458, %v458
        %v492 = vmul.f32 %v459, %v459
        %v493 = vmul.f32 %v460, %v460
        %v494 = vmul.f32 %v461, %v461
        %495 = vadd.xlane.f32.xlu0 %v487
        %v496 = vpop.xlane.xlu0 %495
        %497 = vadd.xlane.f32.xlu0 %v488
        %v498 = vpop.xlane.xlu0 %497
        %499 = vadd.xlane.f32.xlu0 %v489
        %v500 = vpop.xlane.xlu0 %499
        %501 = vadd.xlane.f32.xlu0 %v490
        %v502 = vpop.xlane.xlu0 %501
        %503 = vadd.xlane.f32.xlu0 %v491
        %v504 = vpop.xlane.xlu0 %503
        %505 = vadd.xlane.f32.xlu0 %v492
        %v506 = vpop.xlane.xlu0 %505
        %507 = vadd.xlane.f32.xlu0 %v493
        %v508 = vpop.xlane.xlu0 %507
        %509 = vadd.xlane.f32.xlu0 %v494
        %v510 = vpop.xlane.xlu0 %509
        %v511 = vmul.f32 %v496, %v478
        %v512 = vmul.f32 %v498, %v478
        %v513 = vmul.f32 %v500, %v478
        %v514 = vmul.f32 %v502, %v478
        %v515 = vmul.f32 %v504, %v478
        %v516 = vmul.f32 %v506, %v478
        %v517 = vmul.f32 %v508, %v478
        %v518 = vmul.f32 %v510, %v478
        %v519 = vmul.f32 %v479, %v479
        %v520 = vmul.f32 %v480, %v480
        %v521 = vmul.f32 %v481, %v481
        %v522 = vmul.f32 %v482, %v482
        %v523 = vmul.f32 %v483, %v483
        %v524 = vmul.f32 %v484, %v484
        %v525 = vmul.f32 %v485, %v485
        %v526 = vmul.f32 %v486, %v486
        %v527 = vsub.f32 %v511, %v519
        %v528 = vsub.f32 %v512, %v520
        %v529 = vsub.f32 %v513, %v521
        %v530 = vsub.f32 %v514, %v522
        %v531 = vsub.f32 %v515, %v523
        %v532 = vsub.f32 %v516, %v524
        %v533 = vsub.f32 %v517, %v525
        %v534 = vsub.f32 %v518, %v526
        %v535 = vmax.f32 %v527, 0.0
        %v536 = vmax.f32 %v528, 0.0
        %v537 = vmax.f32 %v529, 0.0
        %v538 = vmax.f32 %v530, 0.0
        %v539 = vmax.f32 %v531, 0.0
        %v540 = vmax.f32 %v532, 0.0
        %v541 = vmax.f32 %v533, 0.0
        %v542 = vmax.f32 %v534, 0.0
        %v543 = vsub.f32 %v454, %v479
        %v544 = vsub.f32 %v455, %v480
        %v545 = vsub.f32 %v456, %v481
        %v546 = vsub.f32 %v457, %v482
        %v547 = vsub.f32 %v458, %v483
        %v548 = vsub.f32 %v459, %v484
        %v549 = vsub.f32 %v460, %v485
        %v550 = vsub.f32 %v461, %v486
        %v551 = vadd.f32 %v535, 1e-06
        %v552 = vadd.f32 %v536, 1e-06
        %v553 = vadd.f32 %v537, 1e-06
        %v554 = vadd.f32 %v538, 1e-06
        %v555 = vadd.f32 %v539, 1e-06
        %v556 = vadd.f32 %v540, 1e-06
        %v557 = vadd.f32 %v541, 1e-06
        %v558 = vadd.f32 %v542, 1e-06
        %v559 = vrsqrt.pop %v551
        %v560 = vrsqrt.pop %v552
        %v561 = vrsqrt.pop %v553
        %v562 = vrsqrt.pop %v554
        %v563 = vrsqrt.pop %v555
        %v564 = vrsqrt.pop %v556
        %v565 = vrsqrt.pop %v557
        %v566 = vrsqrt.pop %v558
        %v567 = vmul.f32 %v543, %v559
        %v568 = vmul.f32 %v544, %v560
        %v569 = vmul.f32 %v545, %v561
        %v570 = vmul.f32 %v546, %v562
        %v571 = vmul.f32 %v547, %v563
        %v572 = vmul.f32 %v548, %v564
        %v573 = vmul.f32 %v549, %v565
        %v574 = vmul.f32 %v550, %v566
        %v575 = vadd.f32 %v453, 1.0
        %v576 = vlaneseq
        %v577 = vshrl.u32 %v576, 7
        %v578 = vsub.s32 1, %v577
        %v579 = vrot.slane %v575, %v578
        %v580 = vmul.f32 %v567, %v579
        %v581 = vmul.f32 %v568, %v579
        %v582 = vmul.f32 %v569, %v579
        %v583 = vmul.f32 %v570, %v579
        %v584 = vmul.f32 %v571, %v579
        %v585 = vmul.f32 %v572, %v579
        %v586 = vmul.f32 %v573, %v579
        %v587 = vmul.f32 %v574, %v579
        %v588 = vlaneseq
        %v589 = vshrl.u32 %v588, 7
        %v590 = vsub.s32 0, %v589
        %v591 = vrot.slane %v453, %v590
        %v592 = vadd.f32 %v580, %v591
        %v593 = vadd.f32 %v581, %v591
        %v594 = vadd.f32 %v582, %v591
        %v595 = vadd.f32 %v583, %v591
        %v596 = vadd.f32 %v584, %v591
        %v597 = vadd.f32 %v585, %v591
        %v598 = vadd.f32 %v586, %v591
        %v599 = vadd.f32 %v587, %v591
        %v600 = vld [vmem:[#allocation5] sm:$0xff]
        %v601 = vld [vmem:[#allocation5 + $0x8] sm:$0xff]
        %v602 = vld [vmem:[#allocation5 + $0x10] sm:$0xff]
        %v603 = vld [vmem:[#allocation5 + $0x18] sm:$0xff]
        %v604 = vld [vmem:[#allocation5 + $0x20] sm:$0xff]
        %v605 = vld [vmem:[#allocation5 + $0x28] sm:$0xff]
        %v606 = vld [vmem:[#allocation5 + $0x30] sm:$0xff]
        %v607 = vld [vmem:[#allocation5 + $0x38] sm:$0xff]
        %v608 = vld [vmem:[#allocation5 + $0x40] sm:$0xff]
        %v609 = vld [vmem:[#allocation5 + $0x48] sm:$0xff]
        %v610 = vld [vmem:[#allocation5 + $0x50] sm:$0xff]
        %v611 = vld [vmem:[#allocation5 + $0x58] sm:$0xff]
        %v612 = vld [vmem:[#allocation5 + $0x60] sm:$0xff]
        %v613 = vld [vmem:[#allocation5 + $0x68] sm:$0xff]
        %v614 = vld [vmem:[#allocation5 + $0x70] sm:$0xff]
        %v615 = vld [vmem:[#allocation5 + $0x78] sm:$0xff]
        %v616 = vld [vmem:[#allocation5 + $0x80] sm:$0xff]
        %v617 = vld [vmem:[#allocation5 + $0x88] sm:$0xff]
        %v618 = vld [vmem:[#allocation5 + $0x90] sm:$0xff]
        %v619 = vld [vmem:[#allocation5 + $0x98] sm:$0xff]
        %v620 = vld [vmem:[#allocation5 + $0xa0] sm:$0xff]
        %v621 = vld [vmem:[#allocation5 + $0xa8] sm:$0xff]
        %v622 = vld [vmem:[#allocation5 + $0xb0] sm:$0xff]
        %v623 = vld [vmem:[#allocation5 + $0xb8] sm:$0xff]
        %v624 = vld [vmem:[#allocation5 + $0xc0] sm:$0xff]
        %v625 = vld [vmem:[#allocation5 + $0xc8] sm:$0xff]
        %v626 = vld [vmem:[#allocation5 + $0xd0] sm:$0xff]
        %v627 = vld [vmem:[#allocation5 + $0xd8] sm:$0xff]
        %v628 = vld [vmem:[#allocation5 + $0xe0] sm:$0xff]
        %v629 = vld [vmem:[#allocation5 + $0xe8] sm:$0xff]
        %v630 = vld [vmem:[#allocation5 + $0xf0] sm:$0xff]
        %v631 = vld [vmem:[#allocation5 + $0xf8] sm:$0xff]
        %v632 = vld [vmem:[#allocation5 + $0x100] sm:$0xff]
        %v633 = vld [vmem:[#allocation5 + $0x108] sm:$0xff]
        %v634 = vld [vmem:[#allocation5 + $0x110] sm:$0xff]
        %v635 = vld [vmem:[#allocation5 + $0x118] sm:$0xff]
        %v636 = vld [vmem:[#allocation5 + $0x120] sm:$0xff]
        %v637 = vld [vmem:[#allocation5 + $0x128] sm:$0xff]
        %v638 = vld [vmem:[#allocation5 + $0x130] sm:$0xff]
        %v639 = vld [vmem:[#allocation5 + $0x138] sm:$0xff]
        %v640 = vld [vmem:[#allocation5 + $0x140] sm:$0xff]
        %v641 = vld [vmem:[#allocation5 + $0x148] sm:$0xff]
        %v642 = vld [vmem:[#allocation5 + $0x150] sm:$0xff]
        %v643 = vld [vmem:[#allocation5 + $0x158] sm:$0xff]
        %v644 = vld [vmem:[#allocation5 + $0x160] sm:$0xff]
        %v645 = vld [vmem:[#allocation5 + $0x168] sm:$0xff]
        %v646 = vld [vmem:[#allocation5 + $0x170] sm:$0xff]
        %v647 = vld [vmem:[#allocation5 + $0x178] sm:$0xff]
        %v648 = vld [vmem:[%s3] sm:$0x7]
        %v650 = vlaneseq
        %v651 = vshrl.u32 %v650, 7
        %v652 = vsub.s32 0, %v651
        %v653 = vrot.slane %v648, %v652
        %v654 = vlaneseq
        %v655 = vshrl.u32 %v654, 7
        %v656 = vsub.s32 1, %v655
        %v657 = vrot.slane %v648, %v656
        %v658 = vlaneseq
        %v659 = vshrl.u32 %v658, 7
        %v660 = vsub.s32 2, %v659
        %v661 = vrot.slane %v648, %v660
        %665 = vmatprep.subr.mxu0 %v601
        %666 = vmatpush1.msra.mxu0 %v600
        %667 = vmatprep.subr.mxu0 %v604
        %668 = vmatpush1.msra.mxu0 %v603
        %669 = vmatprep.subr.mxu0 %v607
        %670 = vmatpush1.msra.mxu0 %v606
        %671 = vmatprep.subr.mxu0 %v610
        %672 = vmatpush1.msra.mxu0 %v609
        %673 = vmatprep.subr.mxu0 %v613
        %674 = vmatpush1.msra.mxu0 %v612
        %675 = vmatprep.subr.mxu0 %v616
        %676 = vmatpush1.msra.mxu0 %v615
        %677 = vmatprep.subr.mxu0 %v619
        %678 = vmatpush1.msra.mxu0 %v618
        %679 = vmatprep.subr.mxu0 %v622
        %680 = vmatpush1.msra.mxu0 %v621
        %681 = vmatprep.subr.mxu0 %v625
        %682 = vmatpush1.msra.mxu0 %v624
        %683 = vmatprep.subr.mxu0 %v628
        %684 = vmatpush1.msra.mxu0 %v627
        %685 = vmatprep.subr.mxu0 %v631
        %686 = vmatpush1.msra.mxu0 %v630
        %687 = vmatprep.subr.mxu0 %v634
        %688 = vmatpush1.msra.mxu0 %v633
        %689 = vmatprep.subr.mxu0 %v637
        %690 = vmatpush1.msra.mxu0 %v636
        %691 = vmatprep.subr.mxu0 %v640
        %692 = vmatpush1.msra.mxu0 %v639
        %693 = vmatprep.subr.mxu0 %v643
        %694 = vmatpush1.msra.mxu0 %v642
        %695 = vmatprep.subr.mxu0 %v646
        %696 = vmatpush1.msra.mxu0 %v645
        %697 = vmatprep.subr.mxu0 0.0
        %698 = vmatpush1.msra.mxu0 0.0
        %699 = vmatprep.subr.mxu0 0.0
        %700 = vmatpush1.msra.mxu0 0.0
        %701 = vmatprep.subr.mxu0 0.0
        %702 = vmatpush1.msra.mxu0 0.0
        %703 = vmatprep.subr.mxu0 0.0
        %704 = vmatpush1.msra.mxu0 0.0
        %705 = vmatprep.subr.mxu0 0.0
        %706 = vmatpush1.msra.mxu0 0.0
        %707 = vmatprep.subr.mxu0 0.0
        %708 = vmatpush1.msra.mxu0 0.0
        %709 = vmatprep.subr.mxu0 0.0
        %710 = vmatpush1.msra.mxu0 0.0
        %711 = vmatprep.subr.mxu0 0.0
        %712 = vmatpush1.msra.mxu0 0.0
        %713 = vmatprep.subr.mxu0 0.0
        %714 = vmatpush1.msra.mxu0 0.0
        %715 = vmatprep.subr.mxu0 0.0
        %716 = vmatpush1.msra.mxu0 0.0
        %717 = vmatprep.subr.mxu0 0.0
        %718 = vmatpush1.msra.mxu0 0.0
        %719 = vmatprep.subr.mxu0 0.0
        %720 = vmatpush1.msra.mxu0 0.0
        %721 = vmatprep.subr.mxu0 0.0
        %722 = vmatpush1.msra.mxu0 0.0
        %723 = vmatprep.subr.mxu0 0.0
        %724 = vmatpush1.msra.mxu0 0.0
        %725 = vmatprep.subr.mxu0 0.0
        %726 = vmatpush1.msra.mxu0 0.0
        %727 = vmatprep.subr.mxu0 0.0
        %728 = vmatpush1.msra.mxu0 0.0
        %729 = vmatprep.mubr.f32.mxu0 0.0
        %730 = vmatmul.mubr.f32.gmra.mrb[0].mxu0 %v592
        %v731 = vpop.f32.mrb[0].mxu0
        %v732 = vadd.f32 %v653, %v731
        %v733 = vpop.f32.mrb[0].mxu0
        %v734 = vadd.f32 %v657, %v733
        %735 = vmatprep.mubr.f32.mxu0 0.0
        %736 = vmatmul.mubr.f32.gmra.mrb[0].mxu0 %v593
        %v737 = vpop.f32.mrb[0].mxu0
        %v738 = vadd.f32 %v653, %v737
        %v739 = vpop.f32.mrb[0].mxu0
        %v740 = vadd.f32 %v657, %v739
        %741 = vmatprep.mubr.f32.mxu0 0.0
        %742 = vmatmul.mubr.f32.gmra.mrb[0].mxu0 %v594
        %v743 = vpop.f32.mrb[0].mxu0
        %v744 = vadd.f32 %v653, %v743
        %v745 = vpop.f32.mrb[0].mxu0
        %v746 = vadd.f32 %v657, %v745
        %747 = vmatprep.mubr.f32.mxu0 0.0
        %748 = vmatmul.mubr.f32.gmra.mrb[0].mxu0 %v595
        %v749 = vpop.f32.mrb[0].mxu0
        %v750 = vadd.f32 %v653, %v749
        %v751 = vpop.f32.mrb[0].mxu0
        %v752 = vadd.f32 %v657, %v751
        %753 = vmatprep.mubr.f32.mxu0 0.0
        %754 = vmatmul.mubr.f32.gmra.mrb[0].mxu0 %v596
        %v755 = vpop.f32.mrb[0].mxu0
        %v756 = vadd.f32 %v653, %v755
        %v757 = vpop.f32.mrb[0].mxu0
        %v758 = vadd.f32 %v657, %v757
        %759 = vmatprep.mubr.f32.mxu0 0.0
        %760 = vmatmul.mubr.f32.gmra.mrb[0].mxu0 %v597
        %v761 = vpop.f32.mrb[0].mxu0
        %v762 = vadd.f32 %v653, %v761
        %v763 = vpop.f32.mrb[0].mxu0
        %v764 = vadd.f32 %v657, %v763
        %765 = vmatprep.mubr.f32.mxu0 0.0
        %766 = vmatmul.mubr.f32.gmra.mrb[0].mxu0 %v598
        %v767 = vpop.f32.mrb[0].mxu0
        %v768 = vadd.f32 %v653, %v767
        %v769 = vpop.f32.mrb[0].mxu0
        %v770 = vadd.f32 %v657, %v769
        %771 = vmatprep.mubr.f32.mxu0 0.0
        %772 = vmatmul.mubr.f32.gmra.mrb[0].mxu0 %v599
        %v773 = vpop.f32.mrb[0].mxu0
        %v774 = vadd.f32 %v653, %v773
        %v775 = vpop.f32.mrb[0].mxu0
        %v776 = vadd.f32 %v657, %v775
        %777 = vdwg.mxu0
        %778 = vmatprep.subr.mxu0 0.0
        %779 = vmatpush1.msra.mxu0 %v602
        %780 = vmatprep.subr.mxu0 0.0
        %781 = vmatpush1.msra.mxu0 %v605
        %782 = vmatprep.subr.mxu0 0.0
        %783 = vmatpush1.msra.mxu0 %v608
        %784 = vmatprep.subr.mxu0 0.0
        %785 = vmatpush1.msra.mxu0 %v611
        %786 = vmatprep.subr.mxu0 0.0
        %787 = vmatpush1.msra.mxu0 %v614
        %788 = vmatprep.subr.mxu0 0.0
        %789 = vmatpush1.msra.mxu0 %v617
        %790 = vmatprep.subr.mxu0 0.0
        %791 = vmatpush1.msra.mxu0 %v620
        %792 = vmatprep.subr.mxu0 0.0
        %793 = vmatpush1.msra.mxu0 %v623
        %794 = vmatprep.subr.mxu0 0.0
        %795 = vmatpush1.msra.mxu0 %v626
        %796 = vmatprep.subr.mxu0 0.0
        %797 = vmatpush1.msra.mxu0 %v629
        %798 = vmatprep.subr.mxu0 0.0
        %799 = vmatpush1.msra.mxu0 %v632
        %800 = vmatprep.subr.mxu0 0.0
        %801 = vmatpush1.msra.mxu0 %v635
        %802 = vmatprep.subr.mxu0 0.0
        %803 = vmatpush1.msra.mxu0 %v638
        %804 = vmatprep.subr.mxu0 0.0
        %805 = vmatpush1.msra.mxu0 %v641
        %806 = vmatprep.subr.mxu0 0.0
        %807 = vmatpush1.msra.mxu0 %v644
        %808 = vmatprep.subr.mxu0 0.0
        %809 = vmatpush1.msra.mxu0 %v647
        %810 = vmatprep.subr.mxu0 0.0
        %811 = vmatpush1.msra.mxu0 0.0
        %812 = vmatprep.subr.mxu0 0.0
        %813 = vmatpush1.msra.mxu0 0.0
        %814 = vmatprep.subr.mxu0 0.0
        %815 = vmatpush1.msra.mxu0 0.0
        %816 = vmatprep.subr.mxu0 0.0
        %817 = vmatpush1.msra.mxu0 0.0
        %818 = vmatprep.subr.mxu0 0.0
        %819 = vmatpush1.msra.mxu0 0.0
        %820 = vmatprep.subr.mxu0 0.0
        %821 = vmatpush1.msra.mxu0 0.0
        %822 = vmatprep.subr.mxu0 0.0
        %823 = vmatpush1.msra.mxu0 0.0
        %824 = vmatprep.subr.mxu0 0.0
        %825 = vmatpush1.msra.mxu0 0.0
        %826 = vmatprep.subr.mxu0 0.0
        %827 = vmatpush1.msra.mxu0 0.0
        %828 = vmatprep.subr.mxu0 0.0
        %829 = vmatpush1.msra.mxu0 0.0
        %830 = vmatprep.subr.mxu0 0.0
        %831 = vmatpush1.msra.mxu0 0.0
        %832 = vmatprep.subr.mxu0 0.0
        %833 = vmatpush1.msra.mxu0 0.0
        %834 = vmatprep.subr.mxu0 0.0
        %835 = vmatpush1.msra.mxu0 0.0
        %836 = vmatprep.subr.mxu0 0.0
        %837 = vmatpush1.msra.mxu0 0.0
        %838 = vmatprep.subr.mxu0 0.0
        %839 = vmatpush1.msra.mxu0 0.0
        %840 = vmatprep.subr.mxu0 0.0
        %841 = vmatpush1.msra.mxu0 0.0
        %842 = vmatprep.mubr.f32.mxu0 0.0
        %843 = vmatmul.mubr.f32.gmra.mrb[0].mxu0 %v592
        %v844 = vpop.f32.mrb[0].mxu0
        %v845 = vadd.f32 %v661, %v844
        %v846 = vpop.f32.mrb[0].mxu0
        %847 = vmatprep.mubr.f32.mxu0 0.0
        %848 = vmatmul.mubr.f32.gmra.mrb[0].mxu0 %v593
        %v849 = vpop.f32.mrb[0].mxu0
        %v850 = vadd.f32 %v661, %v849
        %v851 = vpop.f32.mrb[0].mxu0
        %852 = vmatprep.mubr.f32.mxu0 0.0
        %853 = vmatmul.mubr.f32.gmra.mrb[0].mxu0 %v594
        %v854 = vpop.f32.mrb[0].mxu0
        %v855 = vadd.f32 %v661, %v854
        %v856 = vpop.f32.mrb[0].mxu0
        %857 = vmatprep.mubr.f32.mxu0 0.0
        %858 = vmatmul.mubr.f32.gmra.mrb[0].mxu0 %v595
        %v859 = vpop.f32.mrb[0].mxu0
        %v860 = vadd.f32 %v661, %v859
        %v861 = vpop.f32.mrb[0].mxu0
        %862 = vmatprep.mubr.f32.mxu0 0.0
        %863 = vmatmul.mubr.f32.gmra.mrb[0].mxu0 %v596
        %v864 = vpop.f32.mrb[0].mxu0
        %v865 = vadd.f32 %v661, %v864
        %v866 = vpop.f32.mrb[0].mxu0
        %867 = vmatprep.mubr.f32.mxu0 0.0
        %868 = vmatmul.mubr.f32.gmra.mrb[0].mxu0 %v597
        %v869 = vpop.f32.mrb[0].mxu0
        %v870 = vadd.f32 %v661, %v869
        %v871 = vpop.f32.mrb[0].mxu0
        %872 = vmatprep.mubr.f32.mxu0 0.0
        %873 = vmatmul.mubr.f32.gmra.mrb[0].mxu0 %v598
        %v874 = vpop.f32.mrb[0].mxu0
        %v875 = vadd.f32 %v661, %v874
        %v876 = vpop.f32.mrb[0].mxu0
        %877 = vmatprep.mubr.f32.mxu0 0.0
        %878 = vmatmul.mubr.f32.gmra.mrb[0].mxu0 %v599
        %v879 = vpop.f32.mrb[0].mxu0
        %v880 = vadd.f32 %v661, %v879
        %v881 = vpop.f32.mrb[0].mxu0
        %882 = vdwg.mxu0
        %891 = vrot.lane.b32.xlu0 %v732, 96
        %v892 = vpop.permute.xlu0 %891
        %893 = vrot.lane.b32.xlu0 %v738, 96
        %v894 = vpop.permute.xlu0 %893
        %895 = vrot.lane.b32.xlu0 %v744, 96
        %v896 = vpop.permute.xlu0 %895
        %897 = vrot.lane.b32.xlu0 %v750, 96
        %v898 = vpop.permute.xlu0 %897
        %899 = vrot.lane.b32.xlu0 %v756, 96
        %v900 = vpop.permute.xlu0 %899
        %901 = vrot.lane.b32.xlu0 %v762, 96
        %v902 = vpop.permute.xlu0 %901
        %903 = vrot.lane.b32.xlu0 %v768, 96
        %v904 = vpop.permute.xlu0 %903
        %905 = vrot.lane.b32.xlu0 %v774, 96
        %v906 = vpop.permute.xlu0 %905
        %915 = vrot.lane.b32.xlu0 %v732, 64
        %v916 = vpop.permute.xlu0 %915
        %917 = vrot.lane.b32.xlu0 %v738, 64
        %v918 = vpop.permute.xlu0 %917
        %919 = vrot.lane.b32.xlu0 %v744, 64
        %v920 = vpop.permute.xlu0 %919
        %921 = vrot.lane.b32.xlu0 %v750, 64
        %v922 = vpop.permute.xlu0 %921
        %923 = vrot.lane.b32.xlu0 %v756, 64
        %v924 = vpop.permute.xlu0 %923
        %925 = vrot.lane.b32.xlu0 %v762, 64
        %v926 = vpop.permute.xlu0 %925
        %927 = vrot.lane.b32.xlu0 %v768, 64
        %v928 = vpop.permute.xlu0 %927
        %929 = vrot.lane.b32.xlu0 %v774, 64
        %v930 = vpop.permute.xlu0 %929
        %939 = vrot.lane.b32.xlu0 %v732, 32
        %v940 = vpop.permute.xlu0 %939
        %941 = vrot.lane.b32.xlu0 %v738, 32
        %v942 = vpop.permute.xlu0 %941
        %943 = vrot.lane.b32.xlu0 %v744, 32
        %v944 = vpop.permute.xlu0 %943
        %945 = vrot.lane.b32.xlu0 %v750, 32
        %v946 = vpop.permute.xlu0 %945
        %947 = vrot.lane.b32.xlu0 %v756, 32
        %v948 = vpop.permute.xlu0 %947
        %949 = vrot.lane.b32.xlu0 %v762, 32
        %v950 = vpop.permute.xlu0 %949
        %951 = vrot.lane.b32.xlu0 %v768, 32
        %v952 = vpop.permute.xlu0 %951
        %953 = vrot.lane.b32.xlu0 %v774, 32
        %v954 = vpop.permute.xlu0 %953
        %971 = vrot.lane.b32.xlu0 %v734, 96
        %v972 = vpop.permute.xlu0 %971
        %973 = vrot.lane.b32.xlu0 %v740, 96
        %v974 = vpop.permute.xlu0 %973
        %975 = vrot.lane.b32.xlu0 %v746, 96
        %v976 = vpop.permute.xlu0 %975
        %977 = vrot.lane.b32.xlu0 %v752, 96
        %v978 = vpop.permute.xlu0 %977
        %979 = vrot.lane.b32.xlu0 %v758, 96
        %v980 = vpop.permute.xlu0 %979
        %981 = vrot.lane.b32.xlu0 %v764, 96
        %v982 = vpop.permute.xlu0 %981
        %983 = vrot.lane.b32.xlu0 %v770, 96
        %v984 = vpop.permute.xlu0 %983
        %985 = vrot.lane.b32.xlu0 %v776, 96
        %v986 = vpop.permute.xlu0 %985
        %995 = vrot.lane.b32.xlu0 %v734, 64
        %v996 = vpop.permute.xlu0 %995
        %997 = vrot.lane.b32.xlu0 %v740, 64
        %v998 = vpop.permute.xlu0 %997
        %999 = vrot.lane.b32.xlu0 %v746, 64
        %v1000 = vpop.permute.xlu0 %999
        %1001 = vrot.lane.b32.xlu0 %v752, 64
        %v1002 = vpop.permute.xlu0 %1001
        %1003 = vrot.lane.b32.xlu0 %v758, 64
        %v1004 = vpop.permute.xlu0 %1003
        %1005 = vrot.lane.b32.xlu0 %v764, 64
        %v1006 = vpop.permute.xlu0 %1005
        %1007 = vrot.lane.b32.xlu0 %v770, 64
        %v1008 = vpop.permute.xlu0 %1007
        %1009 = vrot.lane.b32.xlu0 %v776, 64
        %v1010 = vpop.permute.xlu0 %1009
        %1019 = vrot.lane.b32.xlu0 %v734, 32
        %v1020 = vpop.permute.xlu0 %1019
        %1021 = vrot.lane.b32.xlu0 %v740, 32
        %v1022 = vpop.permute.xlu0 %1021
        %1023 = vrot.lane.b32.xlu0 %v746, 32
        %v1024 = vpop.permute.xlu0 %1023
        %1025 = vrot.lane.b32.xlu0 %v752, 32
        %v1026 = vpop.permute.xlu0 %1025
        %1027 = vrot.lane.b32.xlu0 %v758, 32
        %v1028 = vpop.permute.xlu0 %1027
        %1029 = vrot.lane.b32.xlu0 %v764, 32
        %v1030 = vpop.permute.xlu0 %1029
        %1031 = vrot.lane.b32.xlu0 %v770, 32
        %v1032 = vpop.permute.xlu0 %1031
        %1033 = vrot.lane.b32.xlu0 %v776, 32
        %v1034 = vpop.permute.xlu0 %1033
        %1051 = vrot.lane.b32.xlu0 %v845, 96
        %v1052 = vpop.permute.xlu0 %1051
        %1053 = vrot.lane.b32.xlu0 %v850, 96
        %v1054 = vpop.permute.xlu0 %1053
        %1055 = vrot.lane.b32.xlu0 %v855, 96
        %v1056 = vpop.permute.xlu0 %1055
        %1057 = vrot.lane.b32.xlu0 %v860, 96
        %v1058 = vpop.permute.xlu0 %1057
        %1059 = vrot.lane.b32.xlu0 %v865, 96
        %v1060 = vpop.permute.xlu0 %1059
        %1061 = vrot.lane.b32.xlu0 %v870, 96
        %v1062 = vpop.permute.xlu0 %1061
        %1063 = vrot.lane.b32.xlu0 %v875, 96
        %v1064 = vpop.permute.xlu0 %1063
        %1065 = vrot.lane.b32.xlu0 %v880, 96
        %v1066 = vpop.permute.xlu0 %1065
        %1075 = vrot.lane.b32.xlu0 %v845, 64
        %v1076 = vpop.permute.xlu0 %1075
        %1077 = vrot.lane.b32.xlu0 %v850, 64
        %v1078 = vpop.permute.xlu0 %1077
        %1079 = vrot.lane.b32.xlu0 %v855, 64
        %v1080 = vpop.permute.xlu0 %1079
        %1081 = vrot.lane.b32.xlu0 %v860, 64
        %v1082 = vpop.permute.xlu0 %1081
        %1083 = vrot.lane.b32.xlu0 %v865, 64
        %v1084 = vpop.permute.xlu0 %1083
        %1085 = vrot.lane.b32.xlu0 %v870, 64
        %v1086 = vpop.permute.xlu0 %1085
        %1087 = vrot.lane.b32.xlu0 %v875, 64
        %v1088 = vpop.permute.xlu0 %1087
        %1089 = vrot.lane.b32.xlu0 %v880, 64
        %v1090 = vpop.permute.xlu0 %1089
        %1099 = vrot.lane.b32.xlu0 %v845, 32
        %v1100 = vpop.permute.xlu0 %1099
        %1101 = vrot.lane.b32.xlu0 %v850, 32
        %v1102 = vpop.permute.xlu0 %1101
        %1103 = vrot.lane.b32.xlu0 %v855, 32
        %v1104 = vpop.permute.xlu0 %1103
        %1105 = vrot.lane.b32.xlu0 %v860, 32
        %v1106 = vpop.permute.xlu0 %1105
        %1107 = vrot.lane.b32.xlu0 %v865, 32
        %v1108 = vpop.permute.xlu0 %1107
        %1109 = vrot.lane.b32.xlu0 %v870, 32
        %v1110 = vpop.permute.xlu0 %1109
        %1111 = vrot.lane.b32.xlu0 %v875, 32
        %v1112 = vpop.permute.xlu0 %1111
        %1113 = vrot.lane.b32.xlu0 %v880, 32
        %v1114 = vpop.permute.xlu0 %1113
        %v1123 = vcombine.low %v732, %v916
        %v1124 = vcombine.high %v732, %v916
        %v1126 = vunpack.c.l.s4 1983009808
        %v1127 = vunpack.c.0.s8 %v1126
        %v1128 = vlaneseq
        %v1129 = vshrl.u32 %v1128, 7
        %v1130 = vsub.s32 %v1127, %v1129
        %v1131 = vrot.slane %v1123, %v1130
        %v1133 = vunpack.c.l.s4 1983009808
        %v1134 = vunpack.c.0.s8 %v1133
        %v1135 = vlaneseq
        %v1136 = vshrl.u32 %v1135, 7
        %v1137 = vsub.s32 %v1134, %v1136
        %v1138 = vrot.slane %v1124, %v1137
        %v1139 = vcombine.low %v892, %v940
        %v1140 = vcombine.high %v892, %v940
        %v1142 = vunpack.c.l.s4 1983009808
        %v1143 = vunpack.c.0.s8 %v1142
        %v1144 = vlaneseq
        %v1145 = vshrl.u32 %v1144, 7
        %v1146 = vsub.s32 %v1143, %v1145
        %v1147 = vrot.slane %v1139, %v1146
        %v1149 = vunpack.c.l.s4 1983009808
        %v1150 = vunpack.c.0.s8 %v1149
        %v1151 = vlaneseq
        %v1152 = vshrl.u32 %v1151, 7
        %v1153 = vsub.s32 %v1150, %v1152
        %v1154 = vrot.slane %v1140, %v1153
        %v1155 = vcombine.low %v734, %v996
        %v1156 = vcombine.high %v734, %v996
        %v1158 = vunpack.c.l.s4 1983009808
        %v1159 = vunpack.c.0.s8 %v1158
        %v1160 = vlaneseq
        %v1161 = vshrl.u32 %v1160, 7
        %v1162 = vsub.s32 %v1159, %v1161
        %v1163 = vrot.slane %v1155, %v1162
        %v1165 = vunpack.c.l.s4 1983009808
        %v1166 = vunpack.c.0.s8 %v1165
        %v1167 = vlaneseq
        %v1168 = vshrl.u32 %v1167, 7
        %v1169 = vsub.s32 %v1166, %v1168
        %v1170 = vrot.slane %v1156, %v1169
        %v1171 = vcombine.low %v972, %v1020
        %v1172 = vcombine.high %v972, %v1020
        %v1174 = vunpack.c.l.s4 1983009808
        %v1175 = vunpack.c.0.s8 %v1174
        %v1176 = vlaneseq
        %v1177 = vshrl.u32 %v1176, 7
        %v1178 = vsub.s32 %v1175, %v1177
        %v1179 = vrot.slane %v1171, %v1178
        %v1181 = vunpack.c.l.s4 1983009808
        %v1182 = vunpack.c.0.s8 %v1181
        %v1183 = vlaneseq
        %v1184 = vshrl.u32 %v1183, 7
        %v1185 = vsub.s32 %v1182, %v1184
        %v1186 = vrot.slane %v1172, %v1185
        %v1187 = vcombine.low %v1131, %v1147
        %v1188 = vcombine.high %v1131, %v1147
        %v1190 = vunpack.c.l.s4 1934713408
        %v1191 = vunpack.c.0.s8 %v1190
        %v1192 = vlaneseq
        %v1193 = vshrl.u32 %v1192, 7
        %v1194 = vsub.s32 %v1191, %v1193
        %v1195 = vrot.slane %v1187, %v1194
        %v1197 = vunpack.c.l.s4 1934713408
        %v1198 = vunpack.c.0.s8 %v1197
        %v1199 = vlaneseq
        %v1200 = vshrl.u32 %v1199, 7
        %v1201 = vsub.s32 %v1198, %v1200
        %v1202 = vrot.slane %v1188, %v1201
        %v1203 = vcombine.low %v1138, %v1154
        %v1204 = vcombine.high %v1138, %v1154
        %v1206 = vunpack.c.l.s4 1934713408
        %v1207 = vunpack.c.0.s8 %v1206
        %v1208 = vlaneseq
        %v1209 = vshrl.u32 %v1208, 7
        %v1210 = vsub.s32 %v1207, %v1209
        %v1211 = vrot.slane %v1203, %v1210
        %v1213 = vunpack.c.l.s4 1934713408
        %v1214 = vunpack.c.0.s8 %v1213
        %v1215 = vlaneseq
        %v1216 = vshrl.u32 %v1215, 7
        %v1217 = vsub.s32 %v1214, %v1216
        %v1218 = vrot.slane %v1204, %v1217
        %v1219 = vcombine.low %v1163, %v1179
        %v1220 = vcombine.high %v1163, %v1179
        %v1222 = vunpack.c.l.s4 1934713408
        %v1223 = vunpack.c.0.s8 %v1222
        %v1224 = vlaneseq
        %v1225 = vshrl.u32 %v1224, 7
        %v1226 = vsub.s32 %v1223, %v1225
        %v1227 = vrot.slane %v1219, %v1226
        %v1229 = vunpack.c.l.s4 1934713408
        %v1230 = vunpack.c.0.s8 %v1229
        %v1231 = vlaneseq
        %v1232 = vshrl.u32 %v1231, 7
        %v1233 = vsub.s32 %v1230, %v1232
        %v1234 = vrot.slane %v1220, %v1233
        %v1235 = vcombine.low %v1170, %v1186
        %v1236 = vcombine.high %v1170, %v1186
        %v1238 = vunpack.c.l.s4 1934713408
        %v1239 = vunpack.c.0.s8 %v1238
        %v1240 = vlaneseq
        %v1241 = vshrl.u32 %v1240, 7
        %v1242 = vsub.s32 %v1239, %v1241
        %v1243 = vrot.slane %v1235, %v1242
        %v1245 = vunpack.c.l.s4 1934713408
        %v1246 = vunpack.c.0.s8 %v1245
        %v1247 = vlaneseq
        %v1248 = vshrl.u32 %v1247, 7
        %v1249 = vsub.s32 %v1246, %v1248
        %v1250 = vrot.slane %v1236, %v1249
        %v1251 = vcombine.low %v1195, %v1227
        %v1252 = vcombine.high %v1195, %v1227
        %v1253 = vcombine.low %v1202, %v1234
        %v1254 = vcombine.high %v1202, %v1234
        %v1255 = vcombine.low %v1211, %v1243
        %v1256 = vcombine.high %v1211, %v1243
        %v1257 = vcombine.low %v1218, %v1250
        %v1258 = vcombine.high %v1218, %v1250
        %v1259 = vcombine.low %v845, %v1076
        %v1260 = vcombine.high %v845, %v1076
        %v1262 = vunpack.c.l.s4 1983009808
        %v1263 = vunpack.c.0.s8 %v1262
        %v1264 = vlaneseq
        %v1265 = vshrl.u32 %v1264, 7
        %v1266 = vsub.s32 %v1263, %v1265
        %v1267 = vrot.slane %v1259, %v1266
        %v1269 = vunpack.c.l.s4 1983009808
        %v1270 = vunpack.c.0.s8 %v1269
        %v1271 = vlaneseq
        %v1272 = vshrl.u32 %v1271, 7
        %v1273 = vsub.s32 %v1270, %v1272
        %v1274 = vrot.slane %v1260, %v1273
        %v1275 = vcombine.low %v1052, %v1100
        %v1276 = vcombine.high %v1052, %v1100
        %v1278 = vunpack.c.l.s4 1983009808
        %v1279 = vunpack.c.0.s8 %v1278
        %v1280 = vlaneseq
        %v1281 = vshrl.u32 %v1280, 7
        %v1282 = vsub.s32 %v1279, %v1281
        %v1283 = vrot.slane %v1275, %v1282
        %v1285 = vunpack.c.l.s4 1983009808
        %v1286 = vunpack.c.0.s8 %v1285
        %v1287 = vlaneseq
        %v1288 = vshrl.u32 %v1287, 7
        %v1289 = vsub.s32 %v1286, %v1288
        %v1290 = vrot.slane %v1276, %v1289
        %v1291 = vcombine.low %v1267, %v1283
        %v1292 = vcombine.high %v1267, %v1283
        %v1294 = vunpack.c.l.s4 1934713408
        %v1295 = vunpack.c.0.s8 %v1294
        %v1296 = vlaneseq
        %v1297 = vshrl.u32 %v1296, 7
        %v1298 = vsub.s32 %v1295, %v1297
        %v1299 = vrot.slane %v1291, %v1298
        %v1301 = vunpack.c.l.s4 1934713408
        %v1302 = vunpack.c.0.s8 %v1301
        %v1303 = vlaneseq
        %v1304 = vshrl.u32 %v1303, 7
        %v1305 = vsub.s32 %v1302, %v1304
        %v1306 = vrot.slane %v1292, %v1305
        %v1307 = vcombine.low %v1274, %v1290
        %v1308 = vcombine.high %v1274, %v1290
        %v1310 = vunpack.c.l.s4 1934713408
        %v1311 = vunpack.c.0.s8 %v1310
        %v1312 = vlaneseq
        %v1313 = vshrl.u32 %v1312, 7
        %v1314 = vsub.s32 %v1311, %v1313
        %v1315 = vrot.slane %v1307, %v1314
        %v1317 = vunpack.c.l.s4 1934713408
        %v1318 = vunpack.c.0.s8 %v1317
        %v1319 = vlaneseq
        %v1320 = vshrl.u32 %v1319, 7
        %v1321 = vsub.s32 %v1318, %v1320
        %v1322 = vrot.slane %v1308, %v1321
        %v1323 = vcombine.high %v1299, 0.0
        %v1324 = vcombine.high %v1306, 0.0
        %v1325 = vcombine.high %v1315, 0.0
        %v1326 = vcombine.high %v1322, 0.0
        %v1327 = vcombine.low %v738, %v918
        %v1328 = vcombine.high %v738, %v918
        %v1330 = vunpack.c.l.s4 1983009808
        %v1331 = vunpack.c.0.s8 %v1330
        %v1332 = vlaneseq
        %v1333 = vshrl.u32 %v1332, 7
        %v1334 = vsub.s32 %v1331, %v1333
        %v1335 = vrot.slane %v1327, %v1334
        %v1337 = vunpack.c.l.s4 1983009808
        %v1338 = vunpack.c.0.s8 %v1337
        %v1339 = vlaneseq
        %v1340 = vshrl.u32 %v1339, 7
        %v1341 = vsub.s32 %v1338, %v1340
        %v1342 = vrot.slane %v1328, %v1341
        %v1343 = vcombine.low %v894, %v942
        %v1344 = vcombine.high %v894, %v942
        %v1346 = vunpack.c.l.s4 1983009808
        %v1347 = vunpack.c.0.s8 %v1346
        %v1348 = vlaneseq
        %v1349 = vshrl.u32 %v1348, 7
        %v1350 = vsub.s32 %v1347, %v1349
        %v1351 = vrot.slane %v1343, %v1350
        %v1353 = vunpack.c.l.s4 1983009808
        %v1354 = vunpack.c.0.s8 %v1353
        %v1355 = vlaneseq
        %v1356 = vshrl.u32 %v1355, 7
        %v1357 = vsub.s32 %v1354, %v1356
        %v1358 = vrot.slane %v1344, %v1357
        %v1359 = vcombine.low %v740, %v998
        %v1360 = vcombine.high %v740, %v998
        %v1362 = vunpack.c.l.s4 1983009808
        %v1363 = vunpack.c.0.s8 %v1362
        %v1364 = vlaneseq
        %v1365 = vshrl.u32 %v1364, 7
        %v1366 = vsub.s32 %v1363, %v1365
        %v1367 = vrot.slane %v1359, %v1366
        %v1369 = vunpack.c.l.s4 1983009808
        %v1370 = vunpack.c.0.s8 %v1369
        %v1371 = vlaneseq
        %v1372 = vshrl.u32 %v1371, 7
        %v1373 = vsub.s32 %v1370, %v1372
        %v1374 = vrot.slane %v1360, %v1373
        %v1375 = vcombine.low %v974, %v1022
        %v1376 = vcombine.high %v974, %v1022
        %v1378 = vunpack.c.l.s4 1983009808
        %v1379 = vunpack.c.0.s8 %v1378
        %v1380 = vlaneseq
        %v1381 = vshrl.u32 %v1380, 7
        %v1382 = vsub.s32 %v1379, %v1381
        %v1383 = vrot.slane %v1375, %v1382
        %v1385 = vunpack.c.l.s4 1983009808
        %v1386 = vunpack.c.0.s8 %v1385
        %v1387 = vlaneseq
        %v1388 = vshrl.u32 %v1387, 7
        %v1389 = vsub.s32 %v1386, %v1388
        %v1390 = vrot.slane %v1376, %v1389
        %v1391 = vcombine.low %v1335, %v1351
        %v1392 = vcombine.high %v1335, %v1351
        %v1394 = vunpack.c.l.s4 1934713408
        %v1395 = vunpack.c.0.s8 %v1394
        %v1396 = vlaneseq
        %v1397 = vshrl.u32 %v1396, 7
        %v1398 = vsub.s32 %v1395, %v1397
        %v1399 = vrot.slane %v1391, %v1398
        %v1401 = vunpack.c.l.s4 1934713408
        %v1402 = vunpack.c.0.s8 %v1401
        %v1403 = vlaneseq
        %v1404 = vshrl.u32 %v1403, 7
        %v1405 = vsub.s32 %v1402, %v1404
        %v1406 = vrot.slane %v1392, %v1405
        %v1407 = vcombine.low %v1342, %v1358
        %v1408 = vcombine.high %v1342, %v1358
        %v1410 = vunpack.c.l.s4 1934713408
        %v1411 = vunpack.c.0.s8 %v1410
        %v1412 = vlaneseq
        %v1413 = vshrl.u32 %v1412, 7
        %v1414 = vsub.s32 %v1411, %v1413
        %v1415 = vrot.slane %v1407, %v1414
        %v1417 = vunpack.c.l.s4 1934713408
        %v1418 = vunpack.c.0.s8 %v1417
        %v1419 = vlaneseq
        %v1420 = vshrl.u32 %v1419, 7
        %v1421 = vsub.s32 %v1418, %v1420
        %v1422 = vrot.slane %v1408, %v1421
        %v1423 = vcombine.low %v1367, %v1383
        %v1424 = vcombine.high %v1367, %v1383
        %v1426 = vunpack.c.l.s4 1934713408
        %v1427 = vunpack.c.0.s8 %v1426
        %v1428 = vlaneseq
        %v1429 = vshrl.u32 %v1428, 7
        %v1430 = vsub.s32 %v1427, %v1429
        %v1431 = vrot.slane %v1423, %v1430
        %v1433 = vunpack.c.l.s4 1934713408
        %v1434 = vunpack.c.0.s8 %v1433
        %v1435 = vlaneseq
        %v1436 = vshrl.u32 %v1435, 7
        %v1437 = vsub.s32 %v1434, %v1436
        %v1438 = vrot.slane %v1424, %v1437
        %v1439 = vcombine.low %v1374, %v1390
        %v1440 = vcombine.high %v1374, %v1390
        %v1442 = vunpack.c.l.s4 1934713408
        %v1443 = vunpack.c.0.s8 %v1442
        %v1444 = vlaneseq
        %v1445 = vshrl.u32 %v1444, 7
        %v1446 = vsub.s32 %v1443, %v1445
        %v1447 = vrot.slane %v1439, %v1446
        %v1449 = vunpack.c.l.s4 1934713408
        %v1450 = vunpack.c.0.s8 %v1449
        %v1451 = vlaneseq
        %v1452 = vshrl.u32 %v1451, 7
        %v1453 = vsub.s32 %v1450, %v1452
        %v1454 = vrot.slane %v1440, %v1453
        %v1455 = vcombine.low %v1399, %v1431
        %v1456 = vcombine.high %v1399, %v1431
        %v1457 = vcombine.low %v1406, %v1438
        %v1458 = vcombine.high %v1406, %v1438
        %v1459 = vcombine.low %v1415, %v1447
        %v1460 = vcombine.high %v1415, %v1447
        %v1461 = vcombine.low %v1422, %v1454
        %v1462 = vcombine.high %v1422, %v1454
        %v1463 = vcombine.low %v850, %v1078
        %v1464 = vcombine.high %v850, %v1078
        %v1466 = vunpack.c.l.s4 1983009808
        %v1467 = vunpack.c.0.s8 %v1466
        %v1468 = vlaneseq
        %v1469 = vshrl.u32 %v1468, 7
        %v1470 = vsub.s32 %v1467, %v1469
        %v1471 = vrot.slane %v1463, %v1470
        %v1473 = vunpack.c.l.s4 1983009808
        %v1474 = vunpack.c.0.s8 %v1473
        %v1475 = vlaneseq
        %v1476 = vshrl.u32 %v1475, 7
        %v1477 = vsub.s32 %v1474, %v1476
        %v1478 = vrot.slane %v1464, %v1477
        %v1479 = vcombine.low %v1054, %v1102
        %v1480 = vcombine.high %v1054, %v1102
        %v1482 = vunpack.c.l.s4 1983009808
        %v1483 = vunpack.c.0.s8 %v1482
        %v1484 = vlaneseq
        %v1485 = vshrl.u32 %v1484, 7
        %v1486 = vsub.s32 %v1483, %v1485
        %v1487 = vrot.slane %v1479, %v1486
        %v1489 = vunpack.c.l.s4 1983009808
        %v1490 = vunpack.c.0.s8 %v1489
        %v1491 = vlaneseq
        %v1492 = vshrl.u32 %v1491, 7
        %v1493 = vsub.s32 %v1490, %v1492
        %v1494 = vrot.slane %v1480, %v1493
        %v1495 = vcombine.low %v1471, %v1487
        %v1496 = vcombine.high %v1471, %v1487
        %v1498 = vunpack.c.l.s4 1934713408
        %v1499 = vunpack.c.0.s8 %v1498
        %v1500 = vlaneseq
        %v1501 = vshrl.u32 %v1500, 7
        %v1502 = vsub.s32 %v1499, %v1501
        %v1503 = vrot.slane %v1495, %v1502
        %v1505 = vunpack.c.l.s4 1934713408
        %v1506 = vunpack.c.0.s8 %v1505
        %v1507 = vlaneseq
        %v1508 = vshrl.u32 %v1507, 7
        %v1509 = vsub.s32 %v1506, %v1508
        %v1510 = vrot.slane %v1496, %v1509
        %v1511 = vcombine.low %v1478, %v1494
        %v1512 = vcombine.high %v1478, %v1494
        %v1514 = vunpack.c.l.s4 1934713408
        %v1515 = vunpack.c.0.s8 %v1514
        %v1516 = vlaneseq
        %v1517 = vshrl.u32 %v1516, 7
        %v1518 = vsub.s32 %v1515, %v1517
        %v1519 = vrot.slane %v1511, %v1518
        %v1521 = vunpack.c.l.s4 1934713408
        %v1522 = vunpack.c.0.s8 %v1521
        %v1523 = vlaneseq
        %v1524 = vshrl.u32 %v1523, 7
        %v1525 = vsub.s32 %v1522, %v1524
        %v1526 = vrot.slane %v1512, %v1525
        %v1527 = vcombine.high %v1503, 0.0
        %v1528 = vcombine.high %v1510, 0.0
        %v1529 = vcombine.high %v1519, 0.0
        %v1530 = vcombine.high %v1526, 0.0
        %v1531 = vcombine.low %v744, %v920
        %v1532 = vcombine.high %v744, %v920
        %v1534 = vunpack.c.l.s4 1983009808
        %v1535 = vunpack.c.0.s8 %v1534
        %v1536 = vlaneseq
        %v1537 = vshrl.u32 %v1536, 7
        %v1538 = vsub.s32 %v1535, %v1537
        %v1539 = vrot.slane %v1531, %v1538
        %v1541 = vunpack.c.l.s4 1983009808
        %v1542 = vunpack.c.0.s8 %v1541
        %v1543 = vlaneseq
        %v1544 = vshrl.u32 %v1543, 7
        %v1545 = vsub.s32 %v1542, %v1544
        %v1546 = vrot.slane %v1532, %v1545
        %v1547 = vcombine.low %v896, %v944
        %v1548 = vcombine.high %v896, %v944
        %v1550 = vunpack.c.l.s4 1983009808
        %v1551 = vunpack.c.0.s8 %v1550
        %v1552 = vlaneseq
        %v1553 = vshrl.u32 %v1552, 7
        %v1554 = vsub.s32 %v1551, %v1553
        %v1555 = vrot.slane %v1547, %v1554
        %v1557 = vunpack.c.l.s4 1983009808
        %v1558 = vunpack.c.0.s8 %v1557
        %v1559 = vlaneseq
        %v1560 = vshrl.u32 %v1559, 7
        %v1561 = vsub.s32 %v1558, %v1560
        %v1562 = vrot.slane %v1548, %v1561
        %v1563 = vcombine.low %v746, %v1000
        %v1564 = vcombine.high %v746, %v1000
        %v1566 = vunpack.c.l.s4 1983009808
        %v1567 = vunpack.c.0.s8 %v1566
        %v1568 = vlaneseq
        %v1569 = vshrl.u32 %v1568, 7
        %v1570 = vsub.s32 %v1567, %v1569
        %v1571 = vrot.slane %v1563, %v1570
        %v1573 = vunpack.c.l.s4 1983009808
        %v1574 = vunpack.c.0.s8 %v1573
        %v1575 = vlaneseq
        %v1576 = vshrl.u32 %v1575, 7
        %v1577 = vsub.s32 %v1574, %v1576
        %v1578 = vrot.slane %v1564, %v1577
        %v1579 = vcombine.low %v976, %v1024
        %v1580 = vcombine.high %v976, %v1024
        %v1582 = vunpack.c.l.s4 1983009808
        %v1583 = vunpack.c.0.s8 %v1582
        %v1584 = vlaneseq
        %v1585 = vshrl.u32 %v1584, 7
        %v1586 = vsub.s32 %v1583, %v1585
        %v1587 = vrot.slane %v1579, %v1586
        %v1589 = vunpack.c.l.s4 1983009808
        %v1590 = vunpack.c.0.s8 %v1589
        %v1591 = vlaneseq
        %v1592 = vshrl.u32 %v1591, 7
        %v1593 = vsub.s32 %v1590, %v1592
        %v1594 = vrot.slane %v1580, %v1593
        %v1595 = vcombine.low %v1539, %v1555
        %v1596 = vcombine.high %v1539, %v1555
        %v1598 = vunpack.c.l.s4 1934713408
        %v1599 = vunpack.c.0.s8 %v1598
        %v1600 = vlaneseq
        %v1601 = vshrl.u32 %v1600, 7
        %v1602 = vsub.s32 %v1599, %v1601
        %v1603 = vrot.slane %v1595, %v1602
        %v1605 = vunpack.c.l.s4 1934713408
        %v1606 = vunpack.c.0.s8 %v1605
        %v1607 = vlaneseq
        %v1608 = vshrl.u32 %v1607, 7
        %v1609 = vsub.s32 %v1606, %v1608
        %v1610 = vrot.slane %v1596, %v1609
        %v1611 = vcombine.low %v1546, %v1562
        %v1612 = vcombine.high %v1546, %v1562
        %v1614 = vunpack.c.l.s4 1934713408
        %v1615 = vunpack.c.0.s8 %v1614
        %v1616 = vlaneseq
        %v1617 = vshrl.u32 %v1616, 7
        %v1618 = vsub.s32 %v1615, %v1617
        %v1619 = vrot.slane %v1611, %v1618
        %v1621 = vunpack.c.l.s4 1934713408
        %v1622 = vunpack.c.0.s8 %v1621
        %v1623 = vlaneseq
        %v1624 = vshrl.u32 %v1623, 7
        %v1625 = vsub.s32 %v1622, %v1624
        %v1626 = vrot.slane %v1612, %v1625
        %v1627 = vcombine.low %v1571, %v1587
        %v1628 = vcombine.high %v1571, %v1587
        %v1630 = vunpack.c.l.s4 1934713408
        %v1631 = vunpack.c.0.s8 %v1630
        %v1632 = vlaneseq
        %v1633 = vshrl.u32 %v1632, 7
        %v1634 = vsub.s32 %v1631, %v1633
        %v1635 = vrot.slane %v1627, %v1634
        %v1637 = vunpack.c.l.s4 1934713408
        %v1638 = vunpack.c.0.s8 %v1637
        %v1639 = vlaneseq
        %v1640 = vshrl.u32 %v1639, 7
        %v1641 = vsub.s32 %v1638, %v1640
        %v1642 = vrot.slane %v1628, %v1641
        %v1643 = vcombine.low %v1578, %v1594
        %v1644 = vcombine.high %v1578, %v1594
        %v1646 = vunpack.c.l.s4 1934713408
        %v1647 = vunpack.c.0.s8 %v1646
        %v1648 = vlaneseq
        %v1649 = vshrl.u32 %v1648, 7
        %v1650 = vsub.s32 %v1647, %v1649
        %v1651 = vrot.slane %v1643, %v1650
        %v1653 = vunpack.c.l.s4 1934713408
        %v1654 = vunpack.c.0.s8 %v1653
        %v1655 = vlaneseq
        %v1656 = vshrl.u32 %v1655, 7
        %v1657 = vsub.s32 %v1654, %v1656
        %v1658 = vrot.slane %v1644, %v1657
        %v1659 = vcombine.low %v1603, %v1635
        %v1660 = vcombine.high %v1603, %v1635
        %v1661 = vcombine.low %v1610, %v1642
        %v1662 = vcombine.high %v1610, %v1642
        %v1663 = vcombine.low %v1619, %v1651
        %v1664 = vcombine.high %v1619, %v1651
        %v1665 = vcombine.low %v1626, %v1658
        %v1666 = vcombine.high %v1626, %v1658
        %v1667 = vcombine.low %v855, %v1080
        %v1668 = vcombine.high %v855, %v1080
        %v1670 = vunpack.c.l.s4 1983009808
        %v1671 = vunpack.c.0.s8 %v1670
        %v1672 = vlaneseq
        %v1673 = vshrl.u32 %v1672, 7
        %v1674 = vsub.s32 %v1671, %v1673
        %v1675 = vrot.slane %v1667, %v1674
        %v1677 = vunpack.c.l.s4 1983009808
        %v1678 = vunpack.c.0.s8 %v1677
        %v1679 = vlaneseq
        %v1680 = vshrl.u32 %v1679, 7
        %v1681 = vsub.s32 %v1678, %v1680
        %v1682 = vrot.slane %v1668, %v1681
        %v1683 = vcombine.low %v1056, %v1104
        %v1684 = vcombine.high %v1056, %v1104
        %v1686 = vunpack.c.l.s4 1983009808
        %v1687 = vunpack.c.0.s8 %v1686
        %v1688 = vlaneseq
        %v1689 = vshrl.u32 %v1688, 7
        %v1690 = vsub.s32 %v1687, %v1689
        %v1691 = vrot.slane %v1683, %v1690
        %v1693 = vunpack.c.l.s4 1983009808
        %v1694 = vunpack.c.0.s8 %v1693
        %v1695 = vlaneseq
        %v1696 = vshrl.u32 %v1695, 7
        %v1697 = vsub.s32 %v1694, %v1696
        %v1698 = vrot.slane %v1684, %v1697
        %v1699 = vcombine.low %v1675, %v1691
        %v1700 = vcombine.high %v1675, %v1691
        %v1702 = vunpack.c.l.s4 1934713408
        %v1703 = vunpack.c.0.s8 %v1702
        %v1704 = vlaneseq
        %v1705 = vshrl.u32 %v1704, 7
        %v1706 = vsub.s32 %v1703, %v1705
        %v1707 = vrot.slane %v1699, %v1706
        %v1709 = vunpack.c.l.s4 1934713408
        %v1710 = vunpack.c.0.s8 %v1709
        %v1711 = vlaneseq
        %v1712 = vshrl.u32 %v1711, 7
        %v1713 = vsub.s32 %v1710, %v1712
        %v1714 = vrot.slane %v1700, %v1713
        %v1715 = vcombine.low %v1682, %v1698
        %v1716 = vcombine.high %v1682, %v1698
        %v1718 = vunpack.c.l.s4 1934713408
        %v1719 = vunpack.c.0.s8 %v1718
        %v1720 = vlaneseq
        %v1721 = vshrl.u32 %v1720, 7
        %v1722 = vsub.s32 %v1719, %v1721
        %v1723 = vrot.slane %v1715, %v1722
        %v1725 = vunpack.c.l.s4 1934713408
        %v1726 = vunpack.c.0.s8 %v1725
        %v1727 = vlaneseq
        %v1728 = vshrl.u32 %v1727, 7
        %v1729 = vsub.s32 %v1726, %v1728
        %v1730 = vrot.slane %v1716, %v1729
        %v1731 = vcombine.high %v1707, 0.0
        %v1732 = vcombine.high %v1714, 0.0
        %v1733 = vcombine.high %v1723, 0.0
        %v1734 = vcombine.high %v1730, 0.0
        %v1735 = vcombine.low %v750, %v922
        %v1736 = vcombine.high %v750, %v922
        %v1738 = vunpack.c.l.s4 1983009808
        %v1739 = vunpack.c.0.s8 %v1738
        %v1740 = vlaneseq
        %v1741 = vshrl.u32 %v1740, 7
        %v1742 = vsub.s32 %v1739, %v1741
        %v1743 = vrot.slane %v1735, %v1742
        %v1745 = vunpack.c.l.s4 1983009808
        %v1746 = vunpack.c.0.s8 %v1745
        %v1747 = vlaneseq
        %v1748 = vshrl.u32 %v1747, 7
        %v1749 = vsub.s32 %v1746, %v1748
        %v1750 = vrot.slane %v1736, %v1749
        %v1751 = vcombine.low %v898, %v946
        %v1752 = vcombine.high %v898, %v946
        %v1754 = vunpack.c.l.s4 1983009808
        %v1755 = vunpack.c.0.s8 %v1754
        %v1756 = vlaneseq
        %v1757 = vshrl.u32 %v1756, 7
        %v1758 = vsub.s32 %v1755, %v1757
        %v1759 = vrot.slane %v1751, %v1758
        %v1761 = vunpack.c.l.s4 1983009808
        %v1762 = vunpack.c.0.s8 %v1761
        %v1763 = vlaneseq
        %v1764 = vshrl.u32 %v1763, 7
        %v1765 = vsub.s32 %v1762, %v1764
        %v1766 = vrot.slane %v1752, %v1765
        %v1767 = vcombine.low %v752, %v1002
        %v1768 = vcombine.high %v752, %v1002
        %v1770 = vunpack.c.l.s4 1983009808
        %v1771 = vunpack.c.0.s8 %v1770
        %v1772 = vlaneseq
        %v1773 = vshrl.u32 %v1772, 7
        %v1774 = vsub.s32 %v1771, %v1773
        %v1775 = vrot.slane %v1767, %v1774
        %v1777 = vunpack.c.l.s4 1983009808
        %v1778 = vunpack.c.0.s8 %v1777
        %v1779 = vlaneseq
        %v1780 = vshrl.u32 %v1779, 7
        %v1781 = vsub.s32 %v1778, %v1780
        %v1782 = vrot.slane %v1768, %v1781
        %v1783 = vcombine.low %v978, %v1026
        %v1784 = vcombine.high %v978, %v1026
        %v1786 = vunpack.c.l.s4 1983009808
        %v1787 = vunpack.c.0.s8 %v1786
        %v1788 = vlaneseq
        %v1789 = vshrl.u32 %v1788, 7
        %v1790 = vsub.s32 %v1787, %v1789
        %v1791 = vrot.slane %v1783, %v1790
        %v1793 = vunpack.c.l.s4 1983009808
        %v1794 = vunpack.c.0.s8 %v1793
        %v1795 = vlaneseq
        %v1796 = vshrl.u32 %v1795, 7
        %v1797 = vsub.s32 %v1794, %v1796
        %v1798 = vrot.slane %v1784, %v1797
        %v1799 = vcombine.low %v1743, %v1759
        %v1800 = vcombine.high %v1743, %v1759
        %v1802 = vunpack.c.l.s4 1934713408
        %v1803 = vunpack.c.0.s8 %v1802
        %v1804 = vlaneseq
        %v1805 = vshrl.u32 %v1804, 7
        %v1806 = vsub.s32 %v1803, %v1805
        %v1807 = vrot.slane %v1799, %v1806
        %v1809 = vunpack.c.l.s4 1934713408
        %v1810 = vunpack.c.0.s8 %v1809
        %v1811 = vlaneseq
        %v1812 = vshrl.u32 %v1811, 7
        %v1813 = vsub.s32 %v1810, %v1812
        %v1814 = vrot.slane %v1800, %v1813
        %v1815 = vcombine.low %v1750, %v1766
        %v1816 = vcombine.high %v1750, %v1766
        %v1818 = vunpack.c.l.s4 1934713408
        %v1819 = vunpack.c.0.s8 %v1818
        %v1820 = vlaneseq
        %v1821 = vshrl.u32 %v1820, 7
        %v1822 = vsub.s32 %v1819, %v1821
        %v1823 = vrot.slane %v1815, %v1822
        %v1825 = vunpack.c.l.s4 1934713408
        %v1826 = vunpack.c.0.s8 %v1825
        %v1827 = vlaneseq
        %v1828 = vshrl.u32 %v1827, 7
        %v1829 = vsub.s32 %v1826, %v1828
        %v1830 = vrot.slane %v1816, %v1829
        %v1831 = vcombine.low %v1775, %v1791
        %v1832 = vcombine.high %v1775, %v1791
        %v1834 = vunpack.c.l.s4 1934713408
        %v1835 = vunpack.c.0.s8 %v1834
        %v1836 = vlaneseq
        %v1837 = vshrl.u32 %v1836, 7
        %v1838 = vsub.s32 %v1835, %v1837
        %v1839 = vrot.slane %v1831, %v1838
        %v1841 = vunpack.c.l.s4 1934713408
        %v1842 = vunpack.c.0.s8 %v1841
        %v1843 = vlaneseq
        %v1844 = vshrl.u32 %v1843, 7
        %v1845 = vsub.s32 %v1842, %v1844
        %v1846 = vrot.slane %v1832, %v1845
        %v1847 = vcombine.low %v1782, %v1798
        %v1848 = vcombine.high %v1782, %v1798
        %v1850 = vunpack.c.l.s4 1934713408
        %v1851 = vunpack.c.0.s8 %v1850
        %v1852 = vlaneseq
        %v1853 = vshrl.u32 %v1852, 7
        %v1854 = vsub.s32 %v1851, %v1853
        %v1855 = vrot.slane %v1847, %v1854
        %v1857 = vunpack.c.l.s4 1934713408
        %v1858 = vunpack.c.0.s8 %v1857
        %v1859 = vlaneseq
        %v1860 = vshrl.u32 %v1859, 7
        %v1861 = vsub.s32 %v1858, %v1860
        %v1862 = vrot.slane %v1848, %v1861
        %v1863 = vcombine.low %v1807, %v1839
        %v1864 = vcombine.high %v1807, %v1839
        %v1865 = vcombine.low %v1814, %v1846
        %v1866 = vcombine.high %v1814, %v1846
        %v1867 = vcombine.low %v1823, %v1855
        %v1868 = vcombine.high %v1823, %v1855
        %v1869 = vcombine.low %v1830, %v1862
        %v1870 = vcombine.high %v1830, %v1862
        %v1871 = vcombine.low %v860, %v1082
        %v1872 = vcombine.high %v860, %v1082
        %v1874 = vunpack.c.l.s4 1983009808
        %v1875 = vunpack.c.0.s8 %v1874
        %v1876 = vlaneseq
        %v1877 = vshrl.u32 %v1876, 7
        %v1878 = vsub.s32 %v1875, %v1877
        %v1879 = vrot.slane %v1871, %v1878
        %v1881 = vunpack.c.l.s4 1983009808
        %v1882 = vunpack.c.0.s8 %v1881
        %v1883 = vlaneseq
        %v1884 = vshrl.u32 %v1883, 7
        %v1885 = vsub.s32 %v1882, %v1884
        %v1886 = vrot.slane %v1872, %v1885
        %v1887 = vcombine.low %v1058, %v1106
        %v1888 = vcombine.high %v1058, %v1106
        %v1890 = vunpack.c.l.s4 1983009808
        %v1891 = vunpack.c.0.s8 %v1890
        %v1892 = vlaneseq
        %v1893 = vshrl.u32 %v1892, 7
        %v1894 = vsub.s32 %v1891, %v1893
        %v1895 = vrot.slane %v1887, %v1894
        %v1897 = vunpack.c.l.s4 1983009808
        %v1898 = vunpack.c.0.s8 %v1897
        %v1899 = vlaneseq
        %v1900 = vshrl.u32 %v1899, 7
        %v1901 = vsub.s32 %v1898, %v1900
        %v1902 = vrot.slane %v1888, %v1901
        %v1903 = vcombine.low %v1879, %v1895
        %v1904 = vcombine.high %v1879, %v1895
        %v1906 = vunpack.c.l.s4 1934713408
        %v1907 = vunpack.c.0.s8 %v1906
        %v1908 = vlaneseq
        %v1909 = vshrl.u32 %v1908, 7
        %v1910 = vsub.s32 %v1907, %v1909
        %v1911 = vrot.slane %v1903, %v1910
        %v1913 = vunpack.c.l.s4 1934713408
        %v1914 = vunpack.c.0.s8 %v1913
        %v1915 = vlaneseq
        %v1916 = vshrl.u32 %v1915, 7
        %v1917 = vsub.s32 %v1914, %v1916
        %v1918 = vrot.slane %v1904, %v1917
        %v1919 = vcombine.low %v1886, %v1902
        %v1920 = vcombine.high %v1886, %v1902
        %v1922 = vunpack.c.l.s4 1934713408
        %v1923 = vunpack.c.0.s8 %v1922
        %v1924 = vlaneseq
        %v1925 = vshrl.u32 %v1924, 7
        %v1926 = vsub.s32 %v1923, %v1925
        %v1927 = vrot.slane %v1919, %v1926
        %v1929 = vunpack.c.l.s4 1934713408
        %v1930 = vunpack.c.0.s8 %v1929
        %v1931 = vlaneseq
        %v1932 = vshrl.u32 %v1931, 7
        %v1933 = vsub.s32 %v1930, %v1932
        %v1934 = vrot.slane %v1920, %v1933
        %v1935 = vcombine.high %v1911, 0.0
        %v1936 = vcombine.high %v1918, 0.0
        %v1937 = vcombine.high %v1927, 0.0
        %v1938 = vcombine.high %v1934, 0.0
        %v1939 = vcombine.low %v756, %v924
        %v1940 = vcombine.high %v756, %v924
        %v1942 = vunpack.c.l.s4 1983009808
        %v1943 = vunpack.c.0.s8 %v1942
        %v1944 = vlaneseq
        %v1945 = vshrl.u32 %v1944, 7
        %v1946 = vsub.s32 %v1943, %v1945
        %v1947 = vrot.slane %v1939, %v1946
        %v1949 = vunpack.c.l.s4 1983009808
        %v1950 = vunpack.c.0.s8 %v1949
        %v1951 = vlaneseq
        %v1952 = vshrl.u32 %v1951, 7
        %v1953 = vsub.s32 %v1950, %v1952
        %v1954 = vrot.slane %v1940, %v1953
        %v1955 = vcombine.low %v900, %v948
        %v1956 = vcombine.high %v900, %v948
        %v1958 = vunpack.c.l.s4 1983009808
        %v1959 = vunpack.c.0.s8 %v1958
        %v1960 = vlaneseq
        %v1961 = vshrl.u32 %v1960, 7
        %v1962 = vsub.s32 %v1959, %v1961
        %v1963 = vrot.slane %v1955, %v1962
        %v1965 = vunpack.c.l.s4 1983009808
        %v1966 = vunpack.c.0.s8 %v1965
        %v1967 = vlaneseq
        %v1968 = vshrl.u32 %v1967, 7
        %v1969 = vsub.s32 %v1966, %v1968
        %v1970 = vrot.slane %v1956, %v1969
        %v1971 = vcombine.low %v758, %v1004
        %v1972 = vcombine.high %v758, %v1004
        %v1974 = vunpack.c.l.s4 1983009808
        %v1975 = vunpack.c.0.s8 %v1974
        %v1976 = vlaneseq
        %v1977 = vshrl.u32 %v1976, 7
        %v1978 = vsub.s32 %v1975, %v1977
        %v1979 = vrot.slane %v1971, %v1978
        %v1981 = vunpack.c.l.s4 1983009808
        %v1982 = vunpack.c.0.s8 %v1981
        %v1983 = vlaneseq
        %v1984 = vshrl.u32 %v1983, 7
        %v1985 = vsub.s32 %v1982, %v1984
        %v1986 = vrot.slane %v1972, %v1985
        %v1987 = vcombine.low %v980, %v1028
        %v1988 = vcombine.high %v980, %v1028
        %v1990 = vunpack.c.l.s4 1983009808
        %v1991 = vunpack.c.0.s8 %v1990
        %v1992 = vlaneseq
        %v1993 = vshrl.u32 %v1992, 7
        %v1994 = vsub.s32 %v1991, %v1993
        %v1995 = vrot.slane %v1987, %v1994
        %v1997 = vunpack.c.l.s4 1983009808
        %v1998 = vunpack.c.0.s8 %v1997
        %v1999 = vlaneseq
        %v2000 = vshrl.u32 %v1999, 7
        %v2001 = vsub.s32 %v1998, %v2000
        %v2002 = vrot.slane %v1988, %v2001
        %v2003 = vcombine.low %v1947, %v1963
        %v2004 = vcombine.high %v1947, %v1963
        %v2006 = vunpack.c.l.s4 1934713408
        %v2007 = vunpack.c.0.s8 %v2006
        %v2008 = vlaneseq
        %v2009 = vshrl.u32 %v2008, 7
        %v2010 = vsub.s32 %v2007, %v2009
        %v2011 = vrot.slane %v2003, %v2010
        %v2013 = vunpack.c.l.s4 1934713408
        %v2014 = vunpack.c.0.s8 %v2013
        %v2015 = vlaneseq
        %v2016 = vshrl.u32 %v2015, 7
        %v2017 = vsub.s32 %v2014, %v2016
        %v2018 = vrot.slane %v2004, %v2017
        %v2019 = vcombine.low %v1954, %v1970
        %v2020 = vcombine.high %v1954, %v1970
        %v2022 = vunpack.c.l.s4 1934713408
        %v2023 = vunpack.c.0.s8 %v2022
        %v2024 = vlaneseq
        %v2025 = vshrl.u32 %v2024, 7
        %v2026 = vsub.s32 %v2023, %v2025
        %v2027 = vrot.slane %v2019, %v2026
        %v2029 = vunpack.c.l.s4 1934713408
        %v2030 = vunpack.c.0.s8 %v2029
        %v2031 = vlaneseq
        %v2032 = vshrl.u32 %v2031, 7
        %v2033 = vsub.s32 %v2030, %v2032
        %v2034 = vrot.slane %v2020, %v2033
        %v2035 = vcombine.low %v1979, %v1995
        %v2036 = vcombine.high %v1979, %v1995
        %v2038 = vunpack.c.l.s4 1934713408
        %v2039 = vunpack.c.0.s8 %v2038
        %v2040 = vlaneseq
        %v2041 = vshrl.u32 %v2040, 7
        %v2042 = vsub.s32 %v2039, %v2041
        %v2043 = vrot.slane %v2035, %v2042
        %v2045 = vunpack.c.l.s4 1934713408
        %v2046 = vunpack.c.0.s8 %v2045
        %v2047 = vlaneseq
        %v2048 = vshrl.u32 %v2047, 7
        %v2049 = vsub.s32 %v2046, %v2048
        %v2050 = vrot.slane %v2036, %v2049
        %v2051 = vcombine.low %v1986, %v2002
        %v2052 = vcombine.high %v1986, %v2002
        %v2054 = vunpack.c.l.s4 1934713408
        %v2055 = vunpack.c.0.s8 %v2054
        %v2056 = vlaneseq
        %v2057 = vshrl.u32 %v2056, 7
        %v2058 = vsub.s32 %v2055, %v2057
        %v2059 = vrot.slane %v2051, %v2058
        %v2061 = vunpack.c.l.s4 1934713408
        %v2062 = vunpack.c.0.s8 %v2061
        %v2063 = vlaneseq
        %v2064 = vshrl.u32 %v2063, 7
        %v2065 = vsub.s32 %v2062, %v2064
        %v2066 = vrot.slane %v2052, %v2065
        %v2067 = vcombine.low %v2011, %v2043
        %v2068 = vcombine.high %v2011, %v2043
        %v2069 = vcombine.low %v2018, %v2050
        %v2070 = vcombine.high %v2018, %v2050
        %v2071 = vcombine.low %v2027, %v2059
        %v2072 = vcombine.high %v2027, %v2059
        %v2073 = vcombine.low %v2034, %v2066
        %v2074 = vcombine.high %v2034, %v2066
        %v2075 = vcombine.low %v865, %v1084
        %v2076 = vcombine.high %v865, %v1084
        %v2078 = vunpack.c.l.s4 1983009808
        %v2079 = vunpack.c.0.s8 %v2078
        %v2080 = vlaneseq
        %v2081 = vshrl.u32 %v2080, 7
        %v2082 = vsub.s32 %v2079, %v2081
        %v2083 = vrot.slane %v2075, %v2082
        %v2085 = vunpack.c.l.s4 1983009808
        %v2086 = vunpack.c.0.s8 %v2085
        %v2087 = vlaneseq
        %v2088 = vshrl.u32 %v2087, 7
        %v2089 = vsub.s32 %v2086, %v2088
        %v2090 = vrot.slane %v2076, %v2089
        %v2091 = vcombine.low %v1060, %v1108
        %v2092 = vcombine.high %v1060, %v1108
        %v2094 = vunpack.c.l.s4 1983009808
        %v2095 = vunpack.c.0.s8 %v2094
        %v2096 = vlaneseq
        %v2097 = vshrl.u32 %v2096, 7
        %v2098 = vsub.s32 %v2095, %v2097
        %v2099 = vrot.slane %v2091, %v2098
        %v2101 = vunpack.c.l.s4 1983009808
        %v2102 = vunpack.c.0.s8 %v2101
        %v2103 = vlaneseq
        %v2104 = vshrl.u32 %v2103, 7
        %v2105 = vsub.s32 %v2102, %v2104
        %v2106 = vrot.slane %v2092, %v2105
        %v2107 = vcombine.low %v2083, %v2099
        %v2108 = vcombine.high %v2083, %v2099
        %v2110 = vunpack.c.l.s4 1934713408
        %v2111 = vunpack.c.0.s8 %v2110
        %v2112 = vlaneseq
        %v2113 = vshrl.u32 %v2112, 7
        %v2114 = vsub.s32 %v2111, %v2113
        %v2115 = vrot.slane %v2107, %v2114
        %v2117 = vunpack.c.l.s4 1934713408
        %v2118 = vunpack.c.0.s8 %v2117
        %v2119 = vlaneseq
        %v2120 = vshrl.u32 %v2119, 7
        %v2121 = vsub.s32 %v2118, %v2120
        %v2122 = vrot.slane %v2108, %v2121
        %v2123 = vcombine.low %v2090, %v2106
        %v2124 = vcombine.high %v2090, %v2106
        %v2126 = vunpack.c.l.s4 1934713408
        %v2127 = vunpack.c.0.s8 %v2126
        %v2128 = vlaneseq
        %v2129 = vshrl.u32 %v2128, 7
        %v2130 = vsub.s32 %v2127, %v2129
        %v2131 = vrot.slane %v2123, %v2130
        %v2133 = vunpack.c.l.s4 1934713408
        %v2134 = vunpack.c.0.s8 %v2133
        %v2135 = vlaneseq
        %v2136 = vshrl.u32 %v2135, 7
        %v2137 = vsub.s32 %v2134, %v2136
        %v2138 = vrot.slane %v2124, %v2137
        %v2139 = vcombine.high %v2115, 0.0
        %v2140 = vcombine.high %v2122, 0.0
        %v2141 = vcombine.high %v2131, 0.0
        %v2142 = vcombine.high %v2138, 0.0
        %v2143 = vcombine.low %v762, %v926
        %v2144 = vcombine.high %v762, %v926
        %v2146 = vunpack.c.l.s4 1983009808
        %v2147 = vunpack.c.0.s8 %v2146
        %v2148 = vlaneseq
        %v2149 = vshrl.u32 %v2148, 7
        %v2150 = vsub.s32 %v2147, %v2149
        %v2151 = vrot.slane %v2143, %v2150
        %v2153 = vunpack.c.l.s4 1983009808
        %v2154 = vunpack.c.0.s8 %v2153
        %v2155 = vlaneseq
        %v2156 = vshrl.u32 %v2155, 7
        %v2157 = vsub.s32 %v2154, %v2156
        %v2158 = vrot.slane %v2144, %v2157
        %v2159 = vcombine.low %v902, %v950
        %v2160 = vcombine.high %v902, %v950
        %v2162 = vunpack.c.l.s4 1983009808
        %v2163 = vunpack.c.0.s8 %v2162
        %v2164 = vlaneseq
        %v2165 = vshrl.u32 %v2164, 7
        %v2166 = vsub.s32 %v2163, %v2165
        %v2167 = vrot.slane %v2159, %v2166
        %v2169 = vunpack.c.l.s4 1983009808
        %v2170 = vunpack.c.0.s8 %v2169
        %v2171 = vlaneseq
        %v2172 = vshrl.u32 %v2171, 7
        %v2173 = vsub.s32 %v2170, %v2172
        %v2174 = vrot.slane %v2160, %v2173
        %v2175 = vcombine.low %v764, %v1006
        %v2176 = vcombine.high %v764, %v1006
        %v2178 = vunpack.c.l.s4 1983009808
        %v2179 = vunpack.c.0.s8 %v2178
        %v2180 = vlaneseq
        %v2181 = vshrl.u32 %v2180, 7
        %v2182 = vsub.s32 %v2179, %v2181
        %v2183 = vrot.slane %v2175, %v2182
        %v2185 = vunpack.c.l.s4 1983009808
        %v2186 = vunpack.c.0.s8 %v2185
        %v2187 = vlaneseq
        %v2188 = vshrl.u32 %v2187, 7
        %v2189 = vsub.s32 %v2186, %v2188
        %v2190 = vrot.slane %v2176, %v2189
        %v2191 = vcombine.low %v982, %v1030
        %v2192 = vcombine.high %v982, %v1030
        %v2194 = vunpack.c.l.s4 1983009808
        %v2195 = vunpack.c.0.s8 %v2194
        %v2196 = vlaneseq
        %v2197 = vshrl.u32 %v2196, 7
        %v2198 = vsub.s32 %v2195, %v2197
        %v2199 = vrot.slane %v2191, %v2198
        %v2201 = vunpack.c.l.s4 1983009808
        %v2202 = vunpack.c.0.s8 %v2201
        %v2203 = vlaneseq
        %v2204 = vshrl.u32 %v2203, 7
        %v2205 = vsub.s32 %v2202, %v2204
        %v2206 = vrot.slane %v2192, %v2205
        %v2207 = vcombine.low %v2151, %v2167
        %v2208 = vcombine.high %v2151, %v2167
        %v2210 = vunpack.c.l.s4 1934713408
        %v2211 = vunpack.c.0.s8 %v2210
        %v2212 = vlaneseq
        %v2213 = vshrl.u32 %v2212, 7
        %v2214 = vsub.s32 %v2211, %v2213
        %v2215 = vrot.slane %v2207, %v2214
        %v2217 = vunpack.c.l.s4 1934713408
        %v2218 = vunpack.c.0.s8 %v2217
        %v2219 = vlaneseq
        %v2220 = vshrl.u32 %v2219, 7
        %v2221 = vsub.s32 %v2218, %v2220
        %v2222 = vrot.slane %v2208, %v2221
        %v2223 = vcombine.low %v2158, %v2174
        %v2224 = vcombine.high %v2158, %v2174
        %v2226 = vunpack.c.l.s4 1934713408
        %v2227 = vunpack.c.0.s8 %v2226
        %v2228 = vlaneseq
        %v2229 = vshrl.u32 %v2228, 7
        %v2230 = vsub.s32 %v2227, %v2229
        %v2231 = vrot.slane %v2223, %v2230
        %v2233 = vunpack.c.l.s4 1934713408
        %v2234 = vunpack.c.0.s8 %v2233
        %v2235 = vlaneseq
        %v2236 = vshrl.u32 %v2235, 7
        %v2237 = vsub.s32 %v2234, %v2236
        %v2238 = vrot.slane %v2224, %v2237
        %v2239 = vcombine.low %v2183, %v2199
        %v2240 = vcombine.high %v2183, %v2199
        %v2242 = vunpack.c.l.s4 1934713408
        %v2243 = vunpack.c.0.s8 %v2242
        %v2244 = vlaneseq
        %v2245 = vshrl.u32 %v2244, 7
        %v2246 = vsub.s32 %v2243, %v2245
        %v2247 = vrot.slane %v2239, %v2246
        %v2249 = vunpack.c.l.s4 1934713408
        %v2250 = vunpack.c.0.s8 %v2249
        %v2251 = vlaneseq
        %v2252 = vshrl.u32 %v2251, 7
        %v2253 = vsub.s32 %v2250, %v2252
        %v2254 = vrot.slane %v2240, %v2253
        %v2255 = vcombine.low %v2190, %v2206
        %v2256 = vcombine.high %v2190, %v2206
        %v2258 = vunpack.c.l.s4 1934713408
        %v2259 = vunpack.c.0.s8 %v2258
        %v2260 = vlaneseq
        %v2261 = vshrl.u32 %v2260, 7
        %v2262 = vsub.s32 %v2259, %v2261
        %v2263 = vrot.slane %v2255, %v2262
        %v2265 = vunpack.c.l.s4 1934713408
        %v2266 = vunpack.c.0.s8 %v2265
        %v2267 = vlaneseq
        %v2268 = vshrl.u32 %v2267, 7
        %v2269 = vsub.s32 %v2266, %v2268
        %v2270 = vrot.slane %v2256, %v2269
        %v2271 = vcombine.low %v2215, %v2247
        %v2272 = vcombine.high %v2215, %v2247
        %v2273 = vcombine.low %v2222, %v2254
        %v2274 = vcombine.high %v2222, %v2254
        %v2275 = vcombine.low %v2231, %v2263
        %v2276 = vcombine.high %v2231, %v2263
        %v2277 = vcombine.low %v2238, %v2270
        %v2278 = vcombine.high %v2238, %v2270
        %v2279 = vcombine.low %v870, %v1086
        %v2280 = vcombine.high %v870, %v1086
        %v2282 = vunpack.c.l.s4 1983009808
        %v2283 = vunpack.c.0.s8 %v2282
        %v2284 = vlaneseq
        %v2285 = vshrl.u32 %v2284, 7
        %v2286 = vsub.s32 %v2283, %v2285
        %v2287 = vrot.slane %v2279, %v2286
        %v2289 = vunpack.c.l.s4 1983009808
        %v2290 = vunpack.c.0.s8 %v2289
        %v2291 = vlaneseq
        %v2292 = vshrl.u32 %v2291, 7
        %v2293 = vsub.s32 %v2290, %v2292
        %v2294 = vrot.slane %v2280, %v2293
        %v2295 = vcombine.low %v1062, %v1110
        %v2296 = vcombine.high %v1062, %v1110
        %v2298 = vunpack.c.l.s4 1983009808
        %v2299 = vunpack.c.0.s8 %v2298
        %v2300 = vlaneseq
        %v2301 = vshrl.u32 %v2300, 7
        %v2302 = vsub.s32 %v2299, %v2301
        %v2303 = vrot.slane %v2295, %v2302
        %v2305 = vunpack.c.l.s4 1983009808
        %v2306 = vunpack.c.0.s8 %v2305
        %v2307 = vlaneseq
        %v2308 = vshrl.u32 %v2307, 7
        %v2309 = vsub.s32 %v2306, %v2308
        %v2310 = vrot.slane %v2296, %v2309
        %v2311 = vcombine.low %v2287, %v2303
        %v2312 = vcombine.high %v2287, %v2303
        %v2314 = vunpack.c.l.s4 1934713408
        %v2315 = vunpack.c.0.s8 %v2314
        %v2316 = vlaneseq
        %v2317 = vshrl.u32 %v2316, 7
        %v2318 = vsub.s32 %v2315, %v2317
        %v2319 = vrot.slane %v2311, %v2318
        %v2321 = vunpack.c.l.s4 1934713408
        %v2322 = vunpack.c.0.s8 %v2321
        %v2323 = vlaneseq
        %v2324 = vshrl.u32 %v2323, 7
        %v2325 = vsub.s32 %v2322, %v2324
        %v2326 = vrot.slane %v2312, %v2325
        %v2327 = vcombine.low %v2294, %v2310
        %v2328 = vcombine.high %v2294, %v2310
        %v2330 = vunpack.c.l.s4 1934713408
        %v2331 = vunpack.c.0.s8 %v2330
        %v2332 = vlaneseq
        %v2333 = vshrl.u32 %v2332, 7
        %v2334 = vsub.s32 %v2331, %v2333
        %v2335 = vrot.slane %v2327, %v2334
        %v2337 = vunpack.c.l.s4 1934713408
        %v2338 = vunpack.c.0.s8 %v2337
        %v2339 = vlaneseq
        %v2340 = vshrl.u32 %v2339, 7
        %v2341 = vsub.s32 %v2338, %v2340
        %v2342 = vrot.slane %v2328, %v2341
        %v2343 = vcombine.high %v2319, 0.0
        %v2344 = vcombine.high %v2326, 0.0
        %v2345 = vcombine.high %v2335, 0.0
        %v2346 = vcombine.high %v2342, 0.0
        %v2347 = vcombine.low %v768, %v928
        %v2348 = vcombine.high %v768, %v928
        %v2350 = vunpack.c.l.s4 1983009808
        %v2351 = vunpack.c.0.s8 %v2350
        %v2352 = vlaneseq
        %v2353 = vshrl.u32 %v2352, 7
        %v2354 = vsub.s32 %v2351, %v2353
        %v2355 = vrot.slane %v2347, %v2354
        %v2357 = vunpack.c.l.s4 1983009808
        %v2358 = vunpack.c.0.s8 %v2357
        %v2359 = vlaneseq
        %v2360 = vshrl.u32 %v2359, 7
        %v2361 = vsub.s32 %v2358, %v2360
        %v2362 = vrot.slane %v2348, %v2361
        %v2363 = vcombine.low %v904, %v952
        %v2364 = vcombine.high %v904, %v952
        %v2366 = vunpack.c.l.s4 1983009808
        %v2367 = vunpack.c.0.s8 %v2366
        %v2368 = vlaneseq
        %v2369 = vshrl.u32 %v2368, 7
        %v2370 = vsub.s32 %v2367, %v2369
        %v2371 = vrot.slane %v2363, %v2370
        %v2373 = vunpack.c.l.s4 1983009808
        %v2374 = vunpack.c.0.s8 %v2373
        %v2375 = vlaneseq
        %v2376 = vshrl.u32 %v2375, 7
        %v2377 = vsub.s32 %v2374, %v2376
        %v2378 = vrot.slane %v2364, %v2377
        %v2379 = vcombine.low %v770, %v1008
        %v2380 = vcombine.high %v770, %v1008
        %v2382 = vunpack.c.l.s4 1983009808
        %v2383 = vunpack.c.0.s8 %v2382
        %v2384 = vlaneseq
        %v2385 = vshrl.u32 %v2384, 7
        %v2386 = vsub.s32 %v2383, %v2385
        %v2387 = vrot.slane %v2379, %v2386
        %v2389 = vunpack.c.l.s4 1983009808
        %v2390 = vunpack.c.0.s8 %v2389
        %v2391 = vlaneseq
        %v2392 = vshrl.u32 %v2391, 7
        %v2393 = vsub.s32 %v2390, %v2392
        %v2394 = vrot.slane %v2380, %v2393
        %v2395 = vcombine.low %v984, %v1032
        %v2396 = vcombine.high %v984, %v1032
        %v2398 = vunpack.c.l.s4 1983009808
        %v2399 = vunpack.c.0.s8 %v2398
        %v2400 = vlaneseq
        %v2401 = vshrl.u32 %v2400, 7
        %v2402 = vsub.s32 %v2399, %v2401
        %v2403 = vrot.slane %v2395, %v2402
        %v2405 = vunpack.c.l.s4 1983009808
        %v2406 = vunpack.c.0.s8 %v2405
        %v2407 = vlaneseq
        %v2408 = vshrl.u32 %v2407, 7
        %v2409 = vsub.s32 %v2406, %v2408
        %v2410 = vrot.slane %v2396, %v2409
        %v2411 = vcombine.low %v2355, %v2371
        %v2412 = vcombine.high %v2355, %v2371
        %v2414 = vunpack.c.l.s4 1934713408
        %v2415 = vunpack.c.0.s8 %v2414
        %v2416 = vlaneseq
        %v2417 = vshrl.u32 %v2416, 7
        %v2418 = vsub.s32 %v2415, %v2417
        %v2419 = vrot.slane %v2411, %v2418
        %v2421 = vunpack.c.l.s4 1934713408
        %v2422 = vunpack.c.0.s8 %v2421
        %v2423 = vlaneseq
        %v2424 = vshrl.u32 %v2423, 7
        %v2425 = vsub.s32 %v2422, %v2424
        %v2426 = vrot.slane %v2412, %v2425
        %v2427 = vcombine.low %v2362, %v2378
        %v2428 = vcombine.high %v2362, %v2378
        %v2430 = vunpack.c.l.s4 1934713408
        %v2431 = vunpack.c.0.s8 %v2430
        %v2432 = vlaneseq
        %v2433 = vshrl.u32 %v2432, 7
        %v2434 = vsub.s32 %v2431, %v2433
        %v2435 = vrot.slane %v2427, %v2434
        %v2437 = vunpack.c.l.s4 1934713408
        %v2438 = vunpack.c.0.s8 %v2437
        %v2439 = vlaneseq
        %v2440 = vshrl.u32 %v2439, 7
        %v2441 = vsub.s32 %v2438, %v2440
        %v2442 = vrot.slane %v2428, %v2441
        %v2443 = vcombine.low %v2387, %v2403
        %v2444 = vcombine.high %v2387, %v2403
        %v2446 = vunpack.c.l.s4 1934713408
        %v2447 = vunpack.c.0.s8 %v2446
        %v2448 = vlaneseq
        %v2449 = vshrl.u32 %v2448, 7
        %v2450 = vsub.s32 %v2447, %v2449
        %v2451 = vrot.slane %v2443, %v2450
        %v2453 = vunpack.c.l.s4 1934713408
        %v2454 = vunpack.c.0.s8 %v2453
        %v2455 = vlaneseq
        %v2456 = vshrl.u32 %v2455, 7
        %v2457 = vsub.s32 %v2454, %v2456
        %v2458 = vrot.slane %v2444, %v2457
        %v2459 = vcombine.low %v2394, %v2410
        %v2460 = vcombine.high %v2394, %v2410
        %v2462 = vunpack.c.l.s4 1934713408
        %v2463 = vunpack.c.0.s8 %v2462
        %v2464 = vlaneseq
        %v2465 = vshrl.u32 %v2464, 7
        %v2466 = vsub.s32 %v2463, %v2465
        %v2467 = vrot.slane %v2459, %v2466
        %v2469 = vunpack.c.l.s4 1934713408
        %v2470 = vunpack.c.0.s8 %v2469
        %v2471 = vlaneseq
        %v2472 = vshrl.u32 %v2471, 7
        %v2473 = vsub.s32 %v2470, %v2472
        %v2474 = vrot.slane %v2460, %v2473
        %v2475 = vcombine.low %v2419, %v2451
        %v2476 = vcombine.high %v2419, %v2451
        %v2477 = vcombine.low %v2426, %v2458
        %v2478 = vcombine.high %v2426, %v2458
        %v2479 = vcombine.low %v2435, %v2467
        %v2480 = vcombine.high %v2435, %v2467
        %v2481 = vcombine.low %v2442, %v2474
        %v2482 = vcombine.high %v2442, %v2474
        %v2483 = vcombine.low %v875, %v1088
        %v2484 = vcombine.high %v875, %v1088
        %v2486 = vunpack.c.l.s4 1983009808
        %v2487 = vunpack.c.0.s8 %v2486
        %v2488 = vlaneseq
        %v2489 = vshrl.u32 %v2488, 7
        %v2490 = vsub.s32 %v2487, %v2489
        %v2491 = vrot.slane %v2483, %v2490
        %v2493 = vunpack.c.l.s4 1983009808
        %v2494 = vunpack.c.0.s8 %v2493
        %v2495 = vlaneseq
        %v2496 = vshrl.u32 %v2495, 7
        %v2497 = vsub.s32 %v2494, %v2496
        %v2498 = vrot.slane %v2484, %v2497
        %v2499 = vcombine.low %v1064, %v1112
        %v2500 = vcombine.high %v1064, %v1112
        %v2502 = vunpack.c.l.s4 1983009808
        %v2503 = vunpack.c.0.s8 %v2502
        %v2504 = vlaneseq
        %v2505 = vshrl.u32 %v2504, 7
        %v2506 = vsub.s32 %v2503, %v2505
        %v2507 = vrot.slane %v2499, %v2506
        %v2509 = vunpack.c.l.s4 1983009808
        %v2510 = vunpack.c.0.s8 %v2509
        %v2511 = vlaneseq
        %v2512 = vshrl.u32 %v2511, 7
        %v2513 = vsub.s32 %v2510, %v2512
        %v2514 = vrot.slane %v2500, %v2513
        %v2515 = vcombine.low %v2491, %v2507
        %v2516 = vcombine.high %v2491, %v2507
        %v2518 = vunpack.c.l.s4 1934713408
        %v2519 = vunpack.c.0.s8 %v2518
        %v2520 = vlaneseq
        %v2521 = vshrl.u32 %v2520, 7
        %v2522 = vsub.s32 %v2519, %v2521
        %v2523 = vrot.slane %v2515, %v2522
        %v2525 = vunpack.c.l.s4 1934713408
        %v2526 = vunpack.c.0.s8 %v2525
        %v2527 = vlaneseq
        %v2528 = vshrl.u32 %v2527, 7
        %v2529 = vsub.s32 %v2526, %v2528
        %v2530 = vrot.slane %v2516, %v2529
        %v2531 = vcombine.low %v2498, %v2514
        %v2532 = vcombine.high %v2498, %v2514
        %v2534 = vunpack.c.l.s4 1934713408
        %v2535 = vunpack.c.0.s8 %v2534
        %v2536 = vlaneseq
        %v2537 = vshrl.u32 %v2536, 7
        %v2538 = vsub.s32 %v2535, %v2537
        %v2539 = vrot.slane %v2531, %v2538
        %v2541 = vunpack.c.l.s4 1934713408
        %v2542 = vunpack.c.0.s8 %v2541
        %v2543 = vlaneseq
        %v2544 = vshrl.u32 %v2543, 7
        %v2545 = vsub.s32 %v2542, %v2544
        %v2546 = vrot.slane %v2532, %v2545
        %v2547 = vcombine.high %v2523, 0.0
        %v2548 = vcombine.high %v2530, 0.0
        %v2549 = vcombine.high %v2539, 0.0
        %v2550 = vcombine.high %v2546, 0.0
        %v2551 = vcombine.low %v774, %v930
        %v2552 = vcombine.high %v774, %v930
        %v2554 = vunpack.c.l.s4 1983009808
        %v2555 = vunpack.c.0.s8 %v2554
        %v2556 = vlaneseq
        %v2557 = vshrl.u32 %v2556, 7
        %v2558 = vsub.s32 %v2555, %v2557
        %v2559 = vrot.slane %v2551, %v2558
        %v2561 = vunpack.c.l.s4 1983009808
        %v2562 = vunpack.c.0.s8 %v2561
        %v2563 = vlaneseq
        %v2564 = vshrl.u32 %v2563, 7
        %v2565 = vsub.s32 %v2562, %v2564
        %v2566 = vrot.slane %v2552, %v2565
        %v2567 = vcombine.low %v906, %v954
        %v2568 = vcombine.high %v906, %v954
        %v2570 = vunpack.c.l.s4 1983009808
        %v2571 = vunpack.c.0.s8 %v2570
        %v2572 = vlaneseq
        %v2573 = vshrl.u32 %v2572, 7
        %v2574 = vsub.s32 %v2571, %v2573
        %v2575 = vrot.slane %v2567, %v2574
        %v2577 = vunpack.c.l.s4 1983009808
        %v2578 = vunpack.c.0.s8 %v2577
        %v2579 = vlaneseq
        %v2580 = vshrl.u32 %v2579, 7
        %v2581 = vsub.s32 %v2578, %v2580
        %v2582 = vrot.slane %v2568, %v2581
        %v2583 = vcombine.low %v776, %v1010
        %v2584 = vcombine.high %v776, %v1010
        %v2586 = vunpack.c.l.s4 1983009808
        %v2587 = vunpack.c.0.s8 %v2586
        %v2588 = vlaneseq
        %v2589 = vshrl.u32 %v2588, 7
        %v2590 = vsub.s32 %v2587, %v2589
        %v2591 = vrot.slane %v2583, %v2590
        %v2593 = vunpack.c.l.s4 1983009808
        %v2594 = vunpack.c.0.s8 %v2593
        %v2595 = vlaneseq
        %v2596 = vshrl.u32 %v2595, 7
        %v2597 = vsub.s32 %v2594, %v2596
        %v2598 = vrot.slane %v2584, %v2597
        %v2599 = vcombine.low %v986, %v1034
        %v2600 = vcombine.high %v986, %v1034
        %v2602 = vunpack.c.l.s4 1983009808
        %v2603 = vunpack.c.0.s8 %v2602
        %v2604 = vlaneseq
        %v2605 = vshrl.u32 %v2604, 7
        %v2606 = vsub.s32 %v2603, %v2605
        %v2607 = vrot.slane %v2599, %v2606
        %v2609 = vunpack.c.l.s4 1983009808
        %v2610 = vunpack.c.0.s8 %v2609
        %v2611 = vlaneseq
        %v2612 = vshrl.u32 %v2611, 7
        %v2613 = vsub.s32 %v2610, %v2612
        %v2614 = vrot.slane %v2600, %v2613
        %v2615 = vcombine.low %v2559, %v2575
        %v2616 = vcombine.high %v2559, %v2575
        %v2618 = vunpack.c.l.s4 1934713408
        %v2619 = vunpack.c.0.s8 %v2618
        %v2620 = vlaneseq
        %v2621 = vshrl.u32 %v2620, 7
        %v2622 = vsub.s32 %v2619, %v2621
        %v2623 = vrot.slane %v2615, %v2622
        %v2625 = vunpack.c.l.s4 1934713408
        %v2626 = vunpack.c.0.s8 %v2625
        %v2627 = vlaneseq
        %v2628 = vshrl.u32 %v2627, 7
        %v2629 = vsub.s32 %v2626, %v2628
        %v2630 = vrot.slane %v2616, %v2629
        %v2631 = vcombine.low %v2566, %v2582
        %v2632 = vcombine.high %v2566, %v2582
        %v2634 = vunpack.c.l.s4 1934713408
        %v2635 = vunpack.c.0.s8 %v2634
        %v2636 = vlaneseq
        %v2637 = vshrl.u32 %v2636, 7
        %v2638 = vsub.s32 %v2635, %v2637
        %v2639 = vrot.slane %v2631, %v2638
        %v2641 = vunpack.c.l.s4 1934713408
        %v2642 = vunpack.c.0.s8 %v2641
        %v2643 = vlaneseq
        %v2644 = vshrl.u32 %v2643, 7
        %v2645 = vsub.s32 %v2642, %v2644
        %v2646 = vrot.slane %v2632, %v2645
        %v2647 = vcombine.low %v2591, %v2607
        %v2648 = vcombine.high %v2591, %v2607
        %v2650 = vunpack.c.l.s4 1934713408
        %v2651 = vunpack.c.0.s8 %v2650
        %v2652 = vlaneseq
        %v2653 = vshrl.u32 %v2652, 7
        %v2654 = vsub.s32 %v2651, %v2653
        %v2655 = vrot.slane %v2647, %v2654
        %v2657 = vunpack.c.l.s4 1934713408
        %v2658 = vunpack.c.0.s8 %v2657
        %v2659 = vlaneseq
        %v2660 = vshrl.u32 %v2659, 7
        %v2661 = vsub.s32 %v2658, %v2660
        %v2662 = vrot.slane %v2648, %v2661
        %v2663 = vcombine.low %v2598, %v2614
        %v2664 = vcombine.high %v2598, %v2614
        %v2666 = vunpack.c.l.s4 1934713408
        %v2667 = vunpack.c.0.s8 %v2666
        %v2668 = vlaneseq
        %v2669 = vshrl.u32 %v2668, 7
        %v2670 = vsub.s32 %v2667, %v2669
        %v2671 = vrot.slane %v2663, %v2670
        %v2673 = vunpack.c.l.s4 1934713408
        %v2674 = vunpack.c.0.s8 %v2673
        %v2675 = vlaneseq
        %v2676 = vshrl.u32 %v2675, 7
        %v2677 = vsub.s32 %v2674, %v2676
        %v2678 = vrot.slane %v2664, %v2677
        %v2679 = vcombine.low %v2623, %v2655
        %v2680 = vcombine.high %v2623, %v2655
        %v2681 = vcombine.low %v2630, %v2662
        %v2682 = vcombine.high %v2630, %v2662
        %v2683 = vcombine.low %v2639, %v2671
        %v2684 = vcombine.high %v2639, %v2671
        %v2685 = vcombine.low %v2646, %v2678
        %v2686 = vcombine.high %v2646, %v2678
        %v2687 = vcombine.low %v880, %v1090
        %v2688 = vcombine.high %v880, %v1090
        %v2690 = vunpack.c.l.s4 1983009808
        %v2691 = vunpack.c.0.s8 %v2690
        %v2692 = vlaneseq
        %v2693 = vshrl.u32 %v2692, 7
        %v2694 = vsub.s32 %v2691, %v2693
        %v2695 = vrot.slane %v2687, %v2694
        %v2697 = vunpack.c.l.s4 1983009808
        %v2698 = vunpack.c.0.s8 %v2697
        %v2699 = vlaneseq
        %v2700 = vshrl.u32 %v2699, 7
        %v2701 = vsub.s32 %v2698, %v2700
        %v2702 = vrot.slane %v2688, %v2701
        %v2703 = vcombine.low %v1066, %v1114
        %v2704 = vcombine.high %v1066, %v1114
        %v2706 = vunpack.c.l.s4 1983009808
        %v2707 = vunpack.c.0.s8 %v2706
        %v2708 = vlaneseq
        %v2709 = vshrl.u32 %v2708, 7
        %v2710 = vsub.s32 %v2707, %v2709
        %v2711 = vrot.slane %v2703, %v2710
        %v2713 = vunpack.c.l.s4 1983009808
        %v2714 = vunpack.c.0.s8 %v2713
        %v2715 = vlaneseq
        %v2716 = vshrl.u32 %v2715, 7
        %v2717 = vsub.s32 %v2714, %v2716
        %v2718 = vrot.slane %v2704, %v2717
        %v2719 = vcombine.low %v2695, %v2711
        %v2720 = vcombine.high %v2695, %v2711
        %v2722 = vunpack.c.l.s4 1934713408
        %v2723 = vunpack.c.0.s8 %v2722
        %v2724 = vlaneseq
        %v2725 = vshrl.u32 %v2724, 7
        %v2726 = vsub.s32 %v2723, %v2725
        %v2727 = vrot.slane %v2719, %v2726
        %v2729 = vunpack.c.l.s4 1934713408
        %v2730 = vunpack.c.0.s8 %v2729
        %v2731 = vlaneseq
        %v2732 = vshrl.u32 %v2731, 7
        %v2733 = vsub.s32 %v2730, %v2732
        %v2734 = vrot.slane %v2720, %v2733
        %v2735 = vcombine.low %v2702, %v2718
        %v2736 = vcombine.high %v2702, %v2718
        %v2738 = vunpack.c.l.s4 1934713408
        %v2739 = vunpack.c.0.s8 %v2738
        %v2740 = vlaneseq
        %v2741 = vshrl.u32 %v2740, 7
        %v2742 = vsub.s32 %v2739, %v2741
        %v2743 = vrot.slane %v2735, %v2742
        %v2745 = vunpack.c.l.s4 1934713408
        %v2746 = vunpack.c.0.s8 %v2745
        %v2747 = vlaneseq
        %v2748 = vshrl.u32 %v2747, 7
        %v2749 = vsub.s32 %v2746, %v2748
        %v2750 = vrot.slane %v2736, %v2749
        %v2751 = vcombine.high %v2727, 0.0
        %v2752 = vcombine.high %v2734, 0.0
        %v2753 = vcombine.high %v2743, 0.0
        %v2754 = vcombine.high %v2750, 0.0
        %v2755 = vcombine.low %v1251, %v1253
        %v2756 = vcombine.high %v1251, %v1253
        %v2758 = vunpack.c.l.s4 1983009808
        %v2759 = vunpack.c.0.s8 %v2758
        %v2760 = vlaneseq
        %v2761 = vshrl.u32 %v2760, 7
        %v2762 = vsub.s32 %v2759, %v2761
        %v2763 = vrot.slane %v2755, %v2762
        %v2765 = vunpack.c.l.s4 1983009808
        %v2766 = vunpack.c.0.s8 %v2765
        %v2767 = vlaneseq
        %v2768 = vshrl.u32 %v2767, 7
        %v2769 = vsub.s32 %v2766, %v2768
        %v2770 = vrot.slane %v2756, %v2769
        %v2771 = vcombine.low %v1252, %v1254
        %v2772 = vcombine.high %v1252, %v1254
        %v2774 = vunpack.c.l.s4 1983009808
        %v2775 = vunpack.c.0.s8 %v2774
        %v2776 = vlaneseq
        %v2777 = vshrl.u32 %v2776, 7
        %v2778 = vsub.s32 %v2775, %v2777
        %v2779 = vrot.slane %v2771, %v2778
        %v2781 = vunpack.c.l.s4 1983009808
        %v2782 = vunpack.c.0.s8 %v2781
        %v2783 = vlaneseq
        %v2784 = vshrl.u32 %v2783, 7
        %v2785 = vsub.s32 %v2782, %v2784
        %v2786 = vrot.slane %v2772, %v2785
        %v2787 = vcombine.low %v1255, %v1257
        %v2788 = vcombine.high %v1255, %v1257
        %v2790 = vunpack.c.l.s4 1983009808
        %v2791 = vunpack.c.0.s8 %v2790
        %v2792 = vlaneseq
        %v2793 = vshrl.u32 %v2792, 7
        %v2794 = vsub.s32 %v2791, %v2793
        %v2795 = vrot.slane %v2787, %v2794
        %v2797 = vunpack.c.l.s4 1983009808
        %v2798 = vunpack.c.0.s8 %v2797
        %v2799 = vlaneseq
        %v2800 = vshrl.u32 %v2799, 7
        %v2801 = vsub.s32 %v2798, %v2800
        %v2802 = vrot.slane %v2788, %v2801
        %v2803 = vcombine.low %v1256, %v1258
        %v2804 = vcombine.high %v1256, %v1258
        %v2806 = vunpack.c.l.s4 1983009808
        %v2807 = vunpack.c.0.s8 %v2806
        %v2808 = vlaneseq
        %v2809 = vshrl.u32 %v2808, 7
        %v2810 = vsub.s32 %v2807, %v2809
        %v2811 = vrot.slane %v2803, %v2810
        %v2813 = vunpack.c.l.s4 1983009808
        %v2814 = vunpack.c.0.s8 %v2813
        %v2815 = vlaneseq
        %v2816 = vshrl.u32 %v2815, 7
        %v2817 = vsub.s32 %v2814, %v2816
        %v2818 = vrot.slane %v2804, %v2817
        %v2819 = vcombine.low %v2763, %v2779
        %v2820 = vcombine.high %v2763, %v2779
        %v2822 = vunpack.c.l.s4 1934713408
        %v2823 = vunpack.c.0.s8 %v2822
        %v2824 = vlaneseq
        %v2825 = vshrl.u32 %v2824, 7
        %v2826 = vsub.s32 %v2823, %v2825
        %v2827 = vrot.slane %v2819, %v2826
        %v2829 = vunpack.c.l.s4 1934713408
        %v2830 = vunpack.c.0.s8 %v2829
        %v2831 = vlaneseq
        %v2832 = vshrl.u32 %v2831, 7
        %v2833 = vsub.s32 %v2830, %v2832
        %v2834 = vrot.slane %v2820, %v2833
        %v2835 = vcombine.low %v2770, %v2786
        %v2836 = vcombine.high %v2770, %v2786
        %v2838 = vunpack.c.l.s4 1934713408
        %v2839 = vunpack.c.0.s8 %v2838
        %v2840 = vlaneseq
        %v2841 = vshrl.u32 %v2840, 7
        %v2842 = vsub.s32 %v2839, %v2841
        %v2843 = vrot.slane %v2835, %v2842
        %v2845 = vunpack.c.l.s4 1934713408
        %v2846 = vunpack.c.0.s8 %v2845
        %v2847 = vlaneseq
        %v2848 = vshrl.u32 %v2847, 7
        %v2849 = vsub.s32 %v2846, %v2848
        %v2850 = vrot.slane %v2836, %v2849
        %v2851 = vcombine.low %v2795, %v2811
        %v2852 = vcombine.high %v2795, %v2811
        %v2854 = vunpack.c.l.s4 1934713408
        %v2855 = vunpack.c.0.s8 %v2854
        %v2856 = vlaneseq
        %v2857 = vshrl.u32 %v2856, 7
        %v2858 = vsub.s32 %v2855, %v2857
        %v2859 = vrot.slane %v2851, %v2858
        %v2861 = vunpack.c.l.s4 1934713408
        %v2862 = vunpack.c.0.s8 %v2861
        %v2863 = vlaneseq
        %v2864 = vshrl.u32 %v2863, 7
        %v2865 = vsub.s32 %v2862, %v2864
        %v2866 = vrot.slane %v2852, %v2865
        %v2867 = vcombine.low %v2802, %v2818
        %v2868 = vcombine.high %v2802, %v2818
        %v2870 = vunpack.c.l.s4 1934713408
        %v2871 = vunpack.c.0.s8 %v2870
        %v2872 = vlaneseq
        %v2873 = vshrl.u32 %v2872, 7
        %v2874 = vsub.s32 %v2871, %v2873
        %v2875 = vrot.slane %v2867, %v2874
        %v2877 = vunpack.c.l.s4 1934713408
        %v2878 = vunpack.c.0.s8 %v2877
        %v2879 = vlaneseq
        %v2880 = vshrl.u32 %v2879, 7
        %v2881 = vsub.s32 %v2878, %v2880
        %v2882 = vrot.slane %v2868, %v2881
        %v2883 = vcombine.low %v2827, %v2859
        %v2884 = vcombine.high %v2827, %v2859
        %v2885 = vcombine.low %v2834, %v2866
        %v2886 = vcombine.high %v2834, %v2866
        %v2887 = vcombine.low %v2843, %v2875
        %v2888 = vcombine.high %v2843, %v2875
        %v2889 = vcombine.low %v2850, %v2882
        %v2890 = vcombine.high %v2850, %v2882
        %v2891 = vcombine.low %v1455, %v1457
        %v2892 = vcombine.high %v1455, %v1457
        %v2894 = vunpack.c.l.s4 1983009808
        %v2895 = vunpack.c.0.s8 %v2894
        %v2896 = vlaneseq
        %v2897 = vshrl.u32 %v2896, 7
        %v2898 = vsub.s32 %v2895, %v2897
        %v2899 = vrot.slane %v2891, %v2898
        %v2901 = vunpack.c.l.s4 1983009808
        %v2902 = vunpack.c.0.s8 %v2901
        %v2903 = vlaneseq
        %v2904 = vshrl.u32 %v2903, 7
        %v2905 = vsub.s32 %v2902, %v2904
        %v2906 = vrot.slane %v2892, %v2905
        %v2907 = vcombine.low %v1456, %v1458
        %v2908 = vcombine.high %v1456, %v1458
        %v2910 = vunpack.c.l.s4 1983009808
        %v2911 = vunpack.c.0.s8 %v2910
        %v2912 = vlaneseq
        %v2913 = vshrl.u32 %v2912, 7
        %v2914 = vsub.s32 %v2911, %v2913
        %v2915 = vrot.slane %v2907, %v2914
        %v2917 = vunpack.c.l.s4 1983009808
        %v2918 = vunpack.c.0.s8 %v2917
        %v2919 = vlaneseq
        %v2920 = vshrl.u32 %v2919, 7
        %v2921 = vsub.s32 %v2918, %v2920
        %v2922 = vrot.slane %v2908, %v2921
        %v2923 = vcombine.low %v1459, %v1461
        %v2924 = vcombine.high %v1459, %v1461
        %v2926 = vunpack.c.l.s4 1983009808
        %v2927 = vunpack.c.0.s8 %v2926
        %v2928 = vlaneseq
        %v2929 = vshrl.u32 %v2928, 7
        %v2930 = vsub.s32 %v2927, %v2929
        %v2931 = vrot.slane %v2923, %v2930
        %v2933 = vunpack.c.l.s4 1983009808
        %v2934 = vunpack.c.0.s8 %v2933
        %v2935 = vlaneseq
        %v2936 = vshrl.u32 %v2935, 7
        %v2937 = vsub.s32 %v2934, %v2936
        %v2938 = vrot.slane %v2924, %v2937
        %v2939 = vcombine.low %v1460, %v1462
        %v2940 = vcombine.high %v1460, %v1462
        %v2942 = vunpack.c.l.s4 1983009808
        %v2943 = vunpack.c.0.s8 %v2942
        %v2944 = vlaneseq
        %v2945 = vshrl.u32 %v2944, 7
        %v2946 = vsub.s32 %v2943, %v2945
        %v2947 = vrot.slane %v2939, %v2946
        %v2949 = vunpack.c.l.s4 1983009808
        %v2950 = vunpack.c.0.s8 %v2949
        %v2951 = vlaneseq
        %v2952 = vshrl.u32 %v2951, 7
        %v2953 = vsub.s32 %v2950, %v2952
        %v2954 = vrot.slane %v2940, %v2953
        %v2955 = vcombine.low %v2899, %v2915
        %v2956 = vcombine.high %v2899, %v2915
        %v2958 = vunpack.c.l.s4 1934713408
        %v2959 = vunpack.c.0.s8 %v2958
        %v2960 = vlaneseq
        %v2961 = vshrl.u32 %v2960, 7
        %v2962 = vsub.s32 %v2959, %v2961
        %v2963 = vrot.slane %v2955, %v2962
        %v2965 = vunpack.c.l.s4 1934713408
        %v2966 = vunpack.c.0.s8 %v2965
        %v2967 = vlaneseq
        %v2968 = vshrl.u32 %v2967, 7
        %v2969 = vsub.s32 %v2966, %v2968
        %v2970 = vrot.slane %v2956, %v2969
        %v2971 = vcombine.low %v2906, %v2922
        %v2972 = vcombine.high %v2906, %v2922
        %v2974 = vunpack.c.l.s4 1934713408
        %v2975 = vunpack.c.0.s8 %v2974
        %v2976 = vlaneseq
        %v2977 = vshrl.u32 %v2976, 7
        %v2978 = vsub.s32 %v2975, %v2977
        %v2979 = vrot.slane %v2971, %v2978
        %v2981 = vunpack.c.l.s4 1934713408
        %v2982 = vunpack.c.0.s8 %v2981
        %v2983 = vlaneseq
        %v2984 = vshrl.u32 %v2983, 7
        %v2985 = vsub.s32 %v2982, %v2984
        %v2986 = vrot.slane %v2972, %v2985
        %v2987 = vcombine.low %v2931, %v2947
        %v2988 = vcombine.high %v2931, %v2947
        %v2990 = vunpack.c.l.s4 1934713408
        %v2991 = vunpack.c.0.s8 %v2990
        %v2992 = vlaneseq
        %v2993 = vshrl.u32 %v2992, 7
        %v2994 = vsub.s32 %v2991, %v2993
        %v2995 = vrot.slane %v2987, %v2994
        %v2997 = vunpack.c.l.s4 1934713408
        %v2998 = vunpack.c.0.s8 %v2997
        %v2999 = vlaneseq
        %v3000 = vshrl.u32 %v2999, 7
        %v3001 = vsub.s32 %v2998, %v3000
        %v3002 = vrot.slane %v2988, %v3001
        %v3003 = vcombine.low %v2938, %v2954
        %v3004 = vcombine.high %v2938, %v2954
        %v3006 = vunpack.c.l.s4 1934713408
        %v3007 = vunpack.c.0.s8 %v3006
        %v3008 = vlaneseq
        %v3009 = vshrl.u32 %v3008, 7
        %v3010 = vsub.s32 %v3007, %v3009
        %v3011 = vrot.slane %v3003, %v3010
        %v3013 = vunpack.c.l.s4 1934713408
        %v3014 = vunpack.c.0.s8 %v3013
        %v3015 = vlaneseq
        %v3016 = vshrl.u32 %v3015, 7
        %v3017 = vsub.s32 %v3014, %v3016
        %v3018 = vrot.slane %v3004, %v3017
        %v3019 = vcombine.low %v2963, %v2995
        %v3020 = vcombine.high %v2963, %v2995
        %v3021 = vcombine.low %v2970, %v3002
        %v3022 = vcombine.high %v2970, %v3002
        %v3023 = vcombine.low %v2979, %v3011
        %v3024 = vcombine.high %v2979, %v3011
        %v3025 = vcombine.low %v2986, %v3018
        %v3026 = vcombine.high %v2986, %v3018
        %v3027 = vcombine.low %v1659, %v1661
        %v3028 = vcombine.high %v1659, %v1661
        %v3030 = vunpack.c.l.s4 1983009808
        %v3031 = vunpack.c.0.s8 %v3030
        %v3032 = vlaneseq
        %v3033 = vshrl.u32 %v3032, 7
        %v3034 = vsub.s32 %v3031, %v3033
        %v3035 = vrot.slane %v3027, %v3034
        %v3037 = vunpack.c.l.s4 1983009808
        %v3038 = vunpack.c.0.s8 %v3037
        %v3039 = vlaneseq
        %v3040 = vshrl.u32 %v3039, 7
        %v3041 = vsub.s32 %v3038, %v3040
        %v3042 = vrot.slane %v3028, %v3041
        %v3043 = vcombine.low %v1660, %v1662
        %v3044 = vcombine.high %v1660, %v1662
        %v3046 = vunpack.c.l.s4 1983009808
        %v3047 = vunpack.c.0.s8 %v3046
        %v3048 = vlaneseq
        %v3049 = vshrl.u32 %v3048, 7
        %v3050 = vsub.s32 %v3047, %v3049
        %v3051 = vrot.slane %v3043, %v3050
        %v3053 = vunpack.c.l.s4 1983009808
        %v3054 = vunpack.c.0.s8 %v3053
        %v3055 = vlaneseq
        %v3056 = vshrl.u32 %v3055, 7
        %v3057 = vsub.s32 %v3054, %v3056
        %v3058 = vrot.slane %v3044, %v3057
        %v3059 = vcombine.low %v1663, %v1665
        %v3060 = vcombine.high %v1663, %v1665
        %v3062 = vunpack.c.l.s4 1983009808
        %v3063 = vunpack.c.0.s8 %v3062
        %v3064 = vlaneseq
        %v3065 = vshrl.u32 %v3064, 7
        %v3066 = vsub.s32 %v3063, %v3065
        %v3067 = vrot.slane %v3059, %v3066
        %v3069 = vunpack.c.l.s4 1983009808
        %v3070 = vunpack.c.0.s8 %v3069
        %v3071 = vlaneseq
        %v3072 = vshrl.u32 %v3071, 7
        %v3073 = vsub.s32 %v3070, %v3072
        %v3074 = vrot.slane %v3060, %v3073
        %v3075 = vcombine.low %v1664, %v1666
        %v3076 = vcombine.high %v1664, %v1666
        %v3078 = vunpack.c.l.s4 1983009808
        %v3079 = vunpack.c.0.s8 %v3078
        %v3080 = vlaneseq
        %v3081 = vshrl.u32 %v3080, 7
        %v3082 = vsub.s32 %v3079, %v3081
        %v3083 = vrot.slane %v3075, %v3082
        %v3085 = vunpack.c.l.s4 1983009808
        %v3086 = vunpack.c.0.s8 %v3085
        %v3087 = vlaneseq
        %v3088 = vshrl.u32 %v3087, 7
        %v3089 = vsub.s32 %v3086, %v3088
        %v3090 = vrot.slane %v3076, %v3089
        %v3091 = vcombine.low %v3035, %v3051
        %v3092 = vcombine.high %v3035, %v3051
        %v3094 = vunpack.c.l.s4 1934713408
        %v3095 = vunpack.c.0.s8 %v3094
        %v3096 = vlaneseq
        %v3097 = vshrl.u32 %v3096, 7
        %v3098 = vsub.s32 %v3095, %v3097
        %v3099 = vrot.slane %v3091, %v3098
        %v3101 = vunpack.c.l.s4 1934713408
        %v3102 = vunpack.c.0.s8 %v3101
        %v3103 = vlaneseq
        %v3104 = vshrl.u32 %v3103, 7
        %v3105 = vsub.s32 %v3102, %v3104
        %v3106 = vrot.slane %v3092, %v3105
        %v3107 = vcombine.low %v3042, %v3058
        %v3108 = vcombine.high %v3042, %v3058
        %v3110 = vunpack.c.l.s4 1934713408
        %v3111 = vunpack.c.0.s8 %v3110
        %v3112 = vlaneseq
        %v3113 = vshrl.u32 %v3112, 7
        %v3114 = vsub.s32 %v3111, %v3113
        %v3115 = vrot.slane %v3107, %v3114
        %v3117 = vunpack.c.l.s4 1934713408
        %v3118 = vunpack.c.0.s8 %v3117
        %v3119 = vlaneseq
        %v3120 = vshrl.u32 %v3119, 7
        %v3121 = vsub.s32 %v3118, %v3120
        %v3122 = vrot.slane %v3108, %v3121
        %v3123 = vcombine.low %v3067, %v3083
        %v3124 = vcombine.high %v3067, %v3083
        %v3126 = vunpack.c.l.s4 1934713408
        %v3127 = vunpack.c.0.s8 %v3126
        %v3128 = vlaneseq
        %v3129 = vshrl.u32 %v3128, 7
        %v3130 = vsub.s32 %v3127, %v3129
        %v3131 = vrot.slane %v3123, %v3130
        %v3133 = vunpack.c.l.s4 1934713408
        %v3134 = vunpack.c.0.s8 %v3133
        %v3135 = vlaneseq
        %v3136 = vshrl.u32 %v3135, 7
        %v3137 = vsub.s32 %v3134, %v3136
        %v3138 = vrot.slane %v3124, %v3137
        %v3139 = vcombine.low %v3074, %v3090
        %v3140 = vcombine.high %v3074, %v3090
        %v3142 = vunpack.c.l.s4 1934713408
        %v3143 = vunpack.c.0.s8 %v3142
        %v3144 = vlaneseq
        %v3145 = vshrl.u32 %v3144, 7
        %v3146 = vsub.s32 %v3143, %v3145
        %v3147 = vrot.slane %v3139, %v3146
        %v3149 = vunpack.c.l.s4 1934713408
        %v3150 = vunpack.c.0.s8 %v3149
        %v3151 = vlaneseq
        %v3152 = vshrl.u32 %v3151, 7
        %v3153 = vsub.s32 %v3150, %v3152
        %v3154 = vrot.slane %v3140, %v3153
        %v3155 = vcombine.low %v3099, %v3131
        %v3156 = vcombine.high %v3099, %v3131
        %v3157 = vcombine.low %v3106, %v3138
        %v3158 = vcombine.high %v3106, %v3138
        %v3159 = vcombine.low %v3115, %v3147
        %v3160 = vcombine.high %v3115, %v3147
        %v3161 = vcombine.low %v3122, %v3154
        %v3162 = vcombine.high %v3122, %v3154
        %v3163 = vcombine.low %v1863, %v1865
        %v3164 = vcombine.high %v1863, %v1865
        %v3166 = vunpack.c.l.s4 1983009808
        %v3167 = vunpack.c.0.s8 %v3166
        %v3168 = vlaneseq
        %v3169 = vshrl.u32 %v3168, 7
        %v3170 = vsub.s32 %v3167, %v3169
        %v3171 = vrot.slane %v3163, %v3170
        %v3173 = vunpack.c.l.s4 1983009808
        %v3174 = vunpack.c.0.s8 %v3173
        %v3175 = vlaneseq
        %v3176 = vshrl.u32 %v3175, 7
        %v3177 = vsub.s32 %v3174, %v3176
        %v3178 = vrot.slane %v3164, %v3177
        %v3179 = vcombine.low %v1864, %v1866
        %v3180 = vcombine.high %v1864, %v1866
        %v3182 = vunpack.c.l.s4 1983009808
        %v3183 = vunpack.c.0.s8 %v3182
        %v3184 = vlaneseq
        %v3185 = vshrl.u32 %v3184, 7
        %v3186 = vsub.s32 %v3183, %v3185
        %v3187 = vrot.slane %v3179, %v3186
        %v3189 = vunpack.c.l.s4 1983009808
        %v3190 = vunpack.c.0.s8 %v3189
        %v3191 = vlaneseq
        %v3192 = vshrl.u32 %v3191, 7
        %v3193 = vsub.s32 %v3190, %v3192
        %v3194 = vrot.slane %v3180, %v3193
        %v3195 = vcombine.low %v1867, %v1869
        %v3196 = vcombine.high %v1867, %v1869
        %v3198 = vunpack.c.l.s4 1983009808
        %v3199 = vunpack.c.0.s8 %v3198
        %v3200 = vlaneseq
        %v3201 = vshrl.u32 %v3200, 7
        %v3202 = vsub.s32 %v3199, %v3201
        %v3203 = vrot.slane %v3195, %v3202
        %v3205 = vunpack.c.l.s4 1983009808
        %v3206 = vunpack.c.0.s8 %v3205
        %v3207 = vlaneseq
        %v3208 = vshrl.u32 %v3207, 7
        %v3209 = vsub.s32 %v3206, %v3208
        %v3210 = vrot.slane %v3196, %v3209
        %v3211 = vcombine.low %v1868, %v1870
        %v3212 = vcombine.high %v1868, %v1870
        %v3214 = vunpack.c.l.s4 1983009808
        %v3215 = vunpack.c.0.s8 %v3214
        %v3216 = vlaneseq
        %v3217 = vshrl.u32 %v3216, 7
        %v3218 = vsub.s32 %v3215, %v3217
        %v3219 = vrot.slane %v3211, %v3218
        %v3221 = vunpack.c.l.s4 1983009808
        %v3222 = vunpack.c.0.s8 %v3221
        %v3223 = vlaneseq
        %v3224 = vshrl.u32 %v3223, 7
        %v3225 = vsub.s32 %v3222, %v3224
        %v3226 = vrot.slane %v3212, %v3225
        %v3227 = vcombine.low %v3171, %v3187
        %v3228 = vcombine.high %v3171, %v3187
        %v3230 = vunpack.c.l.s4 1934713408
        %v3231 = vunpack.c.0.s8 %v3230
        %v3232 = vlaneseq
        %v3233 = vshrl.u32 %v3232, 7
        %v3234 = vsub.s32 %v3231, %v3233
        %v3235 = vrot.slane %v3227, %v3234
        %v3237 = vunpack.c.l.s4 1934713408
        %v3238 = vunpack.c.0.s8 %v3237
        %v3239 = vlaneseq
        %v3240 = vshrl.u32 %v3239, 7
        %v3241 = vsub.s32 %v3238, %v3240
        %v3242 = vrot.slane %v3228, %v3241
        %v3243 = vcombine.low %v3178, %v3194
        %v3244 = vcombine.high %v3178, %v3194
        %v3246 = vunpack.c.l.s4 1934713408
        %v3247 = vunpack.c.0.s8 %v3246
        %v3248 = vlaneseq
        %v3249 = vshrl.u32 %v3248, 7
        %v3250 = vsub.s32 %v3247, %v3249
        %v3251 = vrot.slane %v3243, %v3250
        %v3253 = vunpack.c.l.s4 1934713408
        %v3254 = vunpack.c.0.s8 %v3253
        %v3255 = vlaneseq
        %v3256 = vshrl.u32 %v3255, 7
        %v3257 = vsub.s32 %v3254, %v3256
        %v3258 = vrot.slane %v3244, %v3257
        %v3259 = vcombine.low %v3203, %v3219
        %v3260 = vcombine.high %v3203, %v3219
        %v3262 = vunpack.c.l.s4 1934713408
        %v3263 = vunpack.c.0.s8 %v3262
        %v3264 = vlaneseq
        %v3265 = vshrl.u32 %v3264, 7
        %v3266 = vsub.s32 %v3263, %v3265
        %v3267 = vrot.slane %v3259, %v3266
        %v3269 = vunpack.c.l.s4 1934713408
        %v3270 = vunpack.c.0.s8 %v3269
        %v3271 = vlaneseq
        %v3272 = vshrl.u32 %v3271, 7
        %v3273 = vsub.s32 %v3270, %v3272
        %v3274 = vrot.slane %v3260, %v3273
        %v3275 = vcombine.low %v3210, %v3226
        %v3276 = vcombine.high %v3210, %v3226
        %v3278 = vunpack.c.l.s4 1934713408
        %v3279 = vunpack.c.0.s8 %v3278
        %v3280 = vlaneseq
        %v3281 = vshrl.u32 %v3280, 7
        %v3282 = vsub.s32 %v3279, %v3281
        %v3283 = vrot.slane %v3275, %v3282
        %v3285 = vunpack.c.l.s4 1934713408
        %v3286 = vunpack.c.0.s8 %v3285
        %v3287 = vlaneseq
        %v3288 = vshrl.u32 %v3287, 7
        %v3289 = vsub.s32 %v3286, %v3288
        %v3290 = vrot.slane %v3276, %v3289
        %v3291 = vcombine.low %v3235, %v3267
        %v3292 = vcombine.high %v3235, %v3267
        %v3293 = vcombine.low %v3242, %v3274
        %v3294 = vcombine.high %v3242, %v3274
        %v3295 = vcombine.low %v3251, %v3283
        %v3296 = vcombine.high %v3251, %v3283
        %v3297 = vcombine.low %v3258, %v3290
        %v3298 = vcombine.high %v3258, %v3290
        %v3299 = vcombine.low %v2067, %v2069
        %v3300 = vcombine.high %v2067, %v2069
        %v3302 = vunpack.c.l.s4 1983009808
        %v3303 = vunpack.c.0.s8 %v3302
        %v3304 = vlaneseq
        %v3305 = vshrl.u32 %v3304, 7
        %v3306 = vsub.s32 %v3303, %v3305
        %v3307 = vrot.slane %v3299, %v3306
        %v3309 = vunpack.c.l.s4 1983009808
        %v3310 = vunpack.c.0.s8 %v3309
        %v3311 = vlaneseq
        %v3312 = vshrl.u32 %v3311, 7
        %v3313 = vsub.s32 %v3310, %v3312
        %v3314 = vrot.slane %v3300, %v3313
        %v3315 = vcombine.low %v2068, %v2070
        %v3316 = vcombine.high %v2068, %v2070
        %v3318 = vunpack.c.l.s4 1983009808
        %v3319 = vunpack.c.0.s8 %v3318
        %v3320 = vlaneseq
        %v3321 = vshrl.u32 %v3320, 7
        %v3322 = vsub.s32 %v3319, %v3321
        %v3323 = vrot.slane %v3315, %v3322
        %v3325 = vunpack.c.l.s4 1983009808
        %v3326 = vunpack.c.0.s8 %v3325
        %v3327 = vlaneseq
        %v3328 = vshrl.u32 %v3327, 7
        %v3329 = vsub.s32 %v3326, %v3328
        %v3330 = vrot.slane %v3316, %v3329
        %v3331 = vcombine.low %v2071, %v2073
        %v3332 = vcombine.high %v2071, %v2073
        %v3334 = vunpack.c.l.s4 1983009808
        %v3335 = vunpack.c.0.s8 %v3334
        %v3336 = vlaneseq
        %v3337 = vshrl.u32 %v3336, 7
        %v3338 = vsub.s32 %v3335, %v3337
        %v3339 = vrot.slane %v3331, %v3338
        %v3341 = vunpack.c.l.s4 1983009808
        %v3342 = vunpack.c.0.s8 %v3341
        %v3343 = vlaneseq
        %v3344 = vshrl.u32 %v3343, 7
        %v3345 = vsub.s32 %v3342, %v3344
        %v3346 = vrot.slane %v3332, %v3345
        %v3347 = vcombine.low %v2072, %v2074
        %v3348 = vcombine.high %v2072, %v2074
        %v3350 = vunpack.c.l.s4 1983009808
        %v3351 = vunpack.c.0.s8 %v3350
        %v3352 = vlaneseq
        %v3353 = vshrl.u32 %v3352, 7
        %v3354 = vsub.s32 %v3351, %v3353
        %v3355 = vrot.slane %v3347, %v3354
        %v3357 = vunpack.c.l.s4 1983009808
        %v3358 = vunpack.c.0.s8 %v3357
        %v3359 = vlaneseq
        %v3360 = vshrl.u32 %v3359, 7
        %v3361 = vsub.s32 %v3358, %v3360
        %v3362 = vrot.slane %v3348, %v3361
        %v3363 = vcombine.low %v3307, %v3323
        %v3364 = vcombine.high %v3307, %v3323
        %v3366 = vunpack.c.l.s4 1934713408
        %v3367 = vunpack.c.0.s8 %v3366
        %v3368 = vlaneseq
        %v3369 = vshrl.u32 %v3368, 7
        %v3370 = vsub.s32 %v3367, %v3369
        %v3371 = vrot.slane %v3363, %v3370
        %v3373 = vunpack.c.l.s4 1934713408
        %v3374 = vunpack.c.0.s8 %v3373
        %v3375 = vlaneseq
        %v3376 = vshrl.u32 %v3375, 7
        %v3377 = vsub.s32 %v3374, %v3376
        %v3378 = vrot.slane %v3364, %v3377
        %v3379 = vcombine.low %v3314, %v3330
        %v3380 = vcombine.high %v3314, %v3330
        %v3382 = vunpack.c.l.s4 1934713408
        %v3383 = vunpack.c.0.s8 %v3382
        %v3384 = vlaneseq
        %v3385 = vshrl.u32 %v3384, 7
        %v3386 = vsub.s32 %v3383, %v3385
        %v3387 = vrot.slane %v3379, %v3386
        %v3389 = vunpack.c.l.s4 1934713408
        %v3390 = vunpack.c.0.s8 %v3389
        %v3391 = vlaneseq
        %v3392 = vshrl.u32 %v3391, 7
        %v3393 = vsub.s32 %v3390, %v3392
        %v3394 = vrot.slane %v3380, %v3393
        %v3395 = vcombine.low %v3339, %v3355
        %v3396 = vcombine.high %v3339, %v3355
        %v3398 = vunpack.c.l.s4 1934713408
        %v3399 = vunpack.c.0.s8 %v3398
        %v3400 = vlaneseq
        %v3401 = vshrl.u32 %v3400, 7
        %v3402 = vsub.s32 %v3399, %v3401
        %v3403 = vrot.slane %v3395, %v3402
        %v3405 = vunpack.c.l.s4 1934713408
        %v3406 = vunpack.c.0.s8 %v3405
        %v3407 = vlaneseq
        %v3408 = vshrl.u32 %v3407, 7
        %v3409 = vsub.s32 %v3406, %v3408
        %v3410 = vrot.slane %v3396, %v3409
        %v3411 = vcombine.low %v3346, %v3362
        %v3412 = vcombine.high %v3346, %v3362
        %v3414 = vunpack.c.l.s4 1934713408
        %v3415 = vunpack.c.0.s8 %v3414
        %v3416 = vlaneseq
        %v3417 = vshrl.u32 %v3416, 7
        %v3418 = vsub.s32 %v3415, %v3417
        %v3419 = vrot.slane %v3411, %v3418
        %v3421 = vunpack.c.l.s4 1934713408
        %v3422 = vunpack.c.0.s8 %v3421
        %v3423 = vlaneseq
        %v3424 = vshrl.u32 %v3423, 7
        %v3425 = vsub.s32 %v3422, %v3424
        %v3426 = vrot.slane %v3412, %v3425
        %v3427 = vcombine.low %v3371, %v3403
        %v3428 = vcombine.high %v3371, %v3403
        %v3429 = vcombine.low %v3378, %v3410
        %v3430 = vcombine.high %v3378, %v3410
        %v3431 = vcombine.low %v3387, %v3419
        %v3432 = vcombine.high %v3387, %v3419
        %v3433 = vcombine.low %v3394, %v3426
        %v3434 = vcombine.high %v3394, %v3426
        %v3435 = vcombine.low %v2271, %v2273
        %v3436 = vcombine.high %v2271, %v2273
        %v3438 = vunpack.c.l.s4 1983009808
        %v3439 = vunpack.c.0.s8 %v3438
        %v3440 = vlaneseq
        %v3441 = vshrl.u32 %v3440, 7
        %v3442 = vsub.s32 %v3439, %v3441
        %v3443 = vrot.slane %v3435, %v3442
        %v3445 = vunpack.c.l.s4 1983009808
        %v3446 = vunpack.c.0.s8 %v3445
        %v3447 = vlaneseq
        %v3448 = vshrl.u32 %v3447, 7
        %v3449 = vsub.s32 %v3446, %v3448
        %v3450 = vrot.slane %v3436, %v3449
        %v3451 = vcombine.low %v2272, %v2274
        %v3452 = vcombine.high %v2272, %v2274
        %v3454 = vunpack.c.l.s4 1983009808
        %v3455 = vunpack.c.0.s8 %v3454
        %v3456 = vlaneseq
        %v3457 = vshrl.u32 %v3456, 7
        %v3458 = vsub.s32 %v3455, %v3457
        %v3459 = vrot.slane %v3451, %v3458
        %v3461 = vunpack.c.l.s4 1983009808
        %v3462 = vunpack.c.0.s8 %v3461
        %v3463 = vlaneseq
        %v3464 = vshrl.u32 %v3463, 7
        %v3465 = vsub.s32 %v3462, %v3464
        %v3466 = vrot.slane %v3452, %v3465
        %v3467 = vcombine.low %v2275, %v2277
        %v3468 = vcombine.high %v2275, %v2277
        %v3470 = vunpack.c.l.s4 1983009808
        %v3471 = vunpack.c.0.s8 %v3470
        %v3472 = vlaneseq
        %v3473 = vshrl.u32 %v3472, 7
        %v3474 = vsub.s32 %v3471, %v3473
        %v3475 = vrot.slane %v3467, %v3474
        %v3477 = vunpack.c.l.s4 1983009808
        %v3478 = vunpack.c.0.s8 %v3477
        %v3479 = vlaneseq
        %v3480 = vshrl.u32 %v3479, 7
        %v3481 = vsub.s32 %v3478, %v3480
        %v3482 = vrot.slane %v3468, %v3481
        %v3483 = vcombine.low %v2276, %v2278
        %v3484 = vcombine.high %v2276, %v2278
        %v3486 = vunpack.c.l.s4 1983009808
        %v3487 = vunpack.c.0.s8 %v3486
        %v3488 = vlaneseq
        %v3489 = vshrl.u32 %v3488, 7
        %v3490 = vsub.s32 %v3487, %v3489
        %v3491 = vrot.slane %v3483, %v3490
        %v3493 = vunpack.c.l.s4 1983009808
        %v3494 = vunpack.c.0.s8 %v3493
        %v3495 = vlaneseq
        %v3496 = vshrl.u32 %v3495, 7
        %v3497 = vsub.s32 %v3494, %v3496
        %v3498 = vrot.slane %v3484, %v3497
        %v3499 = vcombine.low %v3443, %v3459
        %v3500 = vcombine.high %v3443, %v3459
        %v3502 = vunpack.c.l.s4 1934713408
        %v3503 = vunpack.c.0.s8 %v3502
        %v3504 = vlaneseq
        %v3505 = vshrl.u32 %v3504, 7
        %v3506 = vsub.s32 %v3503, %v3505
        %v3507 = vrot.slane %v3499, %v3506
        %v3509 = vunpack.c.l.s4 1934713408
        %v3510 = vunpack.c.0.s8 %v3509
        %v3511 = vlaneseq
        %v3512 = vshrl.u32 %v3511, 7
        %v3513 = vsub.s32 %v3510, %v3512
        %v3514 = vrot.slane %v3500, %v3513
        %v3515 = vcombine.low %v3450, %v3466
        %v3516 = vcombine.high %v3450, %v3466
        %v3518 = vunpack.c.l.s4 1934713408
        %v3519 = vunpack.c.0.s8 %v3518
        %v3520 = vlaneseq
        %v3521 = vshrl.u32 %v3520, 7
        %v3522 = vsub.s32 %v3519, %v3521
        %v3523 = vrot.slane %v3515, %v3522
        %v3525 = vunpack.c.l.s4 1934713408
        %v3526 = vunpack.c.0.s8 %v3525
        %v3527 = vlaneseq
        %v3528 = vshrl.u32 %v3527, 7
        %v3529 = vsub.s32 %v3526, %v3528
        %v3530 = vrot.slane %v3516, %v3529
        %v3531 = vcombine.low %v3475, %v3491
        %v3532 = vcombine.high %v3475, %v3491
        %v3534 = vunpack.c.l.s4 1934713408
        %v3535 = vunpack.c.0.s8 %v3534
        %v3536 = vlaneseq
        %v3537 = vshrl.u32 %v3536, 7
        %v3538 = vsub.s32 %v3535, %v3537
        %v3539 = vrot.slane %v3531, %v3538
        %v3541 = vunpack.c.l.s4 1934713408
        %v3542 = vunpack.c.0.s8 %v3541
        %v3543 = vlaneseq
        %v3544 = vshrl.u32 %v3543, 7
        %v3545 = vsub.s32 %v3542, %v3544
        %v3546 = vrot.slane %v3532, %v3545
        %v3547 = vcombine.low %v3482, %v3498
        %v3548 = vcombine.high %v3482, %v3498
        %v3550 = vunpack.c.l.s4 1934713408
        %v3551 = vunpack.c.0.s8 %v3550
        %v3552 = vlaneseq
        %v3553 = vshrl.u32 %v3552, 7
        %v3554 = vsub.s32 %v3551, %v3553
        %v3555 = vrot.slane %v3547, %v3554
        %v3557 = vunpack.c.l.s4 1934713408
        %v3558 = vunpack.c.0.s8 %v3557
        %v3559 = vlaneseq
        %v3560 = vshrl.u32 %v3559, 7
        %v3561 = vsub.s32 %v3558, %v3560
        %v3562 = vrot.slane %v3548, %v3561
        %v3563 = vcombine.low %v3507, %v3539
        %v3564 = vcombine.high %v3507, %v3539
        %v3565 = vcombine.low %v3514, %v3546
        %v3566 = vcombine.high %v3514, %v3546
        %v3567 = vcombine.low %v3523, %v3555
        %v3568 = vcombine.high %v3523, %v3555
        %v3569 = vcombine.low %v3530, %v3562
        %v3570 = vcombine.high %v3530, %v3562
        %v3571 = vcombine.low %v2475, %v2477
        %v3572 = vcombine.high %v2475, %v2477
        %v3574 = vunpack.c.l.s4 1983009808
        %v3575 = vunpack.c.0.s8 %v3574
        %v3576 = vlaneseq
        %v3577 = vshrl.u32 %v3576, 7
        %v3578 = vsub.s32 %v3575, %v3577
        %v3579 = vrot.slane %v3571, %v3578
        %v3581 = vunpack.c.l.s4 1983009808
        %v3582 = vunpack.c.0.s8 %v3581
        %v3583 = vlaneseq
        %v3584 = vshrl.u32 %v3583, 7
        %v3585 = vsub.s32 %v3582, %v3584
        %v3586 = vrot.slane %v3572, %v3585
        %v3587 = vcombine.low %v2476, %v2478
        %v3588 = vcombine.high %v2476, %v2478
        %v3590 = vunpack.c.l.s4 1983009808
        %v3591 = vunpack.c.0.s8 %v3590
        %v3592 = vlaneseq
        %v3593 = vshrl.u32 %v3592, 7
        %v3594 = vsub.s32 %v3591, %v3593
        %v3595 = vrot.slane %v3587, %v3594
        %v3597 = vunpack.c.l.s4 1983009808
        %v3598 = vunpack.c.0.s8 %v3597
        %v3599 = vlaneseq
        %v3600 = vshrl.u32 %v3599, 7
        %v3601 = vsub.s32 %v3598, %v3600
        %v3602 = vrot.slane %v3588, %v3601
        %v3603 = vcombine.low %v2479, %v2481
        %v3604 = vcombine.high %v2479, %v2481
        %v3606 = vunpack.c.l.s4 1983009808
        %v3607 = vunpack.c.0.s8 %v3606
        %v3608 = vlaneseq
        %v3609 = vshrl.u32 %v3608, 7
        %v3610 = vsub.s32 %v3607, %v3609
        %v3611 = vrot.slane %v3603, %v3610
        %v3613 = vunpack.c.l.s4 1983009808
        %v3614 = vunpack.c.0.s8 %v3613
        %v3615 = vlaneseq
        %v3616 = vshrl.u32 %v3615, 7
        %v3617 = vsub.s32 %v3614, %v3616
        %v3618 = vrot.slane %v3604, %v3617
        %v3619 = vcombine.low %v2480, %v2482
        %v3620 = vcombine.high %v2480, %v2482
        %v3622 = vunpack.c.l.s4 1983009808
        %v3623 = vunpack.c.0.s8 %v3622
        %v3624 = vlaneseq
        %v3625 = vshrl.u32 %v3624, 7
        %v3626 = vsub.s32 %v3623, %v3625
        %v3627 = vrot.slane %v3619, %v3626
        %v3629 = vunpack.c.l.s4 1983009808
        %v3630 = vunpack.c.0.s8 %v3629
        %v3631 = vlaneseq
        %v3632 = vshrl.u32 %v3631, 7
        %v3633 = vsub.s32 %v3630, %v3632
        %v3634 = vrot.slane %v3620, %v3633
        %v3635 = vcombine.low %v3579, %v3595
        %v3636 = vcombine.high %v3579, %v3595
        %v3638 = vunpack.c.l.s4 1934713408
        %v3639 = vunpack.c.0.s8 %v3638
        %v3640 = vlaneseq
        %v3641 = vshrl.u32 %v3640, 7
        %v3642 = vsub.s32 %v3639, %v3641
        %v3643 = vrot.slane %v3635, %v3642
        %v3645 = vunpack.c.l.s4 1934713408
        %v3646 = vunpack.c.0.s8 %v3645
        %v3647 = vlaneseq
        %v3648 = vshrl.u32 %v3647, 7
        %v3649 = vsub.s32 %v3646, %v3648
        %v3650 = vrot.slane %v3636, %v3649
        %v3651 = vcombine.low %v3586, %v3602
        %v3652 = vcombine.high %v3586, %v3602
        %v3654 = vunpack.c.l.s4 1934713408
        %v3655 = vunpack.c.0.s8 %v3654
        %v3656 = vlaneseq
        %v3657 = vshrl.u32 %v3656, 7
        %v3658 = vsub.s32 %v3655, %v3657
        %v3659 = vrot.slane %v3651, %v3658
        %v3661 = vunpack.c.l.s4 1934713408
        %v3662 = vunpack.c.0.s8 %v3661
        %v3663 = vlaneseq
        %v3664 = vshrl.u32 %v3663, 7
        %v3665 = vsub.s32 %v3662, %v3664
        %v3666 = vrot.slane %v3652, %v3665
        %v3667 = vcombine.low %v3611, %v3627
        %v3668 = vcombine.high %v3611, %v3627
        %v3670 = vunpack.c.l.s4 1934713408
        %v3671 = vunpack.c.0.s8 %v3670
        %v3672 = vlaneseq
        %v3673 = vshrl.u32 %v3672, 7
        %v3674 = vsub.s32 %v3671, %v3673
        %v3675 = vrot.slane %v3667, %v3674
        %v3677 = vunpack.c.l.s4 1934713408
        %v3678 = vunpack.c.0.s8 %v3677
        %v3679 = vlaneseq
        %v3680 = vshrl.u32 %v3679, 7
        %v3681 = vsub.s32 %v3678, %v3680
        %v3682 = vrot.slane %v3668, %v3681
        %v3683 = vcombine.low %v3618, %v3634
        %v3684 = vcombine.high %v3618, %v3634
        %v3686 = vunpack.c.l.s4 1934713408
        %v3687 = vunpack.c.0.s8 %v3686
        %v3688 = vlaneseq
        %v3689 = vshrl.u32 %v3688, 7
        %v3690 = vsub.s32 %v3687, %v3689
        %v3691 = vrot.slane %v3683, %v3690
        %v3693 = vunpack.c.l.s4 1934713408
        %v3694 = vunpack.c.0.s8 %v3693
        %v3695 = vlaneseq
        %v3696 = vshrl.u32 %v3695, 7
        %v3697 = vsub.s32 %v3694, %v3696
        %v3698 = vrot.slane %v3684, %v3697
        %v3699 = vcombine.low %v3643, %v3675
        %v3700 = vcombine.high %v3643, %v3675
        %v3701 = vcombine.low %v3650, %v3682
        %v3702 = vcombine.high %v3650, %v3682
        %v3703 = vcombine.low %v3659, %v3691
        %v3704 = vcombine.high %v3659, %v3691
        %v3705 = vcombine.low %v3666, %v3698
        %v3706 = vcombine.high %v3666, %v3698
        %v3707 = vcombine.low %v2679, %v2681
        %v3708 = vcombine.high %v2679, %v2681
        %v3710 = vunpack.c.l.s4 1983009808
        %v3711 = vunpack.c.0.s8 %v3710
        %v3712 = vlaneseq
        %v3713 = vshrl.u32 %v3712, 7
        %v3714 = vsub.s32 %v3711, %v3713
        %v3715 = vrot.slane %v3707, %v3714
        %v3717 = vunpack.c.l.s4 1983009808
        %v3718 = vunpack.c.0.s8 %v3717
        %v3719 = vlaneseq
        %v3720 = vshrl.u32 %v3719, 7
        %v3721 = vsub.s32 %v3718, %v3720
        %v3722 = vrot.slane %v3708, %v3721
        %v3723 = vcombine.low %v2680, %v2682
        %v3724 = vcombine.high %v2680, %v2682
        %v3726 = vunpack.c.l.s4 1983009808
        %v3727 = vunpack.c.0.s8 %v3726
        %v3728 = vlaneseq
        %v3729 = vshrl.u32 %v3728, 7
        %v3730 = vsub.s32 %v3727, %v3729
        %v3731 = vrot.slane %v3723, %v3730
        %v3733 = vunpack.c.l.s4 1983009808
        %v3734 = vunpack.c.0.s8 %v3733
        %v3735 = vlaneseq
        %v3736 = vshrl.u32 %v3735, 7
        %v3737 = vsub.s32 %v3734, %v3736
        %v3738 = vrot.slane %v3724, %v3737
        %v3739 = vcombine.low %v2683, %v2685
        %v3740 = vcombine.high %v2683, %v2685
        %v3742 = vunpack.c.l.s4 1983009808
        %v3743 = vunpack.c.0.s8 %v3742
        %v3744 = vlaneseq
        %v3745 = vshrl.u32 %v3744, 7
        %v3746 = vsub.s32 %v3743, %v3745
        %v3747 = vrot.slane %v3739, %v3746
        %v3749 = vunpack.c.l.s4 1983009808
        %v3750 = vunpack.c.0.s8 %v3749
        %v3751 = vlaneseq
        %v3752 = vshrl.u32 %v3751, 7
        %v3753 = vsub.s32 %v3750, %v3752
        %v3754 = vrot.slane %v3740, %v3753
        %v3755 = vcombine.low %v2684, %v2686
        %v3756 = vcombine.high %v2684, %v2686
        %v3758 = vunpack.c.l.s4 1983009808
        %v3759 = vunpack.c.0.s8 %v3758
        %v3760 = vlaneseq
        %v3761 = vshrl.u32 %v3760, 7
        %v3762 = vsub.s32 %v3759, %v3761
        %v3763 = vrot.slane %v3755, %v3762
        %v3765 = vunpack.c.l.s4 1983009808
        %v3766 = vunpack.c.0.s8 %v3765
        %v3767 = vlaneseq
        %v3768 = vshrl.u32 %v3767, 7
        %v3769 = vsub.s32 %v3766, %v3768
        %v3770 = vrot.slane %v3756, %v3769
        %v3771 = vcombine.low %v3715, %v3731
        %v3772 = vcombine.high %v3715, %v3731
        %v3774 = vunpack.c.l.s4 1934713408
        %v3775 = vunpack.c.0.s8 %v3774
        %v3776 = vlaneseq
        %v3777 = vshrl.u32 %v3776, 7
        %v3778 = vsub.s32 %v3775, %v3777
        %v3779 = vrot.slane %v3771, %v3778
        %v3781 = vunpack.c.l.s4 1934713408
        %v3782 = vunpack.c.0.s8 %v3781
        %v3783 = vlaneseq
        %v3784 = vshrl.u32 %v3783, 7
        %v3785 = vsub.s32 %v3782, %v3784
        %v3786 = vrot.slane %v3772, %v3785
        %v3787 = vcombine.low %v3722, %v3738
        %v3788 = vcombine.high %v3722, %v3738
        %v3790 = vunpack.c.l.s4 1934713408
        %v3791 = vunpack.c.0.s8 %v3790
        %v3792 = vlaneseq
        %v3793 = vshrl.u32 %v3792, 7
        %v3794 = vsub.s32 %v3791, %v3793
        %v3795 = vrot.slane %v3787, %v3794
        %v3797 = vunpack.c.l.s4 1934713408
        %v3798 = vunpack.c.0.s8 %v3797
        %v3799 = vlaneseq
        %v3800 = vshrl.u32 %v3799, 7
        %v3801 = vsub.s32 %v3798, %v3800
        %v3802 = vrot.slane %v3788, %v3801
        %v3803 = vcombine.low %v3747, %v3763
        %v3804 = vcombine.high %v3747, %v3763
        %v3806 = vunpack.c.l.s4 1934713408
        %v3807 = vunpack.c.0.s8 %v3806
        %v3808 = vlaneseq
        %v3809 = vshrl.u32 %v3808, 7
        %v3810 = vsub.s32 %v3807, %v3809
        %v3811 = vrot.slane %v3803, %v3810
        %v3813 = vunpack.c.l.s4 1934713408
        %v3814 = vunpack.c.0.s8 %v3813
        %v3815 = vlaneseq
        %v3816 = vshrl.u32 %v3815, 7
        %v3817 = vsub.s32 %v3814, %v3816
        %v3818 = vrot.slane %v3804, %v3817
        %v3819 = vcombine.low %v3754, %v3770
        %v3820 = vcombine.high %v3754, %v3770
        %v3822 = vunpack.c.l.s4 1934713408
        %v3823 = vunpack.c.0.s8 %v3822
        %v3824 = vlaneseq
        %v3825 = vshrl.u32 %v3824, 7
        %v3826 = vsub.s32 %v3823, %v3825
        %v3827 = vrot.slane %v3819, %v3826
        %v3829 = vunpack.c.l.s4 1934713408
        %v3830 = vunpack.c.0.s8 %v3829
        %v3831 = vlaneseq
        %v3832 = vshrl.u32 %v3831, 7
        %v3833 = vsub.s32 %v3830, %v3832
        %v3834 = vrot.slane %v3820, %v3833
        %v3835 = vcombine.low %v3779, %v3811
        %v3836 = vcombine.high %v3779, %v3811
        %v3837 = vcombine.low %v3786, %v3818
        %v3838 = vcombine.high %v3786, %v3818
        %v3839 = vcombine.low %v3795, %v3827
        %v3840 = vcombine.high %v3795, %v3827
        %v3841 = vcombine.low %v3802, %v3834
        %v3842 = vcombine.high %v3802, %v3834
        %v3843 = vcombine.low %v1299, %v1306
        %v3845 = vunpack.c.l.s4 1983009808
        %v3846 = vunpack.c.0.s8 %v3845
        %v3847 = vlaneseq
        %v3848 = vshrl.u32 %v3847, 7
        %v3849 = vsub.s32 %v3846, %v3848
        %v3850 = vrot.slane %v3843, %v3849
        %v3851 = vcombine.low %v1323, %v1324
        %v3853 = vunpack.c.l.s4 1983009808
        %v3854 = vunpack.c.0.s8 %v3853
        %v3855 = vlaneseq
        %v3856 = vshrl.u32 %v3855, 7
        %v3857 = vsub.s32 %v3854, %v3856
        %v3858 = vrot.slane %v3851, %v3857
        %v3859 = vcombine.low %v1315, %v1322
        %v3861 = vunpack.c.l.s4 1983009808
        %v3862 = vunpack.c.0.s8 %v3861
        %v3863 = vlaneseq
        %v3864 = vshrl.u32 %v3863, 7
        %v3865 = vsub.s32 %v3862, %v3864
        %v3866 = vrot.slane %v3859, %v3865
        %v3867 = vcombine.low %v1325, %v1326
        %v3869 = vunpack.c.l.s4 1983009808
        %v3870 = vunpack.c.0.s8 %v3869
        %v3871 = vlaneseq
        %v3872 = vshrl.u32 %v3871, 7
        %v3873 = vsub.s32 %v3870, %v3872
        %v3874 = vrot.slane %v3867, %v3873
        %v3875 = vcombine.low %v3850, %v3858
        %v3876 = vcombine.high %v3850, %v3858
        %v3878 = vunpack.c.l.s4 1934713408
        %v3879 = vunpack.c.0.s8 %v3878
        %v3880 = vlaneseq
        %v3881 = vshrl.u32 %v3880, 7
        %v3882 = vsub.s32 %v3879, %v3881
        %v3883 = vrot.slane %v3875, %v3882
        %v3885 = vunpack.c.l.s4 1934713408
        %v3886 = vunpack.c.0.s8 %v3885
        %v3887 = vlaneseq
        %v3888 = vshrl.u32 %v3887, 7
        %v3889 = vsub.s32 %v3886, %v3888
        %v3890 = vrot.slane %v3876, %v3889
        %v3891 = vcombine.low %v3866, %v3874
        %v3892 = vcombine.high %v3866, %v3874
        %v3894 = vunpack.c.l.s4 1934713408
        %v3895 = vunpack.c.0.s8 %v3894
        %v3896 = vlaneseq
        %v3897 = vshrl.u32 %v3896, 7
        %v3898 = vsub.s32 %v3895, %v3897
        %v3899 = vrot.slane %v3891, %v3898
        %v3901 = vunpack.c.l.s4 1934713408
        %v3902 = vunpack.c.0.s8 %v3901
        %v3903 = vlaneseq
        %v3904 = vshrl.u32 %v3903, 7
        %v3905 = vsub.s32 %v3902, %v3904
        %v3906 = vrot.slane %v3892, %v3905
        %v3907 = vcombine.low %v3883, %v3899
        %v3908 = vcombine.high %v3883, %v3899
        %v3909 = vcombine.low %v3890, %v3906
        %v3910 = vcombine.high %v3890, %v3906
        %v3911 = vcombine.low %v1503, %v1510
        %v3913 = vunpack.c.l.s4 1983009808
        %v3914 = vunpack.c.0.s8 %v3913
        %v3915 = vlaneseq
        %v3916 = vshrl.u32 %v3915, 7
        %v3917 = vsub.s32 %v3914, %v3916
        %v3918 = vrot.slane %v3911, %v3917
        %v3919 = vcombine.low %v1527, %v1528
        %v3921 = vunpack.c.l.s4 1983009808
        %v3922 = vunpack.c.0.s8 %v3921
        %v3923 = vlaneseq
        %v3924 = vshrl.u32 %v3923, 7
        %v3925 = vsub.s32 %v3922, %v3924
        %v3926 = vrot.slane %v3919, %v3925
        %v3927 = vcombine.low %v1519, %v1526
        %v3929 = vunpack.c.l.s4 1983009808
        %v3930 = vunpack.c.0.s8 %v3929
        %v3931 = vlaneseq
        %v3932 = vshrl.u32 %v3931, 7
        %v3933 = vsub.s32 %v3930, %v3932
        %v3934 = vrot.slane %v3927, %v3933
        %v3935 = vcombine.low %v1529, %v1530
        %v3937 = vunpack.c.l.s4 1983009808
        %v3938 = vunpack.c.0.s8 %v3937
        %v3939 = vlaneseq
        %v3940 = vshrl.u32 %v3939, 7
        %v3941 = vsub.s32 %v3938, %v3940
        %v3942 = vrot.slane %v3935, %v3941
        %v3943 = vcombine.low %v3918, %v3926
        %v3944 = vcombine.high %v3918, %v3926
        %v3946 = vunpack.c.l.s4 1934713408
        %v3947 = vunpack.c.0.s8 %v3946
        %v3948 = vlaneseq
        %v3949 = vshrl.u32 %v3948, 7
        %v3950 = vsub.s32 %v3947, %v3949
        %v3951 = vrot.slane %v3943, %v3950
        %v3953 = vunpack.c.l.s4 1934713408
        %v3954 = vunpack.c.0.s8 %v3953
        %v3955 = vlaneseq
        %v3956 = vshrl.u32 %v3955, 7
        %v3957 = vsub.s32 %v3954, %v3956
        %v3958 = vrot.slane %v3944, %v3957
        %v3959 = vcombine.low %v3934, %v3942
        %v3960 = vcombine.high %v3934, %v3942
        %v3962 = vunpack.c.l.s4 1934713408
        %v3963 = vunpack.c.0.s8 %v3962
        %v3964 = vlaneseq
        %v3965 = vshrl.u32 %v3964, 7
        %v3966 = vsub.s32 %v3963, %v3965
        %v3967 = vrot.slane %v3959, %v3966
        %v3969 = vunpack.c.l.s4 1934713408
        %v3970 = vunpack.c.0.s8 %v3969
        %v3971 = vlaneseq
        %v3972 = vshrl.u32 %v3971, 7
        %v3973 = vsub.s32 %v3970, %v3972
        %v3974 = vrot.slane %v3960, %v3973
        %v3975 = vcombine.low %v3951, %v3967
        %v3976 = vcombine.high %v3951, %v3967
        %v3977 = vcombine.low %v3958, %v3974
        %v3978 = vcombine.high %v3958, %v3974
        %v3979 = vcombine.low %v1707, %v1714
        %v3981 = vunpack.c.l.s4 1983009808
        %v3982 = vunpack.c.0.s8 %v3981
        %v3983 = vlaneseq
        %v3984 = vshrl.u32 %v3983, 7
        %v3985 = vsub.s32 %v3982, %v3984
        %v3986 = vrot.slane %v3979, %v3985
        %v3987 = vcombine.low %v1731, %v1732
        %v3989 = vunpack.c.l.s4 1983009808
        %v3990 = vunpack.c.0.s8 %v3989
        %v3991 = vlaneseq
        %v3992 = vshrl.u32 %v3991, 7
        %v3993 = vsub.s32 %v3990, %v3992
        %v3994 = vrot.slane %v3987, %v3993
        %v3995 = vcombine.low %v1723, %v1730
        %v3997 = vunpack.c.l.s4 1983009808
        %v3998 = vunpack.c.0.s8 %v3997
        %v3999 = vlaneseq
        %v4000 = vshrl.u32 %v3999, 7
        %v4001 = vsub.s32 %v3998, %v4000
        %v4002 = vrot.slane %v3995, %v4001
        %v4003 = vcombine.low %v1733, %v1734
        %v4005 = vunpack.c.l.s4 1983009808
        %v4006 = vunpack.c.0.s8 %v4005
        %v4007 = vlaneseq
        %v4008 = vshrl.u32 %v4007, 7
        %v4009 = vsub.s32 %v4006, %v4008
        %v4010 = vrot.slane %v4003, %v4009
        %v4011 = vcombine.low %v3986, %v3994
        %v4012 = vcombine.high %v3986, %v3994
        %v4014 = vunpack.c.l.s4 1934713408
        %v4015 = vunpack.c.0.s8 %v4014
        %v4016 = vlaneseq
        %v4017 = vshrl.u32 %v4016, 7
        %v4018 = vsub.s32 %v4015, %v4017
        %v4019 = vrot.slane %v4011, %v4018
        %v4021 = vunpack.c.l.s4 1934713408
        %v4022 = vunpack.c.0.s8 %v4021
        %v4023 = vlaneseq
        %v4024 = vshrl.u32 %v4023, 7
        %v4025 = vsub.s32 %v4022, %v4024
        %v4026 = vrot.slane %v4012, %v4025
        %v4027 = vcombine.low %v4002, %v4010
        %v4028 = vcombine.high %v4002, %v4010
        %v4030 = vunpack.c.l.s4 1934713408
        %v4031 = vunpack.c.0.s8 %v4030
        %v4032 = vlaneseq
        %v4033 = vshrl.u32 %v4032, 7
        %v4034 = vsub.s32 %v4031, %v4033
        %v4035 = vrot.slane %v4027, %v4034
        %v4037 = vunpack.c.l.s4 1934713408
        %v4038 = vunpack.c.0.s8 %v4037
        %v4039 = vlaneseq
        %v4040 = vshrl.u32 %v4039, 7
        %v4041 = vsub.s32 %v4038, %v4040
        %v4042 = vrot.slane %v4028, %v4041
        %v4043 = vcombine.low %v4019, %v4035
        %v4044 = vcombine.high %v4019, %v4035
        %v4045 = vcombine.low %v4026, %v4042
        %v4046 = vcombine.high %v4026, %v4042
        %v4047 = vcombine.low %v1911, %v1918
        %v4049 = vunpack.c.l.s4 1983009808
        %v4050 = vunpack.c.0.s8 %v4049
        %v4051 = vlaneseq
        %v4052 = vshrl.u32 %v4051, 7
        %v4053 = vsub.s32 %v4050, %v4052
        %v4054 = vrot.slane %v4047, %v4053
        %v4055 = vcombine.low %v1935, %v1936
        %v4057 = vunpack.c.l.s4 1983009808
        %v4058 = vunpack.c.0.s8 %v4057
        %v4059 = vlaneseq
        %v4060 = vshrl.u32 %v4059, 7
        %v4061 = vsub.s32 %v4058, %v4060
        %v4062 = vrot.slane %v4055, %v4061
        %v4063 = vcombine.low %v1927, %v1934
        %v4065 = vunpack.c.l.s4 1983009808
        %v4066 = vunpack.c.0.s8 %v4065
        %v4067 = vlaneseq
        %v4068 = vshrl.u32 %v4067, 7
        %v4069 = vsub.s32 %v4066, %v4068
        %v4070 = vrot.slane %v4063, %v4069
        %v4071 = vcombine.low %v1937, %v1938
        %v4073 = vunpack.c.l.s4 1983009808
        %v4074 = vunpack.c.0.s8 %v4073
        %v4075 = vlaneseq
        %v4076 = vshrl.u32 %v4075, 7
        %v4077 = vsub.s32 %v4074, %v4076
        %v4078 = vrot.slane %v4071, %v4077
        %v4079 = vcombine.low %v4054, %v4062
        %v4080 = vcombine.high %v4054, %v4062
        %v4082 = vunpack.c.l.s4 1934713408
        %v4083 = vunpack.c.0.s8 %v4082
        %v4084 = vlaneseq
        %v4085 = vshrl.u32 %v4084, 7
        %v4086 = vsub.s32 %v4083, %v4085
        %v4087 = vrot.slane %v4079, %v4086
        %v4089 = vunpack.c.l.s4 1934713408
        %v4090 = vunpack.c.0.s8 %v4089
        %v4091 = vlaneseq
        %v4092 = vshrl.u32 %v4091, 7
        %v4093 = vsub.s32 %v4090, %v4092
        %v4094 = vrot.slane %v4080, %v4093
        %v4095 = vcombine.low %v4070, %v4078
        %v4096 = vcombine.high %v4070, %v4078
        %v4098 = vunpack.c.l.s4 1934713408
        %v4099 = vunpack.c.0.s8 %v4098
        %v4100 = vlaneseq
        %v4101 = vshrl.u32 %v4100, 7
        %v4102 = vsub.s32 %v4099, %v4101
        %v4103 = vrot.slane %v4095, %v4102
        %v4105 = vunpack.c.l.s4 1934713408
        %v4106 = vunpack.c.0.s8 %v4105
        %v4107 = vlaneseq
        %v4108 = vshrl.u32 %v4107, 7
        %v4109 = vsub.s32 %v4106, %v4108
        %v4110 = vrot.slane %v4096, %v4109
        %v4111 = vcombine.low %v4087, %v4103
        %v4112 = vcombine.high %v4087, %v4103
        %v4113 = vcombine.low %v4094, %v4110
        %v4114 = vcombine.high %v4094, %v4110
        %v4115 = vcombine.low %v2115, %v2122
        %v4117 = vunpack.c.l.s4 1983009808
        %v4118 = vunpack.c.0.s8 %v4117
        %v4119 = vlaneseq
        %v4120 = vshrl.u32 %v4119, 7
        %v4121 = vsub.s32 %v4118, %v4120
        %v4122 = vrot.slane %v4115, %v4121
        %v4123 = vcombine.low %v2139, %v2140
        %v4125 = vunpack.c.l.s4 1983009808
        %v4126 = vunpack.c.0.s8 %v4125
        %v4127 = vlaneseq
        %v4128 = vshrl.u32 %v4127, 7
        %v4129 = vsub.s32 %v4126, %v4128
        %v4130 = vrot.slane %v4123, %v4129
        %v4131 = vcombine.low %v2131, %v2138
        %v4133 = vunpack.c.l.s4 1983009808
        %v4134 = vunpack.c.0.s8 %v4133
        %v4135 = vlaneseq
        %v4136 = vshrl.u32 %v4135, 7
        %v4137 = vsub.s32 %v4134, %v4136
        %v4138 = vrot.slane %v4131, %v4137
        %v4139 = vcombine.low %v2141, %v2142
        %v4141 = vunpack.c.l.s4 1983009808
        %v4142 = vunpack.c.0.s8 %v4141
        %v4143 = vlaneseq
        %v4144 = vshrl.u32 %v4143, 7
        %v4145 = vsub.s32 %v4142, %v4144
        %v4146 = vrot.slane %v4139, %v4145
        %v4147 = vcombine.low %v4122, %v4130
        %v4148 = vcombine.high %v4122, %v4130
        %v4150 = vunpack.c.l.s4 1934713408
        %v4151 = vunpack.c.0.s8 %v4150
        %v4152 = vlaneseq
        %v4153 = vshrl.u32 %v4152, 7
        %v4154 = vsub.s32 %v4151, %v4153
        %v4155 = vrot.slane %v4147, %v4154
        %v4157 = vunpack.c.l.s4 1934713408
        %v4158 = vunpack.c.0.s8 %v4157
        %v4159 = vlaneseq
        %v4160 = vshrl.u32 %v4159, 7
        %v4161 = vsub.s32 %v4158, %v4160
        %v4162 = vrot.slane %v4148, %v4161
        %v4163 = vcombine.low %v4138, %v4146
        %v4164 = vcombine.high %v4138, %v4146
        %v4166 = vunpack.c.l.s4 1934713408
        %v4167 = vunpack.c.0.s8 %v4166
        %v4168 = vlaneseq
        %v4169 = vshrl.u32 %v4168, 7
        %v4170 = vsub.s32 %v4167, %v4169
        %v4171 = vrot.slane %v4163, %v4170
        %v4173 = vunpack.c.l.s4 1934713408
        %v4174 = vunpack.c.0.s8 %v4173
        %v4175 = vlaneseq
        %v4176 = vshrl.u32 %v4175, 7
        %v4177 = vsub.s32 %v4174, %v4176
        %v4178 = vrot.slane %v4164, %v4177
        %v4179 = vcombine.low %v4155, %v4171
        %v4180 = vcombine.high %v4155, %v4171
        %v4181 = vcombine.low %v4162, %v4178
        %v4182 = vcombine.high %v4162, %v4178
        %v4183 = vcombine.low %v2319, %v2326
        %v4185 = vunpack.c.l.s4 1983009808
        %v4186 = vunpack.c.0.s8 %v4185
        %v4187 = vlaneseq
        %v4188 = vshrl.u32 %v4187, 7
        %v4189 = vsub.s32 %v4186, %v4188
        %v4190 = vrot.slane %v4183, %v4189
        %v4191 = vcombine.low %v2343, %v2344
        %v4193 = vunpack.c.l.s4 1983009808
        %v4194 = vunpack.c.0.s8 %v4193
        %v4195 = vlaneseq
        %v4196 = vshrl.u32 %v4195, 7
        %v4197 = vsub.s32 %v4194, %v4196
        %v4198 = vrot.slane %v4191, %v4197
        %v4199 = vcombine.low %v2335, %v2342
        %v4201 = vunpack.c.l.s4 1983009808
        %v4202 = vunpack.c.0.s8 %v4201
        %v4203 = vlaneseq
        %v4204 = vshrl.u32 %v4203, 7
        %v4205 = vsub.s32 %v4202, %v4204
        %v4206 = vrot.slane %v4199, %v4205
        %v4207 = vcombine.low %v2345, %v2346
        %v4209 = vunpack.c.l.s4 1983009808
        %v4210 = vunpack.c.0.s8 %v4209
        %v4211 = vlaneseq
        %v4212 = vshrl.u32 %v4211, 7
        %v4213 = vsub.s32 %v4210, %v4212
        %v4214 = vrot.slane %v4207, %v4213
        %v4215 = vcombine.low %v4190, %v4198
        %v4216 = vcombine.high %v4190, %v4198
        %v4218 = vunpack.c.l.s4 1934713408
        %v4219 = vunpack.c.0.s8 %v4218
        %v4220 = vlaneseq
        %v4221 = vshrl.u32 %v4220, 7
        %v4222 = vsub.s32 %v4219, %v4221
        %v4223 = vrot.slane %v4215, %v4222
        %v4225 = vunpack.c.l.s4 1934713408
        %v4226 = vunpack.c.0.s8 %v4225
        %v4227 = vlaneseq
        %v4228 = vshrl.u32 %v4227, 7
        %v4229 = vsub.s32 %v4226, %v4228
        %v4230 = vrot.slane %v4216, %v4229
        %v4231 = vcombine.low %v4206, %v4214
        %v4232 = vcombine.high %v4206, %v4214
        %v4234 = vunpack.c.l.s4 1934713408
        %v4235 = vunpack.c.0.s8 %v4234
        %v4236 = vlaneseq
        %v4237 = vshrl.u32 %v4236, 7
        %v4238 = vsub.s32 %v4235, %v4237
        %v4239 = vrot.slane %v4231, %v4238
        %v4241 = vunpack.c.l.s4 1934713408
        %v4242 = vunpack.c.0.s8 %v4241
        %v4243 = vlaneseq
        %v4244 = vshrl.u32 %v4243, 7
        %v4245 = vsub.s32 %v4242, %v4244
        %v4246 = vrot.slane %v4232, %v4245
        %v4247 = vcombine.low %v4223, %v4239
        %v4248 = vcombine.high %v4223, %v4239
        %v4249 = vcombine.low %v4230, %v4246
        %v4250 = vcombine.high %v4230, %v4246
        %v4251 = vcombine.low %v2523, %v2530
        %v4253 = vunpack.c.l.s4 1983009808
        %v4254 = vunpack.c.0.s8 %v4253
        %v4255 = vlaneseq
        %v4256 = vshrl.u32 %v4255, 7
        %v4257 = vsub.s32 %v4254, %v4256
        %v4258 = vrot.slane %v4251, %v4257
        %v4259 = vcombine.low %v2547, %v2548
        %v4261 = vunpack.c.l.s4 1983009808
        %v4262 = vunpack.c.0.s8 %v4261
        %v4263 = vlaneseq
        %v4264 = vshrl.u32 %v4263, 7
        %v4265 = vsub.s32 %v4262, %v4264
        %v4266 = vrot.slane %v4259, %v4265
        %v4267 = vcombine.low %v2539, %v2546
        %v4269 = vunpack.c.l.s4 1983009808
        %v4270 = vunpack.c.0.s8 %v4269
        %v4271 = vlaneseq
        %v4272 = vshrl.u32 %v4271, 7
        %v4273 = vsub.s32 %v4270, %v4272
        %v4274 = vrot.slane %v4267, %v4273
        %v4275 = vcombine.low %v2549, %v2550
        %v4277 = vunpack.c.l.s4 1983009808
        %v4278 = vunpack.c.0.s8 %v4277
        %v4279 = vlaneseq
        %v4280 = vshrl.u32 %v4279, 7
        %v4281 = vsub.s32 %v4278, %v4280
        %v4282 = vrot.slane %v4275, %v4281
        %v4283 = vcombine.low %v4258, %v4266
        %v4284 = vcombine.high %v4258, %v4266
        %v4286 = vunpack.c.l.s4 1934713408
        %v4287 = vunpack.c.0.s8 %v4286
        %v4288 = vlaneseq
        %v4289 = vshrl.u32 %v4288, 7
        %v4290 = vsub.s32 %v4287, %v4289
        %v4291 = vrot.slane %v4283, %v4290
        %v4293 = vunpack.c.l.s4 1934713408
        %v4294 = vunpack.c.0.s8 %v4293
        %v4295 = vlaneseq
        %v4296 = vshrl.u32 %v4295, 7
        %v4297 = vsub.s32 %v4294, %v4296
        %v4298 = vrot.slane %v4284, %v4297
        %v4299 = vcombine.low %v4274, %v4282
        %v4300 = vcombine.high %v4274, %v4282
        %v4302 = vunpack.c.l.s4 1934713408
        %v4303 = vunpack.c.0.s8 %v4302
        %v4304 = vlaneseq
        %v4305 = vshrl.u32 %v4304, 7
        %v4306 = vsub.s32 %v4303, %v4305
        %v4307 = vrot.slane %v4299, %v4306
        %v4309 = vunpack.c.l.s4 1934713408
        %v4310 = vunpack.c.0.s8 %v4309
        %v4311 = vlaneseq
        %v4312 = vshrl.u32 %v4311, 7
        %v4313 = vsub.s32 %v4310, %v4312
        %v4314 = vrot.slane %v4300, %v4313
        %v4315 = vcombine.low %v4291, %v4307
        %v4316 = vcombine.high %v4291, %v4307
        %v4317 = vcombine.low %v4298, %v4314
        %v4318 = vcombine.high %v4298, %v4314
        %v4319 = vcombine.low %v2727, %v2734
        %v4321 = vunpack.c.l.s4 1983009808
        %v4322 = vunpack.c.0.s8 %v4321
        %v4323 = vlaneseq
        %v4324 = vshrl.u32 %v4323, 7
        %v4325 = vsub.s32 %v4322, %v4324
        %v4326 = vrot.slane %v4319, %v4325
        %v4327 = vcombine.low %v2751, %v2752
        %v4329 = vunpack.c.l.s4 1983009808
        %v4330 = vunpack.c.0.s8 %v4329
        %v4331 = vlaneseq
        %v4332 = vshrl.u32 %v4331, 7
        %v4333 = vsub.s32 %v4330, %v4332
        %v4334 = vrot.slane %v4327, %v4333
        %v4335 = vcombine.low %v2743, %v2750
        %v4337 = vunpack.c.l.s4 1983009808
        %v4338 = vunpack.c.0.s8 %v4337
        %v4339 = vlaneseq
        %v4340 = vshrl.u32 %v4339, 7
        %v4341 = vsub.s32 %v4338, %v4340
        %v4342 = vrot.slane %v4335, %v4341
        %v4343 = vcombine.low %v2753, %v2754
        %v4345 = vunpack.c.l.s4 1983009808
        %v4346 = vunpack.c.0.s8 %v4345
        %v4347 = vlaneseq
        %v4348 = vshrl.u32 %v4347, 7
        %v4349 = vsub.s32 %v4346, %v4348
        %v4350 = vrot.slane %v4343, %v4349
        %v4351 = vcombine.low %v4326, %v4334
        %v4352 = vcombine.high %v4326, %v4334
        %v4354 = vunpack.c.l.s4 1934713408
        %v4355 = vunpack.c.0.s8 %v4354
        %v4356 = vlaneseq
        %v4357 = vshrl.u32 %v4356, 7
        %v4358 = vsub.s32 %v4355, %v4357
        %v4359 = vrot.slane %v4351, %v4358
        %v4361 = vunpack.c.l.s4 1934713408
        %v4362 = vunpack.c.0.s8 %v4361
        %v4363 = vlaneseq
        %v4364 = vshrl.u32 %v4363, 7
        %v4365 = vsub.s32 %v4362, %v4364
        %v4366 = vrot.slane %v4352, %v4365
        %v4367 = vcombine.low %v4342, %v4350
        %v4368 = vcombine.high %v4342, %v4350
        %v4370 = vunpack.c.l.s4 1934713408
        %v4371 = vunpack.c.0.s8 %v4370
        %v4372 = vlaneseq
        %v4373 = vshrl.u32 %v4372, 7
        %v4374 = vsub.s32 %v4371, %v4373
        %v4375 = vrot.slane %v4367, %v4374
        %v4377 = vunpack.c.l.s4 1934713408
        %v4378 = vunpack.c.0.s8 %v4377
        %v4379 = vlaneseq
        %v4380 = vshrl.u32 %v4379, 7
        %v4381 = vsub.s32 %v4378, %v4380
        %v4382 = vrot.slane %v4368, %v4381
        %v4383 = vcombine.low %v4359, %v4375
        %v4384 = vcombine.high %v4359, %v4375
        %v4385 = vcombine.low %v4366, %v4382
        %v4386 = vcombine.high %v4366, %v4382
        %vm4387 = vcmask 261120
        %v4389 = vsel %vm4387, %v2883, 0
        %v4392 = vsel %vm4387, %v3019, 0
        %v4395 = vsel %vm4387, %v3155, 0
        %v4398 = vsel %vm4387, %v3291, 0
        %v4401 = vsel %vm4387, %v3427, 0
        %v4404 = vsel %vm4387, %v3563, 0
        %v4407 = vsel %vm4387, %v3699, 0
        %v4410 = vsel %vm4387, %v3835, 0
        %v4413 = vsel %vm4387, %v2887, 0
        %v4416 = vsel %vm4387, %v3023, 0
        %v4419 = vsel %vm4387, %v3159, 0
        %v4422 = vsel %vm4387, %v3295, 0
        %v4425 = vsel %vm4387, %v3431, 0
        %v4428 = vsel %vm4387, %v3567, 0
        %v4431 = vsel %vm4387, %v3703, 0
        %v4434 = vsel %vm4387, %v3839, 0
        %4436 = vmatprep.subr.mxu0 0.0
        %4437 = vmatpush1.xpose.msra.mxu0 %v4413
        %4438 = vmatprep.subr.mxu0 0.0
        %4439 = vmatpush1.xpose.msra.mxu0 %v4416
        %4440 = vmatprep.subr.mxu0 0.0
        %4441 = vmatpush1.xpose.msra.mxu0 %v4419
        %4442 = vmatprep.subr.mxu0 0.0
        %4443 = vmatpush1.xpose.msra.mxu0 %v4422
        %4444 = vmatprep.subr.mxu0 0.0
        %4445 = vmatpush1.xpose.msra.mxu0 %v4425
        %4446 = vmatprep.subr.mxu0 0.0
        %4447 = vmatpush1.xpose.msra.mxu0 %v4428
        %4448 = vmatprep.subr.mxu0 0.0
        %4449 = vmatpush1.xpose.msra.mxu0 %v4431
        %4450 = vmatprep.subr.mxu0 0.0
        %4451 = vmatpush1.xpose.msra.mxu0 %v4434
        %4452 = vmatprep.subr.mxu0 0.0
        %4453 = vmatpush1.xpose.msra.mxu0 0.0
        %4454 = vmatprep.subr.mxu0 0.0
        %4455 = vmatpush1.xpose.msra.mxu0 0.0
        %4456 = vmatprep.subr.mxu0 0.0
        %4457 = vmatpush1.xpose.msra.mxu0 0.0
        %4458 = vmatprep.subr.mxu0 0.0
        %4459 = vmatpush1.xpose.msra.mxu0 0.0
        %4460 = vmatprep.subr.mxu0 0.0
        %4461 = vmatpush1.xpose.msra.mxu0 0.0
        %4462 = vmatprep.subr.mxu0 0.0
        %4463 = vmatpush1.xpose.msra.mxu0 0.0
        %4464 = vmatprep.subr.mxu0 0.0
        %4465 = vmatpush1.xpose.msra.mxu0 0.0
        %4466 = vmatprep.subr.mxu0 0.0
        %4467 = vmatpush1.xpose.msra.mxu0 0.0
        %4468 = vmatprep.subr.mxu0 0.0
        %4469 = vmatpush1.xpose.msra.mxu0 0.0
        %4470 = vmatprep.subr.mxu0 0.0
        %4471 = vmatpush1.xpose.msra.mxu0 0.0
        %4472 = vmatprep.subr.mxu0 0.0
        %4473 = vmatpush1.xpose.msra.mxu0 0.0
        %4474 = vmatprep.subr.mxu0 0.0
        %4475 = vmatpush1.xpose.msra.mxu0 0.0
        %4476 = vmatprep.subr.mxu0 0.0
        %4477 = vmatpush1.xpose.msra.mxu0 0.0
        %4478 = vmatprep.subr.mxu0 0.0
        %4479 = vmatpush1.xpose.msra.mxu0 0.0
        %4480 = vmatprep.subr.mxu0 0.0
        %4481 = vmatpush1.xpose.msra.mxu0 0.0
        %4482 = vmatprep.subr.mxu0 0.0
        %4483 = vmatpush1.xpose.msra.mxu0 0.0
        %4484 = vmatprep.subr.mxu0 0.0
        %4485 = vmatpush1.xpose.msra.mxu0 0.0
        %4486 = vmatprep.subr.mxu0 0.0
        %4487 = vmatpush1.xpose.msra.mxu0 0.0
        %4488 = vmatprep.subr.mxu0 0.0
        %4489 = vmatpush1.xpose.msra.mxu0 0.0
        %4490 = vmatprep.subr.mxu0 0.0
        %4491 = vmatpush1.xpose.msra.mxu0 0.0
        %4492 = vmatprep.subr.mxu0 0.0
        %4493 = vmatpush1.xpose.msra.mxu0 0.0
        %4494 = vmatprep.subr.mxu0 0.0
        %4495 = vmatpush1.xpose.msra.mxu0 0.0
        %4496 = vmatprep.subr.mxu0 0.0
        %4497 = vmatpush1.xpose.msra.mxu0 0.0
        %4498 = vmatprep.subr.mxu0 0.0
        %4499 = vmatpush1.xpose.msra.mxu0 0.0
        %4500 = vmatprep.mubr.f32.mxu0 0.0
        %4501 = vmatmul.mubr.f32.gmra.mrb[0].mxu0 %v4389
        %v4502 = vpop.f32.mrb[0].mxu0
        %v4503 = vadd.f32 0.0, %v4502
        %v4504 = vpop.f32.mrb[0].mxu0
        %4505 = vmatprep.mubr.f32.mxu0 0.0
        %4506 = vmatmul.mubr.f32.gmra.mrb[0].mxu0 %v4392
        %v4507 = vpop.f32.mrb[0].mxu0
        %v4508 = vadd.f32 0.0, %v4507
        %v4509 = vpop.f32.mrb[0].mxu0
        %4510 = vmatprep.mubr.f32.mxu0 0.0
        %4511 = vmatmul.mubr.f32.gmra.mrb[0].mxu0 %v4395
        %v4512 = vpop.f32.mrb[0].mxu0
        %v4513 = vadd.f32 0.0, %v4512
        %v4514 = vpop.f32.mrb[0].mxu0
        %4515 = vmatprep.mubr.f32.mxu0 0.0
        %4516 = vmatmul.mubr.f32.gmra.mrb[0].mxu0 %v4398
        %v4517 = vpop.f32.mrb[0].mxu0
        %v4518 = vadd.f32 0.0, %v4517
        %v4519 = vpop.f32.mrb[0].mxu0
        %4520 = vmatprep.mubr.f32.mxu0 0.0
        %4521 = vmatmul.mubr.f32.gmra.mrb[0].mxu0 %v4401
        %v4522 = vpop.f32.mrb[0].mxu0
        %v4523 = vadd.f32 0.0, %v4522
        %v4524 = vpop.f32.mrb[0].mxu0
        %4525 = vmatprep.mubr.f32.mxu0 0.0
        %4526 = vmatmul.mubr.f32.gmra.mrb[0].mxu0 %v4404
        %v4527 = vpop.f32.mrb[0].mxu0
        %v4528 = vadd.f32 0.0, %v4527
        %v4529 = vpop.f32.mrb[0].mxu0
        %4530 = vmatprep.mubr.f32.mxu0 0.0
        %4531 = vmatmul.mubr.f32.gmra.mrb[0].mxu0 %v4407
        %v4532 = vpop.f32.mrb[0].mxu0
        %v4533 = vadd.f32 0.0, %v4532
        %v4534 = vpop.f32.mrb[0].mxu0
        %4535 = vmatprep.mubr.f32.mxu0 0.0
        %4536 = vmatmul.mubr.f32.gmra.mrb[0].mxu0 %v4410
        %v4537 = vpop.f32.mrb[0].mxu0
        %v4538 = vadd.f32 0.0, %v4537
        %v4539 = vpop.f32.mrb[0].mxu0
        %4540 = vdwg.mxu0
        %v4542 = vsel %vm4387, %v2884, 0
        %v4545 = vsel %vm4387, %v3020, 0
        %v4548 = vsel %vm4387, %v3156, 0
        %v4551 = vsel %vm4387, %v3292, 0
        %v4554 = vsel %vm4387, %v3428, 0
        %v4557 = vsel %vm4387, %v3564, 0
        %v4560 = vsel %vm4387, %v3700, 0
        %v4563 = vsel %vm4387, %v3836, 0
        %v4566 = vsel %vm4387, %v2888, 0
        %v4569 = vsel %vm4387, %v3024, 0
        %v4572 = vsel %vm4387, %v3160, 0
        %v4575 = vsel %vm4387, %v3296, 0
        %v4578 = vsel %vm4387, %v3432, 0
        %v4581 = vsel %vm4387, %v3568, 0
        %v4584 = vsel %vm4387, %v3704, 0
        %v4587 = vsel %vm4387, %v3840, 0
        %4589 = vmatprep.subr.mxu0 0.0
        %4590 = vmatpush1.xpose.msra.mxu0 %v4566
        %4591 = vmatprep.subr.mxu0 0.0
        %4592 = vmatpush1.xpose.msra.mxu0 %v4569
        %4593 = vmatprep.subr.mxu0 0.0
        %4594 = vmatpush1.xpose.msra.mxu0 %v4572
        %4595 = vmatprep.subr.mxu0 0.0
        %4596 = vmatpush1.xpose.msra.mxu0 %v4575
        %4597 = vmatprep.subr.mxu0 0.0
        %4598 = vmatpush1.xpose.msra.mxu0 %v4578
        %4599 = vmatprep.subr.mxu0 0.0
        %4600 = vmatpush1.xpose.msra.mxu0 %v4581
        %4601 = vmatprep.subr.mxu0 0.0
        %4602 = vmatpush1.xpose.msra.mxu0 %v4584
        %4603 = vmatprep.subr.mxu0 0.0
        %4604 = vmatpush1.xpose.msra.mxu0 %v4587
        %4605 = vmatprep.subr.mxu0 0.0
        %4606 = vmatpush1.xpose.msra.mxu0 0.0
        %4607 = vmatprep.subr.mxu0 0.0
        %4608 = vmatpush1.xpose.msra.mxu0 0.0
        %4609 = vmatprep.subr.mxu0 0.0
        %4610 = vmatpush1.xpose.msra.mxu0 0.0
        %4611 = vmatprep.subr.mxu0 0.0
        %4612 = vmatpush1.xpose.msra.mxu0 0.0
        %4613 = vmatprep.subr.mxu0 0.0
        %4614 = vmatpush1.xpose.msra.mxu0 0.0
        %4615 = vmatprep.subr.mxu0 0.0
        %4616 = vmatpush1.xpose.msra.mxu0 0.0
        %4617 = vmatprep.subr.mxu0 0.0
        %4618 = vmatpush1.xpose.msra.mxu0 0.0
        %4619 = vmatprep.subr.mxu0 0.0
        %4620 = vmatpush1.xpose.msra.mxu0 0.0
        %4621 = vmatprep.subr.mxu0 0.0
        %4622 = vmatpush1.xpose.msra.mxu0 0.0
        %4623 = vmatprep.subr.mxu0 0.0
        %4624 = vmatpush1.xpose.msra.mxu0 0.0
        %4625 = vmatprep.subr.mxu0 0.0
        %4626 = vmatpush1.xpose.msra.mxu0 0.0
        %4627 = vmatprep.subr.mxu0 0.0
        %4628 = vmatpush1.xpose.msra.mxu0 0.0
        %4629 = vmatprep.subr.mxu0 0.0
        %4630 = vmatpush1.xpose.msra.mxu0 0.0
        %4631 = vmatprep.subr.mxu0 0.0
        %4632 = vmatpush1.xpose.msra.mxu0 0.0
        %4633 = vmatprep.subr.mxu0 0.0
        %4634 = vmatpush1.xpose.msra.mxu0 0.0
        %4635 = vmatprep.subr.mxu0 0.0
        %4636 = vmatpush1.xpose.msra.mxu0 0.0
        %4637 = vmatprep.subr.mxu0 0.0
        %4638 = vmatpush1.xpose.msra.mxu0 0.0
        %4639 = vmatprep.subr.mxu0 0.0
        %4640 = vmatpush1.xpose.msra.mxu0 0.0
        %4641 = vmatprep.subr.mxu0 0.0
        %4642 = vmatpush1.xpose.msra.mxu0 0.0
        %4643 = vmatprep.subr.mxu0 0.0
        %4644 = vmatpush1.xpose.msra.mxu0 0.0
        %4645 = vmatprep.subr.mxu0 0.0
        %4646 = vmatpush1.xpose.msra.mxu0 0.0
        %4647 = vmatprep.subr.mxu0 0.0
        %4648 = vmatpush1.xpose.msra.mxu0 0.0
        %4649 = vmatprep.subr.mxu0 0.0
        %4650 = vmatpush1.xpose.msra.mxu0 0.0
        %4651 = vmatprep.subr.mxu0 0.0
        %4652 = vmatpush1.xpose.msra.mxu0 0.0
        %4653 = vmatprep.mubr.f32.mxu0 0.0
        %4654 = vmatmul.mubr.f32.gmra.mrb[0].mxu0 %v4542
        %v4655 = vpop.f32.mrb[0].mxu0
        %v4656 = vadd.f32 0.0, %v4655
        %v4657 = vpop.f32.mrb[0].mxu0
        %4658 = vmatprep.mubr.f32.mxu0 0.0
        %4659 = vmatmul.mubr.f32.gmra.mrb[0].mxu0 %v4545
        %v4660 = vpop.f32.mrb[0].mxu0
        %v4661 = vadd.f32 0.0, %v4660
        %v4662 = vpop.f32.mrb[0].mxu0
        %4663 = vmatprep.mubr.f32.mxu0 0.0
        %4664 = vmatmul.mubr.f32.gmra.mrb[0].mxu0 %v4548
        %v4665 = vpop.f32.mrb[0].mxu0
        %v4666 = vadd.f32 0.0, %v4665
        %v4667 = vpop.f32.mrb[0].mxu0
        %4668 = vmatprep.mubr.f32.mxu0 0.0
        %4669 = vmatmul.mubr.f32.gmra.mrb[0].mxu0 %v4551
        %v4670 = vpop.f32.mrb[0].mxu0
        %v4671 = vadd.f32 0.0, %v4670
        %v4672 = vpop.f32.mrb[0].mxu0
        %4673 = vmatprep.mubr.f32.mxu0 0.0
        %4674 = vmatmul.mubr.f32.gmra.mrb[0].mxu0 %v4554
        %v4675 = vpop.f32.mrb[0].mxu0
        %v4676 = vadd.f32 0.0, %v4675
        %v4677 = vpop.f32.mrb[0].mxu0
        %4678 = vmatprep.mubr.f32.mxu0 0.0
        %4679 = vmatmul.mubr.f32.gmra.mrb[0].mxu0 %v4557
        %v4680 = vpop.f32.mrb[0].mxu0
        %v4681 = vadd.f32 0.0, %v4680
        %v4682 = vpop.f32.mrb[0].mxu0
        %4683 = vmatprep.mubr.f32.mxu0 0.0
        %4684 = vmatmul.mubr.f32.gmra.mrb[0].mxu0 %v4560
        %v4685 = vpop.f32.mrb[0].mxu0
        %v4686 = vadd.f32 0.0, %v4685
        %v4687 = vpop.f32.mrb[0].mxu0
        %4688 = vmatprep.mubr.f32.mxu0 0.0
        %4689 = vmatmul.mubr.f32.gmra.mrb[0].mxu0 %v4563
        %v4690 = vpop.f32.mrb[0].mxu0
        %v4691 = vadd.f32 0.0, %v4690
        %v4692 = vpop.f32.mrb[0].mxu0
        %4693 = vdwg.mxu0
        %v4695 = vsel %vm4387, %v2885, 0
        %v4698 = vsel %vm4387, %v3021, 0
        %v4701 = vsel %vm4387, %v3157, 0
        %v4704 = vsel %vm4387, %v3293, 0
        %v4707 = vsel %vm4387, %v3429, 0
        %v4710 = vsel %vm4387, %v3565, 0
        %v4713 = vsel %vm4387, %v3701, 0
        %v4716 = vsel %vm4387, %v3837, 0
        %v4719 = vsel %vm4387, %v2889, 0
        %v4722 = vsel %vm4387, %v3025, 0
        %v4725 = vsel %vm4387, %v3161, 0
        %v4728 = vsel %vm4387, %v3297, 0
        %v4731 = vsel %vm4387, %v3433, 0
        %v4734 = vsel %vm4387, %v3569, 0
        %v4737 = vsel %vm4387, %v3705, 0
        %v4740 = vsel %vm4387, %v3841, 0
        %4742 = vmatprep.subr.mxu0 0.0
        %4743 = vmatpush1.xpose.msra.mxu0 %v4719
        %4744 = vmatprep.subr.mxu0 0.0
        %4745 = vmatpush1.xpose.msra.mxu0 %v4722
        %4746 = vmatprep.subr.mxu0 0.0
        %4747 = vmatpush1.xpose.msra.mxu0 %v4725
        %4748 = vmatprep.subr.mxu0 0.0
        %4749 = vmatpush1.xpose.msra.mxu0 %v4728
        %4750 = vmatprep.subr.mxu0 0.0
        %4751 = vmatpush1.xpose.msra.mxu0 %v4731
        %4752 = vmatprep.subr.mxu0 0.0
        %4753 = vmatpush1.xpose.msra.mxu0 %v4734
        %4754 = vmatprep.subr.mxu0 0.0
        %4755 = vmatpush1.xpose.msra.mxu0 %v4737
        %4756 = vmatprep.subr.mxu0 0.0
        %4757 = vmatpush1.xpose.msra.mxu0 %v4740
        %4758 = vmatprep.subr.mxu0 0.0
        %4759 = vmatpush1.xpose.msra.mxu0 0.0
        %4760 = vmatprep.subr.mxu0 0.0
        %4761 = vmatpush1.xpose.msra.mxu0 0.0
        %4762 = vmatprep.subr.mxu0 0.0
        %4763 = vmatpush1.xpose.msra.mxu0 0.0
        %4764 = vmatprep.subr.mxu0 0.0
        %4765 = vmatpush1.xpose.msra.mxu0 0.0
        %4766 = vmatprep.subr.mxu0 0.0
        %4767 = vmatpush1.xpose.msra.mxu0 0.0
        %4768 = vmatprep.subr.mxu0 0.0
        %4769 = vmatpush1.xpose.msra.mxu0 0.0
        %4770 = vmatprep.subr.mxu0 0.0
        %4771 = vmatpush1.xpose.msra.mxu0 0.0
        %4772 = vmatprep.subr.mxu0 0.0
        %4773 = vmatpush1.xpose.msra.mxu0 0.0
        %4774 = vmatprep.subr.mxu0 0.0
        %4775 = vmatpush1.xpose.msra.mxu0 0.0
        %4776 = vmatprep.subr.mxu0 0.0
        %4777 = vmatpush1.xpose.msra.mxu0 0.0
        %4778 = vmatprep.subr.mxu0 0.0
        %4779 = vmatpush1.xpose.msra.mxu0 0.0
        %4780 = vmatprep.subr.mxu0 0.0
        %4781 = vmatpush1.xpose.msra.mxu0 0.0
        %4782 = vmatprep.subr.mxu0 0.0
        %4783 = vmatpush1.xpose.msra.mxu0 0.0
        %4784 = vmatprep.subr.mxu0 0.0
        %4785 = vmatpush1.xpose.msra.mxu0 0.0
        %4786 = vmatprep.subr.mxu0 0.0
        %4787 = vmatpush1.xpose.msra.mxu0 0.0
        %4788 = vmatprep.subr.mxu0 0.0
        %4789 = vmatpush1.xpose.msra.mxu0 0.0
        %4790 = vmatprep.subr.mxu0 0.0
        %4791 = vmatpush1.xpose.msra.mxu0 0.0
        %4792 = vmatprep.subr.mxu0 0.0
        %4793 = vmatpush1.xpose.msra.mxu0 0.0
        %4794 = vmatprep.subr.mxu0 0.0
        %4795 = vmatpush1.xpose.msra.mxu0 0.0
        %4796 = vmatprep.subr.mxu0 0.0
        %4797 = vmatpush1.xpose.msra.mxu0 0.0
        %4798 = vmatprep.subr.mxu0 0.0
        %4799 = vmatpush1.xpose.msra.mxu0 0.0
        %4800 = vmatprep.subr.mxu0 0.0
        %4801 = vmatpush1.xpose.msra.mxu0 0.0
        %4802 = vmatprep.subr.mxu0 0.0
        %4803 = vmatpush1.xpose.msra.mxu0 0.0
        %4804 = vmatprep.subr.mxu0 0.0
        %4805 = vmatpush1.xpose.msra.mxu0 0.0
        %4806 = vmatprep.mubr.f32.mxu0 0.0
        %4807 = vmatmul.mubr.f32.gmra.mrb[0].mxu0 %v4695
        %v4808 = vpop.f32.mrb[0].mxu0
        %v4809 = vadd.f32 0.0, %v4808
        %v4810 = vpop.f32.mrb[0].mxu0
        %4811 = vmatprep.mubr.f32.mxu0 0.0
        %4812 = vmatmul.mubr.f32.gmra.mrb[0].mxu0 %v4698
        %v4813 = vpop.f32.mrb[0].mxu0
        %v4814 = vadd.f32 0.0, %v4813
        %v4815 = vpop.f32.mrb[0].mxu0
        %4816 = vmatprep.mubr.f32.mxu0 0.0
        %4817 = vmatmul.mubr.f32.gmra.mrb[0].mxu0 %v4701
        %v4818 = vpop.f32.mrb[0].mxu0
        %v4819 = vadd.f32 0.0, %v4818
        %v4820 = vpop.f32.mrb[0].mxu0
        %4821 = vmatprep.mubr.f32.mxu0 0.0
        %4822 = vmatmul.mubr.f32.gmra.mrb[0].mxu0 %v4704
        %v4823 = vpop.f32.mrb[0].mxu0
        %v4824 = vadd.f32 0.0, %v4823
        %v4825 = vpop.f32.mrb[0].mxu0
        %4826 = vmatprep.mubr.f32.mxu0 0.0
        %4827 = vmatmul.mubr.f32.gmra.mrb[0].mxu0 %v4707
        %v4828 = vpop.f32.mrb[0].mxu0
        %v4829 = vadd.f32 0.0, %v4828
        %v4830 = vpop.f32.mrb[0].mxu0
        %4831 = vmatprep.mubr.f32.mxu0 0.0
        %4832 = vmatmul.mubr.f32.gmra.mrb[0].mxu0 %v4710
        %v4833 = vpop.f32.mrb[0].mxu0
        %v4834 = vadd.f32 0.0, %v4833
        %v4835 = vpop.f32.mrb[0].mxu0
        %4836 = vmatprep.mubr.f32.mxu0 0.0
        %4837 = vmatmul.mubr.f32.gmra.mrb[0].mxu0 %v4713
        %v4838 = vpop.f32.mrb[0].mxu0
        %v4839 = vadd.f32 0.0, %v4838
        %v4840 = vpop.f32.mrb[0].mxu0
        %4841 = vmatprep.mubr.f32.mxu0 0.0
        %4842 = vmatmul.mubr.f32.gmra.mrb[0].mxu0 %v4716
        %v4843 = vpop.f32.mrb[0].mxu0
        %v4844 = vadd.f32 0.0, %v4843
        %v4845 = vpop.f32.mrb[0].mxu0
        %4846 = vdwg.mxu0
        %v4848 = vsel %vm4387, %v2886, 0
        %v4851 = vsel %vm4387, %v3022, 0
        %v4854 = vsel %vm4387, %v3158, 0
        %v4857 = vsel %vm4387, %v3294, 0
        %v4860 = vsel %vm4387, %v3430, 0
        %v4863 = vsel %vm4387, %v3566, 0
        %v4866 = vsel %vm4387, %v3702, 0
        %v4869 = vsel %vm4387, %v3838, 0
        %v4872 = vsel %vm4387, %v2890, 0
        %v4875 = vsel %vm4387, %v3026, 0
        %v4878 = vsel %vm4387, %v3162, 0
        %v4881 = vsel %vm4387, %v3298, 0
        %v4884 = vsel %vm4387, %v3434, 0
        %v4887 = vsel %vm4387, %v3570, 0
        %v4890 = vsel %vm4387, %v3706, 0
        %v4893 = vsel %vm4387, %v3842, 0
        %4895 = vmatprep.subr.mxu0 0.0
        %4896 = vmatpush1.xpose.msra.mxu0 %v4872
        %4897 = vmatprep.subr.mxu0 0.0
        %4898 = vmatpush1.xpose.msra.mxu0 %v4875
        %4899 = vmatprep.subr.mxu0 0.0
        %4900 = vmatpush1.xpose.msra.mxu0 %v4878
        %4901 = vmatprep.subr.mxu0 0.0
        %4902 = vmatpush1.xpose.msra.mxu0 %v4881
        %4903 = vmatprep.subr.mxu0 0.0
        %4904 = vmatpush1.xpose.msra.mxu0 %v4884
        %4905 = vmatprep.subr.mxu0 0.0
        %4906 = vmatpush1.xpose.msra.mxu0 %v4887
        %4907 = vmatprep.subr.mxu0 0.0
        %4908 = vmatpush1.xpose.msra.mxu0 %v4890
        %4909 = vmatprep.subr.mxu0 0.0
        %4910 = vmatpush1.xpose.msra.mxu0 %v4893
        %4911 = vmatprep.subr.mxu0 0.0
        %4912 = vmatpush1.xpose.msra.mxu0 0.0
        %4913 = vmatprep.subr.mxu0 0.0
        %4914 = vmatpush1.xpose.msra.mxu0 0.0
        %4915 = vmatprep.subr.mxu0 0.0
        %4916 = vmatpush1.xpose.msra.mxu0 0.0
        %4917 = vmatprep.subr.mxu0 0.0
        %4918 = vmatpush1.xpose.msra.mxu0 0.0
        %4919 = vmatprep.subr.mxu0 0.0
        %4920 = vmatpush1.xpose.msra.mxu0 0.0
        %4921 = vmatprep.subr.mxu0 0.0
        %4922 = vmatpush1.xpose.msra.mxu0 0.0
        %4923 = vmatprep.subr.mxu0 0.0
        %4924 = vmatpush1.xpose.msra.mxu0 0.0
        %4925 = vmatprep.subr.mxu0 0.0
        %4926 = vmatpush1.xpose.msra.mxu0 0.0
        %4927 = vmatprep.subr.mxu0 0.0
        %4928 = vmatpush1.xpose.msra.mxu0 0.0
        %4929 = vmatprep.subr.mxu0 0.0
        %4930 = vmatpush1.xpose.msra.mxu0 0.0
        %4931 = vmatprep.subr.mxu0 0.0
        %4932 = vmatpush1.xpose.msra.mxu0 0.0
        %4933 = vmatprep.subr.mxu0 0.0
        %4934 = vmatpush1.xpose.msra.mxu0 0.0
        %4935 = vmatprep.subr.mxu0 0.0
        %4936 = vmatpush1.xpose.msra.mxu0 0.0
        %4937 = vmatprep.subr.mxu0 0.0
        %4938 = vmatpush1.xpose.msra.mxu0 0.0
        %4939 = vmatprep.subr.mxu0 0.0
        %4940 = vmatpush1.xpose.msra.mxu0 0.0
        %4941 = vmatprep.subr.mxu0 0.0
        %4942 = vmatpush1.xpose.msra.mxu0 0.0
        %4943 = vmatprep.subr.mxu0 0.0
        %4944 = vmatpush1.xpose.msra.mxu0 0.0
        %4945 = vmatprep.subr.mxu0 0.0
        %4946 = vmatpush1.xpose.msra.mxu0 0.0
        %4947 = vmatprep.subr.mxu0 0.0
        %4948 = vmatpush1.xpose.msra.mxu0 0.0
        %4949 = vmatprep.subr.mxu0 0.0
        %4950 = vmatpush1.xpose.msra.mxu0 0.0
        %4951 = vmatprep.subr.mxu0 0.0
        %4952 = vmatpush1.xpose.msra.mxu0 0.0
        %4953 = vmatprep.subr.mxu0 0.0
        %4954 = vmatpush1.xpose.msra.mxu0 0.0
        %4955 = vmatprep.subr.mxu0 0.0
        %4956 = vmatpush1.xpose.msra.mxu0 0.0
        %4957 = vmatprep.subr.mxu0 0.0
        %4958 = vmatpush1.xpose.msra.mxu0 0.0
        %4959 = vmatprep.mubr.f32.mxu0 0.0
        %4960 = vmatmul.mubr.f32.gmra.mrb[0].mxu0 %v4848
        %v4961 = vpop.f32.mrb[0].mxu0
        %v4962 = vadd.f32 0.0, %v4961
        %v4963 = vpop.f32.mrb[0].mxu0
        %4964 = vmatprep.mubr.f32.mxu0 0.0
        %4965 = vmatmul.mubr.f32.gmra.mrb[0].mxu0 %v4851
        %v4966 = vpop.f32.mrb[0].mxu0
        %v4967 = vadd.f32 0.0, %v4966
        %v4968 = vpop.f32.mrb[0].mxu0
        %4969 = vmatprep.mubr.f32.mxu0 0.0
        %4970 = vmatmul.mubr.f32.gmra.mrb[0].mxu0 %v4854
        %v4971 = vpop.f32.mrb[0].mxu0
        %v4972 = vadd.f32 0.0, %v4971
        %v4973 = vpop.f32.mrb[0].mxu0
        %4974 = vmatprep.mubr.f32.mxu0 0.0
        %4975 = vmatmul.mubr.f32.gmra.mrb[0].mxu0 %v4857
        %v4976 = vpop.f32.mrb[0].mxu0
        %v4977 = vadd.f32 0.0, %v4976
        %v4978 = vpop.f32.mrb[0].mxu0
        %4979 = vmatprep.mubr.f32.mxu0 0.0
        %4980 = vmatmul.mubr.f32.gmra.mrb[0].mxu0 %v4860
        %v4981 = vpop.f32.mrb[0].mxu0
        %v4982 = vadd.f32 0.0, %v4981
        %v4983 = vpop.f32.mrb[0].mxu0
        %4984 = vmatprep.mubr.f32.mxu0 0.0
        %4985 = vmatmul.mubr.f32.gmra.mrb[0].mxu0 %v4863
        %v4986 = vpop.f32.mrb[0].mxu0
        %v4987 = vadd.f32 0.0, %v4986
        %v4988 = vpop.f32.mrb[0].mxu0
        %4989 = vmatprep.mubr.f32.mxu0 0.0
        %4990 = vmatmul.mubr.f32.gmra.mrb[0].mxu0 %v4866
        %v4991 = vpop.f32.mrb[0].mxu0
        %v4992 = vadd.f32 0.0, %v4991
        %v4993 = vpop.f32.mrb[0].mxu0
        %4994 = vmatprep.mubr.f32.mxu0 0.0
        %4995 = vmatmul.mubr.f32.gmra.mrb[0].mxu0 %v4869
        %v4996 = vpop.f32.mrb[0].mxu0
        %v4997 = vadd.f32 0.0, %v4996
        %v4998 = vpop.f32.mrb[0].mxu0
        %4999 = vdwg.mxu0
        %vm5000 = vcmask 523264
        %v5001 = vsel %vm5000, %v4503, -inf
        %5002 = vmax.xlane.f32.xlu0 %v5001
        %v5003 = vpop.xlane.xlu0 %5002
        %v5004 = vsel %vm5000, %v4508, -inf
        %5005 = vmax.xlane.f32.xlu0 %v5004
        %v5006 = vpop.xlane.xlu0 %5005
        %v5007 = vsel %vm5000, %v4513, -inf
        %5008 = vmax.xlane.f32.xlu0 %v5007
        %v5009 = vpop.xlane.xlu0 %5008
        %v5010 = vsel %vm5000, %v4518, -inf
        %5011 = vmax.xlane.f32.xlu0 %v5010
        %v5012 = vpop.xlane.xlu0 %5011
        %v5013 = vsel %vm5000, %v4523, -inf
        %5014 = vmax.xlane.f32.xlu0 %v5013
        %v5015 = vpop.xlane.xlu0 %5014
        %v5016 = vsel %vm5000, %v4528, -inf
        %5017 = vmax.xlane.f32.xlu0 %v5016
        %v5018 = vpop.xlane.xlu0 %5017
        %v5019 = vsel %vm5000, %v4533, -inf
        %5020 = vmax.xlane.f32.xlu0 %v5019
        %v5021 = vpop.xlane.xlu0 %5020
        %v5022 = vsel %vm5000, %v4538, -inf
        %5023 = vmax.xlane.f32.xlu0 %v5022
        %v5024 = vpop.xlane.xlu0 %5023
        %v5025 = vsel %vm5000, %v4656, -inf
        %5026 = vmax.xlane.f32.xlu0 %v5025
        %v5027 = vpop.xlane.xlu0 %5026
        %v5028 = vsel %vm5000, %v4661, -inf
        %5029 = vmax.xlane.f32.xlu0 %v5028
        %v5030 = vpop.xlane.xlu0 %5029
        %v5031 = vsel %vm5000, %v4666, -inf
        %5032 = vmax.xlane.f32.xlu0 %v5031
        %v5033 = vpop.xlane.xlu0 %5032
        %v5034 = vsel %vm5000, %v4671, -inf
        %5035 = vmax.xlane.f32.xlu0 %v5034
        %v5036 = vpop.xlane.xlu0 %5035
        %v5037 = vsel %vm5000, %v4676, -inf
        %5038 = vmax.xlane.f32.xlu0 %v5037
        %v5039 = vpop.xlane.xlu0 %5038
        %v5040 = vsel %vm5000, %v4681, -inf
        %5041 = vmax.xlane.f32.xlu0 %v5040
        %v5042 = vpop.xlane.xlu0 %5041
        %v5043 = vsel %vm5000, %v4686, -inf
        %5044 = vmax.xlane.f32.xlu0 %v5043
        %v5045 = vpop.xlane.xlu0 %5044
        %v5046 = vsel %vm5000, %v4691, -inf
        %5047 = vmax.xlane.f32.xlu0 %v5046
        %v5048 = vpop.xlane.xlu0 %5047
        %v5049 = vsel %vm5000, %v4809, -inf
        %5050 = vmax.xlane.f32.xlu0 %v5049
        %v5051 = vpop.xlane.xlu0 %5050
        %v5052 = vsel %vm5000, %v4814, -inf
        %5053 = vmax.xlane.f32.xlu0 %v5052
        %v5054 = vpop.xlane.xlu0 %5053
        %v5055 = vsel %vm5000, %v4819, -inf
        %5056 = vmax.xlane.f32.xlu0 %v5055
        %v5057 = vpop.xlane.xlu0 %5056
        %v5058 = vsel %vm5000, %v4824, -inf
        %5059 = vmax.xlane.f32.xlu0 %v5058
        %v5060 = vpop.xlane.xlu0 %5059
        %v5061 = vsel %vm5000, %v4829, -inf
        %5062 = vmax.xlane.f32.xlu0 %v5061
        %v5063 = vpop.xlane.xlu0 %5062
        %v5064 = vsel %vm5000, %v4834, -inf
        %5065 = vmax.xlane.f32.xlu0 %v5064
        %v5066 = vpop.xlane.xlu0 %5065
        %v5067 = vsel %vm5000, %v4839, -inf
        %5068 = vmax.xlane.f32.xlu0 %v5067
        %v5069 = vpop.xlane.xlu0 %5068
        %v5070 = vsel %vm5000, %v4844, -inf
        %5071 = vmax.xlane.f32.xlu0 %v5070
        %v5072 = vpop.xlane.xlu0 %5071
        %v5073 = vsel %vm5000, %v4962, -inf
        %5074 = vmax.xlane.f32.xlu0 %v5073
        %v5075 = vpop.xlane.xlu0 %5074
        %v5076 = vsel %vm5000, %v4967, -inf
        %5077 = vmax.xlane.f32.xlu0 %v5076
        %v5078 = vpop.xlane.xlu0 %5077
        %v5079 = vsel %vm5000, %v4972, -inf
        %5080 = vmax.xlane.f32.xlu0 %v5079
        %v5081 = vpop.xlane.xlu0 %5080
        %v5082 = vsel %vm5000, %v4977, -inf
        %5083 = vmax.xlane.f32.xlu0 %v5082
        %v5084 = vpop.xlane.xlu0 %5083
        %v5085 = vsel %vm5000, %v4982, -inf
        %5086 = vmax.xlane.f32.xlu0 %v5085
        %v5087 = vpop.xlane.xlu0 %5086
        %v5088 = vsel %vm5000, %v4987, -inf
        %5089 = vmax.xlane.f32.xlu0 %v5088
        %v5090 = vpop.xlane.xlu0 %5089
        %v5091 = vsel %vm5000, %v4992, -inf
        %5092 = vmax.xlane.f32.xlu0 %v5091
        %v5093 = vpop.xlane.xlu0 %5092
        %v5094 = vsel %vm5000, %v4997, -inf
        %5095 = vmax.xlane.f32.xlu0 %v5094
        %v5096 = vpop.xlane.xlu0 %5095
        %v5097 = vsub.f32 %v4503, %v5003
        %v5098 = vsub.f32 %v4508, %v5006
        %v5099 = vsub.f32 %v4513, %v5009
        %v5100 = vsub.f32 %v4518, %v5012
        %v5101 = vsub.f32 %v4523, %v5015
        %v5102 = vsub.f32 %v4528, %v5018
        %v5103 = vsub.f32 %v4533, %v5021
        %v5104 = vsub.f32 %v4538, %v5024
        %v5105 = vsub.f32 %v4656, %v5027
        %v5106 = vsub.f32 %v4661, %v5030
        %v5107 = vsub.f32 %v4666, %v5033
        %v5108 = vsub.f32 %v4671, %v5036
        %v5109 = vsub.f32 %v4676, %v5039
        %v5110 = vsub.f32 %v4681, %v5042
        %v5111 = vsub.f32 %v4686, %v5045
        %v5112 = vsub.f32 %v4691, %v5048
        %v5113 = vsub.f32 %v4809, %v5051
        %v5114 = vsub.f32 %v4814, %v5054
        %v5115 = vsub.f32 %v4819, %v5057
        %v5116 = vsub.f32 %v4824, %v5060
        %v5117 = vsub.f32 %v4829, %v5063
        %v5118 = vsub.f32 %v4834, %v5066
        %v5119 = vsub.f32 %v4839, %v5069
        %v5120 = vsub.f32 %v4844, %v5072
        %v5121 = vsub.f32 %v4962, %v5075
        %v5122 = vsub.f32 %v4967, %v5078
        %v5123 = vsub.f32 %v4972, %v5081
        %v5124 = vsub.f32 %v4977, %v5084
        %v5125 = vsub.f32 %v4982, %v5087
        %v5126 = vsub.f32 %v4987, %v5090
        %v5127 = vsub.f32 %v4992, %v5093
        %v5128 = vsub.f32 %v4997, %v5096
        %v5129 = vmul.f32 %v5097, 1.442695
        %v5130 = vpow.pop %v5129
        %v5131 = vmul.f32 %v5098, 1.442695
        %v5132 = vpow.pop %v5131
        %v5133 = vmul.f32 %v5099, 1.442695
        %v5134 = vpow.pop %v5133
        %v5135 = vmul.f32 %v5100, 1.442695
        %v5136 = vpow.pop %v5135
        %v5137 = vmul.f32 %v5101, 1.442695
        %v5138 = vpow.pop %v5137
        %v5139 = vmul.f32 %v5102, 1.442695
        %v5140 = vpow.pop %v5139
        %v5141 = vmul.f32 %v5103, 1.442695
        %v5142 = vpow.pop %v5141
        %v5143 = vmul.f32 %v5104, 1.442695
        %v5144 = vpow.pop %v5143
        %v5145 = vmul.f32 %v5105, 1.442695
        %v5146 = vpow.pop %v5145
        %v5147 = vmul.f32 %v5106, 1.442695
        %v5148 = vpow.pop %v5147
        %v5149 = vmul.f32 %v5107, 1.442695
        %v5150 = vpow.pop %v5149
        %v5151 = vmul.f32 %v5108, 1.442695
        %v5152 = vpow.pop %v5151
        %v5153 = vmul.f32 %v5109, 1.442695
        %v5154 = vpow.pop %v5153
        %v5155 = vmul.f32 %v5110, 1.442695
        %v5156 = vpow.pop %v5155
        %v5157 = vmul.f32 %v5111, 1.442695
        %v5158 = vpow.pop %v5157
        %v5159 = vmul.f32 %v5112, 1.442695
        %v5160 = vpow.pop %v5159
        %v5161 = vmul.f32 %v5113, 1.442695
        %v5162 = vpow.pop %v5161
        %v5163 = vmul.f32 %v5114, 1.442695
        %v5164 = vpow.pop %v5163
        %v5165 = vmul.f32 %v5115, 1.442695
        %v5166 = vpow.pop %v5165
        %v5167 = vmul.f32 %v5116, 1.442695
        %v5168 = vpow.pop %v5167
        %v5169 = vmul.f32 %v5117, 1.442695
        %v5170 = vpow.pop %v5169
        %v5171 = vmul.f32 %v5118, 1.442695
        %v5172 = vpow.pop %v5171
        %v5173 = vmul.f32 %v5119, 1.442695
        %v5174 = vpow.pop %v5173
        %v5175 = vmul.f32 %v5120, 1.442695
        %v5176 = vpow.pop %v5175
        %v5177 = vmul.f32 %v5121, 1.442695
        %v5178 = vpow.pop %v5177
        %v5179 = vmul.f32 %v5122, 1.442695
        %v5180 = vpow.pop %v5179
        %v5181 = vmul.f32 %v5123, 1.442695
        %v5182 = vpow.pop %v5181
        %v5183 = vmul.f32 %v5124, 1.442695
        %v5184 = vpow.pop %v5183
        %v5185 = vmul.f32 %v5125, 1.442695
        %v5186 = vpow.pop %v5185
        %v5187 = vmul.f32 %v5126, 1.442695
        %v5188 = vpow.pop %v5187
        %v5189 = vmul.f32 %v5127, 1.442695
        %v5190 = vpow.pop %v5189
        %v5191 = vmul.f32 %v5128, 1.442695
        %v5192 = vpow.pop %v5191
        %v5193 = vsel %vm5000, %v5130, 0.0
        %5194 = vadd.xlane.f32.xlu0 %v5193
        %v5195 = vpop.xlane.xlu0 %5194
        %v5196 = vsel %vm5000, %v5132, 0.0
        %5197 = vadd.xlane.f32.xlu0 %v5196
        %v5198 = vpop.xlane.xlu0 %5197
        %v5199 = vsel %vm5000, %v5134, 0.0
        %5200 = vadd.xlane.f32.xlu0 %v5199
        %v5201 = vpop.xlane.xlu0 %5200
        %v5202 = vsel %vm5000, %v5136, 0.0
        %5203 = vadd.xlane.f32.xlu0 %v5202
        %v5204 = vpop.xlane.xlu0 %5203
        %v5205 = vsel %vm5000, %v5138, 0.0
        %5206 = vadd.xlane.f32.xlu0 %v5205
        %v5207 = vpop.xlane.xlu0 %5206
        %v5208 = vsel %vm5000, %v5140, 0.0
        %5209 = vadd.xlane.f32.xlu0 %v5208
        %v5210 = vpop.xlane.xlu0 %5209
        %v5211 = vsel %vm5000, %v5142, 0.0
        %5212 = vadd.xlane.f32.xlu0 %v5211
        %v5213 = vpop.xlane.xlu0 %5212
        %v5214 = vsel %vm5000, %v5144, 0.0
        %5215 = vadd.xlane.f32.xlu0 %v5214
        %v5216 = vpop.xlane.xlu0 %5215
        %v5217 = vsel %vm5000, %v5146, 0.0
        %5218 = vadd.xlane.f32.xlu0 %v5217
        %v5219 = vpop.xlane.xlu0 %5218
        %v5220 = vsel %vm5000, %v5148, 0.0
        %5221 = vadd.xlane.f32.xlu0 %v5220
        %v5222 = vpop.xlane.xlu0 %5221
        %v5223 = vsel %vm5000, %v5150, 0.0
        %5224 = vadd.xlane.f32.xlu0 %v5223
        %v5225 = vpop.xlane.xlu0 %5224
        %v5226 = vsel %vm5000, %v5152, 0.0
        %5227 = vadd.xlane.f32.xlu0 %v5226
        %v5228 = vpop.xlane.xlu0 %5227
        %v5229 = vsel %vm5000, %v5154, 0.0
        %5230 = vadd.xlane.f32.xlu0 %v5229
        %v5231 = vpop.xlane.xlu0 %5230
        %v5232 = vsel %vm5000, %v5156, 0.0
        %5233 = vadd.xlane.f32.xlu0 %v5232
        %v5234 = vpop.xlane.xlu0 %5233
        %v5235 = vsel %vm5000, %v5158, 0.0
        %5236 = vadd.xlane.f32.xlu0 %v5235
        %v5237 = vpop.xlane.xlu0 %5236
        %v5238 = vsel %vm5000, %v5160, 0.0
        %5239 = vadd.xlane.f32.xlu0 %v5238
        %v5240 = vpop.xlane.xlu0 %5239
        %v5241 = vsel %vm5000, %v5162, 0.0
        %5242 = vadd.xlane.f32.xlu0 %v5241
        %v5243 = vpop.xlane.xlu0 %5242
        %v5244 = vsel %vm5000, %v5164, 0.0
        %5245 = vadd.xlane.f32.xlu0 %v5244
        %v5246 = vpop.xlane.xlu0 %5245
        %v5247 = vsel %vm5000, %v5166, 0.0
        %5248 = vadd.xlane.f32.xlu0 %v5247
        %v5249 = vpop.xlane.xlu0 %5248
        %v5250 = vsel %vm5000, %v5168, 0.0
        %5251 = vadd.xlane.f32.xlu0 %v5250
        %v5252 = vpop.xlane.xlu0 %5251
        %v5253 = vsel %vm5000, %v5170, 0.0
        %5254 = vadd.xlane.f32.xlu0 %v5253
        %v5255 = vpop.xlane.xlu0 %5254
        %v5256 = vsel %vm5000, %v5172, 0.0
        %5257 = vadd.xlane.f32.xlu0 %v5256
        %v5258 = vpop.xlane.xlu0 %5257
        %v5259 = vsel %vm5000, %v5174, 0.0
        %5260 = vadd.xlane.f32.xlu0 %v5259
        %v5261 = vpop.xlane.xlu0 %5260
        %v5262 = vsel %vm5000, %v5176, 0.0
        %5263 = vadd.xlane.f32.xlu0 %v5262
        %v5264 = vpop.xlane.xlu0 %5263
        %v5265 = vsel %vm5000, %v5178, 0.0
        %5266 = vadd.xlane.f32.xlu0 %v5265
        %v5267 = vpop.xlane.xlu0 %5266
        %v5268 = vsel %vm5000, %v5180, 0.0
        %5269 = vadd.xlane.f32.xlu0 %v5268
        %v5270 = vpop.xlane.xlu0 %5269
        %v5271 = vsel %vm5000, %v5182, 0.0
        %5272 = vadd.xlane.f32.xlu0 %v5271
        %v5273 = vpop.xlane.xlu0 %5272
        %v5274 = vsel %vm5000, %v5184, 0.0
        %5275 = vadd.xlane.f32.xlu0 %v5274
        %v5276 = vpop.xlane.xlu0 %5275
        %v5277 = vsel %vm5000, %v5186, 0.0
        %5278 = vadd.xlane.f32.xlu0 %v5277
        %v5279 = vpop.xlane.xlu0 %5278
        %v5280 = vsel %vm5000, %v5188, 0.0
        %5281 = vadd.xlane.f32.xlu0 %v5280
        %v5282 = vpop.xlane.xlu0 %5281
        %v5283 = vsel %vm5000, %v5190, 0.0
        %5284 = vadd.xlane.f32.xlu0 %v5283
        %v5285 = vpop.xlane.xlu0 %5284
        %v5286 = vsel %vm5000, %v5192, 0.0
        %5287 = vadd.xlane.f32.xlu0 %v5286
        %v5288 = vpop.xlane.xlu0 %5287
        %v5289 = vrcp.pop %v5195
        %v5290 = vrcp.pop %v5198
        %v5291 = vrcp.pop %v5201
        %v5292 = vrcp.pop %v5204
        %v5293 = vrcp.pop %v5207
        %v5294 = vrcp.pop %v5210
        %v5295 = vrcp.pop %v5213
        %v5296 = vrcp.pop %v5216
        %v5297 = vrcp.pop %v5219
        %v5298 = vrcp.pop %v5222
        %v5299 = vrcp.pop %v5225
        %v5300 = vrcp.pop %v5228
        %v5301 = vrcp.pop %v5231
        %v5302 = vrcp.pop %v5234
        %v5303 = vrcp.pop %v5237
        %v5304 = vrcp.pop %v5240
        %v5305 = vrcp.pop %v5243
        %v5306 = vrcp.pop %v5246
        %v5307 = vrcp.pop %v5249
        %v5308 = vrcp.pop %v5252
        %v5309 = vrcp.pop %v5255
        %v5310 = vrcp.pop %v5258
        %v5311 = vrcp.pop %v5261
        %v5312 = vrcp.pop %v5264
        %v5313 = vrcp.pop %v5267
        %v5314 = vrcp.pop %v5270
        %v5315 = vrcp.pop %v5273
        %v5316 = vrcp.pop %v5276
        %v5317 = vrcp.pop %v5279
        %v5318 = vrcp.pop %v5282
        %v5319 = vrcp.pop %v5285
        %v5320 = vrcp.pop %v5288
        %v5321 = vmul.f32 %v5130, %v5289
        %v5322 = vmul.f32 %v5132, %v5290
        %v5323 = vmul.f32 %v5134, %v5291
        %v5324 = vmul.f32 %v5136, %v5292
        %v5325 = vmul.f32 %v5138, %v5293
        %v5326 = vmul.f32 %v5140, %v5294
        %v5327 = vmul.f32 %v5142, %v5295
        %v5328 = vmul.f32 %v5144, %v5296
        %v5329 = vmul.f32 %v5146, %v5297
        %v5330 = vmul.f32 %v5148, %v5298
        %v5331 = vmul.f32 %v5150, %v5299
        %v5332 = vmul.f32 %v5152, %v5300
        %v5333 = vmul.f32 %v5154, %v5301
        %v5334 = vmul.f32 %v5156, %v5302
        %v5335 = vmul.f32 %v5158, %v5303
        %v5336 = vmul.f32 %v5160, %v5304
        %v5337 = vmul.f32 %v5162, %v5305
        %v5338 = vmul.f32 %v5164, %v5306
        %v5339 = vmul.f32 %v5166, %v5307
        %v5340 = vmul.f32 %v5168, %v5308
        %v5341 = vmul.f32 %v5170, %v5309
        %v5342 = vmul.f32 %v5172, %v5310
        %v5343 = vmul.f32 %v5174, %v5311
        %v5344 = vmul.f32 %v5176, %v5312
        %v5345 = vmul.f32 %v5178, %v5313
        %v5346 = vmul.f32 %v5180, %v5314
        %v5347 = vmul.f32 %v5182, %v5315
        %v5348 = vmul.f32 %v5184, %v5316
        %v5349 = vmul.f32 %v5186, %v5317
        %v5350 = vmul.f32 %v5188, %v5318
        %v5351 = vmul.f32 %v5190, %v5319
        %v5352 = vmul.f32 %v5192, %v5320
        %v5354 = vsel %vm5000, %v5321, 0
        %v5357 = vsel %vm5000, %v5322, 0
        %v5360 = vsel %vm5000, %v5323, 0
        %v5363 = vsel %vm5000, %v5324, 0
        %v5366 = vsel %vm5000, %v5325, 0
        %v5369 = vsel %vm5000, %v5326, 0
        %v5372 = vsel %vm5000, %v5327, 0
        %v5375 = vsel %vm5000, %v5328, 0
        %5377 = vmatprep.subr.mxu0 0.0
        %5378 = vmatpush1.msra.mxu0 %v3907
        %5379 = vmatprep.subr.mxu0 0.0
        %5380 = vmatpush1.msra.mxu0 %v3975
        %5381 = vmatprep.subr.mxu0 0.0
        %5382 = vmatpush1.msra.mxu0 %v4043
        %5383 = vmatprep.subr.mxu0 0.0
        %5384 = vmatpush1.msra.mxu0 %v4111
        %5385 = vmatprep.subr.mxu0 0.0
        %5386 = vmatpush1.msra.mxu0 %v4179
        %5387 = vmatprep.subr.mxu0 0.0
        %5388 = vmatpush1.msra.mxu0 %v4247
        %5389 = vmatprep.subr.mxu0 0.0
        %5390 = vmatpush1.msra.mxu0 %v4315
        %5391 = vmatprep.subr.mxu0 0.0
        %5392 = vmatpush1.msra.mxu0 %v4383
        %5393 = vmatprep.subr.mxu0 0.0
        %5394 = vmatpush1.msra.mxu0 0.0
        %5395 = vmatprep.subr.mxu0 0.0
        %5396 = vmatpush1.msra.mxu0 0.0
        %5397 = vmatprep.subr.mxu0 0.0
        %5398 = vmatpush1.msra.mxu0 0.0
        %5399 = vmatprep.subr.mxu0 0.0
        %5400 = vmatpush1.msra.mxu0 0.0
        %5401 = vmatprep.subr.mxu0 0.0
        %5402 = vmatpush1.msra.mxu0 0.0
        %5403 = vmatprep.subr.mxu0 0.0
        %5404 = vmatpush1.msra.mxu0 0.0
        %5405 = vmatprep.subr.mxu0 0.0
        %5406 = vmatpush1.msra.mxu0 0.0
        %5407 = vmatprep.subr.mxu0 0.0
        %5408 = vmatpush1.msra.mxu0 0.0
        %5409 = vmatprep.subr.mxu0 0.0
        %5410 = vmatpush1.msra.mxu0 0.0
        %5411 = vmatprep.subr.mxu0 0.0
        %5412 = vmatpush1.msra.mxu0 0.0
        %5413 = vmatprep.subr.mxu0 0.0
        %5414 = vmatpush1.msra.mxu0 0.0
        %5415 = vmatprep.subr.mxu0 0.0
        %5416 = vmatpush1.msra.mxu0 0.0
        %5417 = vmatprep.subr.mxu0 0.0
        %5418 = vmatpush1.msra.mxu0 0.0
        %5419 = vmatprep.subr.mxu0 0.0
        %5420 = vmatpush1.msra.mxu0 0.0
        %5421 = vmatprep.subr.mxu0 0.0
        %5422 = vmatpush1.msra.mxu0 0.0
        %5423 = vmatprep.subr.mxu0 0.0
        %5424 = vmatpush1.msra.mxu0 0.0
        %5425 = vmatprep.subr.mxu0 0.0
        %5426 = vmatpush1.msra.mxu0 0.0
        %5427 = vmatprep.subr.mxu0 0.0
        %5428 = vmatpush1.msra.mxu0 0.0
        %5429 = vmatprep.subr.mxu0 0.0
        %5430 = vmatpush1.msra.mxu0 0.0
        %5431 = vmatprep.subr.mxu0 0.0
        %5432 = vmatpush1.msra.mxu0 0.0
        %5433 = vmatprep.subr.mxu0 0.0
        %5434 = vmatpush1.msra.mxu0 0.0
        %5435 = vmatprep.subr.mxu0 0.0
        %5436 = vmatpush1.msra.mxu0 0.0
        %5437 = vmatprep.subr.mxu0 0.0
        %5438 = vmatpush1.msra.mxu0 0.0
        %5439 = vmatprep.subr.mxu0 0.0
        %5440 = vmatpush1.msra.mxu0 0.0
        %5441 = vmatprep.mubr.f32.mxu0 0.0
        %5442 = vmatmul.mubr.f32.gmra.mrb[0].mxu0 %v5354
        %v5443 = vpop.f32.mrb[0].mxu0
        %v5444 = vadd.f32 0.0, %v5443
        %v5445 = vpop.f32.mrb[0].mxu0
        %5446 = vmatprep.mubr.f32.mxu0 0.0
        %5447 = vmatmul.mubr.f32.gmra.mrb[0].mxu0 %v5357
        %v5448 = vpop.f32.mrb[0].mxu0
        %v5449 = vadd.f32 0.0, %v5448
        %v5450 = vpop.f32.mrb[0].mxu0
        %5451 = vmatprep.mubr.f32.mxu0 0.0
        %5452 = vmatmul.mubr.f32.gmra.mrb[0].mxu0 %v5360
        %v5453 = vpop.f32.mrb[0].mxu0
        %v5454 = vadd.f32 0.0, %v5453
        %v5455 = vpop.f32.mrb[0].mxu0
        %5456 = vmatprep.mubr.f32.mxu0 0.0
        %5457 = vmatmul.mubr.f32.gmra.mrb[0].mxu0 %v5363
        %v5458 = vpop.f32.mrb[0].mxu0
        %v5459 = vadd.f32 0.0, %v5458
        %v5460 = vpop.f32.mrb[0].mxu0
        %5461 = vmatprep.mubr.f32.mxu0 0.0
        %5462 = vmatmul.mubr.f32.gmra.mrb[0].mxu0 %v5366
        %v5463 = vpop.f32.mrb[0].mxu0
        %v5464 = vadd.f32 0.0, %v5463
        %v5465 = vpop.f32.mrb[0].mxu0
        %5466 = vmatprep.mubr.f32.mxu0 0.0
        %5467 = vmatmul.mubr.f32.gmra.mrb[0].mxu0 %v5369
        %v5468 = vpop.f32.mrb[0].mxu0
        %v5469 = vadd.f32 0.0, %v5468
        %v5470 = vpop.f32.mrb[0].mxu0
        %5471 = vmatprep.mubr.f32.mxu0 0.0
        %5472 = vmatmul.mubr.f32.gmra.mrb[0].mxu0 %v5372
        %v5473 = vpop.f32.mrb[0].mxu0
        %v5474 = vadd.f32 0.0, %v5473
        %v5475 = vpop.f32.mrb[0].mxu0
        %5476 = vmatprep.mubr.f32.mxu0 0.0
        %5477 = vmatmul.mubr.f32.gmra.mrb[0].mxu0 %v5375
        %v5478 = vpop.f32.mrb[0].mxu0
        %v5479 = vadd.f32 0.0, %v5478
        %v5480 = vpop.f32.mrb[0].mxu0
        %5481 = vdwg.mxu0
        %v5483 = vsel %vm5000, %v5329, 0
        %v5486 = vsel %vm5000, %v5330, 0
        %v5489 = vsel %vm5000, %v5331, 0
        %v5492 = vsel %vm5000, %v5332, 0
        %v5495 = vsel %vm5000, %v5333, 0
        %v5498 = vsel %vm5000, %v5334, 0
        %v5501 = vsel %vm5000, %v5335, 0
        %v5504 = vsel %vm5000, %v5336, 0
        %5506 = vmatprep.subr.mxu0 0.0
        %5507 = vmatpush1.msra.mxu0 %v3908
        %5508 = vmatprep.subr.mxu0 0.0
        %5509 = vmatpush1.msra.mxu0 %v3976
        %5510 = vmatprep.subr.mxu0 0.0
        %5511 = vmatpush1.msra.mxu0 %v4044
        %5512 = vmatprep.subr.mxu0 0.0
        %5513 = vmatpush1.msra.mxu0 %v4112
        %5514 = vmatprep.subr.mxu0 0.0
        %5515 = vmatpush1.msra.mxu0 %v4180
        %5516 = vmatprep.subr.mxu0 0.0
        %5517 = vmatpush1.msra.mxu0 %v4248
        %5518 = vmatprep.subr.mxu0 0.0
        %5519 = vmatpush1.msra.mxu0 %v4316
        %5520 = vmatprep.subr.mxu0 0.0
        %5521 = vmatpush1.msra.mxu0 %v4384
        %5522 = vmatprep.subr.mxu0 0.0
        %5523 = vmatpush1.msra.mxu0 0.0
        %5524 = vmatprep.subr.mxu0 0.0
        %5525 = vmatpush1.msra.mxu0 0.0
        %5526 = vmatprep.subr.mxu0 0.0
        %5527 = vmatpush1.msra.mxu0 0.0
        %5528 = vmatprep.subr.mxu0 0.0
        %5529 = vmatpush1.msra.mxu0 0.0
        %5530 = vmatprep.subr.mxu0 0.0
        %5531 = vmatpush1.msra.mxu0 0.0
        %5532 = vmatprep.subr.mxu0 0.0
        %5533 = vmatpush1.msra.mxu0 0.0
        %5534 = vmatprep.subr.mxu0 0.0
        %5535 = vmatpush1.msra.mxu0 0.0
        %5536 = vmatprep.subr.mxu0 0.0
        %5537 = vmatpush1.msra.mxu0 0.0
        %5538 = vmatprep.subr.mxu0 0.0
        %5539 = vmatpush1.msra.mxu0 0.0
        %5540 = vmatprep.subr.mxu0 0.0
        %5541 = vmatpush1.msra.mxu0 0.0
        %5542 = vmatprep.subr.mxu0 0.0
        %5543 = vmatpush1.msra.mxu0 0.0
        %5544 = vmatprep.subr.mxu0 0.0
        %5545 = vmatpush1.msra.mxu0 0.0
        %5546 = vmatprep.subr.mxu0 0.0
        %5547 = vmatpush1.msra.mxu0 0.0
        %5548 = vmatprep.subr.mxu0 0.0
        %5549 = vmatpush1.msra.mxu0 0.0
        %5550 = vmatprep.subr.mxu0 0.0
        %5551 = vmatpush1.msra.mxu0 0.0
        %5552 = vmatprep.subr.mxu0 0.0
        %5553 = vmatpush1.msra.mxu0 0.0
        %5554 = vmatprep.subr.mxu0 0.0
        %5555 = vmatpush1.msra.mxu0 0.0
        %5556 = vmatprep.subr.mxu0 0.0
        %5557 = vmatpush1.msra.mxu0 0.0
        %5558 = vmatprep.subr.mxu0 0.0
        %5559 = vmatpush1.msra.mxu0 0.0
        %5560 = vmatprep.subr.mxu0 0.0
        %5561 = vmatpush1.msra.mxu0 0.0
        %5562 = vmatprep.subr.mxu0 0.0
        %5563 = vmatpush1.msra.mxu0 0.0
        %5564 = vmatprep.subr.mxu0 0.0
        %5565 = vmatpush1.msra.mxu0 0.0
        %5566 = vmatprep.subr.mxu0 0.0
        %5567 = vmatpush1.msra.mxu0 0.0
        %5568 = vmatprep.subr.mxu0 0.0
        %5569 = vmatpush1.msra.mxu0 0.0
        %5570 = vmatprep.mubr.f32.mxu0 0.0
        %5571 = vmatmul.mubr.f32.gmra.mrb[0].mxu0 %v5483
        %v5572 = vpop.f32.mrb[0].mxu0
        %v5573 = vadd.f32 0.0, %v5572
        %v5574 = vpop.f32.mrb[0].mxu0
        %5575 = vmatprep.mubr.f32.mxu0 0.0
        %5576 = vmatmul.mubr.f32.gmra.mrb[0].mxu0 %v5486
        %v5577 = vpop.f32.mrb[0].mxu0
        %v5578 = vadd.f32 0.0, %v5577
        %v5579 = vpop.f32.mrb[0].mxu0
        %5580 = vmatprep.mubr.f32.mxu0 0.0
        %5581 = vmatmul.mubr.f32.gmra.mrb[0].mxu0 %v5489
        %v5582 = vpop.f32.mrb[0].mxu0
        %v5583 = vadd.f32 0.0, %v5582
        %v5584 = vpop.f32.mrb[0].mxu0
        %5585 = vmatprep.mubr.f32.mxu0 0.0
        %5586 = vmatmul.mubr.f32.gmra.mrb[0].mxu0 %v5492
        %v5587 = vpop.f32.mrb[0].mxu0
        %v5588 = vadd.f32 0.0, %v5587
        %v5589 = vpop.f32.mrb[0].mxu0
        %5590 = vmatprep.mubr.f32.mxu0 0.0
        %5591 = vmatmul.mubr.f32.gmra.mrb[0].mxu0 %v5495
        %v5592 = vpop.f32.mrb[0].mxu0
        %v5593 = vadd.f32 0.0, %v5592
        %v5594 = vpop.f32.mrb[0].mxu0
        %5595 = vmatprep.mubr.f32.mxu0 0.0
        %5596 = vmatmul.mubr.f32.gmra.mrb[0].mxu0 %v5498
        %v5597 = vpop.f32.mrb[0].mxu0
        %v5598 = vadd.f32 0.0, %v5597
        %v5599 = vpop.f32.mrb[0].mxu0
        %5600 = vmatprep.mubr.f32.mxu0 0.0
        %5601 = vmatmul.mubr.f32.gmra.mrb[0].mxu0 %v5501
        %v5602 = vpop.f32.mrb[0].mxu0
        %v5603 = vadd.f32 0.0, %v5602
        %v5604 = vpop.f32.mrb[0].mxu0
        %5605 = vmatprep.mubr.f32.mxu0 0.0
        %5606 = vmatmul.mubr.f32.gmra.mrb[0].mxu0 %v5504
        %v5607 = vpop.f32.mrb[0].mxu0
        %v5608 = vadd.f32 0.0, %v5607
        %v5609 = vpop.f32.mrb[0].mxu0
        %5610 = vdwg.mxu0
        %v5612 = vsel %vm5000, %v5337, 0
        %v5615 = vsel %vm5000, %v5338, 0
        %v5618 = vsel %vm5000, %v5339, 0
        %v5621 = vsel %vm5000, %v5340, 0
        %v5624 = vsel %vm5000, %v5341, 0
        %v5627 = vsel %vm5000, %v5342, 0
        %v5630 = vsel %vm5000, %v5343, 0
        %v5633 = vsel %vm5000, %v5344, 0
        %5635 = vmatprep.subr.mxu0 0.0
        %5636 = vmatpush1.msra.mxu0 %v3909
        %5637 = vmatprep.subr.mxu0 0.0
        %5638 = vmatpush1.msra.mxu0 %v3977
        %5639 = vmatprep.subr.mxu0 0.0
        %5640 = vmatpush1.msra.mxu0 %v4045
        %5641 = vmatprep.subr.mxu0 0.0
        %5642 = vmatpush1.msra.mxu0 %v4113
        %5643 = vmatprep.subr.mxu0 0.0
        %5644 = vmatpush1.msra.mxu0 %v4181
        %5645 = vmatprep.subr.mxu0 0.0
        %5646 = vmatpush1.msra.mxu0 %v4249
        %5647 = vmatprep.subr.mxu0 0.0
        %5648 = vmatpush1.msra.mxu0 %v4317
        %5649 = vmatprep.subr.mxu0 0.0
        %5650 = vmatpush1.msra.mxu0 %v4385
        %5651 = vmatprep.subr.mxu0 0.0
        %5652 = vmatpush1.msra.mxu0 0.0
        %5653 = vmatprep.subr.mxu0 0.0
        %5654 = vmatpush1.msra.mxu0 0.0
        %5655 = vmatprep.subr.mxu0 0.0
        %5656 = vmatpush1.msra.mxu0 0.0
        %5657 = vmatprep.subr.mxu0 0.0
        %5658 = vmatpush1.msra.mxu0 0.0
        %5659 = vmatprep.subr.mxu0 0.0
        %5660 = vmatpush1.msra.mxu0 0.0
        %5661 = vmatprep.subr.mxu0 0.0
        %5662 = vmatpush1.msra.mxu0 0.0
        %5663 = vmatprep.subr.mxu0 0.0
        %5664 = vmatpush1.msra.mxu0 0.0
        %5665 = vmatprep.subr.mxu0 0.0
        %5666 = vmatpush1.msra.mxu0 0.0
        %5667 = vmatprep.subr.mxu0 0.0
        %5668 = vmatpush1.msra.mxu0 0.0
        %5669 = vmatprep.subr.mxu0 0.0
        %5670 = vmatpush1.msra.mxu0 0.0
        %5671 = vmatprep.subr.mxu0 0.0
        %5672 = vmatpush1.msra.mxu0 0.0
        %5673 = vmatprep.subr.mxu0 0.0
        %5674 = vmatpush1.msra.mxu0 0.0
        %5675 = vmatprep.subr.mxu0 0.0
        %5676 = vmatpush1.msra.mxu0 0.0
        %5677 = vmatprep.subr.mxu0 0.0
        %5678 = vmatpush1.msra.mxu0 0.0
        %5679 = vmatprep.subr.mxu0 0.0
        %5680 = vmatpush1.msra.mxu0 0.0
        %5681 = vmatprep.subr.mxu0 0.0
        %5682 = vmatpush1.msra.mxu0 0.0
        %5683 = vmatprep.subr.mxu0 0.0
        %5684 = vmatpush1.msra.mxu0 0.0
        %5685 = vmatprep.subr.mxu0 0.0
        %5686 = vmatpush1.msra.mxu0 0.0
        %5687 = vmatprep.subr.mxu0 0.0
        %5688 = vmatpush1.msra.mxu0 0.0
        %5689 = vmatprep.subr.mxu0 0.0
        %5690 = vmatpush1.msra.mxu0 0.0
        %5691 = vmatprep.subr.mxu0 0.0
        %5692 = vmatpush1.msra.mxu0 0.0
        %5693 = vmatprep.subr.mxu0 0.0
        %5694 = vmatpush1.msra.mxu0 0.0
        %5695 = vmatprep.subr.mxu0 0.0
        %5696 = vmatpush1.msra.mxu0 0.0
        %5697 = vmatprep.subr.mxu0 0.0
        %5698 = vmatpush1.msra.mxu0 0.0
        %5699 = vmatprep.mubr.f32.mxu0 0.0
        %5700 = vmatmul.mubr.f32.gmra.mrb[0].mxu0 %v5612
        %v5701 = vpop.f32.mrb[0].mxu0
        %v5702 = vadd.f32 0.0, %v5701
        %v5703 = vpop.f32.mrb[0].mxu0
        %5704 = vmatprep.mubr.f32.mxu0 0.0
        %5705 = vmatmul.mubr.f32.gmra.mrb[0].mxu0 %v5615
        %v5706 = vpop.f32.mrb[0].mxu0
        %v5707 = vadd.f32 0.0, %v5706
        %v5708 = vpop.f32.mrb[0].mxu0
        %5709 = vmatprep.mubr.f32.mxu0 0.0
        %5710 = vmatmul.mubr.f32.gmra.mrb[0].mxu0 %v5618
        %v5711 = vpop.f32.mrb[0].mxu0
        %v5712 = vadd.f32 0.0, %v5711
        %v5713 = vpop.f32.mrb[0].mxu0
        %5714 = vmatprep.mubr.f32.mxu0 0.0
        %5715 = vmatmul.mubr.f32.gmra.mrb[0].mxu0 %v5621
        %v5716 = vpop.f32.mrb[0].mxu0
        %v5717 = vadd.f32 0.0, %v5716
        %v5718 = vpop.f32.mrb[0].mxu0
        %5719 = vmatprep.mubr.f32.mxu0 0.0
        %5720 = vmatmul.mubr.f32.gmra.mrb[0].mxu0 %v5624
        %v5721 = vpop.f32.mrb[0].mxu0
        %v5722 = vadd.f32 0.0, %v5721
        %v5723 = vpop.f32.mrb[0].mxu0
        %5724 = vmatprep.mubr.f32.mxu0 0.0
        %5725 = vmatmul.mubr.f32.gmra.mrb[0].mxu0 %v5627
        %v5726 = vpop.f32.mrb[0].mxu0
        %v5727 = vadd.f32 0.0, %v5726
        %v5728 = vpop.f32.mrb[0].mxu0
        %5729 = vmatprep.mubr.f32.mxu0 0.0
        %5730 = vmatmul.mubr.f32.gmra.mrb[0].mxu0 %v5630
        %v5731 = vpop.f32.mrb[0].mxu0
        %v5732 = vadd.f32 0.0, %v5731
        %v5733 = vpop.f32.mrb[0].mxu0
        %5734 = vmatprep.mubr.f32.mxu0 0.0
        %5735 = vmatmul.mubr.f32.gmra.mrb[0].mxu0 %v5633
        %v5736 = vpop.f32.mrb[0].mxu0
        %v5737 = vadd.f32 0.0, %v5736
        %v5738 = vpop.f32.mrb[0].mxu0
        %5739 = vdwg.mxu0
        %v5741 = vsel %vm5000, %v5345, 0
        %v5744 = vsel %vm5000, %v5346, 0
        %v5747 = vsel %vm5000, %v5347, 0
        %v5750 = vsel %vm5000, %v5348, 0
        %v5753 = vsel %vm5000, %v5349, 0
        %v5756 = vsel %vm5000, %v5350, 0
        %v5759 = vsel %vm5000, %v5351, 0
        %v5762 = vsel %vm5000, %v5352, 0
        %5764 = vmatprep.subr.mxu0 0.0
        %5765 = vmatpush1.msra.mxu0 %v3910
        %5766 = vmatprep.subr.mxu0 0.0
        %5767 = vmatpush1.msra.mxu0 %v3978
        %5768 = vmatprep.subr.mxu0 0.0
        %5769 = vmatpush1.msra.mxu0 %v4046
        %5770 = vmatprep.subr.mxu0 0.0
        %5771 = vmatpush1.msra.mxu0 %v4114
        %5772 = vmatprep.subr.mxu0 0.0
        %5773 = vmatpush1.msra.mxu0 %v4182
        %5774 = vmatprep.subr.mxu0 0.0
        %5775 = vmatpush1.msra.mxu0 %v4250
        %5776 = vmatprep.subr.mxu0 0.0
        %5777 = vmatpush1.msra.mxu0 %v4318
        %5778 = vmatprep.subr.mxu0 0.0
        %5779 = vmatpush1.msra.mxu0 %v4386
        %5780 = vmatprep.subr.mxu0 0.0
        %5781 = vmatpush1.msra.mxu0 0.0
        %5782 = vmatprep.subr.mxu0 0.0
        %5783 = vmatpush1.msra.mxu0 0.0
        %5784 = vmatprep.subr.mxu0 0.0
        %5785 = vmatpush1.msra.mxu0 0.0
        %5786 = vmatprep.subr.mxu0 0.0
        %5787 = vmatpush1.msra.mxu0 0.0
        %5788 = vmatprep.subr.mxu0 0.0
        %5789 = vmatpush1.msra.mxu0 0.0
        %5790 = vmatprep.subr.mxu0 0.0
        %5791 = vmatpush1.msra.mxu0 0.0
        %5792 = vmatprep.subr.mxu0 0.0
        %5793 = vmatpush1.msra.mxu0 0.0
        %5794 = vmatprep.subr.mxu0 0.0
        %5795 = vmatpush1.msra.mxu0 0.0
        %5796 = vmatprep.subr.mxu0 0.0
        %5797 = vmatpush1.msra.mxu0 0.0
        %5798 = vmatprep.subr.mxu0 0.0
        %5799 = vmatpush1.msra.mxu0 0.0
        %5800 = vmatprep.subr.mxu0 0.0
        %5801 = vmatpush1.msra.mxu0 0.0
        %5802 = vmatprep.subr.mxu0 0.0
        %5803 = vmatpush1.msra.mxu0 0.0
        %5804 = vmatprep.subr.mxu0 0.0
        %5805 = vmatpush1.msra.mxu0 0.0
        %5806 = vmatprep.subr.mxu0 0.0
        %5807 = vmatpush1.msra.mxu0 0.0
        %5808 = vmatprep.subr.mxu0 0.0
        %5809 = vmatpush1.msra.mxu0 0.0
        %5810 = vmatprep.subr.mxu0 0.0
        %5811 = vmatpush1.msra.mxu0 0.0
        %5812 = vmatprep.subr.mxu0 0.0
        %5813 = vmatpush1.msra.mxu0 0.0
        %5814 = vmatprep.subr.mxu0 0.0
        %5815 = vmatpush1.msra.mxu0 0.0
        %5816 = vmatprep.subr.mxu0 0.0
        %5817 = vmatpush1.msra.mxu0 0.0
        %5818 = vmatprep.subr.mxu0 0.0
        %5819 = vmatpush1.msra.mxu0 0.0
        %5820 = vmatprep.subr.mxu0 0.0
        %5821 = vmatpush1.msra.mxu0 0.0
        %5822 = vmatprep.subr.mxu0 0.0
        %5823 = vmatpush1.msra.mxu0 0.0
        %5824 = vmatprep.subr.mxu0 0.0
        %5825 = vmatpush1.msra.mxu0 0.0
        %5826 = vmatprep.subr.mxu0 0.0
        %5827 = vmatpush1.msra.mxu0 0.0
        %5828 = vmatprep.mubr.f32.mxu0 0.0
        %5829 = vmatmul.mubr.f32.gmra.mrb[0].mxu0 %v5741
        %v5830 = vpop.f32.mrb[0].mxu0
        %v5831 = vadd.f32 0.0, %v5830
        %v5832 = vpop.f32.mrb[0].mxu0
        %5833 = vmatprep.mubr.f32.mxu0 0.0
        %5834 = vmatmul.mubr.f32.gmra.mrb[0].mxu0 %v5744
        %v5835 = vpop.f32.mrb[0].mxu0
        %v5836 = vadd.f32 0.0, %v5835
        %v5837 = vpop.f32.mrb[0].mxu0
        %5838 = vmatprep.mubr.f32.mxu0 0.0
        %5839 = vmatmul.mubr.f32.gmra.mrb[0].mxu0 %v5747
        %v5840 = vpop.f32.mrb[0].mxu0
        %v5841 = vadd.f32 0.0, %v5840
        %v5842 = vpop.f32.mrb[0].mxu0
        %5843 = vmatprep.mubr.f32.mxu0 0.0
        %5844 = vmatmul.mubr.f32.gmra.mrb[0].mxu0 %v5750
        %v5845 = vpop.f32.mrb[0].mxu0
        %v5846 = vadd.f32 0.0, %v5845
        %v5847 = vpop.f32.mrb[0].mxu0
        %5848 = vmatprep.mubr.f32.mxu0 0.0
        %5849 = vmatmul.mubr.f32.gmra.mrb[0].mxu0 %v5753
        %v5850 = vpop.f32.mrb[0].mxu0
        %v5851 = vadd.f32 0.0, %v5850
        %v5852 = vpop.f32.mrb[0].mxu0
        %5853 = vmatprep.mubr.f32.mxu0 0.0
        %5854 = vmatmul.mubr.f32.gmra.mrb[0].mxu0 %v5756
        %v5855 = vpop.f32.mrb[0].mxu0
        %v5856 = vadd.f32 0.0, %v5855
        %v5857 = vpop.f32.mrb[0].mxu0
        %5858 = vmatprep.mubr.f32.mxu0 0.0
        %5859 = vmatmul.mubr.f32.gmra.mrb[0].mxu0 %v5759
        %v5860 = vpop.f32.mrb[0].mxu0
        %v5861 = vadd.f32 0.0, %v5860
        %v5862 = vpop.f32.mrb[0].mxu0
        %5863 = vmatprep.mubr.f32.mxu0 0.0
        %5864 = vmatmul.mubr.f32.gmra.mrb[0].mxu0 %v5762
        %v5865 = vpop.f32.mrb[0].mxu0
        %v5866 = vadd.f32 0.0, %v5865
        %v5867 = vpop.f32.mrb[0].mxu0
        %5868 = vdwg.mxu0
        %v5869 = vcombine.low %v5444, %v5702
        %v5870 = vcombine.high %v5444, %v5702
        %v5872 = vunpack.c.l.s4 1983009808
        %v5873 = vunpack.c.0.s8 %v5872
        %v5874 = vlaneseq
        %v5875 = vshrl.u32 %v5874, 7
        %v5876 = vsub.s32 %v5873, %v5875
        %v5877 = vrot.slane %v5869, %v5876
        %v5879 = vunpack.c.l.s4 1983009808
        %v5880 = vunpack.c.0.s8 %v5879
        %v5881 = vlaneseq
        %v5882 = vshrl.u32 %v5881, 7
        %v5883 = vsub.s32 %v5880, %v5882
        %v5884 = vrot.slane %v5870, %v5883
        %v5885 = vcombine.low %v5573, %v5831
        %v5886 = vcombine.high %v5573, %v5831
        %v5888 = vunpack.c.l.s4 1983009808
        %v5889 = vunpack.c.0.s8 %v5888
        %v5890 = vlaneseq
        %v5891 = vshrl.u32 %v5890, 7
        %v5892 = vsub.s32 %v5889, %v5891
        %v5893 = vrot.slane %v5885, %v5892
        %v5895 = vunpack.c.l.s4 1983009808
        %v5896 = vunpack.c.0.s8 %v5895
        %v5897 = vlaneseq
        %v5898 = vshrl.u32 %v5897, 7
        %v5899 = vsub.s32 %v5896, %v5898
        %v5900 = vrot.slane %v5886, %v5899
        %v5901 = vcombine.low %v5877, %v5893
        %v5902 = vcombine.high %v5877, %v5893
        %v5904 = vunpack.c.l.s4 1934713408
        %v5905 = vunpack.c.0.s8 %v5904
        %v5906 = vlaneseq
        %v5907 = vshrl.u32 %v5906, 7
        %v5908 = vsub.s32 %v5905, %v5907
        %v5909 = vrot.slane %v5901, %v5908
        %v5911 = vunpack.c.l.s4 1934713408
        %v5912 = vunpack.c.0.s8 %v5911
        %v5913 = vlaneseq
        %v5914 = vshrl.u32 %v5913, 7
        %v5915 = vsub.s32 %v5912, %v5914
        %v5916 = vrot.slane %v5902, %v5915
        %v5917 = vcombine.low %v5884, %v5900
        %v5918 = vcombine.high %v5884, %v5900
        %v5920 = vunpack.c.l.s4 1934713408
        %v5921 = vunpack.c.0.s8 %v5920
        %v5922 = vlaneseq
        %v5923 = vshrl.u32 %v5922, 7
        %v5924 = vsub.s32 %v5921, %v5923
        %v5925 = vrot.slane %v5917, %v5924
        %v5927 = vunpack.c.l.s4 1934713408
        %v5928 = vunpack.c.0.s8 %v5927
        %v5929 = vlaneseq
        %v5930 = vshrl.u32 %v5929, 7
        %v5931 = vsub.s32 %v5928, %v5930
        %v5932 = vrot.slane %v5918, %v5931
        %v5933 = vcombine.high %v5909, 0.0
        %v5934 = vcombine.high %v5916, 0.0
        %v5935 = vcombine.high %v5925, 0.0
        %v5936 = vcombine.high %v5932, 0.0
        %v5937 = vcombine.low %v5449, %v5707
        %v5938 = vcombine.high %v5449, %v5707
        %v5940 = vunpack.c.l.s4 1983009808
        %v5941 = vunpack.c.0.s8 %v5940
        %v5942 = vlaneseq
        %v5943 = vshrl.u32 %v5942, 7
        %v5944 = vsub.s32 %v5941, %v5943
        %v5945 = vrot.slane %v5937, %v5944
        %v5947 = vunpack.c.l.s4 1983009808
        %v5948 = vunpack.c.0.s8 %v5947
        %v5949 = vlaneseq
        %v5950 = vshrl.u32 %v5949, 7
        %v5951 = vsub.s32 %v5948, %v5950
        %v5952 = vrot.slane %v5938, %v5951
        %v5953 = vcombine.low %v5578, %v5836
        %v5954 = vcombine.high %v5578, %v5836
        %v5956 = vunpack.c.l.s4 1983009808
        %v5957 = vunpack.c.0.s8 %v5956
        %v5958 = vlaneseq
        %v5959 = vshrl.u32 %v5958, 7
        %v5960 = vsub.s32 %v5957, %v5959
        %v5961 = vrot.slane %v5953, %v5960
        %v5963 = vunpack.c.l.s4 1983009808
        %v5964 = vunpack.c.0.s8 %v5963
        %v5965 = vlaneseq
        %v5966 = vshrl.u32 %v5965, 7
        %v5967 = vsub.s32 %v5964, %v5966
        %v5968 = vrot.slane %v5954, %v5967
        %v5969 = vcombine.low %v5945, %v5961
        %v5970 = vcombine.high %v5945, %v5961
        %v5972 = vunpack.c.l.s4 1934713408
        %v5973 = vunpack.c.0.s8 %v5972
        %v5974 = vlaneseq
        %v5975 = vshrl.u32 %v5974, 7
        %v5976 = vsub.s32 %v5973, %v5975
        %v5977 = vrot.slane %v5969, %v5976
        %v5979 = vunpack.c.l.s4 1934713408
        %v5980 = vunpack.c.0.s8 %v5979
        %v5981 = vlaneseq
        %v5982 = vshrl.u32 %v5981, 7
        %v5983 = vsub.s32 %v5980, %v5982
        %v5984 = vrot.slane %v5970, %v5983
        %v5985 = vcombine.low %v5952, %v5968
        %v5986 = vcombine.high %v5952, %v5968
        %v5988 = vunpack.c.l.s4 1934713408
        %v5989 = vunpack.c.0.s8 %v5988
        %v5990 = vlaneseq
        %v5991 = vshrl.u32 %v5990, 7
        %v5992 = vsub.s32 %v5989, %v5991
        %v5993 = vrot.slane %v5985, %v5992
        %v5995 = vunpack.c.l.s4 1934713408
        %v5996 = vunpack.c.0.s8 %v5995
        %v5997 = vlaneseq
        %v5998 = vshrl.u32 %v5997, 7
        %v5999 = vsub.s32 %v5996, %v5998
        %v6000 = vrot.slane %v5986, %v5999
        %v6001 = vcombine.high %v5977, 0.0
        %v6002 = vcombine.high %v5984, 0.0
        %v6003 = vcombine.high %v5993, 0.0
        %v6004 = vcombine.high %v6000, 0.0
        %v6005 = vcombine.low %v5454, %v5712
        %v6006 = vcombine.high %v5454, %v5712
        %v6008 = vunpack.c.l.s4 1983009808
        %v6009 = vunpack.c.0.s8 %v6008
        %v6010 = vlaneseq
        %v6011 = vshrl.u32 %v6010, 7
        %v6012 = vsub.s32 %v6009, %v6011
        %v6013 = vrot.slane %v6005, %v6012
        %v6015 = vunpack.c.l.s4 1983009808
        %v6016 = vunpack.c.0.s8 %v6015
        %v6017 = vlaneseq
        %v6018 = vshrl.u32 %v6017, 7
        %v6019 = vsub.s32 %v6016, %v6018
        %v6020 = vrot.slane %v6006, %v6019
        %v6021 = vcombine.low %v5583, %v5841
        %v6022 = vcombine.high %v5583, %v5841
        %v6024 = vunpack.c.l.s4 1983009808
        %v6025 = vunpack.c.0.s8 %v6024
        %v6026 = vlaneseq
        %v6027 = vshrl.u32 %v6026, 7
        %v6028 = vsub.s32 %v6025, %v6027
        %v6029 = vrot.slane %v6021, %v6028
        %v6031 = vunpack.c.l.s4 1983009808
        %v6032 = vunpack.c.0.s8 %v6031
        %v6033 = vlaneseq
        %v6034 = vshrl.u32 %v6033, 7
        %v6035 = vsub.s32 %v6032, %v6034
        %v6036 = vrot.slane %v6022, %v6035
        %v6037 = vcombine.low %v6013, %v6029
        %v6038 = vcombine.high %v6013, %v6029
        %v6040 = vunpack.c.l.s4 1934713408
        %v6041 = vunpack.c.0.s8 %v6040
        %v6042 = vlaneseq
        %v6043 = vshrl.u32 %v6042, 7
        %v6044 = vsub.s32 %v6041, %v6043
        %v6045 = vrot.slane %v6037, %v6044
        %v6047 = vunpack.c.l.s4 1934713408
        %v6048 = vunpack.c.0.s8 %v6047
        %v6049 = vlaneseq
        %v6050 = vshrl.u32 %v6049, 7
        %v6051 = vsub.s32 %v6048, %v6050
        %v6052 = vrot.slane %v6038, %v6051
        %v6053 = vcombine.low %v6020, %v6036
        %v6054 = vcombine.high %v6020, %v6036
        %v6056 = vunpack.c.l.s4 1934713408
        %v6057 = vunpack.c.0.s8 %v6056
        %v6058 = vlaneseq
        %v6059 = vshrl.u32 %v6058, 7
        %v6060 = vsub.s32 %v6057, %v6059
        %v6061 = vrot.slane %v6053, %v6060
        %v6063 = vunpack.c.l.s4 1934713408
        %v6064 = vunpack.c.0.s8 %v6063
        %v6065 = vlaneseq
        %v6066 = vshrl.u32 %v6065, 7
        %v6067 = vsub.s32 %v6064, %v6066
        %v6068 = vrot.slane %v6054, %v6067
        %v6069 = vcombine.high %v6045, 0.0
        %v6070 = vcombine.high %v6052, 0.0
        %v6071 = vcombine.high %v6061, 0.0
        %v6072 = vcombine.high %v6068, 0.0
        %v6073 = vcombine.low %v5459, %v5717
        %v6074 = vcombine.high %v5459, %v5717
        %v6076 = vunpack.c.l.s4 1983009808
        %v6077 = vunpack.c.0.s8 %v6076
        %v6078 = vlaneseq
        %v6079 = vshrl.u32 %v6078, 7
        %v6080 = vsub.s32 %v6077, %v6079
        %v6081 = vrot.slane %v6073, %v6080
        %v6083 = vunpack.c.l.s4 1983009808
        %v6084 = vunpack.c.0.s8 %v6083
        %v6085 = vlaneseq
        %v6086 = vshrl.u32 %v6085, 7
        %v6087 = vsub.s32 %v6084, %v6086
        %v6088 = vrot.slane %v6074, %v6087
        %v6089 = vcombine.low %v5588, %v5846
        %v6090 = vcombine.high %v5588, %v5846
        %v6092 = vunpack.c.l.s4 1983009808
        %v6093 = vunpack.c.0.s8 %v6092
        %v6094 = vlaneseq
        %v6095 = vshrl.u32 %v6094, 7
        %v6096 = vsub.s32 %v6093, %v6095
        %v6097 = vrot.slane %v6089, %v6096
        %v6099 = vunpack.c.l.s4 1983009808
        %v6100 = vunpack.c.0.s8 %v6099
        %v6101 = vlaneseq
        %v6102 = vshrl.u32 %v6101, 7
        %v6103 = vsub.s32 %v6100, %v6102
        %v6104 = vrot.slane %v6090, %v6103
        %v6105 = vcombine.low %v6081, %v6097
        %v6106 = vcombine.high %v6081, %v6097
        %v6108 = vunpack.c.l.s4 1934713408
        %v6109 = vunpack.c.0.s8 %v6108
        %v6110 = vlaneseq
        %v6111 = vshrl.u32 %v6110, 7
        %v6112 = vsub.s32 %v6109, %v6111
        %v6113 = vrot.slane %v6105, %v6112
        %v6115 = vunpack.c.l.s4 1934713408
        %v6116 = vunpack.c.0.s8 %v6115
        %v6117 = vlaneseq
        %v6118 = vshrl.u32 %v6117, 7
        %v6119 = vsub.s32 %v6116, %v6118
        %v6120 = vrot.slane %v6106, %v6119
        %v6121 = vcombine.low %v6088, %v6104
        %v6122 = vcombine.high %v6088, %v6104
        %v6124 = vunpack.c.l.s4 1934713408
        %v6125 = vunpack.c.0.s8 %v6124
        %v6126 = vlaneseq
        %v6127 = vshrl.u32 %v6126, 7
        %v6128 = vsub.s32 %v6125, %v6127
        %v6129 = vrot.slane %v6121, %v6128
        %v6131 = vunpack.c.l.s4 1934713408
        %v6132 = vunpack.c.0.s8 %v6131
        %v6133 = vlaneseq
        %v6134 = vshrl.u32 %v6133, 7
        %v6135 = vsub.s32 %v6132, %v6134
        %v6136 = vrot.slane %v6122, %v6135
        %v6137 = vcombine.high %v6113, 0.0
        %v6138 = vcombine.high %v6120, 0.0
        %v6139 = vcombine.high %v6129, 0.0
        %v6140 = vcombine.high %v6136, 0.0
        %v6141 = vcombine.low %v5464, %v5722
        %v6142 = vcombine.high %v5464, %v5722
        %v6144 = vunpack.c.l.s4 1983009808
        %v6145 = vunpack.c.0.s8 %v6144
        %v6146 = vlaneseq
        %v6147 = vshrl.u32 %v6146, 7
        %v6148 = vsub.s32 %v6145, %v6147
        %v6149 = vrot.slane %v6141, %v6148
        %v6151 = vunpack.c.l.s4 1983009808
        %v6152 = vunpack.c.0.s8 %v6151
        %v6153 = vlaneseq
        %v6154 = vshrl.u32 %v6153, 7
        %v6155 = vsub.s32 %v6152, %v6154
        %v6156 = vrot.slane %v6142, %v6155
        %v6157 = vcombine.low %v5593, %v5851
        %v6158 = vcombine.high %v5593, %v5851
        %v6160 = vunpack.c.l.s4 1983009808
        %v6161 = vunpack.c.0.s8 %v6160
        %v6162 = vlaneseq
        %v6163 = vshrl.u32 %v6162, 7
        %v6164 = vsub.s32 %v6161, %v6163
        %v6165 = vrot.slane %v6157, %v6164
        %v6167 = vunpack.c.l.s4 1983009808
        %v6168 = vunpack.c.0.s8 %v6167
        %v6169 = vlaneseq
        %v6170 = vshrl.u32 %v6169, 7
        %v6171 = vsub.s32 %v6168, %v6170
        %v6172 = vrot.slane %v6158, %v6171
        %v6173 = vcombine.low %v6149, %v6165
        %v6174 = vcombine.high %v6149, %v6165
        %v6176 = vunpack.c.l.s4 1934713408
        %v6177 = vunpack.c.0.s8 %v6176
        %v6178 = vlaneseq
        %v6179 = vshrl.u32 %v6178, 7
        %v6180 = vsub.s32 %v6177, %v6179
        %v6181 = vrot.slane %v6173, %v6180
        %v6183 = vunpack.c.l.s4 1934713408
        %v6184 = vunpack.c.0.s8 %v6183
        %v6185 = vlaneseq
        %v6186 = vshrl.u32 %v6185, 7
        %v6187 = vsub.s32 %v6184, %v6186
        %v6188 = vrot.slane %v6174, %v6187
        %v6189 = vcombine.low %v6156, %v6172
        %v6190 = vcombine.high %v6156, %v6172
        %v6192 = vunpack.c.l.s4 1934713408
        %v6193 = vunpack.c.0.s8 %v6192
        %v6194 = vlaneseq
        %v6195 = vshrl.u32 %v6194, 7
        %v6196 = vsub.s32 %v6193, %v6195
        %v6197 = vrot.slane %v6189, %v6196
        %v6199 = vunpack.c.l.s4 1934713408
        %v6200 = vunpack.c.0.s8 %v6199
        %v6201 = vlaneseq
        %v6202 = vshrl.u32 %v6201, 7
        %v6203 = vsub.s32 %v6200, %v6202
        %v6204 = vrot.slane %v6190, %v6203
        %v6205 = vcombine.high %v6181, 0.0
        %v6206 = vcombine.high %v6188, 0.0
        %v6207 = vcombine.high %v6197, 0.0
        %v6208 = vcombine.high %v6204, 0.0
        %v6209 = vcombine.low %v5469, %v5727
        %v6210 = vcombine.high %v5469, %v5727
        %v6212 = vunpack.c.l.s4 1983009808
        %v6213 = vunpack.c.0.s8 %v6212
        %v6214 = vlaneseq
        %v6215 = vshrl.u32 %v6214, 7
        %v6216 = vsub.s32 %v6213, %v6215
        %v6217 = vrot.slane %v6209, %v6216
        %v6219 = vunpack.c.l.s4 1983009808
        %v6220 = vunpack.c.0.s8 %v6219
        %v6221 = vlaneseq
        %v6222 = vshrl.u32 %v6221, 7
        %v6223 = vsub.s32 %v6220, %v6222
        %v6224 = vrot.slane %v6210, %v6223
        %v6225 = vcombine.low %v5598, %v5856
        %v6226 = vcombine.high %v5598, %v5856
        %v6228 = vunpack.c.l.s4 1983009808
        %v6229 = vunpack.c.0.s8 %v6228
        %v6230 = vlaneseq
        %v6231 = vshrl.u32 %v6230, 7
        %v6232 = vsub.s32 %v6229, %v6231
        %v6233 = vrot.slane %v6225, %v6232
        %v6235 = vunpack.c.l.s4 1983009808
        %v6236 = vunpack.c.0.s8 %v6235
        %v6237 = vlaneseq
        %v6238 = vshrl.u32 %v6237, 7
        %v6239 = vsub.s32 %v6236, %v6238
        %v6240 = vrot.slane %v6226, %v6239
        %v6241 = vcombine.low %v6217, %v6233
        %v6242 = vcombine.high %v6217, %v6233
        %v6244 = vunpack.c.l.s4 1934713408
        %v6245 = vunpack.c.0.s8 %v6244
        %v6246 = vlaneseq
        %v6247 = vshrl.u32 %v6246, 7
        %v6248 = vsub.s32 %v6245, %v6247
        %v6249 = vrot.slane %v6241, %v6248
        %v6251 = vunpack.c.l.s4 1934713408
        %v6252 = vunpack.c.0.s8 %v6251
        %v6253 = vlaneseq
        %v6254 = vshrl.u32 %v6253, 7
        %v6255 = vsub.s32 %v6252, %v6254
        %v6256 = vrot.slane %v6242, %v6255
        %v6257 = vcombine.low %v6224, %v6240
        %v6258 = vcombine.high %v6224, %v6240
        %v6260 = vunpack.c.l.s4 1934713408
        %v6261 = vunpack.c.0.s8 %v6260
        %v6262 = vlaneseq
        %v6263 = vshrl.u32 %v6262, 7
        %v6264 = vsub.s32 %v6261, %v6263
        %v6265 = vrot.slane %v6257, %v6264
        %v6267 = vunpack.c.l.s4 1934713408
        %v6268 = vunpack.c.0.s8 %v6267
        %v6269 = vlaneseq
        %v6270 = vshrl.u32 %v6269, 7
        %v6271 = vsub.s32 %v6268, %v6270
        %v6272 = vrot.slane %v6258, %v6271
        %v6273 = vcombine.high %v6249, 0.0
        %v6274 = vcombine.high %v6256, 0.0
        %v6275 = vcombine.high %v6265, 0.0
        %v6276 = vcombine.high %v6272, 0.0
        %v6277 = vcombine.low %v5474, %v5732
        %v6278 = vcombine.high %v5474, %v5732
        %v6280 = vunpack.c.l.s4 1983009808
        %v6281 = vunpack.c.0.s8 %v6280
        %v6282 = vlaneseq
        %v6283 = vshrl.u32 %v6282, 7
        %v6284 = vsub.s32 %v6281, %v6283
        %v6285 = vrot.slane %v6277, %v6284
        %v6287 = vunpack.c.l.s4 1983009808
        %v6288 = vunpack.c.0.s8 %v6287
        %v6289 = vlaneseq
        %v6290 = vshrl.u32 %v6289, 7
        %v6291 = vsub.s32 %v6288, %v6290
        %v6292 = vrot.slane %v6278, %v6291
        %v6293 = vcombine.low %v5603, %v5861
        %v6294 = vcombine.high %v5603, %v5861
        %v6296 = vunpack.c.l.s4 1983009808
        %v6297 = vunpack.c.0.s8 %v6296
        %v6298 = vlaneseq
        %v6299 = vshrl.u32 %v6298, 7
        %v6300 = vsub.s32 %v6297, %v6299
        %v6301 = vrot.slane %v6293, %v6300
        %v6303 = vunpack.c.l.s4 1983009808
        %v6304 = vunpack.c.0.s8 %v6303
        %v6305 = vlaneseq
        %v6306 = vshrl.u32 %v6305, 7
        %v6307 = vsub.s32 %v6304, %v6306
        %v6308 = vrot.slane %v6294, %v6307
        %v6309 = vcombine.low %v6285, %v6301
        %v6310 = vcombine.high %v6285, %v6301
        %v6312 = vunpack.c.l.s4 1934713408
        %v6313 = vunpack.c.0.s8 %v6312
        %v6314 = vlaneseq
        %v6315 = vshrl.u32 %v6314, 7
        %v6316 = vsub.s32 %v6313, %v6315
        %v6317 = vrot.slane %v6309, %v6316
        %v6319 = vunpack.c.l.s4 1934713408
        %v6320 = vunpack.c.0.s8 %v6319
        %v6321 = vlaneseq
        %v6322 = vshrl.u32 %v6321, 7
        %v6323 = vsub.s32 %v6320, %v6322
        %v6324 = vrot.slane %v6310, %v6323
        %v6325 = vcombine.low %v6292, %v6308
        %v6326 = vcombine.high %v6292, %v6308
        %v6328 = vunpack.c.l.s4 1934713408
        %v6329 = vunpack.c.0.s8 %v6328
        %v6330 = vlaneseq
        %v6331 = vshrl.u32 %v6330, 7
        %v6332 = vsub.s32 %v6329, %v6331
        %v6333 = vrot.slane %v6325, %v6332
        %v6335 = vunpack.c.l.s4 1934713408
        %v6336 = vunpack.c.0.s8 %v6335
        %v6337 = vlaneseq
        %v6338 = vshrl.u32 %v6337, 7
        %v6339 = vsub.s32 %v6336, %v6338
        %v6340 = vrot.slane %v6326, %v6339
        %v6341 = vcombine.high %v6317, 0.0
        %v6342 = vcombine.high %v6324, 0.0
        %v6343 = vcombine.high %v6333, 0.0
        %v6344 = vcombine.high %v6340, 0.0
        %v6345 = vcombine.low %v5479, %v5737
        %v6346 = vcombine.high %v5479, %v5737
        %v6348 = vunpack.c.l.s4 1983009808
        %v6349 = vunpack.c.0.s8 %v6348
        %v6350 = vlaneseq
        %v6351 = vshrl.u32 %v6350, 7
        %v6352 = vsub.s32 %v6349, %v6351
        %v6353 = vrot.slane %v6345, %v6352
        %v6355 = vunpack.c.l.s4 1983009808
        %v6356 = vunpack.c.0.s8 %v6355
        %v6357 = vlaneseq
        %v6358 = vshrl.u32 %v6357, 7
        %v6359 = vsub.s32 %v6356, %v6358
        %v6360 = vrot.slane %v6346, %v6359
        %v6361 = vcombine.low %v5608, %v5866
        %v6362 = vcombine.high %v5608, %v5866
        %v6364 = vunpack.c.l.s4 1983009808
        %v6365 = vunpack.c.0.s8 %v6364
        %v6366 = vlaneseq
        %v6367 = vshrl.u32 %v6366, 7
        %v6368 = vsub.s32 %v6365, %v6367
        %v6369 = vrot.slane %v6361, %v6368
        %v6371 = vunpack.c.l.s4 1983009808
        %v6372 = vunpack.c.0.s8 %v6371
        %v6373 = vlaneseq
        %v6374 = vshrl.u32 %v6373, 7
        %v6375 = vsub.s32 %v6372, %v6374
        %v6376 = vrot.slane %v6362, %v6375
        %v6377 = vcombine.low %v6353, %v6369
        %v6378 = vcombine.high %v6353, %v6369
        %v6380 = vunpack.c.l.s4 1934713408
        %v6381 = vunpack.c.0.s8 %v6380
        %v6382 = vlaneseq
        %v6383 = vshrl.u32 %v6382, 7
        %v6384 = vsub.s32 %v6381, %v6383
        %v6385 = vrot.slane %v6377, %v6384
        %v6387 = vunpack.c.l.s4 1934713408
        %v6388 = vunpack.c.0.s8 %v6387
        %v6389 = vlaneseq
        %v6390 = vshrl.u32 %v6389, 7
        %v6391 = vsub.s32 %v6388, %v6390
        %v6392 = vrot.slane %v6378, %v6391
        %v6393 = vcombine.low %v6360, %v6376
        %v6394 = vcombine.high %v6360, %v6376
        %v6396 = vunpack.c.l.s4 1934713408
        %v6397 = vunpack.c.0.s8 %v6396
        %v6398 = vlaneseq
        %v6399 = vshrl.u32 %v6398, 7
        %v6400 = vsub.s32 %v6397, %v6399
        %v6401 = vrot.slane %v6393, %v6400
        %v6403 = vunpack.c.l.s4 1934713408
        %v6404 = vunpack.c.0.s8 %v6403
        %v6405 = vlaneseq
        %v6406 = vshrl.u32 %v6405, 7
        %v6407 = vsub.s32 %v6404, %v6406
        %v6408 = vrot.slane %v6394, %v6407
        %v6409 = vcombine.high %v6385, 0.0
        %v6410 = vcombine.high %v6392, 0.0
        %v6411 = vcombine.high %v6401, 0.0
        %v6412 = vcombine.high %v6408, 0.0
        %v6413 = vcombine.low %v5909, %v5916
        %v6415 = vunpack.c.l.s4 1983009808
        %v6416 = vunpack.c.0.s8 %v6415
        %v6417 = vlaneseq
        %v6418 = vshrl.u32 %v6417, 7
        %v6419 = vsub.s32 %v6416, %v6418
        %v6420 = vrot.slane %v6413, %v6419
        %v6421 = vcombine.low %v5933, %v5934
        %v6423 = vunpack.c.l.s4 1983009808
        %v6424 = vunpack.c.0.s8 %v6423
        %v6425 = vlaneseq
        %v6426 = vshrl.u32 %v6425, 7
        %v6427 = vsub.s32 %v6424, %v6426
        %v6428 = vrot.slane %v6421, %v6427
        %v6429 = vcombine.low %v5925, %v5932
        %v6431 = vunpack.c.l.s4 1983009808
        %v6432 = vunpack.c.0.s8 %v6431
        %v6433 = vlaneseq
        %v6434 = vshrl.u32 %v6433, 7
        %v6435 = vsub.s32 %v6432, %v6434
        %v6436 = vrot.slane %v6429, %v6435
        %v6437 = vcombine.low %v5935, %v5936
        %v6439 = vunpack.c.l.s4 1983009808
        %v6440 = vunpack.c.0.s8 %v6439
        %v6441 = vlaneseq
        %v6442 = vshrl.u32 %v6441, 7
        %v6443 = vsub.s32 %v6440, %v6442
        %v6444 = vrot.slane %v6437, %v6443
        %v6445 = vcombine.low %v6420, %v6428
        %v6446 = vcombine.high %v6420, %v6428
        %v6448 = vunpack.c.l.s4 1934713408
        %v6449 = vunpack.c.0.s8 %v6448
        %v6450 = vlaneseq
        %v6451 = vshrl.u32 %v6450, 7
        %v6452 = vsub.s32 %v6449, %v6451
        %v6453 = vrot.slane %v6445, %v6452
        %v6455 = vunpack.c.l.s4 1934713408
        %v6456 = vunpack.c.0.s8 %v6455
        %v6457 = vlaneseq
        %v6458 = vshrl.u32 %v6457, 7
        %v6459 = vsub.s32 %v6456, %v6458
        %v6460 = vrot.slane %v6446, %v6459
        %v6461 = vcombine.low %v6436, %v6444
        %v6462 = vcombine.high %v6436, %v6444
        %v6464 = vunpack.c.l.s4 1934713408
        %v6465 = vunpack.c.0.s8 %v6464
        %v6466 = vlaneseq
        %v6467 = vshrl.u32 %v6466, 7
        %v6468 = vsub.s32 %v6465, %v6467
        %v6469 = vrot.slane %v6461, %v6468
        %v6471 = vunpack.c.l.s4 1934713408
        %v6472 = vunpack.c.0.s8 %v6471
        %v6473 = vlaneseq
        %v6474 = vshrl.u32 %v6473, 7
        %v6475 = vsub.s32 %v6472, %v6474
        %v6476 = vrot.slane %v6462, %v6475
        %v6477 = vcombine.low %v6453, %v6469
        %v6478 = vcombine.high %v6453, %v6469
        %v6479 = vcombine.low %v6460, %v6476
        %v6480 = vcombine.high %v6460, %v6476
        %v6481 = vcombine.low %v5977, %v5984
        %v6483 = vunpack.c.l.s4 1983009808
        %v6484 = vunpack.c.0.s8 %v6483
        %v6485 = vlaneseq
        %v6486 = vshrl.u32 %v6485, 7
        %v6487 = vsub.s32 %v6484, %v6486
        %v6488 = vrot.slane %v6481, %v6487
        %v6489 = vcombine.low %v6001, %v6002
        %v6491 = vunpack.c.l.s4 1983009808
        %v6492 = vunpack.c.0.s8 %v6491
        %v6493 = vlaneseq
        %v6494 = vshrl.u32 %v6493, 7
        %v6495 = vsub.s32 %v6492, %v6494
        %v6496 = vrot.slane %v6489, %v6495
        %v6497 = vcombine.low %v5993, %v6000
        %v6499 = vunpack.c.l.s4 1983009808
        %v6500 = vunpack.c.0.s8 %v6499
        %v6501 = vlaneseq
        %v6502 = vshrl.u32 %v6501, 7
        %v6503 = vsub.s32 %v6500, %v6502
        %v6504 = vrot.slane %v6497, %v6503
        %v6505 = vcombine.low %v6003, %v6004
        %v6507 = vunpack.c.l.s4 1983009808
        %v6508 = vunpack.c.0.s8 %v6507
        %v6509 = vlaneseq
        %v6510 = vshrl.u32 %v6509, 7
        %v6511 = vsub.s32 %v6508, %v6510
        %v6512 = vrot.slane %v6505, %v6511
        %v6513 = vcombine.low %v6488, %v6496
        %v6514 = vcombine.high %v6488, %v6496
        %v6516 = vunpack.c.l.s4 1934713408
        %v6517 = vunpack.c.0.s8 %v6516
        %v6518 = vlaneseq
        %v6519 = vshrl.u32 %v6518, 7
        %v6520 = vsub.s32 %v6517, %v6519
        %v6521 = vrot.slane %v6513, %v6520
        %v6523 = vunpack.c.l.s4 1934713408
        %v6524 = vunpack.c.0.s8 %v6523
        %v6525 = vlaneseq
        %v6526 = vshrl.u32 %v6525, 7
        %v6527 = vsub.s32 %v6524, %v6526
        %v6528 = vrot.slane %v6514, %v6527
        %v6529 = vcombine.low %v6504, %v6512
        %v6530 = vcombine.high %v6504, %v6512
        %v6532 = vunpack.c.l.s4 1934713408
        %v6533 = vunpack.c.0.s8 %v6532
        %v6534 = vlaneseq
        %v6535 = vshrl.u32 %v6534, 7
        %v6536 = vsub.s32 %v6533, %v6535
        %v6537 = vrot.slane %v6529, %v6536
        %v6539 = vunpack.c.l.s4 1934713408
        %v6540 = vunpack.c.0.s8 %v6539
        %v6541 = vlaneseq
        %v6542 = vshrl.u32 %v6541, 7
        %v6543 = vsub.s32 %v6540, %v6542
        %v6544 = vrot.slane %v6530, %v6543
        %v6545 = vcombine.low %v6521, %v6537
        %v6546 = vcombine.high %v6521, %v6537
        %v6547 = vcombine.low %v6528, %v6544
        %v6548 = vcombine.high %v6528, %v6544
        %v6549 = vcombine.low %v6045, %v6052
        %v6551 = vunpack.c.l.s4 1983009808
        %v6552 = vunpack.c.0.s8 %v6551
        %v6553 = vlaneseq
        %v6554 = vshrl.u32 %v6553, 7
        %v6555 = vsub.s32 %v6552, %v6554
        %v6556 = vrot.slane %v6549, %v6555
        %v6557 = vcombine.low %v6069, %v6070
        %v6559 = vunpack.c.l.s4 1983009808
        %v6560 = vunpack.c.0.s8 %v6559
        %v6561 = vlaneseq
        %v6562 = vshrl.u32 %v6561, 7
        %v6563 = vsub.s32 %v6560, %v6562
        %v6564 = vrot.slane %v6557, %v6563
        %v6565 = vcombine.low %v6061, %v6068
        %v6567 = vunpack.c.l.s4 1983009808
        %v6568 = vunpack.c.0.s8 %v6567
        %v6569 = vlaneseq
        %v6570 = vshrl.u32 %v6569, 7
        %v6571 = vsub.s32 %v6568, %v6570
        %v6572 = vrot.slane %v6565, %v6571
        %v6573 = vcombine.low %v6071, %v6072
        %v6575 = vunpack.c.l.s4 1983009808
        %v6576 = vunpack.c.0.s8 %v6575
        %v6577 = vlaneseq
        %v6578 = vshrl.u32 %v6577, 7
        %v6579 = vsub.s32 %v6576, %v6578
        %v6580 = vrot.slane %v6573, %v6579
        %v6581 = vcombine.low %v6556, %v6564
        %v6582 = vcombine.high %v6556, %v6564
        %v6584 = vunpack.c.l.s4 1934713408
        %v6585 = vunpack.c.0.s8 %v6584
        %v6586 = vlaneseq
        %v6587 = vshrl.u32 %v6586, 7
        %v6588 = vsub.s32 %v6585, %v6587
        %v6589 = vrot.slane %v6581, %v6588
        %v6591 = vunpack.c.l.s4 1934713408
        %v6592 = vunpack.c.0.s8 %v6591
        %v6593 = vlaneseq
        %v6594 = vshrl.u32 %v6593, 7
        %v6595 = vsub.s32 %v6592, %v6594
        %v6596 = vrot.slane %v6582, %v6595
        %v6597 = vcombine.low %v6572, %v6580
        %v6598 = vcombine.high %v6572, %v6580
        %v6600 = vunpack.c.l.s4 1934713408
        %v6601 = vunpack.c.0.s8 %v6600
        %v6602 = vlaneseq
        %v6603 = vshrl.u32 %v6602, 7
        %v6604 = vsub.s32 %v6601, %v6603
        %v6605 = vrot.slane %v6597, %v6604
        %v6607 = vunpack.c.l.s4 1934713408
        %v6608 = vunpack.c.0.s8 %v6607
        %v6609 = vlaneseq
        %v6610 = vshrl.u32 %v6609, 7
        %v6611 = vsub.s32 %v6608, %v6610
        %v6612 = vrot.slane %v6598, %v6611
        %v6613 = vcombine.low %v6589, %v6605
        %v6614 = vcombine.high %v6589, %v6605
        %v6615 = vcombine.low %v6596, %v6612
        %v6616 = vcombine.high %v6596, %v6612
        %v6617 = vcombine.low %v6113, %v6120
        %v6619 = vunpack.c.l.s4 1983009808
        %v6620 = vunpack.c.0.s8 %v6619
        %v6621 = vlaneseq
        %v6622 = vshrl.u32 %v6621, 7
        %v6623 = vsub.s32 %v6620, %v6622
        %v6624 = vrot.slane %v6617, %v6623
        %v6625 = vcombine.low %v6137, %v6138
        %v6627 = vunpack.c.l.s4 1983009808
        %v6628 = vunpack.c.0.s8 %v6627
        %v6629 = vlaneseq
        %v6630 = vshrl.u32 %v6629, 7
        %v6631 = vsub.s32 %v6628, %v6630
        %v6632 = vrot.slane %v6625, %v6631
        %v6633 = vcombine.low %v6129, %v6136
        %v6635 = vunpack.c.l.s4 1983009808
        %v6636 = vunpack.c.0.s8 %v6635
        %v6637 = vlaneseq
        %v6638 = vshrl.u32 %v6637, 7
        %v6639 = vsub.s32 %v6636, %v6638
        %v6640 = vrot.slane %v6633, %v6639
        %v6641 = vcombine.low %v6139, %v6140
        %v6643 = vunpack.c.l.s4 1983009808
        %v6644 = vunpack.c.0.s8 %v6643
        %v6645 = vlaneseq
        %v6646 = vshrl.u32 %v6645, 7
        %v6647 = vsub.s32 %v6644, %v6646
        %v6648 = vrot.slane %v6641, %v6647
        %v6649 = vcombine.low %v6624, %v6632
        %v6650 = vcombine.high %v6624, %v6632
        %v6652 = vunpack.c.l.s4 1934713408
        %v6653 = vunpack.c.0.s8 %v6652
        %v6654 = vlaneseq
        %v6655 = vshrl.u32 %v6654, 7
        %v6656 = vsub.s32 %v6653, %v6655
        %v6657 = vrot.slane %v6649, %v6656
        %v6659 = vunpack.c.l.s4 1934713408
        %v6660 = vunpack.c.0.s8 %v6659
        %v6661 = vlaneseq
        %v6662 = vshrl.u32 %v6661, 7
        %v6663 = vsub.s32 %v6660, %v6662
        %v6664 = vrot.slane %v6650, %v6663
        %v6665 = vcombine.low %v6640, %v6648
        %v6666 = vcombine.high %v6640, %v6648
        %v6668 = vunpack.c.l.s4 1934713408
        %v6669 = vunpack.c.0.s8 %v6668
        %v6670 = vlaneseq
        %v6671 = vshrl.u32 %v6670, 7
        %v6672 = vsub.s32 %v6669, %v6671
        %v6673 = vrot.slane %v6665, %v6672
        %v6675 = vunpack.c.l.s4 1934713408
        %v6676 = vunpack.c.0.s8 %v6675
        %v6677 = vlaneseq
        %v6678 = vshrl.u32 %v6677, 7
        %v6679 = vsub.s32 %v6676, %v6678
        %v6680 = vrot.slane %v6666, %v6679
        %v6681 = vcombine.low %v6657, %v6673
        %v6682 = vcombine.high %v6657, %v6673
        %v6683 = vcombine.low %v6664, %v6680
        %v6684 = vcombine.high %v6664, %v6680
        %v6685 = vcombine.low %v6181, %v6188
        %v6687 = vunpack.c.l.s4 1983009808
        %v6688 = vunpack.c.0.s8 %v6687
        %v6689 = vlaneseq
        %v6690 = vshrl.u32 %v6689, 7
        %v6691 = vsub.s32 %v6688, %v6690
        %v6692 = vrot.slane %v6685, %v6691
        %v6693 = vcombine.low %v6205, %v6206
        %v6695 = vunpack.c.l.s4 1983009808
        %v6696 = vunpack.c.0.s8 %v6695
        %v6697 = vlaneseq
        %v6698 = vshrl.u32 %v6697, 7
        %v6699 = vsub.s32 %v6696, %v6698
        %v6700 = vrot.slane %v6693, %v6699
        %v6701 = vcombine.low %v6197, %v6204
        %v6703 = vunpack.c.l.s4 1983009808
        %v6704 = vunpack.c.0.s8 %v6703
        %v6705 = vlaneseq
        %v6706 = vshrl.u32 %v6705, 7
        %v6707 = vsub.s32 %v6704, %v6706
        %v6708 = vrot.slane %v6701, %v6707
        %v6709 = vcombine.low %v6207, %v6208
        %v6711 = vunpack.c.l.s4 1983009808
        %v6712 = vunpack.c.0.s8 %v6711
        %v6713 = vlaneseq
        %v6714 = vshrl.u32 %v6713, 7
        %v6715 = vsub.s32 %v6712, %v6714
        %v6716 = vrot.slane %v6709, %v6715
        %v6717 = vcombine.low %v6692, %v6700
        %v6718 = vcombine.high %v6692, %v6700
        %v6720 = vunpack.c.l.s4 1934713408
        %v6721 = vunpack.c.0.s8 %v6720
        %v6722 = vlaneseq
        %v6723 = vshrl.u32 %v6722, 7
        %v6724 = vsub.s32 %v6721, %v6723
        %v6725 = vrot.slane %v6717, %v6724
        %v6727 = vunpack.c.l.s4 1934713408
        %v6728 = vunpack.c.0.s8 %v6727
        %v6729 = vlaneseq
        %v6730 = vshrl.u32 %v6729, 7
        %v6731 = vsub.s32 %v6728, %v6730
        %v6732 = vrot.slane %v6718, %v6731
        %v6733 = vcombine.low %v6708, %v6716
        %v6734 = vcombine.high %v6708, %v6716
        %v6736 = vunpack.c.l.s4 1934713408
        %v6737 = vunpack.c.0.s8 %v6736
        %v6738 = vlaneseq
        %v6739 = vshrl.u32 %v6738, 7
        %v6740 = vsub.s32 %v6737, %v6739
        %v6741 = vrot.slane %v6733, %v6740
        %v6743 = vunpack.c.l.s4 1934713408
        %v6744 = vunpack.c.0.s8 %v6743
        %v6745 = vlaneseq
        %v6746 = vshrl.u32 %v6745, 7
        %v6747 = vsub.s32 %v6744, %v6746
        %v6748 = vrot.slane %v6734, %v6747
        %v6749 = vcombine.low %v6725, %v6741
        %v6750 = vcombine.high %v6725, %v6741
        %v6751 = vcombine.low %v6732, %v6748
        %v6752 = vcombine.high %v6732, %v6748
        %v6753 = vcombine.low %v6249, %v6256
        %v6755 = vunpack.c.l.s4 1983009808
        %v6756 = vunpack.c.0.s8 %v6755
        %v6757 = vlaneseq
        %v6758 = vshrl.u32 %v6757, 7
        %v6759 = vsub.s32 %v6756, %v6758
        %v6760 = vrot.slane %v6753, %v6759
        %v6761 = vcombine.low %v6273, %v6274
        %v6763 = vunpack.c.l.s4 1983009808
        %v6764 = vunpack.c.0.s8 %v6763
        %v6765 = vlaneseq
        %v6766 = vshrl.u32 %v6765, 7
        %v6767 = vsub.s32 %v6764, %v6766
        %v6768 = vrot.slane %v6761, %v6767
        %v6769 = vcombine.low %v6265, %v6272
        %v6771 = vunpack.c.l.s4 1983009808
        %v6772 = vunpack.c.0.s8 %v6771
        %v6773 = vlaneseq
        %v6774 = vshrl.u32 %v6773, 7
        %v6775 = vsub.s32 %v6772, %v6774
        %v6776 = vrot.slane %v6769, %v6775
        %v6777 = vcombine.low %v6275, %v6276
        %v6779 = vunpack.c.l.s4 1983009808
        %v6780 = vunpack.c.0.s8 %v6779
        %v6781 = vlaneseq
        %v6782 = vshrl.u32 %v6781, 7
        %v6783 = vsub.s32 %v6780, %v6782
        %v6784 = vrot.slane %v6777, %v6783
        %v6785 = vcombine.low %v6760, %v6768
        %v6786 = vcombine.high %v6760, %v6768
        %v6788 = vunpack.c.l.s4 1934713408
        %v6789 = vunpack.c.0.s8 %v6788
        %v6790 = vlaneseq
        %v6791 = vshrl.u32 %v6790, 7
        %v6792 = vsub.s32 %v6789, %v6791
        %v6793 = vrot.slane %v6785, %v6792
        %v6795 = vunpack.c.l.s4 1934713408
        %v6796 = vunpack.c.0.s8 %v6795
        %v6797 = vlaneseq
        %v6798 = vshrl.u32 %v6797, 7
        %v6799 = vsub.s32 %v6796, %v6798
        %v6800 = vrot.slane %v6786, %v6799
        %v6801 = vcombine.low %v6776, %v6784
        %v6802 = vcombine.high %v6776, %v6784
        %v6804 = vunpack.c.l.s4 1934713408
        %v6805 = vunpack.c.0.s8 %v6804
        %v6806 = vlaneseq
        %v6807 = vshrl.u32 %v6806, 7
        %v6808 = vsub.s32 %v6805, %v6807
        %v6809 = vrot.slane %v6801, %v6808
        %v6811 = vunpack.c.l.s4 1934713408
        %v6812 = vunpack.c.0.s8 %v6811
        %v6813 = vlaneseq
        %v6814 = vshrl.u32 %v6813, 7
        %v6815 = vsub.s32 %v6812, %v6814
        %v6816 = vrot.slane %v6802, %v6815
        %v6817 = vcombine.low %v6793, %v6809
        %v6818 = vcombine.high %v6793, %v6809
        %v6819 = vcombine.low %v6800, %v6816
        %v6820 = vcombine.high %v6800, %v6816
        %v6821 = vcombine.low %v6317, %v6324
        %v6823 = vunpack.c.l.s4 1983009808
        %v6824 = vunpack.c.0.s8 %v6823
        %v6825 = vlaneseq
        %v6826 = vshrl.u32 %v6825, 7
        %v6827 = vsub.s32 %v6824, %v6826
        %v6828 = vrot.slane %v6821, %v6827
        %v6829 = vcombine.low %v6341, %v6342
        %v6831 = vunpack.c.l.s4 1983009808
        %v6832 = vunpack.c.0.s8 %v6831
        %v6833 = vlaneseq
        %v6834 = vshrl.u32 %v6833, 7
        %v6835 = vsub.s32 %v6832, %v6834
        %v6836 = vrot.slane %v6829, %v6835
        %v6837 = vcombine.low %v6333, %v6340
        %v6839 = vunpack.c.l.s4 1983009808
        %v6840 = vunpack.c.0.s8 %v6839
        %v6841 = vlaneseq
        %v6842 = vshrl.u32 %v6841, 7
        %v6843 = vsub.s32 %v6840, %v6842
        %v6844 = vrot.slane %v6837, %v6843
        %v6845 = vcombine.low %v6343, %v6344
        %v6847 = vunpack.c.l.s4 1983009808
        %v6848 = vunpack.c.0.s8 %v6847
        %v6849 = vlaneseq
        %v6850 = vshrl.u32 %v6849, 7
        %v6851 = vsub.s32 %v6848, %v6850
        %v6852 = vrot.slane %v6845, %v6851
        %v6853 = vcombine.low %v6828, %v6836
        %v6854 = vcombine.high %v6828, %v6836
        %v6856 = vunpack.c.l.s4 1934713408
        %v6857 = vunpack.c.0.s8 %v6856
        %v6858 = vlaneseq
        %v6859 = vshrl.u32 %v6858, 7
        %v6860 = vsub.s32 %v6857, %v6859
        %v6861 = vrot.slane %v6853, %v6860
        %v6863 = vunpack.c.l.s4 1934713408
        %v6864 = vunpack.c.0.s8 %v6863
        %v6865 = vlaneseq
        %v6866 = vshrl.u32 %v6865, 7
        %v6867 = vsub.s32 %v6864, %v6866
        %v6868 = vrot.slane %v6854, %v6867
        %v6869 = vcombine.low %v6844, %v6852
        %v6870 = vcombine.high %v6844, %v6852
        %v6872 = vunpack.c.l.s4 1934713408
        %v6873 = vunpack.c.0.s8 %v6872
        %v6874 = vlaneseq
        %v6875 = vshrl.u32 %v6874, 7
        %v6876 = vsub.s32 %v6873, %v6875
        %v6877 = vrot.slane %v6869, %v6876
        %v6879 = vunpack.c.l.s4 1934713408
        %v6880 = vunpack.c.0.s8 %v6879
        %v6881 = vlaneseq
        %v6882 = vshrl.u32 %v6881, 7
        %v6883 = vsub.s32 %v6880, %v6882
        %v6884 = vrot.slane %v6870, %v6883
        %v6885 = vcombine.low %v6861, %v6877
        %v6886 = vcombine.high %v6861, %v6877
        %v6887 = vcombine.low %v6868, %v6884
        %v6888 = vcombine.high %v6868, %v6884
        %v6889 = vcombine.low %v6385, %v6392
        %v6891 = vunpack.c.l.s4 1983009808
        %v6892 = vunpack.c.0.s8 %v6891
        %v6893 = vlaneseq
        %v6894 = vshrl.u32 %v6893, 7
        %v6895 = vsub.s32 %v6892, %v6894
        %v6896 = vrot.slane %v6889, %v6895
        %v6897 = vcombine.low %v6409, %v6410
        %v6899 = vunpack.c.l.s4 1983009808
        %v6900 = vunpack.c.0.s8 %v6899
        %v6901 = vlaneseq
        %v6902 = vshrl.u32 %v6901, 7
        %v6903 = vsub.s32 %v6900, %v6902
        %v6904 = vrot.slane %v6897, %v6903
        %v6905 = vcombine.low %v6401, %v6408
        %v6907 = vunpack.c.l.s4 1983009808
        %v6908 = vunpack.c.0.s8 %v6907
        %v6909 = vlaneseq
        %v6910 = vshrl.u32 %v6909, 7
        %v6911 = vsub.s32 %v6908, %v6910
        %v6912 = vrot.slane %v6905, %v6911
        %v6913 = vcombine.low %v6411, %v6412
        %v6915 = vunpack.c.l.s4 1983009808
        %v6916 = vunpack.c.0.s8 %v6915
        %v6917 = vlaneseq
        %v6918 = vshrl.u32 %v6917, 7
        %v6919 = vsub.s32 %v6916, %v6918
        %v6920 = vrot.slane %v6913, %v6919
        %v6921 = vcombine.low %v6896, %v6904
        %v6922 = vcombine.high %v6896, %v6904
        %v6924 = vunpack.c.l.s4 1934713408
        %v6925 = vunpack.c.0.s8 %v6924
        %v6926 = vlaneseq
        %v6927 = vshrl.u32 %v6926, 7
        %v6928 = vsub.s32 %v6925, %v6927
        %v6929 = vrot.slane %v6921, %v6928
        %v6931 = vunpack.c.l.s4 1934713408
        %v6932 = vunpack.c.0.s8 %v6931
        %v6933 = vlaneseq
        %v6934 = vshrl.u32 %v6933, 7
        %v6935 = vsub.s32 %v6932, %v6934
        %v6936 = vrot.slane %v6922, %v6935
        %v6937 = vcombine.low %v6912, %v6920
        %v6938 = vcombine.high %v6912, %v6920
        %v6940 = vunpack.c.l.s4 1934713408
        %v6941 = vunpack.c.0.s8 %v6940
        %v6942 = vlaneseq
        %v6943 = vshrl.u32 %v6942, 7
        %v6944 = vsub.s32 %v6941, %v6943
        %v6945 = vrot.slane %v6937, %v6944
        %v6947 = vunpack.c.l.s4 1934713408
        %v6948 = vunpack.c.0.s8 %v6947
        %v6949 = vlaneseq
        %v6950 = vshrl.u32 %v6949, 7
        %v6951 = vsub.s32 %v6948, %v6950
        %v6952 = vrot.slane %v6938, %v6951
        %v6953 = vcombine.low %v6929, %v6945
        %v6954 = vcombine.high %v6929, %v6945
        %v6955 = vcombine.low %v6936, %v6952
        %v6956 = vcombine.high %v6936, %v6952
        %6965 = vrot.lane.b32.xlu0 %v6478, 32
        %v6966 = vpop.permute.xlu0 %6965
        %6967 = vrot.lane.b32.xlu0 %v6546, 32
        %v6968 = vpop.permute.xlu0 %6967
        %6969 = vrot.lane.b32.xlu0 %v6614, 32
        %v6970 = vpop.permute.xlu0 %6969
        %6971 = vrot.lane.b32.xlu0 %v6682, 32
        %v6972 = vpop.permute.xlu0 %6971
        %6973 = vrot.lane.b32.xlu0 %v6750, 32
        %v6974 = vpop.permute.xlu0 %6973
        %6975 = vrot.lane.b32.xlu0 %v6818, 32
        %v6976 = vpop.permute.xlu0 %6975
        %6977 = vrot.lane.b32.xlu0 %v6886, 32
        %v6978 = vpop.permute.xlu0 %6977
        %6979 = vrot.lane.b32.xlu0 %v6954, 32
        %v6980 = vpop.permute.xlu0 %6979
        %6997 = vrot.lane.b32.xlu0 %v6479, 64
        %v6998 = vpop.permute.xlu0 %6997
        %6999 = vrot.lane.b32.xlu0 %v6547, 64
        %v7000 = vpop.permute.xlu0 %6999
        %7001 = vrot.lane.b32.xlu0 %v6615, 64
        %v7002 = vpop.permute.xlu0 %7001
        %7003 = vrot.lane.b32.xlu0 %v6683, 64
        %v7004 = vpop.permute.xlu0 %7003
        %7005 = vrot.lane.b32.xlu0 %v6751, 64
        %v7006 = vpop.permute.xlu0 %7005
        %7007 = vrot.lane.b32.xlu0 %v6819, 64
        %v7008 = vpop.permute.xlu0 %7007
        %7009 = vrot.lane.b32.xlu0 %v6887, 64
        %v7010 = vpop.permute.xlu0 %7009
        %7011 = vrot.lane.b32.xlu0 %v6955, 64
        %v7012 = vpop.permute.xlu0 %7011
        %7029 = vrot.lane.b32.xlu0 %v6480, 96
        %v7030 = vpop.permute.xlu0 %7029
        %7031 = vrot.lane.b32.xlu0 %v6548, 96
        %v7032 = vpop.permute.xlu0 %7031
        %7033 = vrot.lane.b32.xlu0 %v6616, 96
        %v7034 = vpop.permute.xlu0 %7033
        %7035 = vrot.lane.b32.xlu0 %v6684, 96
        %v7036 = vpop.permute.xlu0 %7035
        %7037 = vrot.lane.b32.xlu0 %v6752, 96
        %v7038 = vpop.permute.xlu0 %7037
        %7039 = vrot.lane.b32.xlu0 %v6820, 96
        %v7040 = vpop.permute.xlu0 %7039
        %7041 = vrot.lane.b32.xlu0 %v6888, 96
        %v7042 = vpop.permute.xlu0 %7041
        %7043 = vrot.lane.b32.xlu0 %v6956, 96
        %v7044 = vpop.permute.xlu0 %7043
        %v7053 = vsel %vm4387, %v6477, %v6966
        %v7054 = vsel %vm4387, %v6545, %v6968
        %v7055 = vsel %vm4387, %v6613, %v6970
        %v7056 = vsel %vm4387, %v6681, %v6972
        %v7057 = vsel %vm4387, %v6749, %v6974
        %v7058 = vsel %vm4387, %v6817, %v6976
        %v7059 = vsel %vm4387, %v6885, %v6978
        %v7060 = vsel %vm4387, %v6953, %v6980
        %v7061 = vsel %vm5000, %v7053, %v6998
        %v7062 = vsel %vm5000, %v7054, %v7000
        %v7063 = vsel %vm5000, %v7055, %v7002
        %v7064 = vsel %vm5000, %v7056, %v7004
        %v7065 = vsel %vm5000, %v7057, %v7006
        %v7066 = vsel %vm5000, %v7058, %v7008
        %v7067 = vsel %vm5000, %v7059, %v7010
        %v7068 = vsel %vm5000, %v7060, %v7012
        %vm7069 = vcmask 785408
        %v7070 = vsel %vm7069, %v7061, %v7030
        %v7071 = vsel %vm7069, %v7062, %v7032
        %v7072 = vsel %vm7069, %v7063, %v7034
        %v7073 = vsel %vm7069, %v7064, %v7036
        %v7074 = vsel %vm7069, %v7065, %v7038
        %v7075 = vsel %vm7069, %v7066, %v7040
        %v7076 = vsel %vm7069, %v7067, %v7042
        %v7077 = vsel %vm7069, %v7068, %v7044
        %v7078 = vld [vmem:[#allocation7] sm:$0xff]
        %v7079 = vld [vmem:[#allocation7 + $0x8] sm:$0xff]
        %v7080 = vld [vmem:[#allocation7 + $0x10] sm:$0xff]
        %v7081 = vld [vmem:[#allocation7 + $0x18] sm:$0xff]
        %v7082 = vld [vmem:[#allocation7 + $0x20] sm:$0xff]
        %v7083 = vld [vmem:[#allocation7 + $0x28] sm:$0xff]
        %v7084 = vld [vmem:[#allocation7 + $0x30] sm:$0xff]
        %v7085 = vld [vmem:[#allocation7 + $0x38] sm:$0xff]
        %v7086 = vld [vmem:[#allocation7 + $0x40] sm:$0xff]
        %v7087 = vld [vmem:[#allocation7 + $0x48] sm:$0xff]
        %v7088 = vld [vmem:[#allocation7 + $0x50] sm:$0xff]
        %v7089 = vld [vmem:[#allocation7 + $0x58] sm:$0xff]
        %v7090 = vld [vmem:[#allocation7 + $0x60] sm:$0xff]
        %v7091 = vld [vmem:[#allocation7 + $0x68] sm:$0xff]
        %v7092 = vld [vmem:[#allocation7 + $0x70] sm:$0xff]
        %v7093 = vld [vmem:[#allocation7 + $0x78] sm:$0xff]
        %v7094 = vld [vmem:[%s5] sm:$0x1]
        %v7096 = vlaneseq
        %v7097 = vshrl.u32 %v7096, 7
        %v7098 = vsub.s32 0, %v7097
        %v7099 = vrot.slane %v7094, %v7098
        %7101 = vmatprep.subr.mxu0 0.0
        %7102 = vmatpush1.msra.mxu0 %v7078
        %7103 = vmatprep.subr.mxu0 0.0
        %7104 = vmatpush1.msra.mxu0 %v7079
        %7105 = vmatprep.subr.mxu0 0.0
        %7106 = vmatpush1.msra.mxu0 %v7080
        %7107 = vmatprep.subr.mxu0 0.0
        %7108 = vmatpush1.msra.mxu0 %v7081
        %7109 = vmatprep.subr.mxu0 0.0
        %7110 = vmatpush1.msra.mxu0 %v7082
        %7111 = vmatprep.subr.mxu0 0.0
        %7112 = vmatpush1.msra.mxu0 %v7083
        %7113 = vmatprep.subr.mxu0 0.0
        %7114 = vmatpush1.msra.mxu0 %v7084
        %7115 = vmatprep.subr.mxu0 0.0
        %7116 = vmatpush1.msra.mxu0 %v7085
        %7117 = vmatprep.subr.mxu0 0.0
        %7118 = vmatpush1.msra.mxu0 %v7086
        %7119 = vmatprep.subr.mxu0 0.0
        %7120 = vmatpush1.msra.mxu0 %v7087
        %7121 = vmatprep.subr.mxu0 0.0
        %7122 = vmatpush1.msra.mxu0 %v7088
        %7123 = vmatprep.subr.mxu0 0.0
        %7124 = vmatpush1.msra.mxu0 %v7089
        %7125 = vmatprep.subr.mxu0 0.0
        %7126 = vmatpush1.msra.mxu0 %v7090
        %7127 = vmatprep.subr.mxu0 0.0
        %7128 = vmatpush1.msra.mxu0 %v7091
        %7129 = vmatprep.subr.mxu0 0.0
        %7130 = vmatpush1.msra.mxu0 %v7092
        %7131 = vmatprep.subr.mxu0 0.0
        %7132 = vmatpush1.msra.mxu0 %v7093
        %7133 = vmatprep.subr.mxu0 0.0
        %7134 = vmatpush1.msra.mxu0 0.0
        %7135 = vmatprep.subr.mxu0 0.0
        %7136 = vmatpush1.msra.mxu0 0.0
        %7137 = vmatprep.subr.mxu0 0.0
        %7138 = vmatpush1.msra.mxu0 0.0
        %7139 = vmatprep.subr.mxu0 0.0
        %7140 = vmatpush1.msra.mxu0 0.0
        %7141 = vmatprep.subr.mxu0 0.0
        %7142 = vmatpush1.msra.mxu0 0.0
        %7143 = vmatprep.subr.mxu0 0.0
        %7144 = vmatpush1.msra.mxu0 0.0
        %7145 = vmatprep.subr.mxu0 0.0
        %7146 = vmatpush1.msra.mxu0 0.0
        %7147 = vmatprep.subr.mxu0 0.0
        %7148 = vmatpush1.msra.mxu0 0.0
        %7149 = vmatprep.subr.mxu0 0.0
        %7150 = vmatpush1.msra.mxu0 0.0
        %7151 = vmatprep.subr.mxu0 0.0
        %7152 = vmatpush1.msra.mxu0 0.0
        %7153 = vmatprep.subr.mxu0 0.0
        %7154 = vmatpush1.msra.mxu0 0.0
        %7155 = vmatprep.subr.mxu0 0.0
        %7156 = vmatpush1.msra.mxu0 0.0
        %7157 = vmatprep.subr.mxu0 0.0
        %7158 = vmatpush1.msra.mxu0 0.0
        %7159 = vmatprep.subr.mxu0 0.0
        %7160 = vmatpush1.msra.mxu0 0.0
        %7161 = vmatprep.subr.mxu0 0.0
        %7162 = vmatpush1.msra.mxu0 0.0
        %7163 = vmatprep.subr.mxu0 0.0
        %7164 = vmatpush1.msra.mxu0 0.0
        %7165 = vmatprep.mubr.f32.mxu0 0.0
        %7166 = vmatmul.mubr.f32.gmra.mrb[0].mxu0 %v7070
        %v7167 = vpop.f32.mrb[0].mxu0
        %v7168 = vadd.f32 %v7099, %v7167
        %v7169 = vpop.f32.mrb[0].mxu0
        %7170 = vmatprep.mubr.f32.mxu0 0.0
        %7171 = vmatmul.mubr.f32.gmra.mrb[0].mxu0 %v7071
        %v7172 = vpop.f32.mrb[0].mxu0
        %v7173 = vadd.f32 %v7099, %v7172
        %v7174 = vpop.f32.mrb[0].mxu0
        %7175 = vmatprep.mubr.f32.mxu0 0.0
        %7176 = vmatmul.mubr.f32.gmra.mrb[0].mxu0 %v7072
        %v7177 = vpop.f32.mrb[0].mxu0
        %v7178 = vadd.f32 %v7099, %v7177
        %v7179 = vpop.f32.mrb[0].mxu0
        %7180 = vmatprep.mubr.f32.mxu0 0.0
        %7181 = vmatmul.mubr.f32.gmra.mrb[0].mxu0 %v7073
        %v7182 = vpop.f32.mrb[0].mxu0
        %v7183 = vadd.f32 %v7099, %v7182
        %v7184 = vpop.f32.mrb[0].mxu0
        %7185 = vmatprep.mubr.f32.mxu0 0.0
        %7186 = vmatmul.mubr.f32.gmra.mrb[0].mxu0 %v7074
        %v7187 = vpop.f32.mrb[0].mxu0
        %v7188 = vadd.f32 %v7099, %v7187
        %v7189 = vpop.f32.mrb[0].mxu0
        %7190 = vmatprep.mubr.f32.mxu0 0.0
        %7191 = vmatmul.mubr.f32.gmra.mrb[0].mxu0 %v7075
        %v7192 = vpop.f32.mrb[0].mxu0
        %v7193 = vadd.f32 %v7099, %v7192
        %v7194 = vpop.f32.mrb[0].mxu0
        %7195 = vmatprep.mubr.f32.mxu0 0.0
        %7196 = vmatmul.mubr.f32.gmra.mrb[0].mxu0 %v7076
        %v7197 = vpop.f32.mrb[0].mxu0
        %v7198 = vadd.f32 %v7099, %v7197
        %v7199 = vpop.f32.mrb[0].mxu0
        %7200 = vmatprep.mubr.f32.mxu0 0.0
        %7201 = vmatmul.mubr.f32.gmra.mrb[0].mxu0 %v7077
        %v7202 = vpop.f32.mrb[0].mxu0
        %v7203 = vadd.f32 %v7099, %v7202
        %v7204 = vpop.f32.mrb[0].mxu0
        %7205 = vdwg.mxu0
        %v7206 = vlaneseq
        %v7207 = vshrl.u32 %v7206, 7
        %v7208 = vsub.s32 2, %v7207
        %v7209 = vrot.slane %v453, %v7208
        %v7210 = vmul.f32 %v7209, %v7168
        %v7211 = vmul.f32 %v7209, %v7173
        %v7212 = vmul.f32 %v7209, %v7178
        %v7213 = vmul.f32 %v7209, %v7183
        %v7214 = vmul.f32 %v7209, %v7188
        %v7215 = vmul.f32 %v7209, %v7193
        %v7216 = vmul.f32 %v7209, %v7198
        %v7217 = vmul.f32 %v7209, %v7203
        %v7218 = vadd.f32 %v592, %v7210
        %v7219 = vadd.f32 %v593, %v7211
        %v7220 = vadd.f32 %v594, %v7212
        %v7221 = vadd.f32 %v595, %v7213
        %v7222 = vadd.f32 %v596, %v7214
        %v7223 = vadd.f32 %v597, %v7215
        %v7224 = vadd.f32 %v598, %v7216
        %v7225 = vadd.f32 %v599, %v7217
        %7226 = vadd.xlane.f32.xlu0 %v7218
        %v7227 = vpop.xlane.xlu0 %7226
        %7228 = vadd.xlane.f32.xlu0 %v7219
        %v7229 = vpop.xlane.xlu0 %7228
        %7230 = vadd.xlane.f32.xlu0 %v7220
        %v7231 = vpop.xlane.xlu0 %7230
        %7232 = vadd.xlane.f32.xlu0 %v7221
        %v7233 = vpop.xlane.xlu0 %7232
        %7234 = vadd.xlane.f32.xlu0 %v7222
        %v7235 = vpop.xlane.xlu0 %7234
        %7236 = vadd.xlane.f32.xlu0 %v7223
        %v7237 = vpop.xlane.xlu0 %7236
        %7238 = vadd.xlane.f32.xlu0 %v7224
        %v7239 = vpop.xlane.xlu0 %7238
        %7240 = vadd.xlane.f32.xlu0 %v7225
        %v7241 = vpop.xlane.xlu0 %7240
        %v7242 = vmul.f32 %v7227, %v478
        %v7243 = vmul.f32 %v7229, %v478
        %v7244 = vmul.f32 %v7231, %v478
        %v7245 = vmul.f32 %v7233, %v478
        %v7246 = vmul.f32 %v7235, %v478
        %v7247 = vmul.f32 %v7237, %v478
        %v7248 = vmul.f32 %v7239, %v478
        %v7249 = vmul.f32 %v7241, %v478
        %v7250 = vmul.f32 %v7218, %v7218
        %v7251 = vmul.f32 %v7219, %v7219
        %v7252 = vmul.f32 %v7220, %v7220
        %v7253 = vmul.f32 %v7221, %v7221
        %v7254 = vmul.f32 %v7222, %v7222
        %v7255 = vmul.f32 %v7223, %v7223
        %v7256 = vmul.f32 %v7224, %v7224
        %v7257 = vmul.f32 %v7225, %v7225
        %7258 = vadd.xlane.f32.xlu0 %v7250
        %v7259 = vpop.xlane.xlu0 %7258
        %7260 = vadd.xlane.f32.xlu0 %v7251
        %v7261 = vpop.xlane.xlu0 %7260
        %7262 = vadd.xlane.f32.xlu0 %v7252
        %v7263 = vpop.xlane.xlu0 %7262
        %7264 = vadd.xlane.f32.xlu0 %v7253
        %v7265 = vpop.xlane.xlu0 %7264
        %7266 = vadd.xlane.f32.xlu0 %v7254
        %v7267 = vpop.xlane.xlu0 %7266
        %7268 = vadd.xlane.f32.xlu0 %v7255
        %v7269 = vpop.xlane.xlu0 %7268
        %7270 = vadd.xlane.f32.xlu0 %v7256
        %v7271 = vpop.xlane.xlu0 %7270
        %7272 = vadd.xlane.f32.xlu0 %v7257
        %v7273 = vpop.xlane.xlu0 %7272
        %v7274 = vmul.f32 %v7259, %v478
        %v7275 = vmul.f32 %v7261, %v478
        %v7276 = vmul.f32 %v7263, %v478
        %v7277 = vmul.f32 %v7265, %v478
        %v7278 = vmul.f32 %v7267, %v478
        %v7279 = vmul.f32 %v7269, %v478
        %v7280 = vmul.f32 %v7271, %v478
        %v7281 = vmul.f32 %v7273, %v478
        %v7282 = vmul.f32 %v7242, %v7242
        %v7283 = vmul.f32 %v7243, %v7243
        %v7284 = vmul.f32 %v7244, %v7244
        %v7285 = vmul.f32 %v7245, %v7245
        %v7286 = vmul.f32 %v7246, %v7246
        %v7287 = vmul.f32 %v7247, %v7247
        %v7288 = vmul.f32 %v7248, %v7248
        %v7289 = vmul.f32 %v7249, %v7249
        %v7290 = vsub.f32 %v7274, %v7282
        %v7291 = vsub.f32 %v7275, %v7283
        %v7292 = vsub.f32 %v7276, %v7284
        %v7293 = vsub.f32 %v7277, %v7285
        %v7294 = vsub.f32 %v7278, %v7286
        %v7295 = vsub.f32 %v7279, %v7287
        %v7296 = vsub.f32 %v7280, %v7288
        %v7297 = vsub.f32 %v7281, %v7289
        %v7298 = vmax.f32 %v7290, 0.0
        %v7299 = vmax.f32 %v7291, 0.0
        %v7300 = vmax.f32 %v7292, 0.0
        %v7301 = vmax.f32 %v7293, 0.0
        %v7302 = vmax.f32 %v7294, 0.0
        %v7303 = vmax.f32 %v7295, 0.0
        %v7304 = vmax.f32 %v7296, 0.0
        %v7305 = vmax.f32 %v7297, 0.0
        %v7306 = vsub.f32 %v7218, %v7242
        %v7307 = vsub.f32 %v7219, %v7243
        %v7308 = vsub.f32 %v7220, %v7244
        %v7309 = vsub.f32 %v7221, %v7245
        %v7310 = vsub.f32 %v7222, %v7246
        %v7311 = vsub.f32 %v7223, %v7247
        %v7312 = vsub.f32 %v7224, %v7248
        %v7313 = vsub.f32 %v7225, %v7249
        %v7314 = vadd.f32 %v7298, 1e-06
        %v7315 = vadd.f32 %v7299, 1e-06
        %v7316 = vadd.f32 %v7300, 1e-06
        %v7317 = vadd.f32 %v7301, 1e-06
        %v7318 = vadd.f32 %v7302, 1e-06
        %v7319 = vadd.f32 %v7303, 1e-06
        %v7320 = vadd.f32 %v7304, 1e-06
        %v7321 = vadd.f32 %v7305, 1e-06
        %v7322 = vrsqrt.pop %v7314
        %v7323 = vrsqrt.pop %v7315
        %v7324 = vrsqrt.pop %v7316
        %v7325 = vrsqrt.pop %v7317
        %v7326 = vrsqrt.pop %v7318
        %v7327 = vrsqrt.pop %v7319
        %v7328 = vrsqrt.pop %v7320
        %v7329 = vrsqrt.pop %v7321
        %v7330 = vmul.f32 %v7306, %v7322
        %v7331 = vmul.f32 %v7307, %v7323
        %v7332 = vmul.f32 %v7308, %v7324
        %v7333 = vmul.f32 %v7309, %v7325
        %v7334 = vmul.f32 %v7310, %v7326
        %v7335 = vmul.f32 %v7311, %v7327
        %v7336 = vmul.f32 %v7312, %v7328
        %v7337 = vmul.f32 %v7313, %v7329
        %v7338 = vlaneseq
        %v7339 = vshrl.u32 %v7338, 7
        %v7340 = vsub.s32 4, %v7339
        %v7341 = vrot.slane %v575, %v7340
        %v7342 = vmul.f32 %v7330, %v7341
        %v7343 = vmul.f32 %v7331, %v7341
        %v7344 = vmul.f32 %v7332, %v7341
        %v7345 = vmul.f32 %v7333, %v7341
        %v7346 = vmul.f32 %v7334, %v7341
        %v7347 = vmul.f32 %v7335, %v7341
        %v7348 = vmul.f32 %v7336, %v7341
        %v7349 = vmul.f32 %v7337, %v7341
        %v7350 = vlaneseq
        %v7351 = vshrl.u32 %v7350, 7
        %v7352 = vsub.s32 3, %v7351
        %v7353 = vrot.slane %v453, %v7352
        %v7354 = vadd.f32 %v7342, %v7353
        %v7355 = vadd.f32 %v7343, %v7353
        %v7356 = vadd.f32 %v7344, %v7353
        %v7357 = vadd.f32 %v7345, %v7353
        %v7358 = vadd.f32 %v7346, %v7353
        %v7359 = vadd.f32 %v7347, %v7353
        %v7360 = vadd.f32 %v7348, %v7353
        %v7361 = vadd.f32 %v7349, %v7353
        %v7362 = vld [vmem:[#allocation8] sm:$0xff]
        %v7363 = vld [vmem:[#allocation8 + $0x8] sm:$0xff]
        %v7364 = vld [vmem:[#allocation8 + $0x10] sm:$0xff]
        %v7365 = vld [vmem:[#allocation8 + $0x18] sm:$0xff]
        %v7366 = vld [vmem:[#allocation8 + $0x20] sm:$0xff]
        %v7367 = vld [vmem:[#allocation8 + $0x28] sm:$0xff]
        %v7368 = vld [vmem:[#allocation8 + $0x30] sm:$0xff]
        %v7369 = vld [vmem:[#allocation8 + $0x38] sm:$0xff]
        %v7370 = vld [vmem:[#allocation8 + $0x40] sm:$0xff]
        %v7371 = vld [vmem:[#allocation8 + $0x48] sm:$0xff]
        %v7372 = vld [vmem:[#allocation8 + $0x50] sm:$0xff]
        %v7373 = vld [vmem:[#allocation8 + $0x58] sm:$0xff]
        %v7374 = vld [vmem:[#allocation8 + $0x60] sm:$0xff]
        %v7375 = vld [vmem:[#allocation8 + $0x68] sm:$0xff]
        %v7376 = vld [vmem:[#allocation8 + $0x70] sm:$0xff]
        %v7377 = vld [vmem:[#allocation8 + $0x78] sm:$0xff]
        %v7378 = vld [vmem:[#allocation8 + $0x80] sm:$0xff]
        %v7379 = vld [vmem:[#allocation8 + $0x88] sm:$0xff]
        %v7380 = vld [vmem:[#allocation8 + $0x90] sm:$0xff]
        %v7381 = vld [vmem:[#allocation8 + $0x98] sm:$0xff]
        %v7382 = vld [vmem:[#allocation8 + $0xa0] sm:$0xff]
        %v7383 = vld [vmem:[#allocation8 + $0xa8] sm:$0xff]
        %v7384 = vld [vmem:[#allocation8 + $0xb0] sm:$0xff]
        %v7385 = vld [vmem:[#allocation8 + $0xb8] sm:$0xff]
        %v7386 = vld [vmem:[#allocation8 + $0xc0] sm:$0xff]
        %v7387 = vld [vmem:[#allocation8 + $0xc8] sm:$0xff]
        %v7388 = vld [vmem:[#allocation8 + $0xd0] sm:$0xff]
        %v7389 = vld [vmem:[#allocation8 + $0xd8] sm:$0xff]
        %v7390 = vld [vmem:[#allocation8 + $0xe0] sm:$0xff]
        %v7391 = vld [vmem:[#allocation8 + $0xe8] sm:$0xff]
        %v7392 = vld [vmem:[#allocation8 + $0xf0] sm:$0xff]
        %v7393 = vld [vmem:[#allocation8 + $0xf8] sm:$0xff]
        %v7394 = vld [vmem:[#allocation8 + $0x100] sm:$0xff]
        %v7395 = vld [vmem:[#allocation8 + $0x108] sm:$0xff]
        %v7396 = vld [vmem:[#allocation8 + $0x110] sm:$0xff]
        %v7397 = vld [vmem:[#allocation8 + $0x118] sm:$0xff]
        %v7398 = vld [vmem:[#allocation8 + $0x120] sm:$0xff]
        %v7399 = vld [vmem:[#allocation8 + $0x128] sm:$0xff]
        %v7400 = vld [vmem:[#allocation8 + $0x130] sm:$0xff]
        %v7401 = vld [vmem:[#allocation8 + $0x138] sm:$0xff]
        %v7402 = vld [vmem:[#allocation8 + $0x140] sm:$0xff]
        %v7403 = vld [vmem:[#allocation8 + $0x148] sm:$0xff]
        %v7404 = vld [vmem:[#allocation8 + $0x150] sm:$0xff]
        %v7405 = vld [vmem:[#allocation8 + $0x158] sm:$0xff]
        %v7406 = vld [vmem:[#allocation8 + $0x160] sm:$0xff]
        %v7407 = vld [vmem:[#allocation8 + $0x168] sm:$0xff]
        %v7408 = vld [vmem:[#allocation8 + $0x170] sm:$0xff]
        %v7409 = vld [vmem:[#allocation8 + $0x178] sm:$0xff]
        %v7410 = vld [vmem:[#allocation8 + $0x180] sm:$0xff]
        %v7411 = vld [vmem:[#allocation8 + $0x188] sm:$0xff]
        %v7412 = vld [vmem:[#allocation8 + $0x190] sm:$0xff]
        %v7413 = vld [vmem:[#allocation8 + $0x198] sm:$0xff]
        %v7414 = vld [vmem:[#allocation8 + $0x1a0] sm:$0xff]
        %v7415 = vld [vmem:[#allocation8 + $0x1a8] sm:$0xff]
        %v7416 = vld [vmem:[#allocation8 + $0x1b0] sm:$0xff]
        %v7417 = vld [vmem:[#allocation8 + $0x1b8] sm:$0xff]
        %v7418 = vld [vmem:[#allocation8 + $0x1c0] sm:$0xff]
        %v7419 = vld [vmem:[#allocation8 + $0x1c8] sm:$0xff]
        %v7420 = vld [vmem:[#allocation8 + $0x1d0] sm:$0xff]
        %v7421 = vld [vmem:[#allocation8 + $0x1d8] sm:$0xff]
        %v7422 = vld [vmem:[#allocation8 + $0x1e0] sm:$0xff]
        %v7423 = vld [vmem:[#allocation8 + $0x1e8] sm:$0xff]
        %v7424 = vld [vmem:[#allocation8 + $0x1f0] sm:$0xff]
        %v7425 = vld [vmem:[#allocation8 + $0x1f8] sm:$0xff]
        %v7426 = vld [vmem:[%s7] sm:$0xf]
        %v7428 = vlaneseq
        %v7429 = vshrl.u32 %v7428, 7
        %v7430 = vsub.s32 0, %v7429
        %v7431 = vrot.slane %v7426, %v7430
        %v7432 = vlaneseq
        %v7433 = vshrl.u32 %v7432, 7
        %v7434 = vsub.s32 1, %v7433
        %v7435 = vrot.slane %v7426, %v7434
        %v7436 = vlaneseq
        %v7437 = vshrl.u32 %v7436, 7
        %v7438 = vsub.s32 2, %v7437
        %v7439 = vrot.slane %v7426, %v7438
        %v7440 = vlaneseq
        %v7441 = vshrl.u32 %v7440, 7
        %v7442 = vsub.s32 3, %v7441
        %v7443 = vrot.slane %v7426, %v7442
        %7448 = vmatprep.subr.mxu0 %v7363
        %7449 = vmatpush1.msra.mxu0 %v7362
        %7450 = vmatprep.subr.mxu0 %v7367
        %7451 = vmatpush1.msra.mxu0 %v7366
        %7452 = vmatprep.subr.mxu0 %v7371
        %7453 = vmatpush1.msra.mxu0 %v7370
        %7454 = vmatprep.subr.mxu0 %v7375
        %7455 = vmatpush1.msra.mxu0 %v7374
        %7456 = vmatprep.subr.mxu0 %v7379
        %7457 = vmatpush1.msra.mxu0 %v7378
        %7458 = vmatprep.subr.mxu0 %v7383
        %7459 = vmatpush1.msra.mxu0 %v7382
        %7460 = vmatprep.subr.mxu0 %v7387
        %7461 = vmatpush1.msra.mxu0 %v7386
        %7462 = vmatprep.subr.mxu0 %v7391
        %7463 = vmatpush1.msra.mxu0 %v7390
        %7464 = vmatprep.subr.mxu0 %v7395
        %7465 = vmatpush1.msra.mxu0 %v7394
        %7466 = vmatprep.subr.mxu0 %v7399
        %7467 = vmatpush1.msra.mxu0 %v7398
        %7468 = vmatprep.subr.mxu0 %v7403
        %7469 = vmatpush1.msra.mxu0 %v7402
        %7470 = vmatprep.subr.mxu0 %v7407
        %7471 = vmatpush1.msra.mxu0 %v7406
        %7472 = vmatprep.subr.mxu0 %v7411
        %7473 = vmatpush1.msra.mxu0 %v7410
        %7474 = vmatprep.subr.mxu0 %v7415
        %7475 = vmatpush1.msra.mxu0 %v7414
        %7476 = vmatprep.subr.mxu0 %v7419
        %7477 = vmatpush1.msra.mxu0 %v7418
        %7478 = vmatprep.subr.mxu0 %v7423
        %7479 = vmatpush1.msra.mxu0 %v7422
        %7480 = vmatprep.subr.mxu0 0.0
        %7481 = vmatpush1.msra.mxu0 0.0
        %7482 = vmatprep.subr.mxu0 0.0
        %7483 = vmatpush1.msra.mxu0 0.0
        %7484 = vmatprep.subr.mxu0 0.0
        %7485 = vmatpush1.msra.mxu0 0.0
        %7486 = vmatprep.subr.mxu0 0.0
        %7487 = vmatpush1.msra.mxu0 0.0
        %7488 = vmatprep.subr.mxu0 0.0
        %7489 = vmatpush1.msra.mxu0 0.0
        %7490 = vmatprep.subr.mxu0 0.0
        %7491 = vmatpush1.msra.mxu0 0.0
        %7492 = vmatprep.subr.mxu0 0.0
        %7493 = vmatpush1.msra.mxu0 0.0
        %7494 = vmatprep.subr.mxu0 0.0
        %7495 = vmatpush1.msra.mxu0 0.0
        %7496 = vmatprep.subr.mxu0 0.0
        %7497 = vmatpush1.msra.mxu0 0.0
        %7498 = vmatprep.subr.mxu0 0.0
        %7499 = vmatpush1.msra.mxu0 0.0
        %7500 = vmatprep.subr.mxu0 0.0
        %7501 = vmatpush1.msra.mxu0 0.0
        %7502 = vmatprep.subr.mxu0 0.0
        %7503 = vmatpush1.msra.mxu0 0.0
        %7504 = vmatprep.subr.mxu0 0.0
        %7505 = vmatpush1.msra.mxu0 0.0
        %7506 = vmatprep.subr.mxu0 0.0
        %7507 = vmatpush1.msra.mxu0 0.0
        %7508 = vmatprep.subr.mxu0 0.0
        %7509 = vmatpush1.msra.mxu0 0.0
        %7510 = vmatprep.subr.mxu0 0.0
        %7511 = vmatpush1.msra.mxu0 0.0
        %7512 = vmatprep.mubr.f32.mxu0 0.0
        %7513 = vmatmul.mubr.f32.gmra.mrb[0].mxu0 %v7354
        %v7514 = vpop.f32.mrb[0].mxu0
        %v7515 = vadd.f32 %v7431, %v7514
        %v7516 = vpop.f32.mrb[0].mxu0
        %v7517 = vadd.f32 %v7435, %v7516
        %7518 = vmatprep.mubr.f32.mxu0 0.0
        %7519 = vmatmul.mubr.f32.gmra.mrb[0].mxu0 %v7355
        %v7520 = vpop.f32.mrb[0].mxu0
        %v7521 = vadd.f32 %v7431, %v7520
        %v7522 = vpop.f32.mrb[0].mxu0
        %v7523 = vadd.f32 %v7435, %v7522
        %7524 = vmatprep.mubr.f32.mxu0 0.0
        %7525 = vmatmul.mubr.f32.gmra.mrb[0].mxu0 %v7356
        %v7526 = vpop.f32.mrb[0].mxu0
        %v7527 = vadd.f32 %v7431, %v7526
        %v7528 = vpop.f32.mrb[0].mxu0
        %v7529 = vadd.f32 %v7435, %v7528
        %7530 = vmatprep.mubr.f32.mxu0 0.0
        %7531 = vmatmul.mubr.f32.gmra.mrb[0].mxu0 %v7357
        %v7532 = vpop.f32.mrb[0].mxu0
        %v7533 = vadd.f32 %v7431, %v7532
        %v7534 = vpop.f32.mrb[0].mxu0
        %v7535 = vadd.f32 %v7435, %v7534
        %7536 = vmatprep.mubr.f32.mxu0 0.0
        %7537 = vmatmul.mubr.f32.gmra.mrb[0].mxu0 %v7358
        %v7538 = vpop.f32.mrb[0].mxu0
        %v7539 = vadd.f32 %v7431, %v7538
        %v7540 = vpop.f32.mrb[0].mxu0
        %v7541 = vadd.f32 %v7435, %v7540
        %7542 = vmatprep.mubr.f32.mxu0 0.0
        %7543 = vmatmul.mubr.f32.gmra.mrb[0].mxu0 %v7359
        %v7544 = vpop.f32.mrb[0].mxu0
        %v7545 = vadd.f32 %v7431, %v7544
        %v7546 = vpop.f32.mrb[0].mxu0
        %v7547 = vadd.f32 %v7435, %v7546
        %7548 = vmatprep.mubr.f32.mxu0 0.0
        %7549 = vmatmul.mubr.f32.gmra.mrb[0].mxu0 %v7360
        %v7550 = vpop.f32.mrb[0].mxu0
        %v7551 = vadd.f32 %v7431, %v7550
        %v7552 = vpop.f32.mrb[0].mxu0
        %v7553 = vadd.f32 %v7435, %v7552
        %7554 = vmatprep.mubr.f32.mxu0 0.0
        %7555 = vmatmul.mubr.f32.gmra.mrb[0].mxu0 %v7361
        %v7556 = vpop.f32.mrb[0].mxu0
        %v7557 = vadd.f32 %v7431, %v7556
        %v7558 = vpop.f32.mrb[0].mxu0
        %v7559 = vadd.f32 %v7435, %v7558
        %7560 = vdwg.mxu0
        %7561 = vmatprep.subr.mxu0 %v7365
        %7562 = vmatpush1.msra.mxu0 %v7364
        %7563 = vmatprep.subr.mxu0 %v7369
        %7564 = vmatpush1.msra.mxu0 %v7368
        %7565 = vmatprep.subr.mxu0 %v7373
        %7566 = vmatpush1.msra.mxu0 %v7372
        %7567 = vmatprep.subr.mxu0 %v7377
        %7568 = vmatpush1.msra.mxu0 %v7376
        %7569 = vmatprep.subr.mxu0 %v7381
        %7570 = vmatpush1.msra.mxu0 %v7380
        %7571 = vmatprep.subr.mxu0 %v7385
        %7572 = vmatpush1.msra.mxu0 %v7384
        %7573 = vmatprep.subr.mxu0 %v7389
        %7574 = vmatpush1.msra.mxu0 %v7388
        %7575 = vmatprep.subr.mxu0 %v7393
        %7576 = vmatpush1.msra.mxu0 %v7392
        %7577 = vmatprep.subr.mxu0 %v7397
        %7578 = vmatpush1.msra.mxu0 %v7396
        %7579 = vmatprep.subr.mxu0 %v7401
        %7580 = vmatpush1.msra.mxu0 %v7400
        %7581 = vmatprep.subr.mxu0 %v7405
        %7582 = vmatpush1.msra.mxu0 %v7404
        %7583 = vmatprep.subr.mxu0 %v7409
        %7584 = vmatpush1.msra.mxu0 %v7408
        %7585 = vmatprep.subr.mxu0 %v7413
        %7586 = vmatpush1.msra.mxu0 %v7412
        %7587 = vmatprep.subr.mxu0 %v7417
        %7588 = vmatpush1.msra.mxu0 %v7416
        %7589 = vmatprep.subr.mxu0 %v7421
        %7590 = vmatpush1.msra.mxu0 %v7420
        %7591 = vmatprep.subr.mxu0 %v7425
        %7592 = vmatpush1.msra.mxu0 %v7424
        %7593 = vmatprep.subr.mxu0 0.0
        %7594 = vmatpush1.msra.mxu0 0.0
        %7595 = vmatprep.subr.mxu0 0.0
        %7596 = vmatpush1.msra.mxu0 0.0
        %7597 = vmatprep.subr.mxu0 0.0
        %7598 = vmatpush1.msra.mxu0 0.0
        %7599 = vmatprep.subr.mxu0 0.0
        %7600 = vmatpush1.msra.mxu0 0.0
        %7601 = vmatprep.subr.mxu0 0.0
        %7602 = vmatpush1.msra.mxu0 0.0
        %7603 = vmatprep.subr.mxu0 0.0
        %7604 = vmatpush1.msra.mxu0 0.0
        %7605 = vmatprep.subr.mxu0 0.0
        %7606 = vmatpush1.msra.mxu0 0.0
        %7607 = vmatprep.subr.mxu0 0.0
        %7608 = vmatpush1.msra.mxu0 0.0
        %7609 = vmatprep.subr.mxu0 0.0
        %7610 = vmatpush1.msra.mxu0 0.0
        %7611 = vmatprep.subr.mxu0 0.0
        %7612 = vmatpush1.msra.mxu0 0.0
        %7613 = vmatprep.subr.mxu0 0.0
        %7614 = vmatpush1.msra.mxu0 0.0
        %7615 = vmatprep.subr.mxu0 0.0
        %7616 = vmatpush1.msra.mxu0 0.0
        %7617 = vmatprep.subr.mxu0 0.0
        %7618 = vmatpush1.msra.mxu0 0.0
        %7619 = vmatprep.subr.mxu0 0.0
        %7620 = vmatpush1.msra.mxu0 0.0
        %7621 = vmatprep.subr.mxu0 0.0
        %7622 = vmatpush1.msra.mxu0 0.0
        %7623 = vmatprep.subr.mxu0 0.0
        %7624 = vmatpush1.msra.mxu0 0.0
        %7625 = vmatprep.mubr.f32.mxu0 0.0
        %7626 = vmatmul.mubr.f32.gmra.mrb[0].mxu0 %v7354
        %v7627 = vpop.f32.mrb[0].mxu0
        %v7628 = vadd.f32 %v7439, %v7627
        %v7629 = vpop.f32.mrb[0].mxu0
        %v7630 = vadd.f32 %v7443, %v7629
        %7631 = vmatprep.mubr.f32.mxu0 0.0
        %7632 = vmatmul.mubr.f32.gmra.mrb[0].mxu0 %v7355
        %v7633 = vpop.f32.mrb[0].mxu0
        %v7634 = vadd.f32 %v7439, %v7633
        %v7635 = vpop.f32.mrb[0].mxu0
        %v7636 = vadd.f32 %v7443, %v7635
        %7637 = vmatprep.mubr.f32.mxu0 0.0
        %7638 = vmatmul.mubr.f32.gmra.mrb[0].mxu0 %v7356
        %v7639 = vpop.f32.mrb[0].mxu0
        %v7640 = vadd.f32 %v7439, %v7639
        %v7641 = vpop.f32.mrb[0].mxu0
        %v7642 = vadd.f32 %v7443, %v7641
        %7643 = vmatprep.mubr.f32.mxu0 0.0
        %7644 = vmatmul.mubr.f32.gmra.mrb[0].mxu0 %v7357
        %v7645 = vpop.f32.mrb[0].mxu0
        %v7646 = vadd.f32 %v7439, %v7645
        %v7647 = vpop.f32.mrb[0].mxu0
        %v7648 = vadd.f32 %v7443, %v7647
        %7649 = vmatprep.mubr.f32.mxu0 0.0
        %7650 = vmatmul.mubr.f32.gmra.mrb[0].mxu0 %v7358
        %v7651 = vpop.f32.mrb[0].mxu0
        %v7652 = vadd.f32 %v7439, %v7651
        %v7653 = vpop.f32.mrb[0].mxu0
        %v7654 = vadd.f32 %v7443, %v7653
        %7655 = vmatprep.mubr.f32.mxu0 0.0
        %7656 = vmatmul.mubr.f32.gmra.mrb[0].mxu0 %v7359
        %v7657 = vpop.f32.mrb[0].mxu0
        %v7658 = vadd.f32 %v7439, %v7657
        %v7659 = vpop.f32.mrb[0].mxu0
        %v7660 = vadd.f32 %v7443, %v7659
        %7661 = vmatprep.mubr.f32.mxu0 0.0
        %7662 = vmatmul.mubr.f32.gmra.mrb[0].mxu0 %v7360
        %v7663 = vpop.f32.mrb[0].mxu0
        %v7664 = vadd.f32 %v7439, %v7663
        %v7665 = vpop.f32.mrb[0].mxu0
        %v7666 = vadd.f32 %v7443, %v7665
        %7667 = vmatprep.mubr.f32.mxu0 0.0
        %7668 = vmatmul.mubr.f32.gmra.mrb[0].mxu0 %v7361
        %v7669 = vpop.f32.mrb[0].mxu0
        %v7670 = vadd.f32 %v7439, %v7669
        %v7671 = vpop.f32.mrb[0].mxu0
        %v7672 = vadd.f32 %v7443, %v7671
        %7673 = vdwg.mxu0
        %v7674 = vmul.f32 %v7515, 0.5
        %v7675 = vmul.f32 %v7517, 0.5
        %v7676 = vmul.f32 %v7628, 0.5
        %v7677 = vmul.f32 %v7630, 0.5
        %v7678 = vmul.f32 %v7521, 0.5
        %v7679 = vmul.f32 %v7523, 0.5
        %v7680 = vmul.f32 %v7634, 0.5
        %v7681 = vmul.f32 %v7636, 0.5
        %v7682 = vmul.f32 %v7527, 0.5
        %v7683 = vmul.f32 %v7529, 0.5
        %v7684 = vmul.f32 %v7640, 0.5
        %v7685 = vmul.f32 %v7642, 0.5
        %v7686 = vmul.f32 %v7533, 0.5
        %v7687 = vmul.f32 %v7535, 0.5
        %v7688 = vmul.f32 %v7646, 0.5
        %v7689 = vmul.f32 %v7648, 0.5
        %v7690 = vmul.f32 %v7539, 0.5
        %v7691 = vmul.f32 %v7541, 0.5
        %v7692 = vmul.f32 %v7652, 0.5
        %v7693 = vmul.f32 %v7654, 0.5
        %v7694 = vmul.f32 %v7545, 0.5
        %v7695 = vmul.f32 %v7547, 0.5
        %v7696 = vmul.f32 %v7658, 0.5
        %v7697 = vmul.f32 %v7660, 0.5
        %v7698 = vmul.f32 %v7551, 0.5
        %v7699 = vmul.f32 %v7553, 0.5
        %v7700 = vmul.f32 %v7664, 0.5
        %v7701 = vmul.f32 %v7666, 0.5
        %v7702 = vmul.f32 %v7557, 0.5
        %v7703 = vmul.f32 %v7559, 0.5
        %v7704 = vmul.f32 %v7670, 0.5
        %v7705 = vmul.f32 %v7672, 0.5
        %v7706 = vmul.f32 %v7515, 0.044715
        %v7707 = vmul.f32 %v7517, 0.044715
        %v7708 = vmul.f32 %v7628, 0.044715
        %v7709 = vmul.f32 %v7630, 0.044715
        %v7710 = vmul.f32 %v7521, 0.044715
        %v7711 = vmul.f32 %v7523, 0.044715
        %v7712 = vmul.f32 %v7634, 0.044715
        %v7713 = vmul.f32 %v7636, 0.044715
        %v7714 = vmul.f32 %v7527, 0.044715
        %v7715 = vmul.f32 %v7529, 0.044715
        %v7716 = vmul.f32 %v7640, 0.044715
        %v7717 = vmul.f32 %v7642, 0.044715
        %v7718 = vmul.f32 %v7533, 0.044715
        %v7719 = vmul.f32 %v7535, 0.044715
        %v7720 = vmul.f32 %v7646, 0.044715
        %v7721 = vmul.f32 %v7648, 0.044715
        %v7722 = vmul.f32 %v7539, 0.044715
        %v7723 = vmul.f32 %v7541, 0.044715
        %v7724 = vmul.f32 %v7652, 0.044715
        %v7725 = vmul.f32 %v7654, 0.044715
        %v7726 = vmul.f32 %v7545, 0.044715
        %v7727 = vmul.f32 %v7547, 0.044715
        %v7728 = vmul.f32 %v7658, 0.044715
        %v7729 = vmul.f32 %v7660, 0.044715
        %v7730 = vmul.f32 %v7551, 0.044715
        %v7731 = vmul.f32 %v7553, 0.044715
        %v7732 = vmul.f32 %v7664, 0.044715
        %v7733 = vmul.f32 %v7666, 0.044715
        %v7734 = vmul.f32 %v7557, 0.044715
        %v7735 = vmul.f32 %v7559, 0.044715
        %v7736 = vmul.f32 %v7670, 0.044715
        %v7737 = vmul.f32 %v7672, 0.044715
        %v7738 = vmul.f32 %v7706, %v7515
        %v7739 = vmul.f32 %v7707, %v7517
        %v7740 = vmul.f32 %v7708, %v7628
        %v7741 = vmul.f32 %v7709, %v7630
        %v7742 = vmul.f32 %v7710, %v7521
        %v7743 = vmul.f32 %v7711, %v7523
        %v7744 = vmul.f32 %v7712, %v7634
        %v7745 = vmul.f32 %v7713, %v7636
        %v7746 = vmul.f32 %v7714, %v7527
        %v7747 = vmul.f32 %v7715, %v7529
        %v7748 = vmul.f32 %v7716, %v7640
        %v7749 = vmul.f32 %v7717, %v7642
        %v7750 = vmul.f32 %v7718, %v7533
        %v7751 = vmul.f32 %v7719, %v7535
        %v7752 = vmul.f32 %v7720, %v7646
        %v7753 = vmul.f32 %v7721, %v7648
        %v7754 = vmul.f32 %v7722, %v7539
        %v7755 = vmul.f32 %v7723, %v7541
        %v7756 = vmul.f32 %v7724, %v7652
        %v7757 = vmul.f32 %v7725, %v7654
        %v7758 = vmul.f32 %v7726, %v7545
        %v7759 = vmul.f32 %v7727, %v7547
        %v7760 = vmul.f32 %v7728, %v7658
        %v7761 = vmul.f32 %v7729, %v7660
        %v7762 = vmul.f32 %v7730, %v7551
        %v7763 = vmul.f32 %v7731, %v7553
        %v7764 = vmul.f32 %v7732, %v7664
        %v7765 = vmul.f32 %v7733, %v7666
        %v7766 = vmul.f32 %v7734, %v7557
        %v7767 = vmul.f32 %v7735, %v7559
        %v7768 = vmul.f32 %v7736, %v7670
        %v7769 = vmul.f32 %v7737, %v7672
        %v7770 = vmul.f32 %v7738, %v7515
        %v7771 = vmul.f32 %v7739, %v7517
        %v7772 = vmul.f32 %v7740, %v7628
        %v7773 = vmul.f32 %v7741, %v7630
        %v7774 = vmul.f32 %v7742, %v7521
        %v7775 = vmul.f32 %v7743, %v7523
        %v7776 = vmul.f32 %v7744, %v7634
        %v7777 = vmul.f32 %v7745, %v7636
        %v7778 = vmul.f32 %v7746, %v7527
        %v7779 = vmul.f32 %v7747, %v7529
        %v7780 = vmul.f32 %v7748, %v7640
        %v7781 = vmul.f32 %v7749, %v7642
        %v7782 = vmul.f32 %v7750, %v7533
        %v7783 = vmul.f32 %v7751, %v7535
        %v7784 = vmul.f32 %v7752, %v7646
        %v7785 = vmul.f32 %v7753, %v7648
        %v7786 = vmul.f32 %v7754, %v7539
        %v7787 = vmul.f32 %v7755, %v7541
        %v7788 = vmul.f32 %v7756, %v7652
        %v7789 = vmul.f32 %v7757, %v7654
        %v7790 = vmul.f32 %v7758, %v7545
        %v7791 = vmul.f32 %v7759, %v7547
        %v7792 = vmul.f32 %v7760, %v7658
        %v7793 = vmul.f32 %v7761, %v7660
        %v7794 = vmul.f32 %v7762, %v7551
        %v7795 = vmul.f32 %v7763, %v7553
        %v7796 = vmul.f32 %v7764, %v7664
        %v7797 = vmul.f32 %v7765, %v7666
        %v7798 = vmul.f32 %v7766, %v7557
        %v7799 = vmul.f32 %v7767, %v7559
        %v7800 = vmul.f32 %v7768, %v7670
        %v7801 = vmul.f32 %v7769, %v7672
        %v7802 = vadd.f32 %v7515, %v7770
        %v7803 = vadd.f32 %v7517, %v7771
        %v7804 = vadd.f32 %v7628, %v7772
        %v7805 = vadd.f32 %v7630, %v7773
        %v7806 = vadd.f32 %v7521, %v7774
        %v7807 = vadd.f32 %v7523, %v7775
        %v7808 = vadd.f32 %v7634, %v7776
        %v7809 = vadd.f32 %v7636, %v7777
        %v7810 = vadd.f32 %v7527, %v7778
        %v7811 = vadd.f32 %v7529, %v7779
        %v7812 = vadd.f32 %v7640, %v7780
        %v7813 = vadd.f32 %v7642, %v7781
        %v7814 = vadd.f32 %v7533, %v7782
        %v7815 = vadd.f32 %v7535, %v7783
        %v7816 = vadd.f32 %v7646, %v7784
        %v7817 = vadd.f32 %v7648, %v7785
        %v7818 = vadd.f32 %v7539, %v7786
        %v7819 = vadd.f32 %v7541, %v7787
        %v7820 = vadd.f32 %v7652, %v7788
        %v7821 = vadd.f32 %v7654, %v7789
        %v7822 = vadd.f32 %v7545, %v7790
        %v7823 = vadd.f32 %v7547, %v7791
        %v7824 = vadd.f32 %v7658, %v7792
        %v7825 = vadd.f32 %v7660, %v7793
        %v7826 = vadd.f32 %v7551, %v7794
        %v7827 = vadd.f32 %v7553, %v7795
        %v7828 = vadd.f32 %v7664, %v7796
        %v7829 = vadd.f32 %v7666, %v7797
        %v7830 = vadd.f32 %v7557, %v7798
        %v7831 = vadd.f32 %v7559, %v7799
        %v7832 = vadd.f32 %v7670, %v7800
        %v7833 = vadd.f32 %v7672, %v7801
        %v7834 = vmul.f32 %v7802, 0.7978846
        %v7835 = vmul.f32 %v7803, 0.7978846
        %v7836 = vmul.f32 %v7804, 0.7978846
        %v7837 = vmul.f32 %v7805, 0.7978846
        %v7838 = vmul.f32 %v7806, 0.7978846
        %v7839 = vmul.f32 %v7807, 0.7978846
        %v7840 = vmul.f32 %v7808, 0.7978846
        %v7841 = vmul.f32 %v7809, 0.7978846
        %v7842 = vmul.f32 %v7810, 0.7978846
        %v7843 = vmul.f32 %v7811, 0.7978846
        %v7844 = vmul.f32 %v7812, 0.7978846
        %v7845 = vmul.f32 %v7813, 0.7978846
        %v7846 = vmul.f32 %v7814, 0.7978846
        %v7847 = vmul.f32 %v7815, 0.7978846
        %v7848 = vmul.f32 %v7816, 0.7978846
        %v7849 = vmul.f32 %v7817, 0.7978846
        %v7850 = vmul.f32 %v7818, 0.7978846
        %v7851 = vmul.f32 %v7819, 0.7978846
        %v7852 = vmul.f32 %v7820, 0.7978846
        %v7853 = vmul.f32 %v7821, 0.7978846
        %v7854 = vmul.f32 %v7822, 0.7978846
        %v7855 = vmul.f32 %v7823, 0.7978846
        %v7856 = vmul.f32 %v7824, 0.7978846
        %v7857 = vmul.f32 %v7825, 0.7978846
        %v7858 = vmul.f32 %v7826, 0.7978846
        %v7859 = vmul.f32 %v7827, 0.7978846
        %v7860 = vmul.f32 %v7828, 0.7978846
        %v7861 = vmul.f32 %v7829, 0.7978846
        %v7862 = vmul.f32 %v7830, 0.7978846
        %v7863 = vmul.f32 %v7831, 0.7978846
        %v7864 = vmul.f32 %v7832, 0.7978846
        %v7865 = vmul.f32 %v7833, 0.7978846
        %v7866 = vtanh.pop %v7834
        %v7867 = vtanh.pop %v7835
        %v7868 = vtanh.pop %v7836
        %v7869 = vtanh.pop %v7837
        %v7870 = vtanh.pop %v7838
        %v7871 = vtanh.pop %v7839
        %v7872 = vtanh.pop %v7840
        %v7873 = vtanh.pop %v7841
        %v7874 = vtanh.pop %v7842
        %v7875 = vtanh.pop %v7843
        %v7876 = vtanh.pop %v7844
        %v7877 = vtanh.pop %v7845
        %v7878 = vtanh.pop %v7846
        %v7879 = vtanh.pop %v7847
        %v7880 = vtanh.pop %v7848
        %v7881 = vtanh.pop %v7849
        %v7882 = vtanh.pop %v7850
        %v7883 = vtanh.pop %v7851
        %v7884 = vtanh.pop %v7852
        %v7885 = vtanh.pop %v7853
        %v7886 = vtanh.pop %v7854
        %v7887 = vtanh.pop %v7855
        %v7888 = vtanh.pop %v7856
        %v7889 = vtanh.pop %v7857
        %v7890 = vtanh.pop %v7858
        %v7891 = vtanh.pop %v7859
        %v7892 = vtanh.pop %v7860
        %v7893 = vtanh.pop %v7861
        %v7894 = vtanh.pop %v7862
        %v7895 = vtanh.pop %v7863
        %v7896 = vtanh.pop %v7864
        %v7897 = vtanh.pop %v7865
        %v7898 = vadd.f32 %v7866, 1.0
        %v7899 = vadd.f32 %v7867, 1.0
        %v7900 = vadd.f32 %v7868, 1.0
        %v7901 = vadd.f32 %v7869, 1.0
        %v7902 = vadd.f32 %v7870, 1.0
        %v7903 = vadd.f32 %v7871, 1.0
        %v7904 = vadd.f32 %v7872, 1.0
        %v7905 = vadd.f32 %v7873, 1.0
        %v7906 = vadd.f32 %v7874, 1.0
        %v7907 = vadd.f32 %v7875, 1.0
        %v7908 = vadd.f32 %v7876, 1.0
        %v7909 = vadd.f32 %v7877, 1.0
        %v7910 = vadd.f32 %v7878, 1.0
        %v7911 = vadd.f32 %v7879, 1.0
        %v7912 = vadd.f32 %v7880, 1.0
        %v7913 = vadd.f32 %v7881, 1.0
        %v7914 = vadd.f32 %v7882, 1.0
        %v7915 = vadd.f32 %v7883, 1.0
        %v7916 = vadd.f32 %v7884, 1.0
        %v7917 = vadd.f32 %v7885, 1.0
        %v7918 = vadd.f32 %v7886, 1.0
        %v7919 = vadd.f32 %v7887, 1.0
        %v7920 = vadd.f32 %v7888, 1.0
        %v7921 = vadd.f32 %v7889, 1.0
        %v7922 = vadd.f32 %v7890, 1.0
        %v7923 = vadd.f32 %v7891, 1.0
        %v7924 = vadd.f32 %v7892, 1.0
        %v7925 = vadd.f32 %v7893, 1.0
        %v7926 = vadd.f32 %v7894, 1.0
        %v7927 = vadd.f32 %v7895, 1.0
        %v7928 = vadd.f32 %v7896, 1.0
        %v7929 = vadd.f32 %v7897, 1.0
        %v7930 = vmul.f32 %v7674, %v7898
        %v7931 = vmul.f32 %v7675, %v7899
        %v7932 = vmul.f32 %v7676, %v7900
        %v7933 = vmul.f32 %v7677, %v7901
        %v7934 = vmul.f32 %v7678, %v7902
        %v7935 = vmul.f32 %v7679, %v7903
        %v7936 = vmul.f32 %v7680, %v7904
        %v7937 = vmul.f32 %v7681, %v7905
        %v7938 = vmul.f32 %v7682, %v7906
        %v7939 = vmul.f32 %v7683, %v7907
        %v7940 = vmul.f32 %v7684, %v7908
        %v7941 = vmul.f32 %v7685, %v7909
        %v7942 = vmul.f32 %v7686, %v7910
        %v7943 = vmul.f32 %v7687, %v7911
        %v7944 = vmul.f32 %v7688, %v7912
        %v7945 = vmul.f32 %v7689, %v7913
        %v7946 = vmul.f32 %v7690, %v7914
        %v7947 = vmul.f32 %v7691, %v7915
        %v7948 = vmul.f32 %v7692, %v7916
        %v7949 = vmul.f32 %v7693, %v7917
        %v7950 = vmul.f32 %v7694, %v7918
        %v7951 = vmul.f32 %v7695, %v7919
        %v7952 = vmul.f32 %v7696, %v7920
        %v7953 = vmul.f32 %v7697, %v7921
        %v7954 = vmul.f32 %v7698, %v7922
        %v7955 = vmul.f32 %v7699, %v7923
        %v7956 = vmul.f32 %v7700, %v7924
        %v7957 = vmul.f32 %v7701, %v7925
        %v7958 = vmul.f32 %v7702, %v7926
        %v7959 = vmul.f32 %v7703, %v7927
        %v7960 = vmul.f32 %v7704, %v7928
        %v7961 = vmul.f32 %v7705, %v7929
        %v7962 = vld [vmem:[#allocation10] sm:$0xff]
        %v7963 = vld [vmem:[#allocation10 + $0x8] sm:$0xff]
        %v7964 = vld [vmem:[#allocation10 + $0x10] sm:$0xff]
        %v7965 = vld [vmem:[#allocation10 + $0x18] sm:$0xff]
        %v7966 = vld [vmem:[#allocation10 + $0x20] sm:$0xff]
        %v7967 = vld [vmem:[#allocation10 + $0x28] sm:$0xff]
        %v7968 = vld [vmem:[#allocation10 + $0x30] sm:$0xff]
        %v7969 = vld [vmem:[#allocation10 + $0x38] sm:$0xff]
        %v7970 = vld [vmem:[#allocation10 + $0x40] sm:$0xff]
        %v7971 = vld [vmem:[#allocation10 + $0x48] sm:$0xff]
        %v7972 = vld [vmem:[#allocation10 + $0x50] sm:$0xff]
        %v7973 = vld [vmem:[#allocation10 + $0x58] sm:$0xff]
        %v7974 = vld [vmem:[#allocation10 + $0x60] sm:$0xff]
        %v7975 = vld [vmem:[#allocation10 + $0x68] sm:$0xff]
        %v7976 = vld [vmem:[#allocation10 + $0x70] sm:$0xff]
        %v7977 = vld [vmem:[#allocation10 + $0x78] sm:$0xff]
        %v7978 = vld [vmem:[#allocation10 + $0x80] sm:$0xff]
        %v7979 = vld [vmem:[#allocation10 + $0x88] sm:$0xff]
        %v7980 = vld [vmem:[#allocation10 + $0x90] sm:$0xff]
        %v7981 = vld [vmem:[#allocation10 + $0x98] sm:$0xff]
        %v7982 = vld [vmem:[#allocation10 + $0xa0] sm:$0xff]
        %v7983 = vld [vmem:[#allocation10 + $0xa8] sm:$0xff]
        %v7984 = vld [vmem:[#allocation10 + $0xb0] sm:$0xff]
        %v7985 = vld [vmem:[#allocation10 + $0xb8] sm:$0xff]
        %v7986 = vld [vmem:[#allocation10 + $0xc0] sm:$0xff]
        %v7987 = vld [vmem:[#allocation10 + $0xc8] sm:$0xff]
        %v7988 = vld [vmem:[#allocation10 + $0xd0] sm:$0xff]
        %v7989 = vld [vmem:[#allocation10 + $0xd8] sm:$0xff]
        %v7990 = vld [vmem:[#allocation10 + $0xe0] sm:$0xff]
        %v7991 = vld [vmem:[#allocation10 + $0xe8] sm:$0xff]
        %v7992 = vld [vmem:[#allocation10 + $0xf0] sm:$0xff]
        %v7993 = vld [vmem:[#allocation10 + $0xf8] sm:$0xff]
        %v7994 = vld [vmem:[#allocation10 + $0x100] sm:$0xff]
        %v7995 = vld [vmem:[#allocation10 + $0x108] sm:$0xff]
        %v7996 = vld [vmem:[#allocation10 + $0x110] sm:$0xff]
        %v7997 = vld [vmem:[#allocation10 + $0x118] sm:$0xff]
        %v7998 = vld [vmem:[#allocation10 + $0x120] sm:$0xff]
        %v7999 = vld [vmem:[#allocation10 + $0x128] sm:$0xff]
        %v8000 = vld [vmem:[#allocation10 + $0x130] sm:$0xff]
        %v8001 = vld [vmem:[#allocation10 + $0x138] sm:$0xff]
        %v8002 = vld [vmem:[#allocation10 + $0x140] sm:$0xff]
        %v8003 = vld [vmem:[#allocation10 + $0x148] sm:$0xff]
        %v8004 = vld [vmem:[#allocation10 + $0x150] sm:$0xff]
        %v8005 = vld [vmem:[#allocation10 + $0x158] sm:$0xff]
        %v8006 = vld [vmem:[#allocation10 + $0x160] sm:$0xff]
        %v8007 = vld [vmem:[#allocation10 + $0x168] sm:$0xff]
        %v8008 = vld [vmem:[#allocation10 + $0x170] sm:$0xff]
        %v8009 = vld [vmem:[#allocation10 + $0x178] sm:$0xff]
        %v8010 = vld [vmem:[#allocation10 + $0x180] sm:$0xff]
        %v8011 = vld [vmem:[#allocation10 + $0x188] sm:$0xff]
        %v8012 = vld [vmem:[#allocation10 + $0x190] sm:$0xff]
        %v8013 = vld [vmem:[#allocation10 + $0x198] sm:$0xff]
        %v8014 = vld [vmem:[#allocation10 + $0x1a0] sm:$0xff]
        %v8015 = vld [vmem:[#allocation10 + $0x1a8] sm:$0xff]
        %v8016 = vld [vmem:[#allocation10 + $0x1b0] sm:$0xff]
        %v8017 = vld [vmem:[#allocation10 + $0x1b8] sm:$0xff]
        %v8018 = vld [vmem:[#allocation10 + $0x1c0] sm:$0xff]
        %v8019 = vld [vmem:[#allocation10 + $0x1c8] sm:$0xff]
        %v8020 = vld [vmem:[#allocation10 + $0x1d0] sm:$0xff]
        %v8021 = vld [vmem:[#allocation10 + $0x1d8] sm:$0xff]
        %v8022 = vld [vmem:[#allocation10 + $0x1e0] sm:$0xff]
        %v8023 = vld [vmem:[#allocation10 + $0x1e8] sm:$0xff]
        %v8024 = vld [vmem:[#allocation10 + $0x1f0] sm:$0xff]
        %v8025 = vld [vmem:[#allocation10 + $0x1f8] sm:$0xff]
        %v8026 = vld [vmem:[%s9] sm:$0x1]
        %v8028 = vlaneseq
        %v8029 = vshrl.u32 %v8028, 7
        %v8030 = vsub.s32 0, %v8029
        %v8031 = vrot.slane %v8026, %v8030
        %8033 = vmatprep.subr.mxu0 0.0
        %8034 = vmatpush1.msra.mxu0 %v7962
        %8035 = vmatprep.subr.mxu0 0.0
        %8036 = vmatpush1.msra.mxu0 %v7963
        %8037 = vmatprep.subr.mxu0 0.0
        %8038 = vmatpush1.msra.mxu0 %v7964
        %8039 = vmatprep.subr.mxu0 0.0
        %8040 = vmatpush1.msra.mxu0 %v7965
        %8041 = vmatprep.subr.mxu0 0.0
        %8042 = vmatpush1.msra.mxu0 %v7966
        %8043 = vmatprep.subr.mxu0 0.0
        %8044 = vmatpush1.msra.mxu0 %v7967
        %8045 = vmatprep.subr.mxu0 0.0
        %8046 = vmatpush1.msra.mxu0 %v7968
        %8047 = vmatprep.subr.mxu0 0.0
        %8048 = vmatpush1.msra.mxu0 %v7969
        %8049 = vmatprep.subr.mxu0 0.0
        %8050 = vmatpush1.msra.mxu0 %v7970
        %8051 = vmatprep.subr.mxu0 0.0
        %8052 = vmatpush1.msra.mxu0 %v7971
        %8053 = vmatprep.subr.mxu0 0.0
        %8054 = vmatpush1.msra.mxu0 %v7972
        %8055 = vmatprep.subr.mxu0 0.0
        %8056 = vmatpush1.msra.mxu0 %v7973
        %8057 = vmatprep.subr.mxu0 0.0
        %8058 = vmatpush1.msra.mxu0 %v7974
        %8059 = vmatprep.subr.mxu0 0.0
        %8060 = vmatpush1.msra.mxu0 %v7975
        %8061 = vmatprep.subr.mxu0 0.0
        %8062 = vmatpush1.msra.mxu0 %v7976
        %8063 = vmatprep.subr.mxu0 0.0
        %8064 = vmatpush1.msra.mxu0 %v7977
        %8065 = vmatprep.subr.mxu0 0.0
        %8066 = vmatpush1.msra.mxu0 %v7978
        %8067 = vmatprep.subr.mxu0 0.0
        %8068 = vmatpush1.msra.mxu0 %v7979
        %8069 = vmatprep.subr.mxu0 0.0
        %8070 = vmatpush1.msra.mxu0 %v7980
        %8071 = vmatprep.subr.mxu0 0.0
        %8072 = vmatpush1.msra.mxu0 %v7981
        %8073 = vmatprep.subr.mxu0 0.0
        %8074 = vmatpush1.msra.mxu0 %v7982
        %8075 = vmatprep.subr.mxu0 0.0
        %8076 = vmatpush1.msra.mxu0 %v7983
        %8077 = vmatprep.subr.mxu0 0.0
        %8078 = vmatpush1.msra.mxu0 %v7984
        %8079 = vmatprep.subr.mxu0 0.0
        %8080 = vmatpush1.msra.mxu0 %v7985
        %8081 = vmatprep.subr.mxu0 0.0
        %8082 = vmatpush1.msra.mxu0 %v7986
        %8083 = vmatprep.subr.mxu0 0.0
        %8084 = vmatpush1.msra.mxu0 %v7987
        %8085 = vmatprep.subr.mxu0 0.0
        %8086 = vmatpush1.msra.mxu0 %v7988
        %8087 = vmatprep.subr.mxu0 0.0
        %8088 = vmatpush1.msra.mxu0 %v7989
        %8089 = vmatprep.subr.mxu0 0.0
        %8090 = vmatpush1.msra.mxu0 %v7990
        %8091 = vmatprep.subr.mxu0 0.0
        %8092 = vmatpush1.msra.mxu0 %v7991
        %8093 = vmatprep.subr.mxu0 0.0
        %8094 = vmatpush1.msra.mxu0 %v7992
        %8095 = vmatprep.subr.mxu0 0.0
        %8096 = vmatpush1.msra.mxu0 %v7993
        %8097 = vmatprep.mubr.f32.mxu0 %v7931
        %8098 = vmatmul.mubr.f32.gmra.mrb[0].mxu0 %v7930
        %v8099 = vpop.f32.mrb[0].mxu0
        %v8100 = vadd.f32 %v8031, %v8099
        %v8101 = vpop.f32.mrb[0].mxu0
        %8102 = vmatprep.mubr.f32.mxu0 %v7935
        %8103 = vmatmul.mubr.f32.gmra.mrb[0].mxu0 %v7934
        %v8104 = vpop.f32.mrb[0].mxu0
        %v8105 = vadd.f32 %v8031, %v8104
        %v8106 = vpop.f32.mrb[0].mxu0
        %8107 = vmatprep.mubr.f32.mxu0 %v7939
        %8108 = vmatmul.mubr.f32.gmra.mrb[0].mxu0 %v7938
        %v8109 = vpop.f32.mrb[0].mxu0
        %v8110 = vadd.f32 %v8031, %v8109
        %v8111 = vpop.f32.mrb[0].mxu0
        %8112 = vmatprep.mubr.f32.mxu0 %v7943
        %8113 = vmatmul.mubr.f32.gmra.mrb[0].mxu0 %v7942
        %v8114 = vpop.f32.mrb[0].mxu0
        %v8115 = vadd.f32 %v8031, %v8114
        %v8116 = vpop.f32.mrb[0].mxu0
        %8117 = vmatprep.mubr.f32.mxu0 %v7947
        %8118 = vmatmul.mubr.f32.gmra.mrb[0].mxu0 %v7946
        %v8119 = vpop.f32.mrb[0].mxu0
        %v8120 = vadd.f32 %v8031, %v8119
        %v8121 = vpop.f32.mrb[0].mxu0
        %8122 = vmatprep.mubr.f32.mxu0 %v7951
        %8123 = vmatmul.mubr.f32.gmra.mrb[0].mxu0 %v7950
        %v8124 = vpop.f32.mrb[0].mxu0
        %v8125 = vadd.f32 %v8031, %v8124
        %v8126 = vpop.f32.mrb[0].mxu0
        %8127 = vmatprep.mubr.f32.mxu0 %v7955
        %8128 = vmatmul.mubr.f32.gmra.mrb[0].mxu0 %v7954
        %v8129 = vpop.f32.mrb[0].mxu0
        %v8130 = vadd.f32 %v8031, %v8129
        %v8131 = vpop.f32.mrb[0].mxu0
        %8132 = vmatprep.mubr.f32.mxu0 %v7959
        %8133 = vmatmul.mubr.f32.gmra.mrb[0].mxu0 %v7958
        %v8134 = vpop.f32.mrb[0].mxu0
        %v8135 = vadd.f32 %v8031, %v8134
        %v8136 = vpop.f32.mrb[0].mxu0
        %8137 = vdwg.mxu0
        %8138 = vmatprep.subr.mxu0 0.0
        %8139 = vmatpush1.msra.mxu0 %v7994
        %8140 = vmatprep.subr.mxu0 0.0
        %8141 = vmatpush1.msra.mxu0 %v7995
        %8142 = vmatprep.subr.mxu0 0.0
        %8143 = vmatpush1.msra.mxu0 %v7996
        %8144 = vmatprep.subr.mxu0 0.0
        %8145 = vmatpush1.msra.mxu0 %v7997
        %8146 = vmatprep.subr.mxu0 0.0
        %8147 = vmatpush1.msra.mxu0 %v7998
        %8148 = vmatprep.subr.mxu0 0.0
        %8149 = vmatpush1.msra.mxu0 %v7999
        %8150 = vmatprep.subr.mxu0 0.0
        %8151 = vmatpush1.msra.mxu0 %v8000
        %8152 = vmatprep.subr.mxu0 0.0
        %8153 = vmatpush1.msra.mxu0 %v8001
        %8154 = vmatprep.subr.mxu0 0.0
        %8155 = vmatpush1.msra.mxu0 %v8002
        %8156 = vmatprep.subr.mxu0 0.0
        %8157 = vmatpush1.msra.mxu0 %v8003
        %8158 = vmatprep.subr.mxu0 0.0
        %8159 = vmatpush1.msra.mxu0 %v8004
        %8160 = vmatprep.subr.mxu0 0.0
        %8161 = vmatpush1.msra.mxu0 %v8005
        %8162 = vmatprep.subr.mxu0 0.0
        %8163 = vmatpush1.msra.mxu0 %v8006
        %8164 = vmatprep.subr.mxu0 0.0
        %8165 = vmatpush1.msra.mxu0 %v8007
        %8166 = vmatprep.subr.mxu0 0.0
        %8167 = vmatpush1.msra.mxu0 %v8008
        %8168 = vmatprep.subr.mxu0 0.0
        %8169 = vmatpush1.msra.mxu0 %v8009
        %8170 = vmatprep.subr.mxu0 0.0
        %8171 = vmatpush1.msra.mxu0 %v8010
        %8172 = vmatprep.subr.mxu0 0.0
        %8173 = vmatpush1.msra.mxu0 %v8011
        %8174 = vmatprep.subr.mxu0 0.0
        %8175 = vmatpush1.msra.mxu0 %v8012
        %8176 = vmatprep.subr.mxu0 0.0
        %8177 = vmatpush1.msra.mxu0 %v8013
        %8178 = vmatprep.subr.mxu0 0.0
        %8179 = vmatpush1.msra.mxu0 %v8014
        %8180 = vmatprep.subr.mxu0 0.0
        %8181 = vmatpush1.msra.mxu0 %v8015
        %8182 = vmatprep.subr.mxu0 0.0
        %8183 = vmatpush1.msra.mxu0 %v8016
        %8184 = vmatprep.subr.mxu0 0.0
        %8185 = vmatpush1.msra.mxu0 %v8017
        %8186 = vmatprep.subr.mxu0 0.0
        %8187 = vmatpush1.msra.mxu0 %v8018
        %8188 = vmatprep.subr.mxu0 0.0
        %8189 = vmatpush1.msra.mxu0 %v8019
        %8190 = vmatprep.subr.mxu0 0.0
        %8191 = vmatpush1.msra.mxu0 %v8020
        %8192 = vmatprep.subr.mxu0 0.0
        %8193 = vmatpush1.msra.mxu0 %v8021
        %8194 = vmatprep.subr.mxu0 0.0
        %8195 = vmatpush1.msra.mxu0 %v8022
        %8196 = vmatprep.subr.mxu0 0.0
        %8197 = vmatpush1.msra.mxu0 %v8023
        %8198 = vmatprep.subr.mxu0 0.0
        %8199 = vmatpush1.msra.mxu0 %v8024
        %8200 = vmatprep.subr.mxu0 0.0
        %8201 = vmatpush1.msra.mxu0 %v8025
        %8202 = vmatprep.mubr.f32.mxu0 %v7933
        %8203 = vmatmul.mubr.f32.gmra.mrb[0].mxu0 %v7932
        %v8204 = vpop.f32.mrb[0].mxu0
        %v8205 = vadd.f32 %v8100, %v8204
        %v8206 = vpop.f32.mrb[0].mxu0
        %8207 = vmatprep.mubr.f32.mxu0 %v7937
        %8208 = vmatmul.mubr.f32.gmra.mrb[0].mxu0 %v7936
        %v8209 = vpop.f32.mrb[0].mxu0
        %v8210 = vadd.f32 %v8105, %v8209
        %v8211 = vpop.f32.mrb[0].mxu0
        %8212 = vmatprep.mubr.f32.mxu0 %v7941
        %8213 = vmatmul.mubr.f32.gmra.mrb[0].mxu0 %v7940
        %v8214 = vpop.f32.mrb[0].mxu0
        %v8215 = vadd.f32 %v8110, %v8214
        %v8216 = vpop.f32.mrb[0].mxu0
        %8217 = vmatprep.mubr.f32.mxu0 %v7945
        %8218 = vmatmul.mubr.f32.gmra.mrb[0].mxu0 %v7944
        %v8219 = vpop.f32.mrb[0].mxu0
        %v8220 = vadd.f32 %v8115, %v8219
        %v8221 = vpop.f32.mrb[0].mxu0
        %8222 = vmatprep.mubr.f32.mxu0 %v7949
        %8223 = vmatmul.mubr.f32.gmra.mrb[0].mxu0 %v7948
        %v8224 = vpop.f32.mrb[0].mxu0
        %v8225 = vadd.f32 %v8120, %v8224
        %v8226 = vpop.f32.mrb[0].mxu0
        %8227 = vmatprep.mubr.f32.mxu0 %v7953
        %8228 = vmatmul.mubr.f32.gmra.mrb[0].mxu0 %v7952
        %v8229 = vpop.f32.mrb[0].mxu0
        %v8230 = vadd.f32 %v8125, %v8229
        %v8231 = vpop.f32.mrb[0].mxu0
        %8232 = vmatprep.mubr.f32.mxu0 %v7957
        %8233 = vmatmul.mubr.f32.gmra.mrb[0].mxu0 %v7956
        %v8234 = vpop.f32.mrb[0].mxu0
        %v8235 = vadd.f32 %v8130, %v8234
        %v8236 = vpop.f32.mrb[0].mxu0
        %8237 = vmatprep.mubr.f32.mxu0 %v7961
        %8238 = vmatmul.mubr.f32.gmra.mrb[0].mxu0 %v7960
        %v8239 = vpop.f32.mrb[0].mxu0
        %v8240 = vadd.f32 %v8135, %v8239
        %v8241 = vpop.f32.mrb[0].mxu0
        %8242 = vdwg.mxu0
        %v8243 = vlaneseq
        %v8244 = vshrl.u32 %v8243, 7
        %v8245 = vsub.s32 5, %v8244
        %v8246 = vrot.slane %v453, %v8245
        %v8247 = vmul.f32 %v8246, %v8205
        %v8248 = vmul.f32 %v8246, %v8210
        %v8249 = vmul.f32 %v8246, %v8215
        %v8250 = vmul.f32 %v8246, %v8220
        %v8251 = vmul.f32 %v8246, %v8225
        %v8252 = vmul.f32 %v8246, %v8230
        %v8253 = vmul.f32 %v8246, %v8235
        %v8254 = vmul.f32 %v8246, %v8240
        %v8255 = vadd.f32 %v7218, %v8247
        %v8256 = vadd.f32 %v7219, %v8248
        %v8257 = vadd.f32 %v7220, %v8249
        %v8258 = vadd.f32 %v7221, %v8250
        %v8259 = vadd.f32 %v7222, %v8251
        %v8260 = vadd.f32 %v7223, %v8252
        %v8261 = vadd.f32 %v7224, %v8253
        %v8262 = vadd.f32 %v7225, %v8254
        %8263 = vst [vmem:[%s448] sm:$0xff] %v8255
        %8264 = vst [vmem:[%s448 + $0x8] sm:$0xff] %v8256
        %8265 = vst [vmem:[%s448 + $0x10] sm:$0xff] %v8257
        %8266 = vst [vmem:[%s448 + $0x18] sm:$0xff] %v8258
        %8267 = vst [vmem:[%s448 + $0x20] sm:$0xff] %v8259
        %8268 = vst [vmem:[%s448 + $0x28] sm:$0xff] %v8260
        %8269 = vst [vmem:[%s448 + $0x30] sm:$0xff] %v8261
        %8270 = vst [vmem:[%s448 + $0x38] sm:$0xff] %v8262
        %s8271 = sand.u32 %s257, 1
        %s8272 = scalar_lea.sflag [#allocation4], %s8271
        %s8273 = sand.u32 %s257, 1
        %s8274 = smul.addr %s8273, 64
        %s8275 = scalar_lea.vmem [#allocation11], %s8274
        // Predicated region
        $region81: #{tpu_custom_call.1} parent=59 // pred_check
          %p8276 = pneg %p267
        $region82: #{tpu_custom_call.1} parent=59 // pred_check_branch
          %8278 = sbr.rel (%p8276) target = $region84
        $region83: #{tpu_custom_call.1} parent=59 // pred_region
          %s8280 = ssub.s32 1024, 1024
          %8281 = vsyncadd %s8272, %s8280
          %s8282 = smul.addr %s29, 8
          %s8283 = smul.addr %s8282, 128
          %s8284 = scalar_lea.hbm %s10, %s8283
          %s8285 = sshll.u32 %s8275, 4
          %s8286 = int_to_ptr.vmem [resolvable:$true] %s8285
          %8291 = dma.vmem_to_hbm [thread:$0]  %s8286, 1024, %s8284, %s8272, 128, 128, 8
        $region84: #{tpu_custom_call.1} parent=59 // pred_fallthru
          _
      $region60: #{tpu_custom_call.1} parent=5 // pred_fallthru
        _
      %p8292 = scmp.le.s32.totalorder 2, %s24
      // Predicated region
      $region85: #{tpu_custom_call.1} parent=5 // pred_check
        %p8293 = pneg %p8292
      $region86: #{tpu_custom_call.1} parent=5 // pred_check_branch
        %8295 = sbr.rel (%p8293) target = $region88
      $region87: #{tpu_custom_call.1} parent=5 // pred_region
        %s8296 = ssub.s32 %s24, 2
        // Predicated region
        $region89: #{tpu_custom_call.1} parent=87 // pred_check
          %p8297 = pneg %p273
        $region90: #{tpu_custom_call.1} parent=87 // pred_check_branch
          %8299 = sbr.rel (%p8297) target = $region92
        $region91: #{tpu_custom_call.1} parent=87 // pred_region
          %s8300 = sand.u32 %s258, 1
          %s8301 = scalar_lea.sflag [#allocation4], %s8300
          %s8302 = sand.u32 %s258, 1
          %s8303 = smul.addr %s8302, 64
          %s8304 = scalar_lea.vmem [#allocation11], %s8303
          %8305 = dma.done %s8301, 1024
        $region92: #{tpu_custom_call.1} parent=87 // pred_fallthru
          _
      $region88: #{tpu_custom_call.1} parent=5 // pred_fallthru
        _
    $region6: #{tpu_custom_call.1} parent=1 // loop_footer
      %s28 = sadd.s32 1, %s24
    $region7: #{tpu_custom_call.1} parent=1 // loop_footer_branch
      %23 = sbr.rel target = $region3
    $region8: #{tpu_custom_call.1} parent=1 // loop_exit
      _
    %8306 = vsyncpa [#allocation3], 1
    %s8307 = scalar_lea.sflag [#allocation3], 1
    %8308 = vsyncpa %s8307, 1
    %8309 = vsyncpa [#allocation6], 1
    %8310 = vsyncpa [#allocation9], 1
    %8311 = vsyncpa [#allocation4], 1
    %s8312 = scalar_lea.sflag [#allocation4], 1
    %8313 = vsyncpa %s8312, 1

</llo_original>
